<compile_context>
chip_gen: v6e
topology: v6e:2x2x1
jax: 0.10.0
libtpu: 0.0.40
codegen_flags: <defaults>
</compile_context>

<pallas_src>
import functools

import jax
import jax.numpy as jnp
from jax.experimental import pallas as pl
from jax.experimental.pallas import tpu as pltpu

LANE = 128       # lane width (last-dim alignment)
SUBLANE = 8      # f32 sublane alignment
MXU_ROWS = 128   # rows fed to the MXU per recurrent step (v5e MXU height)
TIME_TILE = 16   # LSTM time steps per grid iteration


def _vmem_limit_bytes():
    """Generation-aware VMEM limit: ~3/4 of physical (96 MiB v5e/v6e, 48 MiB v7x)."""
    try:
        cap = int(pltpu.get_tpu_info().vmem_capacity_bytes)
    except Exception:
        cap = 64 * 1024 * 1024
    return max(32 * 1024 * 1024, (cap * 3) // 4)


VMEM_LIMIT = _vmem_limit_bytes()


def _round_up(x, m):
    return (x + m - 1) // m * m


def _pick_divisor_tile(total, candidates):
    for c in candidates:
        if total % c == 0:
            return c
    return candidates[-1]


def _regate_pad(w, h, hp):
    """(D, 4H) in PyTorch gate order [i,f,g,o] -> (D, 4Hp) in [i,f,o,g],
    each gate block zero-padded H -> Hp (exact: padded h/c stay 0)."""
    d = w.shape[0]
    w4 = w.reshape(d, 4, h)[:, (0, 1, 3, 2), :]          # i, f, o, g
    w4 = jnp.pad(w4, ((0, 0), (0, 0), (0, hp - h)))
    return w4.reshape(d, 4 * hp)


# ----------------------------------------------------------------------------
# LSTM recurrence kernel (batch-major, no XLA transposes around it).
#   grid = (batch_tiles [parallel], time_tiles [arbitrary])
#   xw  : (Bp, Tp, 4Hp) bf16 pre-gates (x @ W_ih + b_ih + b_hh), hoisted GEMM.
#   out : (Bp, Tp, Hp)  bf16 hidden states.
#   gate layout is [i, f, o, g]; each gate slab is Hp (multiple of 128) wide.
# ----------------------------------------------------------------------------
def lstm_kernel(xw_ref, whh_ref, out_ref, h_scr, c_scr, *, hp, tt):
    @pl.when(pl.program_id(1) == 0)          # new batch tile -> reset state
    def _():
        h_scr[...] = jnp.zeros(h_scr.shape, h_scr.dtype)
        c_scr[...] = jnp.zeros(c_scr.shape, c_scr.dtype)

    # Static unroll over the time tile: all sublane slices have static offsets.
    for s in range(tt):
        gates = xw_ref[:, s].astype(jnp.float32) + jnp.dot(
            h_scr[...], whh_ref[...], preferred_element_type=jnp.float32)  # (bt, 4Hp)
        ifo = jax.nn.sigmoid(gates[:, : 3 * hp])          # contiguous lane slab
        g_g = jnp.tanh(gates[:, 3 * hp:])                 # contiguous lane slab
        i_g = ifo[:, :hp]
        f_g = ifo[:, hp:2 * hp]
        o_g = ifo[:, 2 * hp:]
        c_new = f_g * c_scr[...] + i_g * g_g
        h_new = (o_g * jnp.tanh(c_new)).astype(jnp.bfloat16)
        c_scr[...] = c_new
        h_scr[...] = h_new
        out_ref[:, s] = h_new


def run_lstm(xw, w_hh, *, hp, tt, bt):
    """xw: (Bp, Tp, 4Hp) bf16 pre-gates, w_hh: (Hp, 4Hp) bf16 -> h (Bp, Tp, Hp) bf16."""
    bp, tp, g4 = xw.shape
    grid = (bp // bt, tp // tt)
    return pl.pallas_call(
        functools.partial(lstm_kernel, hp=hp, tt=tt),
        out_shape=jax.ShapeDtypeStruct((bp, tp, hp), jnp.bfloat16),
        grid_spec=pltpu.PrefetchScalarGridSpec(
            num_scalar_prefetch=0,
            grid=grid,
            in_specs=[
                pl.BlockSpec((bt, tt, g4), lambda b, t: (b, t, 0)),
                # Constant index_map: DMA'd once; single-buffered (VMEM relief).
                pl.BlockSpec((hp, g4), lambda b, t: (0, 0),
                             pipeline_mode=pl.Buffered(1)),
            ],
            out_specs=pl.BlockSpec((bt, tt, hp), lambda b, t: (b, t, 0)),
            scratch_shapes=[
                pltpu.VMEM((bt, hp), jnp.bfloat16),   # h state (bf16: MXU input)
                pltpu.VMEM((bt, hp), jnp.float32),    # c state (f32 accumulation)
            ],
        ),
        compiler_params=pltpu.CompilerParams(
            dimension_semantics=("parallel", "arbitrary"),
            vmem_limit_bytes=VMEM_LIMIT,
        ),
        cost_estimate=pl.CostEstimate(
            flops=2 * bp * tp * hp * g4,
            transcendentals=bp * tp * (g4 + hp),
            bytes_accessed=bp * tp * g4 * 2 + hp * g4 * 2 + bp * tp * hp * 2,
        ),
    )(xw, w_hh)


# ----------------------------------------------------------------------------
# FC + log_softmax kernel, tiled over rows (parallel) AND vocab (arbitrary).
#   The (tile_n, Vp) output block is resident across the V axis; raw logits are
#   written per V tile while an online max / sum-exp runs in scratch, and the
#   whole row block is normalized on the last V tile.  The padded-vocab mask is
#   pre-baked into b_fc (-1e30), so no iota/where is needed in-kernel.
# ----------------------------------------------------------------------------
def fc_logsoftmax_kernel(h_ref, w_ref, b_ref, out_ref, m_scr, l_scr, *, tile_v):
    j = pl.program_id(1)

    @pl.when(j == 0)
    def _():
        m_scr[...] = jnp.full(m_scr.shape, -jnp.inf, m_scr.dtype)
        l_scr[...] = jnp.zeros(l_scr.shape, l_scr.dtype)

    logits = jnp.dot(h_ref[...], w_ref[...],
                     preferred_element_type=jnp.float32) + b_ref[...]  # (tn, tv)

    m_prev = m_scr[...]
    m_new = jnp.maximum(m_prev, jnp.max(logits, axis=-1, keepdims=True))
    l_scr[...] = (l_scr[...] * jnp.exp(m_prev - m_new)
                  + jnp.sum(jnp.exp(logits - m_new), axis=-1, keepdims=True))
    m_scr[...] = m_new

    off = pl.multiple_of(j * tile_v, LANE)
    out_ref[:, pl.ds(off, tile_v)] = logits              # raw logits for now

    @pl.when(j == pl.num_programs(1) - 1)
    def _():
        lse = m_scr[...] + jnp.log(l_scr[...])
        out_ref[...] = out_ref[...] - lse                 # finalize log-probs


def run_fc_logsoftmax(h2, w_fc, b_fc, *, tile_n, tile_v):
    """h2: (N, Hp) bf16, w_fc: (Hp, Vp) bf16, b_fc: (1, Vp) f32 -> (N, Vp) f32 log-probs."""
    n, hp = h2.shape
    vp = w_fc.shape[1]
    grid = (n // tile_n, vp // tile_v)
    return pl.pallas_call(
        functools.partial(fc_logsoftmax_kernel, tile_v=tile_v),
        out_shape=jax.ShapeDtypeStruct((n, vp), jnp.float32),
        grid_spec=pltpu.PrefetchScalarGridSpec(
            num_scalar_prefetch=0,
            grid=grid,
            in_specs=[
                pl.BlockSpec((tile_n, hp), lambda i, j: (i, 0)),    # const over j
                pl.BlockSpec((hp, tile_v), lambda i, j: (0, j)),    # V-tiled weights
                pl.BlockSpec((1, tile_v), lambda i, j: (0, j)),     # V-tiled bias
            ],
            out_specs=pl.BlockSpec((tile_n, vp), lambda i, j: (i, 0)),  # row-resident
            scratch_shapes=[
                pltpu.VMEM((tile_n, 1), jnp.float32),   # running max
                pltpu.VMEM((tile_n, 1), jnp.float32),   # running sum of exp
            ],
        ),
        compiler_params=pltpu.CompilerParams(
            dimension_semantics=("parallel", "arbitrary"),
            vmem_limit_bytes=VMEM_LIMIT,
        ),
        cost_estimate=pl.CostEstimate(
            flops=2 * n * hp * vp,
            transcendentals=n * vp,
            bytes_accessed=n * hp * 2 + (n // tile_n) * hp * vp * 2 + n * vp * 4,
        ),
    )(h2, w_fc, b_fc)


# ----------------------------------------------------------------------------
# DecoderRNN forward (num_layers=1; nn.LSTM inter-layer dropout is a no-op).
# ----------------------------------------------------------------------------
@jax.jit
def decoder_rnn_forward(params, features, captions):
    """features: (B, E) f32, captions: (B, L) int32 -> (B, L, V) f32 log-probs."""
    B, L = captions.shape
    E = params["embed"].shape[1]
    H = params["w_hh"].shape[0]
    V = params["w_fc"].shape[1]
    T = L                                    # 1 feature step + (L-1) tokens

    Hp = _round_up(H, LANE)
    Vp = _round_up(V, LANE)
    tt = TIME_TILE
    Tp = _round_up(T, tt)
    # Batch tile = MXU row count (pad batch up to 128 when it is large enough
    # that the extra rows ride on otherwise-idle MXU rows).
    Bp = _round_up(B, MXU_ROWS) if B > 64 else _round_up(B, SUBLANE)
    bt = min(Bp, MXU_ROWS)

    # --- pad / re-layout parameters for the kernels (static-shape, exact) ---
    w_ih = _regate_pad(params["w_ih"], H, Hp).astype(jnp.bfloat16)          # (E, 4Hp)
    w_hh = _regate_pad(params["w_hh"], H, Hp)
    w_hh = jnp.pad(w_hh, ((0, Hp - H), (0, 0))).astype(jnp.bfloat16)        # (Hp, 4Hp)
    b_lstm = _regate_pad((params["b_ih"] + params["b_hh"])[None, :], H, Hp) # (1, 4Hp) f32
    w_fc = jnp.pad(params["w_fc"], ((0, Hp - H), (0, Vp - V))).astype(jnp.bfloat16)
    # Vocab mask baked into the bias padding: padded columns get -1e30.
    b_fc = jnp.pad(params["b_fc"], (0, Vp - V), constant_values=-1e30)[None, :]

    # --- embedding lookup + feature prepend, batch-major (no transposes) ---
    emb = jnp.take(params["embed"], captions[:, :-1], axis=0)      # (B, L-1, E)
    inputs = jnp.concatenate([features[:, None, :], emb], axis=1)  # (B, T, E)
    inputs = jnp.pad(inputs, ((0, Bp - B), (0, Tp - T), (0, 0)))   # (Bp, Tp, E)

    # --- hoisted input projection: one big bf16 GEMM off the serial path ---
    xw = jnp.dot(inputs.reshape(Bp * Tp, E).astype(jnp.bfloat16), w_ih,
                 preferred_element_type=jnp.float32) + b_lstm      # (Bp*Tp, 4Hp) f32
    xw = xw.astype(jnp.bfloat16).reshape(Bp, Tp, 4 * Hp)           # (Bp, Tp, 4Hp) bf16

    # --- recurrence kernel (batch-major in, batch-major bf16 out) ---
    h = run_lstm(xw, w_hh, hp=Hp, tt=tt, bt=bt)                    # (Bp, Tp, Hp) bf16

    # --- FC + log_softmax; reshape is metadata-only, no transpose ---
    h2 = h.reshape(Bp * Tp, Hp)                                    # (N, Hp) bf16
    N = Bp * Tp                                                    # multiple of 128
    tile_n_cap = 256 if VMEM_LIMIT >= (80 << 20) else 128          # v5e/v6e vs v7x
    tile_n = tile_n_cap if N % tile_n_cap == 0 else 128
    tile_v = _pick_divisor_tile(Vp, (2048, 1024, 512, 256, 128))
    logp = run_fc_logsoftmax(h2, w_fc, b_fc, tile_n=tile_n, tile_v=tile_v)  # (N, Vp)
    return logp.reshape(Bp, Tp, Vp)[:B, :T, :V]                    # (B, T, V)


def init_params(key, embed_size, hidden_size, vocab_size):
    """PyTorch-equivalent parameters (weights stored transposed for x @ W;
    LSTM gate order i, f, g, o; b_ih and b_hh kept separate like nn.LSTM)."""
    ks = jax.random.split(key, 7)
    s = 1.0 / (hidden_size ** 0.5)
    return {
        "embed": jax.random.normal(ks[0], (vocab_size, embed_size), jnp.float32),
        "w_ih": jax.random.uniform(ks[1], (embed_size, 4 * hidden_size),
                                   jnp.float32, -s, s),
        "w_hh": jax.random.uniform(ks[2], (hidden_size, 4 * hidden_size),
                                   jnp.float32, -s, s),
        "b_ih": jax.random.uniform(ks[3], (4 * hidden_size,), jnp.float32, -s, s),
        "b_hh": jax.random.uniform(ks[4], (4 * hidden_size,), jnp.float32, -s, s),
        "w_fc": jax.random.uniform(ks[5], (hidden_size, vocab_size),
                                   jnp.float32, -s, s),
        "b_fc": jax.random.uniform(ks[6], (vocab_size,), jnp.float32, -s, s),
    }


if __name__ == "__main__":
    embed_size, hidden_size, vocab_size = 16, 32, 64
    batch, cap_len = 2, 9                    # T = 1 (features) + (cap_len - 1) = 9

    key = jax.random.PRNGKey(0)
    k_params, k_feat, k_cap = jax.random.split(key, 3)

    params = init_params(k_params, embed_size, hidden_size, vocab_size)
    features = jax.random.normal(k_feat, (batch, embed_size), jnp.float32)
    captions = jax.random.randint(k_cap, (batch, cap_len), 0, vocab_size, jnp.int32)

    out = decoder_rnn_forward(params, features, captions)
    out = jax.block_until_ready(out)

    assert out.shape == (batch, cap_len, vocab_size), out.shape
    # Sanity: rows of log_softmax should exponentiate-sum to ~1.
    assert jnp.allclose(jnp.sum(jnp.exp(out), axis=-1), 1.0, atol=1e-3)
    print("KERNEL_OK")
</pallas_src>

<mosaic_0001>
module attributes {stable_mosaic.version = 11 : i64} {
  func.func @fc_logsoftmax_kernel(%arg0: i32, %arg1: i32, %arg2: memref<128x128xbf16, #tpu.memory_space<vmem>>, %arg3: memref<128x128xbf16, #tpu.memory_space<vmem>>, %arg4: memref<1x128xf32, #tpu.memory_space<vmem>>, %arg5: memref<128x128xf32, #tpu.memory_space<vmem>>, %arg6: memref<128x1xf32, #tpu.memory_space<vmem>>, %arg7: memref<128x1xf32, #tpu.memory_space<vmem>>) attributes {dimension_semantics = [#tpu.dimension_semantics<parallel>, #tpu.dimension_semantics<arbitrary>], iteration_bounds = array<i64: 1, 1>, scalar_prefetch = 0 : i64, scratch_operands = 2 : i64, tpu.core_type = #tpu.core_type<tc>, window_params = [{transform_indices = @transform_0, window_bounds = array<i64: 128, 128>}, {transform_indices = @transform_1, window_bounds = array<i64: 128, 128>}, {transform_indices = @transform_2, window_bounds = array<i64: 1, 128>}, {transform_indices = @transform_3, window_bounds = array<i64: 128, 128>}]} {
    %c0_i32 = arith.constant 0 : i32
    %0 = arith.cmpi eq, %arg1, %c0_i32 : i32
    %1 = arith.extui %0 : i1 to i32
    %c0_i32_0 = arith.constant 0 : i32
    %2 = arith.cmpi ne, %1, %c0_i32_0 : i32
    scf.if %2 {
      %cst_19 = arith.constant 0xFF800000 : f32
      %32 = vector.broadcast %cst_19 : f32 to vector<128x1xf32>
      %c0_20 = arith.constant 0 : index
      %c0_21 = arith.constant 0 : index
      %33 = vector.load %arg6[%c0_20, %c0_21] : memref<128x1xf32, #tpu.memory_space<vmem>>, vector<128x1xf32>
      tpu.vector_store %arg6[%c0_20, %c0_21], %32 {strides = array<i32>} : memref<128x1xf32, #tpu.memory_space<vmem>>, vector<128x1xf32>,
      %cst_22 = arith.constant 0.000000e+00 : f32
      %34 = vector.broadcast %cst_22 : f32 to vector<128x1xf32>
      %c0_23 = arith.constant 0 : index
      %c0_24 = arith.constant 0 : index
      %35 = vector.load %arg7[%c0_23, %c0_24] : memref<128x1xf32, #tpu.memory_space<vmem>>, vector<128x1xf32>
      tpu.vector_store %arg7[%c0_23, %c0_24], %34 {strides = array<i32>} : memref<128x1xf32, #tpu.memory_space<vmem>>, vector<128x1xf32>,
    } else {
    }
    %c0 = arith.constant 0 : index
    %c0_1 = arith.constant 0 : index
    %3 = vector.load %arg2[%c0, %c0_1] : memref<128x128xbf16, #tpu.memory_space<vmem>>, vector<128x128xbf16>
    %c0_2 = arith.constant 0 : index
    %c0_3 = arith.constant 0 : index
    %4 = vector.load %arg3[%c0_2, %c0_3] : memref<128x128xbf16, #tpu.memory_space<vmem>>, vector<128x128xbf16>
    %cst = arith.constant dense<0.000000e+00> : vector<128x128xf32>
    %5 = tpu.matmul %3, %4, %cst {dimension_numbers = #tpu.dot_dimension_numbers<[1], [0], [0], [1], [0, 0, 1, 1], [], []>} : vector<128x128xbf16>, vector<128x128xbf16>, vector<128x128xf32> -> vector<128x128xf32>
    %c0_4 = arith.constant 0 : index
    %c0_5 = arith.constant 0 : index
    %6 = vector.load %arg4[%c0_4, %c0_5] : memref<1x128xf32, #tpu.memory_space<vmem>>, vector<1x128xf32>
    %7 = vector.broadcast %6 : vector<1x128xf32> to vector<128x128xf32>
    %8 = arith.addf %5, %7 : vector<128x128xf32>
    %c0_6 = arith.constant 0 : index
    %c0_7 = arith.constant 0 : index
    %9 = vector.load %arg6[%c0_6, %c0_7] : memref<128x1xf32, #tpu.memory_space<vmem>>, vector<128x1xf32>
    %cst_8 = arith.constant dense<0xFF800000> : vector<128xf32>
    %10 = vector.multi_reduction <maximumf>, %8, %cst_8 [1] : vector<128x128xf32> to vector<128xf32>
    %11 = vector.shape_cast %10 : vector<128xf32> to vector<128x1xf32>
    %12 = arith.maximumf %9, %11 : vector<128x1xf32>
    %c0_9 = arith.constant 0 : index
    %c0_10 = arith.constant 0 : index
    %13 = vector.load %arg7[%c0_9, %c0_10] : memref<128x1xf32, #tpu.memory_space<vmem>>, vector<128x1xf32>
    %14 = arith.subf %9, %12 : vector<128x1xf32>
    %15 = math.exp %14 : vector<128x1xf32>
    %16 = arith.mulf %13, %15 : vector<128x1xf32>
    %17 = vector.broadcast %12 : vector<128x1xf32> to vector<128x128xf32>
    %18 = arith.subf %8, %17 : vector<128x128xf32>
    %19 = math.exp %18 : vector<128x128xf32>
    %cst_11 = arith.constant dense<0.000000e+00> : vector<128xf32>
    %20 = vector.multi_reduction <add>, %19, %cst_11 [1] : vector<128x128xf32> to vector<128xf32>
    %21 = vector.shape_cast %20 : vector<128xf32> to vector<128x1xf32>
    %22 = arith.addf %16, %21 : vector<128x1xf32>
    %c0_12 = arith.constant 0 : index
    %c0_13 = arith.constant 0 : index
    %23 = vector.load %arg7[%c0_12, %c0_13] : memref<128x1xf32, #tpu.memory_space<vmem>>, vector<128x1xf32>
    tpu.vector_store %arg7[%c0_12, %c0_13], %22 {strides = array<i32>} : memref<128x1xf32, #tpu.memory_space<vmem>>, vector<128x1xf32>,
    %c0_14 = arith.constant 0 : index
    %c0_15 = arith.constant 0 : index
    %24 = vector.load %arg6[%c0_14, %c0_15] : memref<128x1xf32, #tpu.memory_space<vmem>>, vector<128x1xf32>
    tpu.vector_store %arg6[%c0_14, %c0_15], %12 {strides = array<i32>} : memref<128x1xf32, #tpu.memory_space<vmem>>, vector<128x1xf32>,
    %c128_i32 = arith.constant 128 : i32
    %25 = arith.muli %arg1, %c128_i32 : i32
    %26 = tpu.assume_multiple %25, 128 : i32
    %c0_16 = arith.constant 0 : index
    %27 = arith.index_cast %26 : i32 to index
    %28 = vector.load %arg5[%c0_16, %27] : memref<128x128xf32, #tpu.memory_space<vmem>>, vector<128x128xf32>
    tpu.vector_store %arg5[%c0_16, %27], %8 {strides = array<i32>} : memref<128x128xf32, #tpu.memory_space<vmem>>, vector<128x128xf32>,
    %c0_i32_17 = arith.constant 0 : i32
    %29 = arith.cmpi eq, %arg1, %c0_i32_17 : i32
    %30 = arith.extui %29 : i1 to i32
    %c0_i32_18 = arith.constant 0 : i32
    %31 = arith.cmpi ne, %30, %c0_i32_18 : i32
    scf.if %31 {
      %c0_19 = arith.constant 0 : index
      %c0_20 = arith.constant 0 : index
      %32 = vector.load %arg6[%c0_19, %c0_20] : memref<128x1xf32, #tpu.memory_space<vmem>>, vector<128x1xf32>
      %c0_21 = arith.constant 0 : index
      %c0_22 = arith.constant 0 : index
      %33 = vector.load %arg7[%c0_21, %c0_22] : memref<128x1xf32, #tpu.memory_space<vmem>>, vector<128x1xf32>
      %34 = math.log %33 : vector<128x1xf32>
      %35 = arith.addf %32, %34 : vector<128x1xf32>
      %c0_23 = arith.constant 0 : index
      %c0_24 = arith.constant 0 : index
      %36 = vector.load %arg5[%c0_23, %c0_24] : memref<128x128xf32, #tpu.memory_space<vmem>>, vector<128x128xf32>
      %37 = vector.broadcast %35 : vector<128x1xf32> to vector<128x128xf32>
      %38 = arith.subf %36, %37 : vector<128x128xf32>
      %c0_25 = arith.constant 0 : index
      %c0_26 = arith.constant 0 : index
      %39 = vector.load %arg5[%c0_25, %c0_26] : memref<128x128xf32, #tpu.memory_space<vmem>>, vector<128x128xf32>
      tpu.vector_store %arg5[%c0_25, %c0_26], %38 {strides = array<i32>} : memref<128x128xf32, #tpu.memory_space<vmem>>, vector<128x128xf32>,
    } else {
    }
    return
  }
  func.func @transform_0(%arg0: i32, %arg1: i32) -> (i32, i32) {
    %c0_i32 = arith.constant 0 : i32
    %c0_i32_0 = arith.constant 0 : i32
    return %arg0, %c0_i32 : i32, i32
  }
  func.func @transform_1(%arg0: i32, %arg1: i32) -> (i32, i32) {
    %c0_i32 = arith.constant 0 : i32
    %c0_i32_0 = arith.constant 0 : i32
    return %c0_i32, %arg1 : i32, i32
  }
  func.func @transform_2(%arg0: i32, %arg1: i32) -> (i32, i32) {
    %c0_i32 = arith.constant 0 : i32
    %c0_i32_0 = arith.constant 0 : i32
    return %c0_i32, %arg1 : i32, i32
  }
  func.func @transform_3(%arg0: i32, %arg1: i32) -> (i32, i32) {
    %c0_i32 = arith.constant 0 : i32
    %c0_i32_0 = arith.constant 0 : i32
    return %arg0, %c0_i32 : i32, i32
  }
}

module attributes {stable_mosaic.version = 11 : i64} {
  func.func @lstm_kernel(%arg0: i32, %arg1: i32, %arg2: memref<8x16x512xbf16, #tpu.memory_space<vmem>>, %arg3: memref<128x512xbf16, #tpu.memory_space<vmem>>, %arg4: memref<8x16x128xbf16, #tpu.memory_space<vmem>>, %arg5: memref<8x128xbf16, #tpu.memory_space<vmem>>, %arg6: memref<8x128xf32, #tpu.memory_space<vmem>>) attributes {dimension_semantics = [#tpu.dimension_semantics<parallel>, #tpu.dimension_semantics<arbitrary>], iteration_bounds = array<i64: 1, 1>, scalar_prefetch = 0 : i64, scratch_operands = 2 : i64, tpu.core_type = #tpu.core_type<tc>, window_params = [{transform_indices = @transform_0, window_bounds = array<i64: 8, 16, 512>}, {pipeline_mode = #tpu.pipeline_mode<synchronous>, transform_indices = @transform_1, window_bounds = array<i64: 128, 512>}, {transform_indices = @transform_2, window_bounds = array<i64: 8, 16, 128>}]} {
    %c0_i32 = arith.constant 0 : i32
    %0 = arith.cmpi eq, %arg1, %c0_i32 : i32
    %1 = arith.extui %0 : i1 to i32
    %c0_i32_0 = arith.constant 0 : i32
    %2 = arith.cmpi ne, %1, %c0_i32_0 : i32
    scf.if %2 {
      %cst_272 = arith.constant 0.000000e+00 : bf16
      %483 = vector.broadcast %cst_272 : bf16 to vector<8x128xbf16>
      %c0_273 = arith.constant 0 : index
      %c0_274 = arith.constant 0 : index
      %484 = vector.load %arg5[%c0_273, %c0_274] : memref<8x128xbf16, #tpu.memory_space<vmem>>, vector<8x128xbf16>
      tpu.vector_store %arg5[%c0_273, %c0_274], %483 {strides = array<i32>} : memref<8x128xbf16, #tpu.memory_space<vmem>>, vector<8x128xbf16>,
      %cst_275 = arith.constant 0.000000e+00 : f32
      %485 = vector.broadcast %cst_275 : f32 to vector<8x128xf32>
      %c0_276 = arith.constant 0 : index
      %c0_277 = arith.constant 0 : index
      %486 = vector.load %arg6[%c0_276, %c0_277] : memref<8x128xf32, #tpu.memory_space<vmem>>, vector<8x128xf32>
      tpu.vector_store %arg6[%c0_276, %c0_277], %485 {strides = array<i32>} : memref<8x128xf32, #tpu.memory_space<vmem>>, vector<8x128xf32>,
    } else {
    }
    %c0 = arith.constant 0 : index
    %c0_1 = arith.constant 0 : index
    %c0_2 = arith.constant 0 : index
    %3 = vector.load %arg2[%c0, %c0_1, %c0_2] : memref<8x16x512xbf16, #tpu.memory_space<vmem>>, vector<8x1x512xbf16>
    %4 = vector.shape_cast %3 : vector<8x1x512xbf16> to vector<8x512xbf16>
    %5 = arith.extf %4 : vector<8x512xbf16> to vector<8x512xf32>
    %c0_3 = arith.constant 0 : index
    %c0_4 = arith.constant 0 : index
    %6 = vector.load %arg5[%c0_3, %c0_4] : memref<8x128xbf16, #tpu.memory_space<vmem>>, vector<8x128xbf16>
    %c0_5 = arith.constant 0 : index
    %c0_6 = arith.constant 0 : index
    %7 = vector.load %arg3[%c0_5, %c0_6] : memref<128x512xbf16, #tpu.memory_space<vmem>>, vector<128x512xbf16>
    %cst = arith.constant dense<0.000000e+00> : vector<8x512xf32>
    %8 = tpu.matmul %6, %7, %cst {dimension_numbers = #tpu.dot_dimension_numbers<[1], [0], [0], [1], [0, 0, 1, 1], [], []>} : vector<8x128xbf16>, vector<128x512xbf16>, vector<8x512xf32> -> vector<8x512xf32>
    %9 = arith.addf %5, %8 : vector<8x512xf32>
    %10 = vector.extract_strided_slice %9 {offsets = [0, 0], sizes = [8, 384], strides = [1, 1]} : vector<8x512xf32> to vector<8x384xf32>
    %11 = arith.negf %10 : vector<8x384xf32>
    %12 = math.exp %11 : vector<8x384xf32>
    %cst_7 = arith.constant 1.000000e+00 : f32
    %13 = vector.broadcast %cst_7 : f32 to vector<8x384xf32>
    %14 = arith.addf %13, %12 : vector<8x384xf32>
    %15 = arith.divf %13, %14 : vector<8x384xf32>
    %16 = vector.extract_strided_slice %9 {offsets = [0, 384], sizes = [8, 128], strides = [1, 1]} : vector<8x512xf32> to vector<8x128xf32>
    %17 = math.tanh %16 : vector<8x128xf32>
    %18 = vector.extract_strided_slice %15 {offsets = [0, 0], sizes = [8, 128], strides = [1, 1]} : vector<8x384xf32> to vector<8x128xf32>
    %19 = vector.extract_strided_slice %15 {offsets = [0, 128], sizes = [8, 128], strides = [1, 1]} : vector<8x384xf32> to vector<8x128xf32>
    %20 = vector.extract_strided_slice %15 {offsets = [0, 256], sizes = [8, 128], strides = [1, 1]} : vector<8x384xf32> to vector<8x128xf32>
    %c0_8 = arith.constant 0 : index
    %c0_9 = arith.constant 0 : index
    %21 = vector.load %arg6[%c0_8, %c0_9] : memref<8x128xf32, #tpu.memory_space<vmem>>, vector<8x128xf32>
    %22 = arith.mulf %19, %21 : vector<8x128xf32>
    %23 = arith.mulf %18, %17 : vector<8x128xf32>
    %24 = arith.addf %22, %23 : vector<8x128xf32>
    %25 = math.tanh %24 : vector<8x128xf32>
    %26 = arith.mulf %20, %25 : vector<8x128xf32>
    %27 = arith.truncf %26 : vector<8x128xf32> to vector<8x128xbf16>
    %c0_10 = arith.constant 0 : index
    %c0_11 = arith.constant 0 : index
    %28 = vector.load %arg6[%c0_10, %c0_11] : memref<8x128xf32, #tpu.memory_space<vmem>>, vector<8x128xf32>
    tpu.vector_store %arg6[%c0_10, %c0_11], %24 {strides = array<i32>} : memref<8x128xf32, #tpu.memory_space<vmem>>, vector<8x128xf32>,
    %c0_12 = arith.constant 0 : index
    %c0_13 = arith.constant 0 : index
    %29 = vector.load %arg5[%c0_12, %c0_13] : memref<8x128xbf16, #tpu.memory_space<vmem>>, vector<8x128xbf16>
    tpu.vector_store %arg5[%c0_12, %c0_13], %27 {strides = array<i32>} : memref<8x128xbf16, #tpu.memory_space<vmem>>, vector<8x128xbf16>,
    %c0_14 = arith.constant 0 : index
    %c0_15 = arith.constant 0 : index
    %c0_16 = arith.constant 0 : index
    %30 = vector.load %arg4[%c0_14, %c0_15, %c0_16] : memref<8x16x128xbf16, #tpu.memory_space<vmem>>, vector<8x1x128xbf16>
    %31 = vector.shape_cast %30 : vector<8x1x128xbf16> to vector<8x128xbf16>
    %32 = vector.shape_cast %27 : vector<8x128xbf16> to vector<8x1x128xbf16>
    tpu.vector_store %arg4[%c0_14, %c0_15, %c0_16], %32 {strides = array<i32>} : memref<8x16x128xbf16, #tpu.memory_space<vmem>>, vector<8x1x128xbf16>,
    %c0_17 = arith.constant 0 : index
    %c1 = arith.constant 1 : index
    %c0_18 = arith.constant 0 : index
    %33 = vector.load %arg2[%c0_17, %c1, %c0_18] : memref<8x16x512xbf16, #tpu.memory_space<vmem>>, vector<8x1x512xbf16>
    %34 = vector.shape_cast %33 : vector<8x1x512xbf16> to vector<8x512xbf16>
    %35 = arith.extf %34 : vector<8x512xbf16> to vector<8x512xf32>
    %c0_19 = arith.constant 0 : index
    %c0_20 = arith.constant 0 : index
    %36 = vector.load %arg5[%c0_19, %c0_20] : memref<8x128xbf16, #tpu.memory_space<vmem>>, vector<8x128xbf16>
    %c0_21 = arith.constant 0 : index
    %c0_22 = arith.constant 0 : index
    %37 = vector.load %arg3[%c0_21, %c0_22] : memref<128x512xbf16, #tpu.memory_space<vmem>>, vector<128x512xbf16>
    %cst_23 = arith.constant dense<0.000000e+00> : vector<8x512xf32>
    %38 = tpu.matmul %36, %37, %cst_23 {dimension_numbers = #tpu.dot_dimension_numbers<[1], [0], [0], [1], [0, 0, 1, 1], [], []>} : vector<8x128xbf16>, vector<128x512xbf16>, vector<8x512xf32> -> vector<8x512xf32>
    %39 = arith.addf %35, %38 : vector<8x512xf32>
    %40 = vector.extract_strided_slice %39 {offsets = [0, 0], sizes = [8, 384], strides = [1, 1]} : vector<8x512xf32> to vector<8x384xf32>
    %41 = arith.negf %40 : vector<8x384xf32>
    %42 = math.exp %41 : vector<8x384xf32>
    %cst_24 = arith.constant 1.000000e+00 : f32
    %43 = vector.broadcast %cst_24 : f32 to vector<8x384xf32>
    %44 = arith.addf %43, %42 : vector<8x384xf32>
    %45 = arith.divf %43, %44 : vector<8x384xf32>
    %46 = vector.extract_strided_slice %39 {offsets = [0, 384], sizes = [8, 128], strides = [1, 1]} : vector<8x512xf32> to vector<8x128xf32>
    %47 = math.tanh %46 : vector<8x128xf32>
    %48 = vector.extract_strided_slice %45 {offsets = [0, 0], sizes = [8, 128], strides = [1, 1]} : vector<8x384xf32> to vector<8x128xf32>
    %49 = vector.extract_strided_slice %45 {offsets = [0, 128], sizes = [8, 128], strides = [1, 1]} : vector<8x384xf32> to vector<8x128xf32>
    %50 = vector.extract_strided_slice %45 {offsets = [0, 256], sizes = [8, 128], strides = [1, 1]} : vector<8x384xf32> to vector<8x128xf32>
    %c0_25 = arith.constant 0 : index
    %c0_26 = arith.constant 0 : index
    %51 = vector.load %arg6[%c0_25, %c0_26] : memref<8x128xf32, #tpu.memory_space<vmem>>, vector<8x128xf32>
    %52 = arith.mulf %49, %51 : vector<8x128xf32>
    %53 = arith.mulf %48, %47 : vector<8x128xf32>
    %54 = arith.addf %52, %53 : vector<8x128xf32>
    %55 = math.tanh %54 : vector<8x128xf32>
    %56 = arith.mulf %50, %55 : vector<8x128xf32>
    %57 = arith.truncf %56 : vector<8x128xf32> to vector<8x128xbf16>
    %c0_27 = arith.constant 0 : index
    %c0_28 = arith.constant 0 : index
    %58 = vector.load %arg6[%c0_27, %c0_28] : memref<8x128xf32, #tpu.memory_space<vmem>>, vector<8x128xf32>
    tpu.vector_store %arg6[%c0_27, %c0_28], %54 {strides = array<i32>} : memref<8x128xf32, #tpu.memory_space<vmem>>, vector<8x128xf32>,
    %c0_29 = arith.constant 0 : index
    %c0_30 = arith.constant 0 : index
    %59 = vector.load %arg5[%c0_29, %c0_30] : memref<8x128xbf16, #tpu.memory_space<vmem>>, vector<8x128xbf16>
    tpu.vector_store %arg5[%c0_29, %c0_30], %57 {strides = array<i32>} : memref<8x128xbf16, #tpu.memory_space<vmem>>, vector<8x128xbf16>,
    %c0_31 = arith.constant 0 : index
    %c1_32 = arith.constant 1 : index
    %c0_33 = arith.constant 0 : index
    %60 = vector.load %arg4[%c0_31, %c1_32, %c0_33] : memref<8x16x128xbf16, #tpu.memory_space<vmem>>, vector<8x1x128xbf16>
    %61 = vector.shape_cast %60 : vector<8x1x128xbf16> to vector<8x128xbf16>
    %62 = vector.shape_cast %57 : vector<8x128xbf16> to vector<8x1x128xbf16>
    tpu.vector_store %arg4[%c0_31, %c1_32, %c0_33], %62 {strides = array<i32>} : memref<8x16x128xbf16, #tpu.memory_space<vmem>>, vector<8x1x128xbf16>,
    %c0_34 = arith.constant 0 : index
    %c2 = arith.constant 2 : index
    %c0_35 = arith.constant 0 : index
    %63 = vector.load %arg2[%c0_34, %c2, %c0_35] : memref<8x16x512xbf16, #tpu.memory_space<vmem>>, vector<8x1x512xbf16>
    %64 = vector.shape_cast %63 : vector<8x1x512xbf16> to vector<8x512xbf16>
    %65 = arith.extf %64 : vector<8x512xbf16> to vector<8x512xf32>
    %c0_36 = arith.constant 0 : index
    %c0_37 = arith.constant 0 : index
    %66 = vector.load %arg5[%c0_36, %c0_37] : memref<8x128xbf16, #tpu.memory_space<vmem>>, vector<8x128xbf16>
    %c0_38 = arith.constant 0 : index
    %c0_39 = arith.constant 0 : index
    %67 = vector.load %arg3[%c0_38, %c0_39] : memref<128x512xbf16, #tpu.memory_space<vmem>>, vector<128x512xbf16>
    %cst_40 = arith.constant dense<0.000000e+00> : vector<8x512xf32>
    %68 = tpu.matmul %66, %67, %cst_40 {dimension_numbers = #tpu.dot_dimension_numbers<[1], [0], [0], [1], [0, 0, 1, 1], [], []>} : vector<8x128xbf16>, vector<128x512xbf16>, vector<8x512xf32> -> vector<8x512xf32>
    %69 = arith.addf %65, %68 : vector<8x512xf32>
    %70 = vector.extract_strided_slice %69 {offsets = [0, 0], sizes = [8, 384], strides = [1, 1]} : vector<8x512xf32> to vector<8x384xf32>
    %71 = arith.negf %70 : vector<8x384xf32>
    %72 = math.exp %71 : vector<8x384xf32>
    %cst_41 = arith.constant 1.000000e+00 : f32
    %73 = vector.broadcast %cst_41 : f32 to vector<8x384xf32>
    %74 = arith.addf %73, %72 : vector<8x384xf32>
    %75 = arith.divf %73, %74 : vector<8x384xf32>
    %76 = vector.extract_strided_slice %69 {offsets = [0, 384], sizes = [8, 128], strides = [1, 1]} : vector<8x512xf32> to vector<8x128xf32>
    %77 = math.tanh %76 : vector<8x128xf32>
    %78 = vector.extract_strided_slice %75 {offsets = [0, 0], sizes = [8, 128], strides = [1, 1]} : vector<8x384xf32> to vector<8x128xf32>
    %79 = vector.extract_strided_slice %75 {offsets = [0, 128], sizes = [8, 128], strides = [1, 1]} : vector<8x384xf32> to vector<8x128xf32>
    %80 = vector.extract_strided_slice %75 {offsets = [0, 256], sizes = [8, 128], strides = [1, 1]} : vector<8x384xf32> to vector<8x128xf32>
    %c0_42 = arith.constant 0 : index
    %c0_43 = arith.constant 0 : index
    %81 = vector.load %arg6[%c0_42, %c0_43] : memref<8x128xf32, #tpu.memory_space<vmem>>, vector<8x128xf32>
    %82 = arith.mulf %79, %81 : vector<8x128xf32>
    %83 = arith.mulf %78, %77 : vector<8x128xf32>
    %84 = arith.addf %82, %83 : vector<8x128xf32>
    %85 = math.tanh %84 : vector<8x128xf32>
    %86 = arith.mulf %80, %85 : vector<8x128xf32>
    %87 = arith.truncf %86 : vector<8x128xf32> to vector<8x128xbf16>
    %c0_44 = arith.constant 0 : index
    %c0_45 = arith.constant 0 : index
    %88 = vector.load %arg6[%c0_44, %c0_45] : memref<8x128xf32, #tpu.memory_space<vmem>>, vector<8x128xf32>
    tpu.vector_store %arg6[%c0_44, %c0_45], %84 {strides = array<i32>} : memref<8x128xf32, #tpu.memory_space<vmem>>, vector<8x128xf32>,
    %c0_46 = arith.constant 0 : index
    %c0_47 = arith.constant 0 : index
    %89 = vector.load %arg5[%c0_46, %c0_47] : memref<8x128xbf16, #tpu.memory_space<vmem>>, vector<8x128xbf16>
    tpu.vector_store %arg5[%c0_46, %c0_47], %87 {strides = array<i32>} : memref<8x128xbf16, #tpu.memory_space<vmem>>, vector<8x128xbf16>,
    %c0_48 = arith.constant 0 : index
    %c2_49 = arith.constant 2 : index
    %c0_50 = arith.constant 0 : index
    %90 = vector.load %arg4[%c0_48, %c2_49, %c0_50] : memref<8x16x128xbf16, #tpu.memory_space<vmem>>, vector<8x1x128xbf16>
    %91 = vector.shape_cast %90 : vector<8x1x128xbf16> to vector<8x128xbf16>
    %92 = vector.shape_cast %87 : vector<8x128xbf16> to vector<8x1x128xbf16>
    tpu.vector_store %arg4[%c0_48, %c2_49, %c0_50], %92 {strides = array<i32>} : memref<8x16x128xbf16, #tpu.memory_space<vmem>>, vector<8x1x128xbf16>,
    %c0_51 = arith.constant 0 : index
    %c3 = arith.constant 3 : index
    %c0_52 = arith.constant 0 : index
    %93 = vector.load %arg2[%c0_51, %c3, %c0_52] : memref<8x16x512xbf16, #tpu.memory_space<vmem>>, vector<8x1x512xbf16>
    %94 = vector.shape_cast %93 : vector<8x1x512xbf16> to vector<8x512xbf16>
    %95 = arith.extf %94 : vector<8x512xbf16> to vector<8x512xf32>
    %c0_53 = arith.constant 0 : index
    %c0_54 = arith.constant 0 : index
    %96 = vector.load %arg5[%c0_53, %c0_54] : memref<8x128xbf16, #tpu.memory_space<vmem>>, vector<8x128xbf16>
    %c0_55 = arith.constant 0 : index
    %c0_56 = arith.constant 0 : index
    %97 = vector.load %arg3[%c0_55, %c0_56] : memref<128x512xbf16, #tpu.memory_space<vmem>>, vector<128x512xbf16>
    %cst_57 = arith.constant dense<0.000000e+00> : vector<8x512xf32>
    %98 = tpu.matmul %96, %97, %cst_57 {dimension_numbers = #tpu.dot_dimension_numbers<[1], [0], [0], [1], [0, 0, 1, 1], [], []>} : vector<8x128xbf16>, vector<128x512xbf16>, vector<8x512xf32> -> vector<8x512xf32>
    %99 = arith.addf %95, %98 : vector<8x512xf32>
    %100 = vector.extract_strided_slice %99 {offsets = [0, 0], sizes = [8, 384], strides = [1, 1]} : vector<8x512xf32> to vector<8x384xf32>
    %101 = arith.negf %100 : vector<8x384xf32>
    %102 = math.exp %101 : vector<8x384xf32>
    %cst_58 = arith.constant 1.000000e+00 : f32
    %103 = vector.broadcast %cst_58 : f32 to vector<8x384xf32>
    %104 = arith.addf %103, %102 : vector<8x384xf32>
    %105 = arith.divf %103, %104 : vector<8x384xf32>
    %106 = vector.extract_strided_slice %99 {offsets = [0, 384], sizes = [8, 128], strides = [1, 1]} : vector<8x512xf32> to vector<8x128xf32>
    %107 = math.tanh %106 : vector<8x128xf32>
    %108 = vector.extract_strided_slice %105 {offsets = [0, 0], sizes = [8, 128], strides = [1, 1]} : vector<8x384xf32> to vector<8x128xf32>
    %109 = vector.extract_strided_slice %105 {offsets = [0, 128], sizes = [8, 128], strides = [1, 1]} : vector<8x384xf32> to vector<8x128xf32>
    %110 = vector.extract_strided_slice %105 {offsets = [0, 256], sizes = [8, 128], strides = [1, 1]} : vector<8x384xf32> to vector<8x128xf32>
    %c0_59 = arith.constant 0 : index
    %c0_60 = arith.constant 0 : index
    %111 = vector.load %arg6[%c0_59, %c0_60] : memref<8x128xf32, #tpu.memory_space<vmem>>, vector<8x128xf32>
    %112 = arith.mulf %109, %111 : vector<8x128xf32>
    %113 = arith.mulf %108, %107 : vector<8x128xf32>
    %114 = arith.addf %112, %113 : vector<8x128xf32>
    %115 = math.tanh %114 : vector<8x128xf32>
    %116 = arith.mulf %110, %115 : vector<8x128xf32>
    %117 = arith.truncf %116 : vector<8x128xf32> to vector<8x128xbf16>
    %c0_61 = arith.constant 0 : index
    %c0_62 = arith.constant 0 : index
    %118 = vector.load %arg6[%c0_61, %c0_62] : memref<8x128xf32, #tpu.memory_space<vmem>>, vector<8x128xf32>
    tpu.vector_store %arg6[%c0_61, %c0_62], %114 {strides = array<i32>} : memref<8x128xf32, #tpu.memory_space<vmem>>, vector<8x128xf32>,
    %c0_63 = arith.constant 0 : index
    %c0_64 = arith.constant 0 : index
    %119 = vector.load %arg5[%c0_63, %c0_64] : memref<8x128xbf16, #tpu.memory_space<vmem>>, vector<8x128xbf16>
    tpu.vector_store %arg5[%c0_63, %c0_64], %117 {strides = array<i32>} : memref<8x128xbf16, #tpu.memory_space<vmem>>, vector<8x128xbf16>,
    %c0_65 = arith.constant 0 : index
    %c3_66 = arith.constant 3 : index
    %c0_67 = arith.constant 0 : index
    %120 = vector.load %arg4[%c0_65, %c3_66, %c0_67] : memref<8x16x128xbf16, #tpu.memory_space<vmem>>, vector<8x1x128xbf16>
    %121 = vector.shape_cast %120 : vector<8x1x128xbf16> to vector<8x128xbf16>
    %122 = vector.shape_cast %117 : vector<8x128xbf16> to vector<8x1x128xbf16>
    tpu.vector_store %arg4[%c0_65, %c3_66, %c0_67], %122 {strides = array<i32>} : memref<8x16x128xbf16, #tpu.memory_space<vmem>>, vector<8x1x128xbf16>,
    %c0_68 = arith.constant 0 : index
    %c4 = arith.constant 4 : index
    %c0_69 = arith.constant 0 : index
    %123 = vector.load %arg2[%c0_68, %c4, %c0_69] : memref<8x16x512xbf16, #tpu.memory_space<vmem>>, vector<8x1x512xbf16>
    %124 = vector.shape_cast %123 : vector<8x1x512xbf16> to vector<8x512xbf16>
    %125 = arith.extf %124 : vector<8x512xbf16> to vector<8x512xf32>
    %c0_70 = arith.constant 0 : index
    %c0_71 = arith.constant 0 : index
    %126 = vector.load %arg5[%c0_70, %c0_71] : memref<8x128xbf16, #tpu.memory_space<vmem>>, vector<8x128xbf16>
    %c0_72 = arith.constant 0 : index
    %c0_73 = arith.constant 0 : index
    %127 = vector.load %arg3[%c0_72, %c0_73] : memref<128x512xbf16, #tpu.memory_space<vmem>>, vector<128x512xbf16>
    %cst_74 = arith.constant dense<0.000000e+00> : vector<8x512xf32>
    %128 = tpu.matmul %126, %127, %cst_74 {dimension_numbers = #tpu.dot_dimension_numbers<[1], [0], [0], [1], [0, 0, 1, 1], [], []>} : vector<8x128xbf16>, vector<128x512xbf16>, vector<8x512xf32> -> vector<8x512xf32>
    %129 = arith.addf %125, %128 : vector<8x512xf32>
    %130 = vector.extract_strided_slice %129 {offsets = [0, 0], sizes = [8, 384], strides = [1, 1]} : vector<8x512xf32> to vector<8x384xf32>
    %131 = arith.negf %130 : vector<8x384xf32>
    %132 = math.exp %131 : vector<8x384xf32>
    %cst_75 = arith.constant 1.000000e+00 : f32
    %133 = vector.broadcast %cst_75 : f32 to vector<8x384xf32>
    %134 = arith.addf %133, %132 : vector<8x384xf32>
    %135 = arith.divf %133, %134 : vector<8x384xf32>
    %136 = vector.extract_strided_slice %129 {offsets = [0, 384], sizes = [8, 128], strides = [1, 1]} : vector<8x512xf32> to vector<8x128xf32>
    %137 = math.tanh %136 : vector<8x128xf32>
    %138 = vector.extract_strided_slice %135 {offsets = [0, 0], sizes = [8, 128], strides = [1, 1]} : vector<8x384xf32> to vector<8x128xf32>
    %139 = vector.extract_strided_slice %135 {offsets = [0, 128], sizes = [8, 128], strides = [1, 1]} : vector<8x384xf32> to vector<8x128xf32>
    %140 = vector.extract_strided_slice %135 {offsets = [0, 256], sizes = [8, 128], strides = [1, 1]} : vector<8x384xf32> to vector<8x128xf32>
    %c0_76 = arith.constant 0 : index
    %c0_77 = arith.constant 0 : index
    %141 = vector.load %arg6[%c0_76, %c0_77] : memref<8x128xf32, #tpu.memory_space<vmem>>, vector<8x128xf32>
    %142 = arith.mulf %139, %141 : vector<8x128xf32>
    %143 = arith.mulf %138, %137 : vector<8x128xf32>
    %144 = arith.addf %142, %143 : vector<8x128xf32>
    %145 = math.tanh %144 : vector<8x128xf32>
    %146 = arith.mulf %140, %145 : vector<8x128xf32>
    %147 = arith.truncf %146 : vector<8x128xf32> to vector<8x128xbf16>
    %c0_78 = arith.constant 0 : index
    %c0_79 = arith.constant 0 : index
    %148 = vector.load %arg6[%c0_78, %c0_79] : memref<8x128xf32, #tpu.memory_space<vmem>>, vector<8x128xf32>
    tpu.vector_store %arg6[%c0_78, %c0_79], %144 {strides = array<i32>} : memref<8x128xf32, #tpu.memory_space<vmem>>, vector<8x128xf32>,
    %c0_80 = arith.constant 0 : index
    %c0_81 = arith.constant 0 : index
    %149 = vector.load %arg5[%c0_80, %c0_81] : memref<8x128xbf16, #tpu.memory_space<vmem>>, vector<8x128xbf16>
    tpu.vector_store %arg5[%c0_80, %c0_81], %147 {strides = array<i32>} : memref<8x128xbf16, #tpu.memory_space<vmem>>, vector<8x128xbf16>,
    %c0_82 = arith.constant 0 : index
    %c4_83 = arith.constant 4 : index
    %c0_84 = arith.constant 0 : index
    %150 = vector.load %arg4[%c0_82, %c4_83, %c0_84] : memref<8x16x128xbf16, #tpu.memory_space<vmem>>, vector<8x1x128xbf16>
    %151 = vector.shape_cast %150 : vector<8x1x128xbf16> to vector<8x128xbf16>
    %152 = vector.shape_cast %147 : vector<8x128xbf16> to vector<8x1x128xbf16>
    tpu.vector_store %arg4[%c0_82, %c4_83, %c0_84], %152 {strides = array<i32>} : memref<8x16x128xbf16, #tpu.memory_space<vmem>>, vector<8x1x128xbf16>,
    %c0_85 = arith.constant 0 : index
    %c5 = arith.constant 5 : index
    %c0_86 = arith.constant 0 : index
    %153 = vector.load %arg2[%c0_85, %c5, %c0_86] : memref<8x16x512xbf16, #tpu.memory_space<vmem>>, vector<8x1x512xbf16>
    %154 = vector.shape_cast %153 : vector<8x1x512xbf16> to vector<8x512xbf16>
    %155 = arith.extf %154 : vector<8x512xbf16> to vector<8x512xf32>
    %c0_87 = arith.constant 0 : index
    %c0_88 = arith.constant 0 : index
    %156 = vector.load %arg5[%c0_87, %c0_88] : memref<8x128xbf16, #tpu.memory_space<vmem>>, vector<8x128xbf16>
    %c0_89 = arith.constant 0 : index
    %c0_90 = arith.constant 0 : index
    %157 = vector.load %arg3[%c0_89, %c0_90] : memref<128x512xbf16, #tpu.memory_space<vmem>>, vector<128x512xbf16>
    %cst_91 = arith.constant dense<0.000000e+00> : vector<8x512xf32>
    %158 = tpu.matmul %156, %157, %cst_91 {dimension_numbers = #tpu.dot_dimension_numbers<[1], [0], [0], [1], [0, 0, 1, 1], [], []>} : vector<8x128xbf16>, vector<128x512xbf16>, vector<8x512xf32> -> vector<8x512xf32>
    %159 = arith.addf %155, %158 : vector<8x512xf32>
    %160 = vector.extract_strided_slice %159 {offsets = [0, 0], sizes = [8, 384], strides = [1, 1]} : vector<8x512xf32> to vector<8x384xf32>
    %161 = arith.negf %160 : vector<8x384xf32>
    %162 = math.exp %161 : vector<8x384xf32>
    %cst_92 = arith.constant 1.000000e+00 : f32
    %163 = vector.broadcast %cst_92 : f32 to vector<8x384xf32>
    %164 = arith.addf %163, %162 : vector<8x384xf32>
    %165 = arith.divf %163, %164 : vector<8x384xf32>
    %166 = vector.extract_strided_slice %159 {offsets = [0, 384], sizes = [8, 128], strides = [1, 1]} : vector<8x512xf32> to vector<8x128xf32>
    %167 = math.tanh %166 : vector<8x128xf32>
    %168 = vector.extract_strided_slice %165 {offsets = [0, 0], sizes = [8, 128], strides = [1, 1]} : vector<8x384xf32> to vector<8x128xf32>
    %169 = vector.extract_strided_slice %165 {offsets = [0, 128], sizes = [8, 128], strides = [1, 1]} : vector<8x384xf32> to vector<8x128xf32>
    %170 = vector.extract_strided_slice %165 {offsets = [0, 256], sizes = [8, 128], strides = [1, 1]} : vector<8x384xf32> to vector<8x128xf32>
    %c0_93 = arith.constant 0 : index
    %c0_94 = arith.constant 0 : index
    %171 = vector.load %arg6[%c0_93, %c0_94] : memref<8x128xf32, #tpu.memory_space<vmem>>, vector<8x128xf32>
    %172 = arith.mulf %169, %171 : vector<8x128xf32>
    %173 = arith.mulf %168, %167 : vector<8x128xf32>
    %174 = arith.addf %172, %173 : vector<8x128xf32>
    %175 = math.tanh %174 : vector<8x128xf32>
    %176 = arith.mulf %170, %175 : vector<8x128xf32>
    %177 = arith.truncf %176 : vector<8x128xf32> to vector<8x128xbf16>
    %c0_95 = arith.constant 0 : index
    %c0_96 = arith.constant 0 : index
    %178 = vector.load %arg6[%c0_95, %c0_96] : memref<8x128xf32, #tpu.memory_space<vmem>>, vector<8x128xf32>
    tpu.vector_store %arg6[%c0_95, %c0_96], %174 {strides = array<i32>} : memref<8x128xf32, #tpu.memory_space<vmem>>, vector<8x128xf32>,
    %c0_97 = arith.constant 0 : index
    %c0_98 = arith.constant 0 : index
    %179 = vector.load %arg5[%c0_97, %c0_98] : memref<8x128xbf16, #tpu.memory_space<vmem>>, vector<8x128xbf16>
    tpu.vector_store %arg5[%c0_97, %c0_98], %177 {strides = array<i32>} : memref<8x128xbf16, #tpu.memory_space<vmem>>, vector<8x128xbf16>,
    %c0_99 = arith.constant 0 : index
    %c5_100 = arith.constant 5 : index
    %c0_101 = arith.constant 0 : index
    %180 = vector.load %arg4[%c0_99, %c5_100, %c0_101] : memref<8x16x128xbf16, #tpu.memory_space<vmem>>, vector<8x1x128xbf16>
    %181 = vector.shape_cast %180 : vector<8x1x128xbf16> to vector<8x128xbf16>
    %182 = vector.shape_cast %177 : vector<8x128xbf16> to vector<8x1x128xbf16>
    tpu.vector_store %arg4[%c0_99, %c5_100, %c0_101], %182 {strides = array<i32>} : memref<8x16x128xbf16, #tpu.memory_space<vmem>>, vector<8x1x128xbf16>,
    %c0_102 = arith.constant 0 : index
    %c6 = arith.constant 6 : index
    %c0_103 = arith.constant 0 : index
    %183 = vector.load %arg2[%c0_102, %c6, %c0_103] : memref<8x16x512xbf16, #tpu.memory_space<vmem>>, vector<8x1x512xbf16>
    %184 = vector.shape_cast %183 : vector<8x1x512xbf16> to vector<8x512xbf16>
    %185 = arith.extf %184 : vector<8x512xbf16> to vector<8x512xf32>
    %c0_104 = arith.constant 0 : index
    %c0_105 = arith.constant 0 : index
    %186 = vector.load %arg5[%c0_104, %c0_105] : memref<8x128xbf16, #tpu.memory_space<vmem>>, vector<8x128xbf16>
    %c0_106 = arith.constant 0 : index
    %c0_107 = arith.constant 0 : index
    %187 = vector.load %arg3[%c0_106, %c0_107] : memref<128x512xbf16, #tpu.memory_space<vmem>>, vector<128x512xbf16>
    %cst_108 = arith.constant dense<0.000000e+00> : vector<8x512xf32>
    %188 = tpu.matmul %186, %187, %cst_108 {dimension_numbers = #tpu.dot_dimension_numbers<[1], [0], [0], [1], [0, 0, 1, 1], [], []>} : vector<8x128xbf16>, vector<128x512xbf16>, vector<8x512xf32> -> vector<8x512xf32>
    %189 = arith.addf %185, %188 : vector<8x512xf32>
    %190 = vector.extract_strided_slice %189 {offsets = [0, 0], sizes = [8, 384], strides = [1, 1]} : vector<8x512xf32> to vector<8x384xf32>
    %191 = arith.negf %190 : vector<8x384xf32>
    %192 = math.exp %191 : vector<8x384xf32>
    %cst_109 = arith.constant 1.000000e+00 : f32
    %193 = vector.broadcast %cst_109 : f32 to vector<8x384xf32>
    %194 = arith.addf %193, %192 : vector<8x384xf32>
    %195 = arith.divf %193, %194 : vector<8x384xf32>
    %196 = vector.extract_strided_slice %189 {offsets = [0, 384], sizes = [8, 128], strides = [1, 1]} : vector<8x512xf32> to vector<8x128xf32>
    %197 = math.tanh %196 : vector<8x128xf32>
    %198 = vector.extract_strided_slice %195 {offsets = [0, 0], sizes = [8, 128], strides = [1, 1]} : vector<8x384xf32> to vector<8x128xf32>
    %199 = vector.extract_strided_slice %195 {offsets = [0, 128], sizes = [8, 128], strides = [1, 1]} : vector<8x384xf32> to vector<8x128xf32>
    %200 = vector.extract_strided_slice %195 {offsets = [0, 256], sizes = [8, 128], strides = [1, 1]} : vector<8x384xf32> to vector<8x128xf32>
    %c0_110 = arith.constant 0 : index
    %c0_111 = arith.constant 0 : index
    %201 = vector.load %arg6[%c0_110, %c0_111] : memref<8x128xf32, #tpu.memory_space<vmem>>, vector<8x128xf32>
    %202 = arith.mulf %199, %201 : vector<8x128xf32>
    %203 = arith.mulf %198, %197 : vector<8x128xf32>
    %204 = arith.addf %202, %203 : vector<8x128xf32>
    %205 = math.tanh %204 : vector<8x128xf32>
    %206 = arith.mulf %200, %205 : vector<8x128xf32>
    %207 = arith.truncf %206 : vector<8x128xf32> to vector<8x128xbf16>
    %c0_112 = arith.constant 0 : index
    %c0_113 = arith.constant 0 : index
    %208 = vector.load %arg6[%c0_112, %c0_113] : memref<8x128xf32, #tpu.memory_space<vmem>>, vector<8x128xf32>
    tpu.vector_store %arg6[%c0_112, %c0_113], %204 {strides = array<i32>} : memref<8x128xf32, #tpu.memory_space<vmem>>, vector<8x128xf32>,
    %c0_114 = arith.constant 0 : index
    %c0_115 = arith.constant 0 : index
    %209 = vector.load %arg5[%c0_114, %c0_115] : memref<8x128xbf16, #tpu.memory_space<vmem>>, vector<8x128xbf16>
    tpu.vector_store %arg5[%c0_114, %c0_115], %207 {strides = array<i32>} : memref<8x128xbf16, #tpu.memory_space<vmem>>, vector<8x128xbf16>,
    %c0_116 = arith.constant 0 : index
    %c6_117 = arith.constant 6 : index
    %c0_118 = arith.constant 0 : index
    %210 = vector.load %arg4[%c0_116, %c6_117, %c0_118] : memref<8x16x128xbf16, #tpu.memory_space<vmem>>, vector<8x1x128xbf16>
    %211 = vector.shape_cast %210 : vector<8x1x128xbf16> to vector<8x128xbf16>
    %212 = vector.shape_cast %207 : vector<8x128xbf16> to vector<8x1x128xbf16>
    tpu.vector_store %arg4[%c0_116, %c6_117, %c0_118], %212 {strides = array<i32>} : memref<8x16x128xbf16, #tpu.memory_space<vmem>>, vector<8x1x128xbf16>,
    %c0_119 = arith.constant 0 : index
    %c7 = arith.constant 7 : index
    %c0_120 = arith.constant 0 : index
    %213 = vector.load %arg2[%c0_119, %c7, %c0_120] : memref<8x16x512xbf16, #tpu.memory_space<vmem>>, vector<8x1x512xbf16>
    %214 = vector.shape_cast %213 : vector<8x1x512xbf16> to vector<8x512xbf16>
    %215 = arith.extf %214 : vector<8x512xbf16> to vector<8x512xf32>
    %c0_121 = arith.constant 0 : index
    %c0_122 = arith.constant 0 : index
    %216 = vector.load %arg5[%c0_121, %c0_122] : memref<8x128xbf16, #tpu.memory_space<vmem>>, vector<8x128xbf16>
    %c0_123 = arith.constant 0 : index
    %c0_124 = arith.constant 0 : index
    %217 = vector.load %arg3[%c0_123, %c0_124] : memref<128x512xbf16, #tpu.memory_space<vmem>>, vector<128x512xbf16>
    %cst_125 = arith.constant dense<0.000000e+00> : vector<8x512xf32>
    %218 = tpu.matmul %216, %217, %cst_125 {dimension_numbers = #tpu.dot_dimension_numbers<[1], [0], [0], [1], [0, 0, 1, 1], [], []>} : vector<8x128xbf16>, vector<128x512xbf16>, vector<8x512xf32> -> vector<8x512xf32>
    %219 = arith.addf %215, %218 : vector<8x512xf32>
    %220 = vector.extract_strided_slice %219 {offsets = [0, 0], sizes = [8, 384], strides = [1, 1]} : vector<8x512xf32> to vector<8x384xf32>
    %221 = arith.negf %220 : vector<8x384xf32>
    %222 = math.exp %221 : vector<8x384xf32>
    %cst_126 = arith.constant 1.000000e+00 : f32
    %223 = vector.broadcast %cst_126 : f32 to vector<8x384xf32>
    %224 = arith.addf %223, %222 : vector<8x384xf32>
    %225 = arith.divf %223, %224 : vector<8x384xf32>
    %226 = vector.extract_strided_slice %219 {offsets = [0, 384], sizes = [8, 128], strides = [1, 1]} : vector<8x512xf32> to vector<8x128xf32>
    %227 = math.tanh %226 : vector<8x128xf32>
    %228 = vector.extract_strided_slice %225 {offsets = [0, 0], sizes = [8, 128], strides = [1, 1]} : vector<8x384xf32> to vector<8x128xf32>
    %229 = vector.extract_strided_slice %225 {offsets = [0, 128], sizes = [8, 128], strides = [1, 1]} : vector<8x384xf32> to vector<8x128xf32>
    %230 = vector.extract_strided_slice %225 {offsets = [0, 256], sizes = [8, 128], strides = [1, 1]} : vector<8x384xf32> to vector<8x128xf32>
    %c0_127 = arith.constant 0 : index
    %c0_128 = arith.constant 0 : index
    %231 = vector.load %arg6[%c0_127, %c0_128] : memref<8x128xf32, #tpu.memory_space<vmem>>, vector<8x128xf32>
    %232 = arith.mulf %229, %231 : vector<8x128xf32>
    %233 = arith.mulf %228, %227 : vector<8x128xf32>
    %234 = arith.addf %232, %233 : vector<8x128xf32>
    %235 = math.tanh %234 : vector<8x128xf32>
    %236 = arith.mulf %230, %235 : vector<8x128xf32>
    %237 = arith.truncf %236 : vector<8x128xf32> to vector<8x128xbf16>
    %c0_129 = arith.constant 0 : index
    %c0_130 = arith.constant 0 : index
    %238 = vector.load %arg6[%c0_129, %c0_130] : memref<8x128xf32, #tpu.memory_space<vmem>>, vector<8x128xf32>
    tpu.vector_store %arg6[%c0_129, %c0_130], %234 {strides = array<i32>} : memref<8x128xf32, #tpu.memory_space<vmem>>, vector<8x128xf32>,
    %c0_131 = arith.constant 0 : index
    %c0_132 = arith.constant 0 : index
    %239 = vector.load %arg5[%c0_131, %c0_132] : memref<8x128xbf16, #tpu.memory_space<vmem>>, vector<8x128xbf16>
    tpu.vector_store %arg5[%c0_131, %c0_132], %237 {strides = array<i32>} : memref<8x128xbf16, #tpu.memory_space<vmem>>, vector<8x128xbf16>,
    %c0_133 = arith.constant 0 : index
    %c7_134 = arith.constant 7 : index
    %c0_135 = arith.constant 0 : index
    %240 = vector.load %arg4[%c0_133, %c7_134, %c0_135] : memref<8x16x128xbf16, #tpu.memory_space<vmem>>, vector<8x1x128xbf16>
    %241 = vector.shape_cast %240 : vector<8x1x128xbf16> to vector<8x128xbf16>
    %242 = vector.shape_cast %237 : vector<8x128xbf16> to vector<8x1x128xbf16>
    tpu.vector_store %arg4[%c0_133, %c7_134, %c0_135], %242 {strides = array<i32>} : memref<8x16x128xbf16, #tpu.memory_space<vmem>>, vector<8x1x128xbf16>,
    %c0_136 = arith.constant 0 : index
    %c8 = arith.constant 8 : index
    %c0_137 = arith.constant 0 : index
    %243 = vector.load %arg2[%c0_136, %c8, %c0_137] : memref<8x16x512xbf16, #tpu.memory_space<vmem>>, vector<8x1x512xbf16>
    %244 = vector.shape_cast %243 : vector<8x1x512xbf16> to vector<8x512xbf16>
    %245 = arith.extf %244 : vector<8x512xbf16> to vector<8x512xf32>
    %c0_138 = arith.constant 0 : index
    %c0_139 = arith.constant 0 : index
    %246 = vector.load %arg5[%c0_138, %c0_139] : memref<8x128xbf16, #tpu.memory_space<vmem>>, vector<8x128xbf16>
    %c0_140 = arith.constant 0 : index
    %c0_141 = arith.constant 0 : index
    %247 = vector.load %arg3[%c0_140, %c0_141] : memref<128x512xbf16, #tpu.memory_space<vmem>>, vector<128x512xbf16>
    %cst_142 = arith.constant dense<0.000000e+00> : vector<8x512xf32>
    %248 = tpu.matmul %246, %247, %cst_142 {dimension_numbers = #tpu.dot_dimension_numbers<[1], [0], [0], [1], [0, 0, 1, 1], [], []>} : vector<8x128xbf16>, vector<128x512xbf16>, vector<8x512xf32> -> vector<8x512xf32>
    %249 = arith.addf %245, %248 : vector<8x512xf32>
    %250 = vector.extract_strided_slice %249 {offsets = [0, 0], sizes = [8, 384], strides = [1, 1]} : vector<8x512xf32> to vector<8x384xf32>
    %251 = arith.negf %250 : vector<8x384xf32>
    %252 = math.exp %251 : vector<8x384xf32>
    %cst_143 = arith.constant 1.000000e+00 : f32
    %253 = vector.broadcast %cst_143 : f32 to vector<8x384xf32>
    %254 = arith.addf %253, %252 : vector<8x384xf32>
    %255 = arith.divf %253, %254 : vector<8x384xf32>
    %256 = vector.extract_strided_slice %249 {offsets = [0, 384], sizes = [8, 128], strides = [1, 1]} : vector<8x512xf32> to vector<8x128xf32>
    %257 = math.tanh %256 : vector<8x128xf32>
    %258 = vector.extract_strided_slice %255 {offsets = [0, 0], sizes = [8, 128], strides = [1, 1]} : vector<8x384xf32> to vector<8x128xf32>
    %259 = vector.extract_strided_slice %255 {offsets = [0, 128], sizes = [8, 128], strides = [1, 1]} : vector<8x384xf32> to vector<8x128xf32>
    %260 = vector.extract_strided_slice %255 {offsets = [0, 256], sizes = [8, 128], strides = [1, 1]} : vector<8x384xf32> to vector<8x128xf32>
    %c0_144 = arith.constant 0 : index
    %c0_145 = arith.constant 0 : index
    %261 = vector.load %arg6[%c0_144, %c0_145] : memref<8x128xf32, #tpu.memory_space<vmem>>, vector<8x128xf32>
    %262 = arith.mulf %259, %261 : vector<8x128xf32>
    %263 = arith.mulf %258, %257 : vector<8x128xf32>
    %264 = arith.addf %262, %263 : vector<8x128xf32>
    %265 = math.tanh %264 : vector<8x128xf32>
    %266 = arith.mulf %260, %265 : vector<8x128xf32>
    %267 = arith.truncf %266 : vector<8x128xf32> to vector<8x128xbf16>
    %c0_146 = arith.constant 0 : index
    %c0_147 = arith.constant 0 : index
    %268 = vector.load %arg6[%c0_146, %c0_147] : memref<8x128xf32, #tpu.memory_space<vmem>>, vector<8x128xf32>
    tpu.vector_store %arg6[%c0_146, %c0_147], %264 {strides = array<i32>} : memref<8x128xf32, #tpu.memory_space<vmem>>, vector<8x128xf32>,
    %c0_148 = arith.constant 0 : index
    %c0_149 = arith.constant 0 : index
    %269 = vector.load %arg5[%c0_148, %c0_149] : memref<8x128xbf16, #tpu.memory_space<vmem>>, vector<8x128xbf16>
    tpu.vector_store %arg5[%c0_148, %c0_149], %267 {strides = array<i32>} : memref<8x128xbf16, #tpu.memory_space<vmem>>, vector<8x128xbf16>,
    %c0_150 = arith.constant 0 : index
    %c8_151 = arith.constant 8 : index
    %c0_152 = arith.constant 0 : index
    %270 = vector.load %arg4[%c0_150, %c8_151, %c0_152] : memref<8x16x128xbf16, #tpu.memory_space<vmem>>, vector<8x1x128xbf16>
    %271 = vector.shape_cast %270 : vector<8x1x128xbf16> to vector<8x128xbf16>
    %272 = vector.shape_cast %267 : vector<8x128xbf16> to vector<8x1x128xbf16>
    tpu.vector_store %arg4[%c0_150, %c8_151, %c0_152], %272 {strides = array<i32>} : memref<8x16x128xbf16, #tpu.memory_space<vmem>>, vector<8x1x128xbf16>,
    %c0_153 = arith.constant 0 : index
    %c9 = arith.constant 9 : index
    %c0_154 = arith.constant 0 : index
    %273 = vector.load %arg2[%c0_153, %c9, %c0_154] : memref<8x16x512xbf16, #tpu.memory_space<vmem>>, vector<8x1x512xbf16>
    %274 = vector.shape_cast %273 : vector<8x1x512xbf16> to vector<8x512xbf16>
    %275 = arith.extf %274 : vector<8x512xbf16> to vector<8x512xf32>
    %c0_155 = arith.constant 0 : index
    %c0_156 = arith.constant 0 : index
    %276 = vector.load %arg5[%c0_155, %c0_156] : memref<8x128xbf16, #tpu.memory_space<vmem>>, vector<8x128xbf16>
    %c0_157 = arith.constant 0 : index
    %c0_158 = arith.constant 0 : index
    %277 = vector.load %arg3[%c0_157, %c0_158] : memref<128x512xbf16, #tpu.memory_space<vmem>>, vector<128x512xbf16>
    %cst_159 = arith.constant dense<0.000000e+00> : vector<8x512xf32>
    %278 = tpu.matmul %276, %277, %cst_159 {dimension_numbers = #tpu.dot_dimension_numbers<[1], [0], [0], [1], [0, 0, 1, 1], [], []>} : vector<8x128xbf16>, vector<128x512xbf16>, vector<8x512xf32> -> vector<8x512xf32>
    %279 = arith.addf %275, %278 : vector<8x512xf32>
    %280 = vector.extract_strided_slice %279 {offsets = [0, 0], sizes = [8, 384], strides = [1, 1]} : vector<8x512xf32> to vector<8x384xf32>
    %281 = arith.negf %280 : vector<8x384xf32>
    %282 = math.exp %281 : vector<8x384xf32>
    %cst_160 = arith.constant 1.000000e+00 : f32
    %283 = vector.broadcast %cst_160 : f32 to vector<8x384xf32>
    %284 = arith.addf %283, %282 : vector<8x384xf32>
    %285 = arith.divf %283, %284 : vector<8x384xf32>
    %286 = vector.extract_strided_slice %279 {offsets = [0, 384], sizes = [8, 128], strides = [1, 1]} : vector<8x512xf32> to vector<8x128xf32>
    %287 = math.tanh %286 : vector<8x128xf32>
    %288 = vector.extract_strided_slice %285 {offsets = [0, 0], sizes = [8, 128], strides = [1, 1]} : vector<8x384xf32> to vector<8x128xf32>
    %289 = vector.extract_strided_slice %285 {offsets = [0, 128], sizes = [8, 128], strides = [1, 1]} : vector<8x384xf32> to vector<8x128xf32>
    %290 = vector.extract_strided_slice %285 {offsets = [0, 256], sizes = [8, 128], strides = [1, 1]} : vector<8x384xf32> to vector<8x128xf32>
    %c0_161 = arith.constant 0 : index
    %c0_162 = arith.constant 0 : index
    %291 = vector.load %arg6[%c0_161, %c0_162] : memref<8x128xf32, #tpu.memory_space<vmem>>, vector<8x128xf32>
    %292 = arith.mulf %289, %291 : vector<8x128xf32>
    %293 = arith.mulf %288, %287 : vector<8x128xf32>
    %294 = arith.addf %292, %293 : vector<8x128xf32>
    %295 = math.tanh %294 : vector<8x128xf32>
    %296 = arith.mulf %290, %295 : vector<8x128xf32>
    %297 = arith.truncf %296 : vector<8x128xf32> to vector<8x128xbf16>
    %c0_163 = arith.constant 0 : index
    %c0_164 = arith.constant 0 : index
    %298 = vector.load %arg6[%c0_163, %c0_164] : memref<8x128xf32, #tpu.memory_space<vmem>>, vector<8x128xf32>
    tpu.vector_store %arg6[%c0_163, %c0_164], %294 {strides = array<i32>} : memref<8x128xf32, #tpu.memory_space<vmem>>, vector<8x128xf32>,
    %c0_165 = arith.constant 0 : index
    %c0_166 = arith.constant 0 : index
    %299 = vector.load %arg5[%c0_165, %c0_166] : memref<8x128xbf16, #tpu.memory_space<vmem>>, vector<8x128xbf16>
    tpu.vector_store %arg5[%c0_165, %c0_166], %297 {strides = array<i32>} : memref<8x128xbf16, #tpu.memory_space<vmem>>, vector<8x128xbf16>,
    %c0_167 = arith.constant 0 : index
    %c9_168 = arith.constant 9 : index
    %c0_169 = arith.constant 0 : index
    %300 = vector.load %arg4[%c0_167, %c9_168, %c0_169] : memref<8x16x128xbf16, #tpu.memory_space<vmem>>, vector<8x1x128xbf16>
    %301 = vector.shape_cast %300 : vector<8x1x128xbf16> to vector<8x128xbf16>
    %302 = vector.shape_cast %297 : vector<8x128xbf16> to vector<8x1x128xbf16>
    tpu.vector_store %arg4[%c0_167, %c9_168, %c0_169], %302 {strides = array<i32>} : memref<8x16x128xbf16, #tpu.memory_space<vmem>>, vector<8x1x128xbf16>,
    %c0_170 = arith.constant 0 : index
    %c10 = arith.constant 10 : index
    %c0_171 = arith.constant 0 : index
    %303 = vector.load %arg2[%c0_170, %c10, %c0_171] : memref<8x16x512xbf16, #tpu.memory_space<vmem>>, vector<8x1x512xbf16>
    %304 = vector.shape_cast %303 : vector<8x1x512xbf16> to vector<8x512xbf16>
    %305 = arith.extf %304 : vector<8x512xbf16> to vector<8x512xf32>
    %c0_172 = arith.constant 0 : index
    %c0_173 = arith.constant 0 : index
    %306 = vector.load %arg5[%c0_172, %c0_173] : memref<8x128xbf16, #tpu.memory_space<vmem>>, vector<8x128xbf16>
    %c0_174 = arith.constant 0 : index
    %c0_175 = arith.constant 0 : index
    %307 = vector.load %arg3[%c0_174, %c0_175] : memref<128x512xbf16, #tpu.memory_space<vmem>>, vector<128x512xbf16>
    %cst_176 = arith.constant dense<0.000000e+00> : vector<8x512xf32>
    %308 = tpu.matmul %306, %307, %cst_176 {dimension_numbers = #tpu.dot_dimension_numbers<[1], [0], [0], [1], [0, 0, 1, 1], [], []>} : vector<8x128xbf16>, vector<128x512xbf16>, vector<8x512xf32> -> vector<8x512xf32>
    %309 = arith.addf %305, %308 : vector<8x512xf32>
    %310 = vector.extract_strided_slice %309 {offsets = [0, 0], sizes = [8, 384], strides = [1, 1]} : vector<8x512xf32> to vector<8x384xf32>
    %311 = arith.negf %310 : vector<8x384xf32>
    %312 = math.exp %311 : vector<8x384xf32>
    %cst_177 = arith.constant 1.000000e+00 : f32
    %313 = vector.broadcast %cst_177 : f32 to vector<8x384xf32>
    %314 = arith.addf %313, %312 : vector<8x384xf32>
    %315 = arith.divf %313, %314 : vector<8x384xf32>
    %316 = vector.extract_strided_slice %309 {offsets = [0, 384], sizes = [8, 128], strides = [1, 1]} : vector<8x512xf32> to vector<8x128xf32>
    %317 = math.tanh %316 : vector<8x128xf32>
    %318 = vector.extract_strided_slice %315 {offsets = [0, 0], sizes = [8, 128], strides = [1, 1]} : vector<8x384xf32> to vector<8x128xf32>
    %319 = vector.extract_strided_slice %315 {offsets = [0, 128], sizes = [8, 128], strides = [1, 1]} : vector<8x384xf32> to vector<8x128xf32>
    %320 = vector.extract_strided_slice %315 {offsets = [0, 256], sizes = [8, 128], strides = [1, 1]} : vector<8x384xf32> to vector<8x128xf32>
    %c0_178 = arith.constant 0 : index
    %c0_179 = arith.constant 0 : index
    %321 = vector.load %arg6[%c0_178, %c0_179] : memref<8x128xf32, #tpu.memory_space<vmem>>, vector<8x128xf32>
    %322 = arith.mulf %319, %321 : vector<8x128xf32>
    %323 = arith.mulf %318, %317 : vector<8x128xf32>
    %324 = arith.addf %322, %323 : vector<8x128xf32>
    %325 = math.tanh %324 : vector<8x128xf32>
    %326 = arith.mulf %320, %325 : vector<8x128xf32>
    %327 = arith.truncf %326 : vector<8x128xf32> to vector<8x128xbf16>
    %c0_180 = arith.constant 0 : index
    %c0_181 = arith.constant 0 : index
    %328 = vector.load %arg6[%c0_180, %c0_181] : memref<8x128xf32, #tpu.memory_space<vmem>>, vector<8x128xf32>
    tpu.vector_store %arg6[%c0_180, %c0_181], %324 {strides = array<i32>} : memref<8x128xf32, #tpu.memory_space<vmem>>, vector<8x128xf32>,
    %c0_182 = arith.constant 0 : index
    %c0_183 = arith.constant 0 : index
    %329 = vector.load %arg5[%c0_182, %c0_183] : memref<8x128xbf16, #tpu.memory_space<vmem>>, vector<8x128xbf16>
    tpu.vector_store %arg5[%c0_182, %c0_183], %327 {strides = array<i32>} : memref<8x128xbf16, #tpu.memory_space<vmem>>, vector<8x128xbf16>,
    %c0_184 = arith.constant 0 : index
    %c10_185 = arith.constant 10 : index
    %c0_186 = arith.constant 0 : index
    %330 = vector.load %arg4[%c0_184, %c10_185, %c0_186] : memref<8x16x128xbf16, #tpu.memory_space<vmem>>, vector<8x1x128xbf16>
    %331 = vector.shape_cast %330 : vector<8x1x128xbf16> to vector<8x128xbf16>
    %332 = vector.shape_cast %327 : vector<8x128xbf16> to vector<8x1x128xbf16>
    tpu.vector_store %arg4[%c0_184, %c10_185, %c0_186], %332 {strides = array<i32>} : memref<8x16x128xbf16, #tpu.memory_space<vmem>>, vector<8x1x128xbf16>,
    %c0_187 = arith.constant 0 : index
    %c11 = arith.constant 11 : index
    %c0_188 = arith.constant 0 : index
    %333 = vector.load %arg2[%c0_187, %c11, %c0_188] : memref<8x16x512xbf16, #tpu.memory_space<vmem>>, vector<8x1x512xbf16>
    %334 = vector.shape_cast %333 : vector<8x1x512xbf16> to vector<8x512xbf16>
    %335 = arith.extf %334 : vector<8x512xbf16> to vector<8x512xf32>
    %c0_189 = arith.constant 0 : index
    %c0_190 = arith.constant 0 : index
    %336 = vector.load %arg5[%c0_189, %c0_190] : memref<8x128xbf16, #tpu.memory_space<vmem>>, vector<8x128xbf16>
    %c0_191 = arith.constant 0 : index
    %c0_192 = arith.constant 0 : index
    %337 = vector.load %arg3[%c0_191, %c0_192] : memref<128x512xbf16, #tpu.memory_space<vmem>>, vector<128x512xbf16>
    %cst_193 = arith.constant dense<0.000000e+00> : vector<8x512xf32>
    %338 = tpu.matmul %336, %337, %cst_193 {dimension_numbers = #tpu.dot_dimension_numbers<[1], [0], [0], [1], [0, 0, 1, 1], [], []>} : vector<8x128xbf16>, vector<128x512xbf16>, vector<8x512xf32> -> vector<8x512xf32>
    %339 = arith.addf %335, %338 : vector<8x512xf32>
    %340 = vector.extract_strided_slice %339 {offsets = [0, 0], sizes = [8, 384], strides = [1, 1]} : vector<8x512xf32> to vector<8x384xf32>
    %341 = arith.negf %340 : vector<8x384xf32>
    %342 = math.exp %341 : vector<8x384xf32>
    %cst_194 = arith.constant 1.000000e+00 : f32
    %343 = vector.broadcast %cst_194 : f32 to vector<8x384xf32>
    %344 = arith.addf %343, %342 : vector<8x384xf32>
    %345 = arith.divf %343, %344 : vector<8x384xf32>
    %346 = vector.extract_strided_slice %339 {offsets = [0, 384], sizes = [8, 128], strides = [1, 1]} : vector<8x512xf32> to vector<8x128xf32>
    %347 = math.tanh %346 : vector<8x128xf32>
    %348 = vector.extract_strided_slice %345 {offsets = [0, 0], sizes = [8, 128], strides = [1, 1]} : vector<8x384xf32> to vector<8x128xf32>
    %349 = vector.extract_strided_slice %345 {offsets = [0, 128], sizes = [8, 128], strides = [1, 1]} : vector<8x384xf32> to vector<8x128xf32>
    %350 = vector.extract_strided_slice %345 {offsets = [0, 256], sizes = [8, 128], strides = [1, 1]} : vector<8x384xf32> to vector<8x128xf32>
    %c0_195 = arith.constant 0 : index
    %c0_196 = arith.constant 0 : index
    %351 = vector.load %arg6[%c0_195, %c0_196] : memref<8x128xf32, #tpu.memory_space<vmem>>, vector<8x128xf32>
    %352 = arith.mulf %349, %351 : vector<8x128xf32>
    %353 = arith.mulf %348, %347 : vector<8x128xf32>
    %354 = arith.addf %352, %353 : vector<8x128xf32>
    %355 = math.tanh %354 : vector<8x128xf32>
    %356 = arith.mulf %350, %355 : vector<8x128xf32>
    %357 = arith.truncf %356 : vector<8x128xf32> to vector<8x128xbf16>
    %c0_197 = arith.constant 0 : index
    %c0_198 = arith.constant 0 : index
    %358 = vector.load %arg6[%c0_197, %c0_198] : memref<8x128xf32, #tpu.memory_space<vmem>>, vector<8x128xf32>
    tpu.vector_store %arg6[%c0_197, %c0_198], %354 {strides = array<i32>} : memref<8x128xf32, #tpu.memory_space<vmem>>, vector<8x128xf32>,
    %c0_199 = arith.constant 0 : index
    %c0_200 = arith.constant 0 : index
    %359 = vector.load %arg5[%c0_199, %c0_200] : memref<8x128xbf16, #tpu.memory_space<vmem>>, vector<8x128xbf16>
    tpu.vector_store %arg5[%c0_199, %c0_200], %357 {strides = array<i32>} : memref<8x128xbf16, #tpu.memory_space<vmem>>, vector<8x128xbf16>,
    %c0_201 = arith.constant 0 : index
    %c11_202 = arith.constant 11 : index
    %c0_203 = arith.constant 0 : index
    %360 = vector.load %arg4[%c0_201, %c11_202, %c0_203] : memref<8x16x128xbf16, #tpu.memory_space<vmem>>, vector<8x1x128xbf16>
    %361 = vector.shape_cast %360 : vector<8x1x128xbf16> to vector<8x128xbf16>
    %362 = vector.shape_cast %357 : vector<8x128xbf16> to vector<8x1x128xbf16>
    tpu.vector_store %arg4[%c0_201, %c11_202, %c0_203], %362 {strides = array<i32>} : memref<8x16x128xbf16, #tpu.memory_space<vmem>>, vector<8x1x128xbf16>,
    %c0_204 = arith.constant 0 : index
    %c12 = arith.constant 12 : index
    %c0_205 = arith.constant 0 : index
    %363 = vector.load %arg2[%c0_204, %c12, %c0_205] : memref<8x16x512xbf16, #tpu.memory_space<vmem>>, vector<8x1x512xbf16>
    %364 = vector.shape_cast %363 : vector<8x1x512xbf16> to vector<8x512xbf16>
    %365 = arith.extf %364 : vector<8x512xbf16> to vector<8x512xf32>
    %c0_206 = arith.constant 0 : index
    %c0_207 = arith.constant 0 : index
    %366 = vector.load %arg5[%c0_206, %c0_207] : memref<8x128xbf16, #tpu.memory_space<vmem>>, vector<8x128xbf16>
    %c0_208 = arith.constant 0 : index
    %c0_209 = arith.constant 0 : index
    %367 = vector.load %arg3[%c0_208, %c0_209] : memref<128x512xbf16, #tpu.memory_space<vmem>>, vector<128x512xbf16>
    %cst_210 = arith.constant dense<0.000000e+00> : vector<8x512xf32>
    %368 = tpu.matmul %366, %367, %cst_210 {dimension_numbers = #tpu.dot_dimension_numbers<[1], [0], [0], [1], [0, 0, 1, 1], [], []>} : vector<8x128xbf16>, vector<128x512xbf16>, vector<8x512xf32> -> vector<8x512xf32>
    %369 = arith.addf %365, %368 : vector<8x512xf32>
    %370 = vector.extract_strided_slice %369 {offsets = [0, 0], sizes = [8, 384], strides = [1, 1]} : vector<8x512xf32> to vector<8x384xf32>
    %371 = arith.negf %370 : vector<8x384xf32>
    %372 = math.exp %371 : vector<8x384xf32>
    %cst_211 = arith.constant 1.000000e+00 : f32
    %373 = vector.broadcast %cst_211 : f32 to vector<8x384xf32>
    %374 = arith.addf %373, %372 : vector<8x384xf32>
    %375 = arith.divf %373, %374 : vector<8x384xf32>
    %376 = vector.extract_strided_slice %369 {offsets = [0, 384], sizes = [8, 128], strides = [1, 1]} : vector<8x512xf32> to vector<8x128xf32>
    %377 = math.tanh %376 : vector<8x128xf32>
    %378 = vector.extract_strided_slice %375 {offsets = [0, 0], sizes = [8, 128], strides = [1, 1]} : vector<8x384xf32> to vector<8x128xf32>
    %379 = vector.extract_strided_slice %375 {offsets = [0, 128], sizes = [8, 128], strides = [1, 1]} : vector<8x384xf32> to vector<8x128xf32>
    %380 = vector.extract_strided_slice %375 {offsets = [0, 256], sizes = [8, 128], strides = [1, 1]} : vector<8x384xf32> to vector<8x128xf32>
    %c0_212 = arith.constant 0 : index
    %c0_213 = arith.constant 0 : index
    %381 = vector.load %arg6[%c0_212, %c0_213] : memref<8x128xf32, #tpu.memory_space<vmem>>, vector<8x128xf32>
    %382 = arith.mulf %379, %381 : vector<8x128xf32>
    %383 = arith.mulf %378, %377 : vector<8x128xf32>
    %384 = arith.addf %382, %383 : vector<8x128xf32>
    %385 = math.tanh %384 : vector<8x128xf32>
    %386 = arith.mulf %380, %385 : vector<8x128xf32>
    %387 = arith.truncf %386 : vector<8x128xf32> to vector<8x128xbf16>
    %c0_214 = arith.constant 0 : index
    %c0_215 = arith.constant 0 : index
    %388 = vector.load %arg6[%c0_214, %c0_215] : memref<8x128xf32, #tpu.memory_space<vmem>>, vector<8x128xf32>
    tpu.vector_store %arg6[%c0_214, %c0_215], %384 {strides = array<i32>} : memref<8x128xf32, #tpu.memory_space<vmem>>, vector<8x128xf32>,
    %c0_216 = arith.constant 0 : index
    %c0_217 = arith.constant 0 : index
    %389 = vector.load %arg5[%c0_216, %c0_217] : memref<8x128xbf16, #tpu.memory_space<vmem>>, vector<8x128xbf16>
    tpu.vector_store %arg5[%c0_216, %c0_217], %387 {strides = array<i32>} : memref<8x128xbf16, #tpu.memory_space<vmem>>, vector<8x128xbf16>,
    %c0_218 = arith.constant 0 : index
    %c12_219 = arith.constant 12 : index
    %c0_220 = arith.constant 0 : index
    %390 = vector.load %arg4[%c0_218, %c12_219, %c0_220] : memref<8x16x128xbf16, #tpu.memory_space<vmem>>, vector<8x1x128xbf16>
    %391 = vector.shape_cast %390 : vector<8x1x128xbf16> to vector<8x128xbf16>
    %392 = vector.shape_cast %387 : vector<8x128xbf16> to vector<8x1x128xbf16>
    tpu.vector_store %arg4[%c0_218, %c12_219, %c0_220], %392 {strides = array<i32>} : memref<8x16x128xbf16, #tpu.memory_space<vmem>>, vector<8x1x128xbf16>,
    %c0_221 = arith.constant 0 : index
    %c13 = arith.constant 13 : index
    %c0_222 = arith.constant 0 : index
    %393 = vector.load %arg2[%c0_221, %c13, %c0_222] : memref<8x16x512xbf16, #tpu.memory_space<vmem>>, vector<8x1x512xbf16>
    %394 = vector.shape_cast %393 : vector<8x1x512xbf16> to vector<8x512xbf16>
    %395 = arith.extf %394 : vector<8x512xbf16> to vector<8x512xf32>
    %c0_223 = arith.constant 0 : index
    %c0_224 = arith.constant 0 : index
    %396 = vector.load %arg5[%c0_223, %c0_224] : memref<8x128xbf16, #tpu.memory_space<vmem>>, vector<8x128xbf16>
    %c0_225 = arith.constant 0 : index
    %c0_226 = arith.constant 0 : index
    %397 = vector.load %arg3[%c0_225, %c0_226] : memref<128x512xbf16, #tpu.memory_space<vmem>>, vector<128x512xbf16>
    %cst_227 = arith.constant dense<0.000000e+00> : vector<8x512xf32>
    %398 = tpu.matmul %396, %397, %cst_227 {dimension_numbers = #tpu.dot_dimension_numbers<[1], [0], [0], [1], [0, 0, 1, 1], [], []>} : vector<8x128xbf16>, vector<128x512xbf16>, vector<8x512xf32> -> vector<8x512xf32>
    %399 = arith.addf %395, %398 : vector<8x512xf32>
    %400 = vector.extract_strided_slice %399 {offsets = [0, 0], sizes = [8, 384], strides = [1, 1]} : vector<8x512xf32> to vector<8x384xf32>
    %401 = arith.negf %400 : vector<8x384xf32>
    %402 = math.exp %401 : vector<8x384xf32>
    %cst_228 = arith.constant 1.000000e+00 : f32
    %403 = vector.broadcast %cst_228 : f32 to vector<8x384xf32>
    %404 = arith.addf %403, %402 : vector<8x384xf32>
    %405 = arith.divf %403, %404 : vector<8x384xf32>
    %406 = vector.extract_strided_slice %399 {offsets = [0, 384], sizes = [8, 128], strides = [1, 1]} : vector<8x512xf32> to vector<8x128xf32>
    %407 = math.tanh %406 : vector<8x128xf32>
    %408 = vector.extract_strided_slice %405 {offsets = [0, 0], sizes = [8, 128], strides = [1, 1]} : vector<8x384xf32> to vector<8x128xf32>
    %409 = vector.extract_strided_slice %405 {offsets = [0, 128], sizes = [8, 128], strides = [1, 1]} : vector<8x384xf32> to vector<8x128xf32>
    %410 = vector.extract_strided_slice %405 {offsets = [0, 256], sizes = [8, 128], strides = [1, 1]} : vector<8x384xf32> to vector<8x128xf32>
    %c0_229 = arith.constant 0 : index
    %c0_230 = arith.constant 0 : index
    %411 = vector.load %arg6[%c0_229, %c0_230] : memref<8x128xf32, #tpu.memory_space<vmem>>, vector<8x128xf32>
    %412 = arith.mulf %409, %411 : vector<8x128xf32>
    %413 = arith.mulf %408, %407 : vector<8x128xf32>
    %414 = arith.addf %412, %413 : vector<8x128xf32>
    %415 = math.tanh %414 : vector<8x128xf32>
    %416 = arith.mulf %410, %415 : vector<8x128xf32>
    %417 = arith.truncf %416 : vector<8x128xf32> to vector<8x128xbf16>
    %c0_231 = arith.constant 0 : index
    %c0_232 = arith.constant 0 : index
    %418 = vector.load %arg6[%c0_231, %c0_232] : memref<8x128xf32, #tpu.memory_space<vmem>>, vector<8x128xf32>
    tpu.vector_store %arg6[%c0_231, %c0_232], %414 {strides = array<i32>} : memref<8x128xf32, #tpu.memory_space<vmem>>, vector<8x128xf32>,
    %c0_233 = arith.constant 0 : index
    %c0_234 = arith.constant 0 : index
    %419 = vector.load %arg5[%c0_233, %c0_234] : memref<8x128xbf16, #tpu.memory_space<vmem>>, vector<8x128xbf16>
    tpu.vector_store %arg5[%c0_233, %c0_234], %417 {strides = array<i32>} : memref<8x128xbf16, #tpu.memory_space<vmem>>, vector<8x128xbf16>,
    %c0_235 = arith.constant 0 : index
    %c13_236 = arith.constant 13 : index
    %c0_237 = arith.constant 0 : index
    %420 = vector.load %arg4[%c0_235, %c13_236, %c0_237] : memref<8x16x128xbf16, #tpu.memory_space<vmem>>, vector<8x1x128xbf16>
    %421 = vector.shape_cast %420 : vector<8x1x128xbf16> to vector<8x128xbf16>
    %422 = vector.shape_cast %417 : vector<8x128xbf16> to vector<8x1x128xbf16>
    tpu.vector_store %arg4[%c0_235, %c13_236, %c0_237], %422 {strides = array<i32>} : memref<8x16x128xbf16, #tpu.memory_space<vmem>>, vector<8x1x128xbf16>,
    %c0_238 = arith.constant 0 : index
    %c14 = arith.constant 14 : index
    %c0_239 = arith.constant 0 : index
    %423 = vector.load %arg2[%c0_238, %c14, %c0_239] : memref<8x16x512xbf16, #tpu.memory_space<vmem>>, vector<8x1x512xbf16>
    %424 = vector.shape_cast %423 : vector<8x1x512xbf16> to vector<8x512xbf16>
    %425 = arith.extf %424 : vector<8x512xbf16> to vector<8x512xf32>
    %c0_240 = arith.constant 0 : index
    %c0_241 = arith.constant 0 : index
    %426 = vector.load %arg5[%c0_240, %c0_241] : memref<8x128xbf16, #tpu.memory_space<vmem>>, vector<8x128xbf16>
    %c0_242 = arith.constant 0 : index
    %c0_243 = arith.constant 0 : index
    %427 = vector.load %arg3[%c0_242, %c0_243] : memref<128x512xbf16, #tpu.memory_space<vmem>>, vector<128x512xbf16>
    %cst_244 = arith.constant dense<0.000000e+00> : vector<8x512xf32>
    %428 = tpu.matmul %426, %427, %cst_244 {dimension_numbers = #tpu.dot_dimension_numbers<[1], [0], [0], [1], [0, 0, 1, 1], [], []>} : vector<8x128xbf16>, vector<128x512xbf16>, vector<8x512xf32> -> vector<8x512xf32>
    %429 = arith.addf %425, %428 : vector<8x512xf32>
    %430 = vector.extract_strided_slice %429 {offsets = [0, 0], sizes = [8, 384], strides = [1, 1]} : vector<8x512xf32> to vector<8x384xf32>
    %431 = arith.negf %430 : vector<8x384xf32>
    %432 = math.exp %431 : vector<8x384xf32>
    %cst_245 = arith.constant 1.000000e+00 : f32
    %433 = vector.broadcast %cst_245 : f32 to vector<8x384xf32>
    %434 = arith.addf %433, %432 : vector<8x384xf32>
    %435 = arith.divf %433, %434 : vector<8x384xf32>
    %436 = vector.extract_strided_slice %429 {offsets = [0, 384], sizes = [8, 128], strides = [1, 1]} : vector<8x512xf32> to vector<8x128xf32>
    %437 = math.tanh %436 : vector<8x128xf32>
    %438 = vector.extract_strided_slice %435 {offsets = [0, 0], sizes = [8, 128], strides = [1, 1]} : vector<8x384xf32> to vector<8x128xf32>
    %439 = vector.extract_strided_slice %435 {offsets = [0, 128], sizes = [8, 128], strides = [1, 1]} : vector<8x384xf32> to vector<8x128xf32>
    %440 = vector.extract_strided_slice %435 {offsets = [0, 256], sizes = [8, 128], strides = [1, 1]} : vector<8x384xf32> to vector<8x128xf32>
    %c0_246 = arith.constant 0 : index
    %c0_247 = arith.constant 0 : index
    %441 = vector.load %arg6[%c0_246, %c0_247] : memref<8x128xf32, #tpu.memory_space<vmem>>, vector<8x128xf32>
    %442 = arith.mulf %439, %441 : vector<8x128xf32>
    %443 = arith.mulf %438, %437 : vector<8x128xf32>
    %444 = arith.addf %442, %443 : vector<8x128xf32>
    %445 = math.tanh %444 : vector<8x128xf32>
    %446 = arith.mulf %440, %445 : vector<8x128xf32>
    %447 = arith.truncf %446 : vector<8x128xf32> to vector<8x128xbf16>
    %c0_248 = arith.constant 0 : index
    %c0_249 = arith.constant 0 : index
    %448 = vector.load %arg6[%c0_248, %c0_249] : memref<8x128xf32, #tpu.memory_space<vmem>>, vector<8x128xf32>
    tpu.vector_store %arg6[%c0_248, %c0_249], %444 {strides = array<i32>} : memref<8x128xf32, #tpu.memory_space<vmem>>, vector<8x128xf32>,
    %c0_250 = arith.constant 0 : index
    %c0_251 = arith.constant 0 : index
    %449 = vector.load %arg5[%c0_250, %c0_251] : memref<8x128xbf16, #tpu.memory_space<vmem>>, vector<8x128xbf16>
    tpu.vector_store %arg5[%c0_250, %c0_251], %447 {strides = array<i32>} : memref<8x128xbf16, #tpu.memory_space<vmem>>, vector<8x128xbf16>,
    %c0_252 = arith.constant 0 : index
    %c14_253 = arith.constant 14 : index
    %c0_254 = arith.constant 0 : index
    %450 = vector.load %arg4[%c0_252, %c14_253, %c0_254] : memref<8x16x128xbf16, #tpu.memory_space<vmem>>, vector<8x1x128xbf16>
    %451 = vector.shape_cast %450 : vector<8x1x128xbf16> to vector<8x128xbf16>
    %452 = vector.shape_cast %447 : vector<8x128xbf16> to vector<8x1x128xbf16>
    tpu.vector_store %arg4[%c0_252, %c14_253, %c0_254], %452 {strides = array<i32>} : memref<8x16x128xbf16, #tpu.memory_space<vmem>>, vector<8x1x128xbf16>,
    %c0_255 = arith.constant 0 : index
    %c15 = arith.constant 15 : index
    %c0_256 = arith.constant 0 : index
    %453 = vector.load %arg2[%c0_255, %c15, %c0_256] : memref<8x16x512xbf16, #tpu.memory_space<vmem>>, vector<8x1x512xbf16>
    %454 = vector.shape_cast %453 : vector<8x1x512xbf16> to vector<8x512xbf16>
    %455 = arith.extf %454 : vector<8x512xbf16> to vector<8x512xf32>
    %c0_257 = arith.constant 0 : index
    %c0_258 = arith.constant 0 : index
    %456 = vector.load %arg5[%c0_257, %c0_258] : memref<8x128xbf16, #tpu.memory_space<vmem>>, vector<8x128xbf16>
    %c0_259 = arith.constant 0 : index
    %c0_260 = arith.constant 0 : index
    %457 = vector.load %arg3[%c0_259, %c0_260] : memref<128x512xbf16, #tpu.memory_space<vmem>>, vector<128x512xbf16>
    %cst_261 = arith.constant dense<0.000000e+00> : vector<8x512xf32>
    %458 = tpu.matmul %456, %457, %cst_261 {dimension_numbers = #tpu.dot_dimension_numbers<[1], [0], [0], [1], [0, 0, 1, 1], [], []>} : vector<8x128xbf16>, vector<128x512xbf16>, vector<8x512xf32> -> vector<8x512xf32>
    %459 = arith.addf %455, %458 : vector<8x512xf32>
    %460 = vector.extract_strided_slice %459 {offsets = [0, 0], sizes = [8, 384], strides = [1, 1]} : vector<8x512xf32> to vector<8x384xf32>
    %461 = arith.negf %460 : vector<8x384xf32>
    %462 = math.exp %461 : vector<8x384xf32>
    %cst_262 = arith.constant 1.000000e+00 : f32
    %463 = vector.broadcast %cst_262 : f32 to vector<8x384xf32>
    %464 = arith.addf %463, %462 : vector<8x384xf32>
    %465 = arith.divf %463, %464 : vector<8x384xf32>
    %466 = vector.extract_strided_slice %459 {offsets = [0, 384], sizes = [8, 128], strides = [1, 1]} : vector<8x512xf32> to vector<8x128xf32>
    %467 = math.tanh %466 : vector<8x128xf32>
    %468 = vector.extract_strided_slice %465 {offsets = [0, 0], sizes = [8, 128], strides = [1, 1]} : vector<8x384xf32> to vector<8x128xf32>
    %469 = vector.extract_strided_slice %465 {offsets = [0, 128], sizes = [8, 128], strides = [1, 1]} : vector<8x384xf32> to vector<8x128xf32>
    %470 = vector.extract_strided_slice %465 {offsets = [0, 256], sizes = [8, 128], strides = [1, 1]} : vector<8x384xf32> to vector<8x128xf32>
    %c0_263 = arith.constant 0 : index
    %c0_264 = arith.constant 0 : index
    %471 = vector.load %arg6[%c0_263, %c0_264] : memref<8x128xf32, #tpu.memory_space<vmem>>, vector<8x128xf32>
    %472 = arith.mulf %469, %471 : vector<8x128xf32>
    %473 = arith.mulf %468, %467 : vector<8x128xf32>
    %474 = arith.addf %472, %473 : vector<8x128xf32>
    %475 = math.tanh %474 : vector<8x128xf32>
    %476 = arith.mulf %470, %475 : vector<8x128xf32>
    %477 = arith.truncf %476 : vector<8x128xf32> to vector<8x128xbf16>
    %c0_265 = arith.constant 0 : index
    %c0_266 = arith.constant 0 : index
    %478 = vector.load %arg6[%c0_265, %c0_266] : memref<8x128xf32, #tpu.memory_space<vmem>>, vector<8x128xf32>
    tpu.vector_store %arg6[%c0_265, %c0_266], %474 {strides = array<i32>} : memref<8x128xf32, #tpu.memory_space<vmem>>, vector<8x128xf32>,
    %c0_267 = arith.constant 0 : index
    %c0_268 = arith.constant 0 : index
    %479 = vector.load %arg5[%c0_267, %c0_268] : memref<8x128xbf16, #tpu.memory_space<vmem>>, vector<8x128xbf16>
    tpu.vector_store %arg5[%c0_267, %c0_268], %477 {strides = array<i32>} : memref<8x128xbf16, #tpu.memory_space<vmem>>, vector<8x128xbf16>,
    %c0_269 = arith.constant 0 : index
    %c15_270 = arith.constant 15 : index
    %c0_271 = arith.constant 0 : index
    %480 = vector.load %arg4[%c0_269, %c15_270, %c0_271] : memref<8x16x128xbf16, #tpu.memory_space<vmem>>, vector<8x1x128xbf16>
    %481 = vector.shape_cast %480 : vector<8x1x128xbf16> to vector<8x128xbf16>
    %482 = vector.shape_cast %477 : vector<8x128xbf16> to vector<8x1x128xbf16>
    tpu.vector_store %arg4[%c0_269, %c15_270, %c0_271], %482 {strides = array<i32>} : memref<8x16x128xbf16, #tpu.memory_space<vmem>>, vector<8x1x128xbf16>,
    return
  }
  func.func @transform_0(%arg0: i32, %arg1: i32) -> (i32, i32, i32) {
    %c0_i32 = arith.constant 0 : i32
    %c0_i32_0 = arith.constant 0 : i32
    return %arg0, %arg1, %c0_i32 : i32, i32, i32
  }
  func.func @transform_1(%arg0: i32, %arg1: i32) -> (i32, i32) {
    %c0_i32 = arith.constant 0 : i32
    %c0_i32_0 = arith.constant 0 : i32
    %c0_i32_1 = arith.constant 0 : i32
    return %c0_i32, %c0_i32_0 : i32, i32
  }
  func.func @transform_2(%arg0: i32, %arg1: i32) -> (i32, i32, i32) {
    %c0_i32 = arith.constant 0 : i32
    %c0_i32_0 = arith.constant 0 : i32
    return %arg0, %arg1, %c0_i32 : i32, i32, i32
  }
}

</mosaic_0001>

<llo_original>
// kernel: decoder_rnn_forward.3
$region0: #{decoder_rnn_forward.3}
  #allocation0 [shape = 'u32[]', space=smem, size = 0x4, offset = 0x4, fixed_abs, tag = 'smem constant byte address 0x4 - core index']
  #allocation1 [shape = 'u32[144,128]{1,0:T(1,128)}', space=vmem, size = 0x12000, scoped, tag = 'internal scratch']
  #allocation2 [shape = 'f32[128,1]{1,0:T(8,128)}', space=vmem, size = 0x10000, scoped, tag = 'scratch operand']
  #allocation3 [shape = 'f32[128,1]{1,0:T(8,128)}', space=vmem, size = 0x10000, scoped, tag = 'scratch operand']
  %s0 = inlined_call_operand.vmem [shape: bf16[128,128], index: 0, kind: input, shape index: {}]
  %s1 = inlined_call_operand.vmem [shape: bf16[128,128], index: 1, kind: input, shape index: {}]
  %s2 = inlined_call_operand.vmem [shape: f32[1,128], index: 2, kind: input, shape index: {}]
  %s3 = inlined_call_operand.vmem [shape: f32[128,128], index: 3, kind: output, shape index: {}]
  %s4 = sld [smem:[#allocation0]]
  $region30: #{decoder_rnn_forward.3} parent=0
    _
  %s6 = ssub.s32 1, %s4
  %s7 = scalar_select 0, %s6, %s4
  // Predicated region
  $region2: #{decoder_rnn_forward.3} parent=0 // pred_check
    _
  $region3: #{decoder_rnn_forward.3} parent=0 // pred_check_branch
    %9 = sbr.rel (0) target = $region5
  $region4: #{decoder_rnn_forward.3} parent=0 // pred_region
    _
  $region5: #{decoder_rnn_forward.3} parent=0 // pred_fallthru
    _
  // Predicated region
  $region6: #{decoder_rnn_forward.3} parent=0 // pred_check
    _
  $region7: #{decoder_rnn_forward.3} parent=0 // pred_check_branch
    %11 = sbr.rel (0) target = $region9
  $region8: #{decoder_rnn_forward.3} parent=0 // pred_region
    _
  $region9: #{decoder_rnn_forward.3} parent=0 // pred_fallthru
    _
  // Predicated region
  $region10: #{decoder_rnn_forward.3} parent=0 // pred_check
    _
  $region11: #{decoder_rnn_forward.3} parent=0 // pred_check_branch
    %13 = sbr.rel (0) target = $region13
  $region12: #{decoder_rnn_forward.3} parent=0 // pred_region
    _
  $region13: #{decoder_rnn_forward.3} parent=0 // pred_fallthru
    _
  %p15 = scmp.eq.s32.totalorder 0, 0
  // Predicated region
  $region14: #{decoder_rnn_forward.3} parent=0 // pred_check
    %p16 = pneg %p15
  $region15: #{decoder_rnn_forward.3} parent=0 // pred_check_branch
    %18 = sbr.rel (%p16) target = $region17
  $region16: #{decoder_rnn_forward.3} parent=0 // pred_region
    %vm19 = vcmask 7168
    %20 = vst.msk [vmem:[#allocation2] sm:$0xff] %vm19, -inf
    %21 = vst.msk [vmem:[#allocation2 + $0x8] sm:$0xff] %vm19, -inf
    %22 = vst.msk [vmem:[#allocation2 + $0x10] sm:$0xff] %vm19, -inf
    %23 = vst.msk [vmem:[#allocation2 + $0x18] sm:$0xff] %vm19, -inf
    %24 = vst.msk [vmem:[#allocation2 + $0x20] sm:$0xff] %vm19, -inf
    %25 = vst.msk [vmem:[#allocation2 + $0x28] sm:$0xff] %vm19, -inf
    %26 = vst.msk [vmem:[#allocation2 + $0x30] sm:$0xff] %vm19, -inf
    %27 = vst.msk [vmem:[#allocation2 + $0x38] sm:$0xff] %vm19, -inf
    %28 = vst.msk [vmem:[#allocation2 + $0x40] sm:$0xff] %vm19, -inf
    %29 = vst.msk [vmem:[#allocation2 + $0x48] sm:$0xff] %vm19, -inf
    %30 = vst.msk [vmem:[#allocation2 + $0x50] sm:$0xff] %vm19, -inf
    %31 = vst.msk [vmem:[#allocation2 + $0x58] sm:$0xff] %vm19, -inf
    %32 = vst.msk [vmem:[#allocation2 + $0x60] sm:$0xff] %vm19, -inf
    %33 = vst.msk [vmem:[#allocation2 + $0x68] sm:$0xff] %vm19, -inf
    %34 = vst.msk [vmem:[#allocation2 + $0x70] sm:$0xff] %vm19, -inf
    %35 = vst.msk [vmem:[#allocation2 + $0x78] sm:$0xff] %vm19, -inf
    %36 = vst.msk [vmem:[#allocation3] sm:$0xff] %vm19, 0.0
    %37 = vst.msk [vmem:[#allocation3 + $0x8] sm:$0xff] %vm19, 0.0
    %38 = vst.msk [vmem:[#allocation3 + $0x10] sm:$0xff] %vm19, 0.0
    %39 = vst.msk [vmem:[#allocation3 + $0x18] sm:$0xff] %vm19, 0.0
    %40 = vst.msk [vmem:[#allocation3 + $0x20] sm:$0xff] %vm19, 0.0
    %41 = vst.msk [vmem:[#allocation3 + $0x28] sm:$0xff] %vm19, 0.0
    %42 = vst.msk [vmem:[#allocation3 + $0x30] sm:$0xff] %vm19, 0.0
    %43 = vst.msk [vmem:[#allocation3 + $0x38] sm:$0xff] %vm19, 0.0
    %44 = vst.msk [vmem:[#allocation3 + $0x40] sm:$0xff] %vm19, 0.0
    %45 = vst.msk [vmem:[#allocation3 + $0x48] sm:$0xff] %vm19, 0.0
    %46 = vst.msk [vmem:[#allocation3 + $0x50] sm:$0xff] %vm19, 0.0
    %47 = vst.msk [vmem:[#allocation3 + $0x58] sm:$0xff] %vm19, 0.0
    %48 = vst.msk [vmem:[#allocation3 + $0x60] sm:$0xff] %vm19, 0.0
    %49 = vst.msk [vmem:[#allocation3 + $0x68] sm:$0xff] %vm19, 0.0
    %50 = vst.msk [vmem:[#allocation3 + $0x70] sm:$0xff] %vm19, 0.0
    %51 = vst.msk [vmem:[#allocation3 + $0x78] sm:$0xff] %vm19, 0.0
  $region17: #{decoder_rnn_forward.3} parent=0 // pred_fallthru
    _
  %v52 = vld [vmem:[%s0] sm:$0xf]
  %v53 = vld [vmem:[%s0 + $0x4] sm:$0xf]
  %v54 = vld [vmem:[%s0 + $0x8] sm:$0xf]
  %v55 = vld [vmem:[%s0 + $0xc] sm:$0xf]
  %v56 = vld [vmem:[%s0 + $0x10] sm:$0xf]
  %v57 = vld [vmem:[%s0 + $0x14] sm:$0xf]
  %v58 = vld [vmem:[%s0 + $0x18] sm:$0xf]
  %v59 = vld [vmem:[%s0 + $0x1c] sm:$0xf]
  %v60 = vld [vmem:[%s0 + $0x20] sm:$0xf]
  %v61 = vld [vmem:[%s0 + $0x24] sm:$0xf]
  %v62 = vld [vmem:[%s0 + $0x28] sm:$0xf]
  %v63 = vld [vmem:[%s0 + $0x2c] sm:$0xf]
  %v64 = vld [vmem:[%s0 + $0x30] sm:$0xf]
  %v65 = vld [vmem:[%s0 + $0x34] sm:$0xf]
  %v66 = vld [vmem:[%s0 + $0x38] sm:$0xf]
  %v67 = vld [vmem:[%s0 + $0x3c] sm:$0xf]
  %v68 = vld [vmem:[%s1] sm:$0xf]
  %v69 = vld [vmem:[%s1 + $0x4] sm:$0xf]
  %v70 = vld [vmem:[%s1 + $0x8] sm:$0xf]
  %v71 = vld [vmem:[%s1 + $0xc] sm:$0xf]
  %v72 = vld [vmem:[%s1 + $0x10] sm:$0xf]
  %v73 = vld [vmem:[%s1 + $0x14] sm:$0xf]
  %v74 = vld [vmem:[%s1 + $0x18] sm:$0xf]
  %v75 = vld [vmem:[%s1 + $0x1c] sm:$0xf]
  %v76 = vld [vmem:[%s1 + $0x20] sm:$0xf]
  %v77 = vld [vmem:[%s1 + $0x24] sm:$0xf]
  %v78 = vld [vmem:[%s1 + $0x28] sm:$0xf]
  %v79 = vld [vmem:[%s1 + $0x2c] sm:$0xf]
  %v80 = vld [vmem:[%s1 + $0x30] sm:$0xf]
  %v81 = vld [vmem:[%s1 + $0x34] sm:$0xf]
  %v82 = vld [vmem:[%s1 + $0x38] sm:$0xf]
  %v83 = vld [vmem:[%s1 + $0x3c] sm:$0xf]
  %v84 = vld [vmem:[%s2] sm:$0x1]
  %v86 = vlaneseq
  %v87 = vshrl.u32 %v86, 7
  %v88 = vsub.s32 0, %v87
  %v89 = vrot.slane %v84, %v88
  %v107 = vunpack.c.l.b16 %v52
  %v108 = vunpack.c.l.b16 %v53
  %v109 = vunpack.c.l.b16 %v54
  %v110 = vunpack.c.l.b16 %v55
  %v111 = vunpack.c.l.b16 %v56
  %v112 = vunpack.c.l.b16 %v57
  %v113 = vunpack.c.l.b16 %v58
  %v114 = vunpack.c.l.b16 %v59
  %v115 = vunpack.c.l.b16 %v60
  %v116 = vunpack.c.l.b16 %v61
  %v117 = vunpack.c.l.b16 %v62
  %v118 = vunpack.c.l.b16 %v63
  %v119 = vunpack.c.l.b16 %v64
  %v120 = vunpack.c.l.b16 %v65
  %v121 = vunpack.c.l.b16 %v66
  %v122 = vunpack.c.l.b16 %v67
  %v123 = vpack.c.b16 %v108, %v107
  %v124 = vpack.c.b16 %v110, %v109
  %v125 = vpack.c.b16 %v112, %v111
  %v126 = vpack.c.b16 %v114, %v113
  %v127 = vpack.c.b16 %v116, %v115
  %v128 = vpack.c.b16 %v118, %v117
  %v129 = vpack.c.b16 %v120, %v119
  %v130 = vpack.c.b16 %v122, %v121
  %v155 = vunpack.c.l.b16 %v68
  %v156 = vunpack.c.l.b16 %v69
  %v157 = vunpack.c.l.b16 %v70
  %v158 = vunpack.c.l.b16 %v71
  %v159 = vunpack.c.l.b16 %v72
  %v160 = vunpack.c.l.b16 %v73
  %v161 = vunpack.c.l.b16 %v74
  %v162 = vunpack.c.l.b16 %v75
  %v163 = vunpack.c.l.b16 %v76
  %v164 = vunpack.c.l.b16 %v77
  %v165 = vunpack.c.l.b16 %v78
  %v166 = vunpack.c.l.b16 %v79
  %v167 = vunpack.c.l.b16 %v80
  %v168 = vunpack.c.l.b16 %v81
  %v169 = vunpack.c.l.b16 %v82
  %v170 = vunpack.c.l.b16 %v83
  %v171 = vpack.c.b16 %v156, %v155
  %v172 = vpack.c.b16 %v158, %v157
  %v173 = vpack.c.b16 %v160, %v159
  %v174 = vpack.c.b16 %v162, %v161
  %v175 = vpack.c.b16 %v164, %v163
  %v176 = vpack.c.b16 %v166, %v165
  %v177 = vpack.c.b16 %v168, %v167
  %v178 = vpack.c.b16 %v170, %v169
  %187 = vmatprep.subr.bf16.mxu0 0
  %188 = vmatpush1.bf16.msra.mxu0 %v178
  %189 = vmatprep.subr.bf16.mxu0 0
  %190 = vmatpush1.bf16.msra.mxu0 %v177
  %191 = vmatprep.subr.bf16.mxu0 0
  %192 = vmatpush1.bf16.msra.mxu0 %v176
  %193 = vmatprep.subr.bf16.mxu0 0
  %194 = vmatpush1.bf16.msra.mxu0 %v175
  %195 = vmatprep.subr.bf16.mxu0 0
  %196 = vmatpush1.bf16.msra.mxu0 %v174
  %197 = vmatprep.subr.bf16.mxu0 0
  %198 = vmatpush1.bf16.msra.mxu0 %v173
  %199 = vmatprep.subr.bf16.mxu0 0
  %200 = vmatpush1.bf16.msra.mxu0 %v172
  %201 = vmatprep.subr.bf16.mxu0 0
  %202 = vmatpush1.bf16.msra.mxu0 %v171
  %203 = vmatprep.subr.bf16.mxu0 0
  %204 = vmatpush2.bf16.msra.mxu0 0
  %205 = vmatprep.subr.bf16.mxu0 0
  %206 = vmatpush2.bf16.msra.mxu0 0
  %207 = vmatprep.subr.bf16.mxu0 0
  %208 = vmatpush2.bf16.msra.mxu0 0
  %209 = vmatprep.subr.bf16.mxu0 0
  %210 = vmatpush2.bf16.msra.mxu0 0
  %211 = vmatprep.subr.bf16.mxu0 0
  %212 = vmatpush2.bf16.msra.mxu0 0
  %213 = vmatprep.subr.bf16.mxu0 0
  %214 = vmatpush2.bf16.msra.mxu0 0
  %215 = vmatprep.subr.bf16.mxu0 0
  %216 = vmatpush2.bf16.msra.mxu0 0
  %217 = vmatprep.subr.bf16.mxu0 0
  %218 = vmatpush2.bf16.msra.mxu0 0
  %219 = vmatprep.mubr.bf16.mxu0 0
  %220 = vmatmul.mubr.bf16.gmra.mxu0 %v123
  %v221 = vpop.f32.mrf.mxu0
  %v222 = vadd.f32 %v89, %v221
  %v223 = vpop.f32.mrf.mxu0
  %v224 = vpop.f32.mrf.mxu0
  %v225 = vadd.f32 %v89, %v224
  %v226 = vpop.f32.mrf.mxu0
  %227 = vmatprep.mubr.bf16.mxu0 0
  %228 = vmatmul.mubr.bf16.gmra.mxu0 %v124
  %v229 = vpop.f32.mrf.mxu0
  %v230 = vadd.f32 %v89, %v229
  %v231 = vpop.f32.mrf.mxu0
  %v232 = vpop.f32.mrf.mxu0
  %v233 = vadd.f32 %v89, %v232
  %v234 = vpop.f32.mrf.mxu0
  %235 = vmatprep.mubr.bf16.mxu0 0
  %236 = vmatmul.mubr.bf16.gmra.mxu0 %v125
  %v237 = vpop.f32.mrf.mxu0
  %v238 = vadd.f32 %v89, %v237
  %v239 = vpop.f32.mrf.mxu0
  %v240 = vpop.f32.mrf.mxu0
  %v241 = vadd.f32 %v89, %v240
  %v242 = vpop.f32.mrf.mxu0
  %243 = vmatprep.mubr.bf16.mxu0 0
  %244 = vmatmul.mubr.bf16.gmra.mxu0 %v126
  %v245 = vpop.f32.mrf.mxu0
  %v246 = vadd.f32 %v89, %v245
  %v247 = vpop.f32.mrf.mxu0
  %v248 = vpop.f32.mrf.mxu0
  %v249 = vadd.f32 %v89, %v248
  %v250 = vpop.f32.mrf.mxu0
  %251 = vmatprep.mubr.bf16.mxu0 0
  %252 = vmatmul.mubr.bf16.gmra.mxu0 %v127
  %v253 = vpop.f32.mrf.mxu0
  %v254 = vadd.f32 %v89, %v253
  %v255 = vpop.f32.mrf.mxu0
  %v256 = vpop.f32.mrf.mxu0
  %v257 = vadd.f32 %v89, %v256
  %v258 = vpop.f32.mrf.mxu0
  %259 = vmatprep.mubr.bf16.mxu0 0
  %260 = vmatmul.mubr.bf16.gmra.mxu0 %v128
  %v261 = vpop.f32.mrf.mxu0
  %v262 = vadd.f32 %v89, %v261
  %v263 = vpop.f32.mrf.mxu0
  %v264 = vpop.f32.mrf.mxu0
  %v265 = vadd.f32 %v89, %v264
  %v266 = vpop.f32.mrf.mxu0
  %267 = vmatprep.mubr.bf16.mxu0 0
  %268 = vmatmul.mubr.bf16.gmra.mxu0 %v129
  %v269 = vpop.f32.mrf.mxu0
  %v270 = vadd.f32 %v89, %v269
  %v271 = vpop.f32.mrf.mxu0
  %v272 = vpop.f32.mrf.mxu0
  %v273 = vadd.f32 %v89, %v272
  %v274 = vpop.f32.mrf.mxu0
  %275 = vmatprep.mubr.bf16.mxu0 0
  %276 = vmatmul.mubr.bf16.gmra.mxu0 %v130
  %v277 = vpop.f32.mrf.mxu0
  %v278 = vadd.f32 %v89, %v277
  %v279 = vpop.f32.mrf.mxu0
  %v280 = vpop.f32.mrf.mxu0
  %v281 = vadd.f32 %v89, %v280
  %v282 = vpop.f32.mrf.mxu0
  %283 = vdwg.mxu0
  %v284 = vld [vmem:[#allocation2] sm:$0xff]
  %v285 = vld [vmem:[#allocation2 + $0x8] sm:$0xff]
  %v286 = vld [vmem:[#allocation2 + $0x10] sm:$0xff]
  %v287 = vld [vmem:[#allocation2 + $0x18] sm:$0xff]
  %v288 = vld [vmem:[#allocation2 + $0x20] sm:$0xff]
  %v289 = vld [vmem:[#allocation2 + $0x28] sm:$0xff]
  %v290 = vld [vmem:[#allocation2 + $0x30] sm:$0xff]
  %v291 = vld [vmem:[#allocation2 + $0x38] sm:$0xff]
  %v292 = vld [vmem:[#allocation2 + $0x40] sm:$0xff]
  %v293 = vld [vmem:[#allocation2 + $0x48] sm:$0xff]
  %v294 = vld [vmem:[#allocation2 + $0x50] sm:$0xff]
  %v295 = vld [vmem:[#allocation2 + $0x58] sm:$0xff]
  %v296 = vld [vmem:[#allocation2 + $0x60] sm:$0xff]
  %v297 = vld [vmem:[#allocation2 + $0x68] sm:$0xff]
  %v298 = vld [vmem:[#allocation2 + $0x70] sm:$0xff]
  %v299 = vld [vmem:[#allocation2 + $0x78] sm:$0xff]
  %300 = vmax.xlane.f32.xlu0 %v222
  %v301 = vpop.xlane.xlu0 %300
  %302 = vmax.xlane.f32.xlu0 %v225
  %v303 = vpop.xlane.xlu0 %302
  %304 = vmax.xlane.f32.xlu0 %v230
  %v305 = vpop.xlane.xlu0 %304
  %306 = vmax.xlane.f32.xlu0 %v233
  %v307 = vpop.xlane.xlu0 %306
  %308 = vmax.xlane.f32.xlu0 %v238
  %v309 = vpop.xlane.xlu0 %308
  %310 = vmax.xlane.f32.xlu0 %v241
  %v311 = vpop.xlane.xlu0 %310
  %312 = vmax.xlane.f32.xlu0 %v246
  %v313 = vpop.xlane.xlu0 %312
  %314 = vmax.xlane.f32.xlu0 %v249
  %v315 = vpop.xlane.xlu0 %314
  %316 = vmax.xlane.f32.xlu0 %v254
  %v317 = vpop.xlane.xlu0 %316
  %318 = vmax.xlane.f32.xlu0 %v257
  %v319 = vpop.xlane.xlu0 %318
  %320 = vmax.xlane.f32.xlu0 %v262
  %v321 = vpop.xlane.xlu0 %320
  %322 = vmax.xlane.f32.xlu0 %v265
  %v323 = vpop.xlane.xlu0 %322
  %324 = vmax.xlane.f32.xlu0 %v270
  %v325 = vpop.xlane.xlu0 %324
  %326 = vmax.xlane.f32.xlu0 %v273
  %v327 = vpop.xlane.xlu0 %326
  %328 = vmax.xlane.f32.xlu0 %v278
  %v329 = vpop.xlane.xlu0 %328
  %330 = vmax.xlane.f32.xlu0 %v281
  %v331 = vpop.xlane.xlu0 %330
  %v332 = vmax.f32 %v284, %v301
  %v333 = vmax.f32 %v285, %v303
  %v334 = vmax.f32 %v286, %v305
  %v335 = vmax.f32 %v287, %v307
  %v336 = vmax.f32 %v288, %v309
  %v337 = vmax.f32 %v289, %v311
  %v338 = vmax.f32 %v290, %v313
  %v339 = vmax.f32 %v291, %v315
  %v340 = vmax.f32 %v292, %v317
  %v341 = vmax.f32 %v293, %v319
  %v342 = vmax.f32 %v294, %v321
  %v343 = vmax.f32 %v295, %v323
  %v344 = vmax.f32 %v296, %v325
  %v345 = vmax.f32 %v297, %v327
  %v346 = vmax.f32 %v298, %v329
  %v347 = vmax.f32 %v299, %v331
  %v348 = vld [vmem:[#allocation3] sm:$0xff]
  %v349 = vld [vmem:[#allocation3 + $0x8] sm:$0xff]
  %v350 = vld [vmem:[#allocation3 + $0x10] sm:$0xff]
  %v351 = vld [vmem:[#allocation3 + $0x18] sm:$0xff]
  %v352 = vld [vmem:[#allocation3 + $0x20] sm:$0xff]
  %v353 = vld [vmem:[#allocation3 + $0x28] sm:$0xff]
  %v354 = vld [vmem:[#allocation3 + $0x30] sm:$0xff]
  %v355 = vld [vmem:[#allocation3 + $0x38] sm:$0xff]
  %v356 = vld [vmem:[#allocation3 + $0x40] sm:$0xff]
  %v357 = vld [vmem:[#allocation3 + $0x48] sm:$0xff]
  %v358 = vld [vmem:[#allocation3 + $0x50] sm:$0xff]
  %v359 = vld [vmem:[#allocation3 + $0x58] sm:$0xff]
  %v360 = vld [vmem:[#allocation3 + $0x60] sm:$0xff]
  %v361 = vld [vmem:[#allocation3 + $0x68] sm:$0xff]
  %v362 = vld [vmem:[#allocation3 + $0x70] sm:$0xff]
  %v363 = vld [vmem:[#allocation3 + $0x78] sm:$0xff]
  %v364 = vsub.f32 %v284, %v332
  %v365 = vsub.f32 %v285, %v333
  %v366 = vsub.f32 %v286, %v334
  %v367 = vsub.f32 %v287, %v335
  %v368 = vsub.f32 %v288, %v336
  %v369 = vsub.f32 %v289, %v337
  %v370 = vsub.f32 %v290, %v338
  %v371 = vsub.f32 %v291, %v339
  %v372 = vsub.f32 %v292, %v340
  %v373 = vsub.f32 %v293, %v341
  %v374 = vsub.f32 %v294, %v342
  %v375 = vsub.f32 %v295, %v343
  %v376 = vsub.f32 %v296, %v344
  %v377 = vsub.f32 %v297, %v345
  %v378 = vsub.f32 %v298, %v346
  %v379 = vsub.f32 %v299, %v347
  %v380 = vmul.f32 %v364, 1.442695
  %v381 = vpow.pop %v380
  %v382 = vmul.f32 %v365, 1.442695
  %v383 = vpow.pop %v382
  %v384 = vmul.f32 %v366, 1.442695
  %v385 = vpow.pop %v384
  %v386 = vmul.f32 %v367, 1.442695
  %v387 = vpow.pop %v386
  %v388 = vmul.f32 %v368, 1.442695
  %v389 = vpow.pop %v388
  %v390 = vmul.f32 %v369, 1.442695
  %v391 = vpow.pop %v390
  %v392 = vmul.f32 %v370, 1.442695
  %v393 = vpow.pop %v392
  %v394 = vmul.f32 %v371, 1.442695
  %v395 = vpow.pop %v394
  %v396 = vmul.f32 %v372, 1.442695
  %v397 = vpow.pop %v396
  %v398 = vmul.f32 %v373, 1.442695
  %v399 = vpow.pop %v398
  %v400 = vmul.f32 %v374, 1.442695
  %v401 = vpow.pop %v400
  %v402 = vmul.f32 %v375, 1.442695
  %v403 = vpow.pop %v402
  %v404 = vmul.f32 %v376, 1.442695
  %v405 = vpow.pop %v404
  %v406 = vmul.f32 %v377, 1.442695
  %v407 = vpow.pop %v406
  %v408 = vmul.f32 %v378, 1.442695
  %v409 = vpow.pop %v408
  %v410 = vmul.f32 %v379, 1.442695
  %v411 = vpow.pop %v410
  %v412 = vmul.f32 %v348, %v381
  %v413 = vmul.f32 %v349, %v383
  %v414 = vmul.f32 %v350, %v385
  %v415 = vmul.f32 %v351, %v387
  %v416 = vmul.f32 %v352, %v389
  %v417 = vmul.f32 %v353, %v391
  %v418 = vmul.f32 %v354, %v393
  %v419 = vmul.f32 %v355, %v395
  %v420 = vmul.f32 %v356, %v397
  %v421 = vmul.f32 %v357, %v399
  %v422 = vmul.f32 %v358, %v401
  %v423 = vmul.f32 %v359, %v403
  %v424 = vmul.f32 %v360, %v405
  %v425 = vmul.f32 %v361, %v407
  %v426 = vmul.f32 %v362, %v409
  %v427 = vmul.f32 %v363, %v411
  %429 = vset.pattern.permute.xlu0 0
  %430 = vperm.xlu0 %429, %v332
  %v431 = vpop.permute.xlu0 %430
  %434 = vset.pattern.permute.xlu0 0
  %435 = vperm.xlu0 %434, %v333
  %v436 = vpop.permute.xlu0 %435
  %439 = vset.pattern.permute.xlu0 0
  %440 = vperm.xlu0 %439, %v334
  %v441 = vpop.permute.xlu0 %440
  %444 = vset.pattern.permute.xlu0 0
  %445 = vperm.xlu0 %444, %v335
  %v446 = vpop.permute.xlu0 %445
  %449 = vset.pattern.permute.xlu0 0
  %450 = vperm.xlu0 %449, %v336
  %v451 = vpop.permute.xlu0 %450
  %454 = vset.pattern.permute.xlu0 0
  %455 = vperm.xlu0 %454, %v337
  %v456 = vpop.permute.xlu0 %455
  %459 = vset.pattern.permute.xlu0 0
  %460 = vperm.xlu0 %459, %v338
  %v461 = vpop.permute.xlu0 %460
  %464 = vset.pattern.permute.xlu0 0
  %465 = vperm.xlu0 %464, %v339
  %v466 = vpop.permute.xlu0 %465
  %469 = vset.pattern.permute.xlu0 0
  %470 = vperm.xlu0 %469, %v340
  %v471 = vpop.permute.xlu0 %470
  %474 = vset.pattern.permute.xlu0 0
  %475 = vperm.xlu0 %474, %v341
  %v476 = vpop.permute.xlu0 %475
  %479 = vset.pattern.permute.xlu0 0
  %480 = vperm.xlu0 %479, %v342
  %v481 = vpop.permute.xlu0 %480
  %484 = vset.pattern.permute.xlu0 0
  %485 = vperm.xlu0 %484, %v343
  %v486 = vpop.permute.xlu0 %485
  %489 = vset.pattern.permute.xlu0 0
  %490 = vperm.xlu0 %489, %v344
  %v491 = vpop.permute.xlu0 %490
  %494 = vset.pattern.permute.xlu0 0
  %495 = vperm.xlu0 %494, %v345
  %v496 = vpop.permute.xlu0 %495
  %499 = vset.pattern.permute.xlu0 0
  %500 = vperm.xlu0 %499, %v346
  %v501 = vpop.permute.xlu0 %500
  %504 = vset.pattern.permute.xlu0 0
  %505 = vperm.xlu0 %504, %v347
  %v506 = vpop.permute.xlu0 %505
  %v508 = vsub.f32 %v222, %v431
  %v509 = vsub.f32 %v225, %v436
  %v510 = vsub.f32 %v230, %v441
  %v511 = vsub.f32 %v233, %v446
  %v512 = vsub.f32 %v238, %v451
  %v513 = vsub.f32 %v241, %v456
  %v514 = vsub.f32 %v246, %v461
  %v515 = vsub.f32 %v249, %v466
  %v516 = vsub.f32 %v254, %v471
  %v517 = vsub.f32 %v257, %v476
  %v518 = vsub.f32 %v262, %v481
  %v519 = vsub.f32 %v265, %v486
  %v520 = vsub.f32 %v270, %v491
  %v521 = vsub.f32 %v273, %v496
  %v522 = vsub.f32 %v278, %v501
  %v523 = vsub.f32 %v281, %v506
  %v524 = vmul.f32 %v508, 1.442695
  %v525 = vpow.pop %v524
  %v526 = vmul.f32 %v509, 1.442695
  %v527 = vpow.pop %v526
  %v528 = vmul.f32 %v510, 1.442695
  %v529 = vpow.pop %v528
  %v530 = vmul.f32 %v511, 1.442695
  %v531 = vpow.pop %v530
  %v532 = vmul.f32 %v512, 1.442695
  %v533 = vpow.pop %v532
  %v534 = vmul.f32 %v513, 1.442695
  %v535 = vpow.pop %v534
  %v536 = vmul.f32 %v514, 1.442695
  %v537 = vpow.pop %v536
  %v538 = vmul.f32 %v515, 1.442695
  %v539 = vpow.pop %v538
  %v540 = vmul.f32 %v516, 1.442695
  %v541 = vpow.pop %v540
  %v542 = vmul.f32 %v517, 1.442695
  %v543 = vpow.pop %v542
  %v544 = vmul.f32 %v518, 1.442695
  %v545 = vpow.pop %v544
  %v546 = vmul.f32 %v519, 1.442695
  %v547 = vpow.pop %v546
  %v548 = vmul.f32 %v520, 1.442695
  %v549 = vpow.pop %v548
  %v550 = vmul.f32 %v521, 1.442695
  %v551 = vpow.pop %v550
  %v552 = vmul.f32 %v522, 1.442695
  %v553 = vpow.pop %v552
  %v554 = vmul.f32 %v523, 1.442695
  %v555 = vpow.pop %v554
  %556 = vadd.xlane.f32.xlu0 %v525
  %v557 = vpop.xlane.xlu0 %556
  %558 = vadd.xlane.f32.xlu0 %v527
  %v559 = vpop.xlane.xlu0 %558
  %560 = vadd.xlane.f32.xlu0 %v529
  %v561 = vpop.xlane.xlu0 %560
  %562 = vadd.xlane.f32.xlu0 %v531
  %v563 = vpop.xlane.xlu0 %562
  %564 = vadd.xlane.f32.xlu0 %v533
  %v565 = vpop.xlane.xlu0 %564
  %566 = vadd.xlane.f32.xlu0 %v535
  %v567 = vpop.xlane.xlu0 %566
  %568 = vadd.xlane.f32.xlu0 %v537
  %v569 = vpop.xlane.xlu0 %568
  %570 = vadd.xlane.f32.xlu0 %v539
  %v571 = vpop.xlane.xlu0 %570
  %572 = vadd.xlane.f32.xlu0 %v541
  %v573 = vpop.xlane.xlu0 %572
  %574 = vadd.xlane.f32.xlu0 %v543
  %v575 = vpop.xlane.xlu0 %574
  %576 = vadd.xlane.f32.xlu0 %v545
  %v577 = vpop.xlane.xlu0 %576
  %578 = vadd.xlane.f32.xlu0 %v547
  %v579 = vpop.xlane.xlu0 %578
  %580 = vadd.xlane.f32.xlu0 %v549
  %v581 = vpop.xlane.xlu0 %580
  %582 = vadd.xlane.f32.xlu0 %v551
  %v583 = vpop.xlane.xlu0 %582
  %584 = vadd.xlane.f32.xlu0 %v553
  %v585 = vpop.xlane.xlu0 %584
  %586 = vadd.xlane.f32.xlu0 %v555
  %v587 = vpop.xlane.xlu0 %586
  %v588 = vadd.f32 %v412, %v557
  %v589 = vadd.f32 %v413, %v559
  %v590 = vadd.f32 %v414, %v561
  %v591 = vadd.f32 %v415, %v563
  %v592 = vadd.f32 %v416, %v565
  %v593 = vadd.f32 %v417, %v567
  %v594 = vadd.f32 %v418, %v569
  %v595 = vadd.f32 %v419, %v571
  %v596 = vadd.f32 %v420, %v573
  %v597 = vadd.f32 %v421, %v575
  %v598 = vadd.f32 %v422, %v577
  %v599 = vadd.f32 %v423, %v579
  %v600 = vadd.f32 %v424, %v581
  %v601 = vadd.f32 %v425, %v583
  %v602 = vadd.f32 %v426, %v585
  %v603 = vadd.f32 %v427, %v587
  %vm604 = vcmask 7168
  %605 = vst.msk [vmem:[#allocation3] sm:$0xff] %vm604, %v588
  %606 = vst.msk [vmem:[#allocation3 + $0x8] sm:$0xff] %vm604, %v589
  %607 = vst.msk [vmem:[#allocation3 + $0x10] sm:$0xff] %vm604, %v590
  %608 = vst.msk [vmem:[#allocation3 + $0x18] sm:$0xff] %vm604, %v591
  %609 = vst.msk [vmem:[#allocation3 + $0x20] sm:$0xff] %vm604, %v592
  %610 = vst.msk [vmem:[#allocation3 + $0x28] sm:$0xff] %vm604, %v593
  %611 = vst.msk [vmem:[#allocation3 + $0x30] sm:$0xff] %vm604, %v594
  %612 = vst.msk [vmem:[#allocation3 + $0x38] sm:$0xff] %vm604, %v595
  %613 = vst.msk [vmem:[#allocation3 + $0x40] sm:$0xff] %vm604, %v596
  %614 = vst.msk [vmem:[#allocation3 + $0x48] sm:$0xff] %vm604, %v597
  %615 = vst.msk [vmem:[#allocation3 + $0x50] sm:$0xff] %vm604, %v598
  %616 = vst.msk [vmem:[#allocation3 + $0x58] sm:$0xff] %vm604, %v599
  %617 = vst.msk [vmem:[#allocation3 + $0x60] sm:$0xff] %vm604, %v600
  %618 = vst.msk [vmem:[#allocation3 + $0x68] sm:$0xff] %vm604, %v601
  %619 = vst.msk [vmem:[#allocation3 + $0x70] sm:$0xff] %vm604, %v602
  %620 = vst.msk [vmem:[#allocation3 + $0x78] sm:$0xff] %vm604, %v603
  %621 = vst.msk [vmem:[#allocation2] sm:$0xff] %vm604, %v332
  %622 = vst.msk [vmem:[#allocation2 + $0x8] sm:$0xff] %vm604, %v333
  %623 = vst.msk [vmem:[#allocation2 + $0x10] sm:$0xff] %vm604, %v334
  %624 = vst.msk [vmem:[#allocation2 + $0x18] sm:$0xff] %vm604, %v335
  %625 = vst.msk [vmem:[#allocation2 + $0x20] sm:$0xff] %vm604, %v336
  %626 = vst.msk [vmem:[#allocation2 + $0x28] sm:$0xff] %vm604, %v337
  %627 = vst.msk [vmem:[#allocation2 + $0x30] sm:$0xff] %vm604, %v338
  %628 = vst.msk [vmem:[#allocation2 + $0x38] sm:$0xff] %vm604, %v339
  %629 = vst.msk [vmem:[#allocation2 + $0x40] sm:$0xff] %vm604, %v340
  %630 = vst.msk [vmem:[#allocation2 + $0x48] sm:$0xff] %vm604, %v341
  %631 = vst.msk [vmem:[#allocation2 + $0x50] sm:$0xff] %vm604, %v342
  %632 = vst.msk [vmem:[#allocation2 + $0x58] sm:$0xff] %vm604, %v343
  %633 = vst.msk [vmem:[#allocation2 + $0x60] sm:$0xff] %vm604, %v344
  %634 = vst.msk [vmem:[#allocation2 + $0x68] sm:$0xff] %vm604, %v345
  %635 = vst.msk [vmem:[#allocation2 + $0x70] sm:$0xff] %vm604, %v346
  %636 = vst.msk [vmem:[#allocation2 + $0x78] sm:$0xff] %vm604, %v347
  %s637 = smul.u32 0, 128
  %s638 = sshra.s32 %s637, 7
  %s639 = sand.u32 %s637, 127
  %s640 = scalar_lea.vmem %s3, %s638
  %641 = vst [vmem:[%s640] sm:$0xff] %v222
  %642 = vst [vmem:[%s640 + $0x8] sm:$0xff] %v225
  %643 = vst [vmem:[%s640 + $0x10] sm:$0xff] %v230
  %644 = vst [vmem:[%s640 + $0x18] sm:$0xff] %v233
  %645 = vst [vmem:[%s640 + $0x20] sm:$0xff] %v238
  %646 = vst [vmem:[%s640 + $0x28] sm:$0xff] %v241
  %647 = vst [vmem:[%s640 + $0x30] sm:$0xff] %v246
  %648 = vst [vmem:[%s640 + $0x38] sm:$0xff] %v249
  %649 = vst [vmem:[%s640 + $0x40] sm:$0xff] %v254
  %650 = vst [vmem:[%s640 + $0x48] sm:$0xff] %v257
  %651 = vst [vmem:[%s640 + $0x50] sm:$0xff] %v262
  %652 = vst [vmem:[%s640 + $0x58] sm:$0xff] %v265
  %653 = vst [vmem:[%s640 + $0x60] sm:$0xff] %v270
  %654 = vst [vmem:[%s640 + $0x68] sm:$0xff] %v273
  %655 = vst [vmem:[%s640 + $0x70] sm:$0xff] %v278
  %656 = vst [vmem:[%s640 + $0x78] sm:$0xff] %v281
  // Predicated region
  $region18: #{decoder_rnn_forward.3} parent=0 // pred_check
    %p657 = pneg %p15
  $region19: #{decoder_rnn_forward.3} parent=0 // pred_check_branch
    %659 = sbr.rel (%p657) target = $region21
  $region20: #{decoder_rnn_forward.3} parent=0 // pred_region
    %v660 = vld [vmem:[#allocation2] sm:$0xff]
    %v661 = vld [vmem:[#allocation2 + $0x8] sm:$0xff]
    %v662 = vld [vmem:[#allocation2 + $0x10] sm:$0xff]
    %v663 = vld [vmem:[#allocation2 + $0x18] sm:$0xff]
    %v664 = vld [vmem:[#allocation2 + $0x20] sm:$0xff]
    %v665 = vld [vmem:[#allocation2 + $0x28] sm:$0xff]
    %v666 = vld [vmem:[#allocation2 + $0x30] sm:$0xff]
    %v667 = vld [vmem:[#allocation2 + $0x38] sm:$0xff]
    %v668 = vld [vmem:[#allocation2 + $0x40] sm:$0xff]
    %v669 = vld [vmem:[#allocation2 + $0x48] sm:$0xff]
    %v670 = vld [vmem:[#allocation2 + $0x50] sm:$0xff]
    %v671 = vld [vmem:[#allocation2 + $0x58] sm:$0xff]
    %v672 = vld [vmem:[#allocation2 + $0x60] sm:$0xff]
    %v673 = vld [vmem:[#allocation2 + $0x68] sm:$0xff]
    %v674 = vld [vmem:[#allocation2 + $0x70] sm:$0xff]
    %v675 = vld [vmem:[#allocation2 + $0x78] sm:$0xff]
    %v676 = vld [vmem:[#allocation3] sm:$0xff]
    %v677 = vld [vmem:[#allocation3 + $0x8] sm:$0xff]
    %v678 = vld [vmem:[#allocation3 + $0x10] sm:$0xff]
    %v679 = vld [vmem:[#allocation3 + $0x18] sm:$0xff]
    %v680 = vld [vmem:[#allocation3 + $0x20] sm:$0xff]
    %v681 = vld [vmem:[#allocation3 + $0x28] sm:$0xff]
    %v682 = vld [vmem:[#allocation3 + $0x30] sm:$0xff]
    %v683 = vld [vmem:[#allocation3 + $0x38] sm:$0xff]
    %v684 = vld [vmem:[#allocation3 + $0x40] sm:$0xff]
    %v685 = vld [vmem:[#allocation3 + $0x48] sm:$0xff]
    %v686 = vld [vmem:[#allocation3 + $0x50] sm:$0xff]
    %v687 = vld [vmem:[#allocation3 + $0x58] sm:$0xff]
    %v688 = vld [vmem:[#allocation3 + $0x60] sm:$0xff]
    %v689 = vld [vmem:[#allocation3 + $0x68] sm:$0xff]
    %v690 = vld [vmem:[#allocation3 + $0x70] sm:$0xff]
    %v691 = vld [vmem:[#allocation3 + $0x78] sm:$0xff]
    %v692 = vlog2.pop %v676
    %v693 = vmul.f32 %v692, 0.6931472
    %v694 = vlog2.pop %v677
    %v695 = vmul.f32 %v694, 0.6931472
    %v696 = vlog2.pop %v678
    %v697 = vmul.f32 %v696, 0.6931472
    %v698 = vlog2.pop %v679
    %v699 = vmul.f32 %v698, 0.6931472
    %v700 = vlog2.pop %v680
    %v701 = vmul.f32 %v700, 0.6931472
    %v702 = vlog2.pop %v681
    %v703 = vmul.f32 %v702, 0.6931472
    %v704 = vlog2.pop %v682
    %v705 = vmul.f32 %v704, 0.6931472
    %v706 = vlog2.pop %v683
    %v707 = vmul.f32 %v706, 0.6931472
    %v708 = vlog2.pop %v684
    %v709 = vmul.f32 %v708, 0.6931472
    %v710 = vlog2.pop %v685
    %v711 = vmul.f32 %v710, 0.6931472
    %v712 = vlog2.pop %v686
    %v713 = vmul.f32 %v712, 0.6931472
    %v714 = vlog2.pop %v687
    %v715 = vmul.f32 %v714, 0.6931472
    %v716 = vlog2.pop %v688
    %v717 = vmul.f32 %v716, 0.6931472
    %v718 = vlog2.pop %v689
    %v719 = vmul.f32 %v718, 0.6931472
    %v720 = vlog2.pop %v690
    %v721 = vmul.f32 %v720, 0.6931472
    %v722 = vlog2.pop %v691
    %v723 = vmul.f32 %v722, 0.6931472
    %v724 = vadd.f32 %v660, %v693
    %v725 = vadd.f32 %v661, %v695
    %v726 = vadd.f32 %v662, %v697
    %v727 = vadd.f32 %v663, %v699
    %v728 = vadd.f32 %v664, %v701
    %v729 = vadd.f32 %v665, %v703
    %v730 = vadd.f32 %v666, %v705
    %v731 = vadd.f32 %v667, %v707
    %v732 = vadd.f32 %v668, %v709
    %v733 = vadd.f32 %v669, %v711
    %v734 = vadd.f32 %v670, %v713
    %v735 = vadd.f32 %v671, %v715
    %v736 = vadd.f32 %v672, %v717
    %v737 = vadd.f32 %v673, %v719
    %v738 = vadd.f32 %v674, %v721
    %v739 = vadd.f32 %v675, %v723
    %v740 = vld [vmem:[%s3] sm:$0xff]
    %v741 = vld [vmem:[%s3 + $0x8] sm:$0xff]
    %v742 = vld [vmem:[%s3 + $0x10] sm:$0xff]
    %v743 = vld [vmem:[%s3 + $0x18] sm:$0xff]
    %v744 = vld [vmem:[%s3 + $0x20] sm:$0xff]
    %v745 = vld [vmem:[%s3 + $0x28] sm:$0xff]
    %v746 = vld [vmem:[%s3 + $0x30] sm:$0xff]
    %v747 = vld [vmem:[%s3 + $0x38] sm:$0xff]
    %v748 = vld [vmem:[%s3 + $0x40] sm:$0xff]
    %v749 = vld [vmem:[%s3 + $0x48] sm:$0xff]
    %v750 = vld [vmem:[%s3 + $0x50] sm:$0xff]
    %v751 = vld [vmem:[%s3 + $0x58] sm:$0xff]
    %v752 = vld [vmem:[%s3 + $0x60] sm:$0xff]
    %v753 = vld [vmem:[%s3 + $0x68] sm:$0xff]
    %v754 = vld [vmem:[%s3 + $0x70] sm:$0xff]
    %v755 = vld [vmem:[%s3 + $0x78] sm:$0xff]
    %757 = vset.pattern.permute.xlu0 0
    %758 = vperm.xlu0 %757, %v724
    %v759 = vpop.permute.xlu0 %758
    %762 = vset.pattern.permute.xlu0 0
    %763 = vperm.xlu0 %762, %v725
    %v764 = vpop.permute.xlu0 %763
    %767 = vset.pattern.permute.xlu0 0
    %768 = vperm.xlu0 %767, %v726
    %v769 = vpop.permute.xlu0 %768
    %772 = vset.pattern.permute.xlu0 0
    %773 = vperm.xlu0 %772, %v727
    %v774 = vpop.permute.xlu0 %773
    %777 = vset.pattern.permute.xlu0 0
    %778 = vperm.xlu0 %777, %v728
    %v779 = vpop.permute.xlu0 %778
    %782 = vset.pattern.permute.xlu0 0
    %783 = vperm.xlu0 %782, %v729
    %v784 = vpop.permute.xlu0 %783
    %787 = vset.pattern.permute.xlu0 0
    %788 = vperm.xlu0 %787, %v730
    %v789 = vpop.permute.xlu0 %788
    %792 = vset.pattern.permute.xlu0 0
    %793 = vperm.xlu0 %792, %v731
    %v794 = vpop.permute.xlu0 %793
    %797 = vset.pattern.permute.xlu0 0
    %798 = vperm.xlu0 %797, %v732
    %v799 = vpop.permute.xlu0 %798
    %802 = vset.pattern.permute.xlu0 0
    %803 = vperm.xlu0 %802, %v733
    %v804 = vpop.permute.xlu0 %803
    %807 = vset.pattern.permute.xlu0 0
    %808 = vperm.xlu0 %807, %v734
    %v809 = vpop.permute.xlu0 %808
    %812 = vset.pattern.permute.xlu0 0
    %813 = vperm.xlu0 %812, %v735
    %v814 = vpop.permute.xlu0 %813
    %817 = vset.pattern.permute.xlu0 0
    %818 = vperm.xlu0 %817, %v736
    %v819 = vpop.permute.xlu0 %818
    %822 = vset.pattern.permute.xlu0 0
    %823 = vperm.xlu0 %822, %v737
    %v824 = vpop.permute.xlu0 %823
    %827 = vset.pattern.permute.xlu0 0
    %828 = vperm.xlu0 %827, %v738
    %v829 = vpop.permute.xlu0 %828
    %832 = vset.pattern.permute.xlu0 0
    %833 = vperm.xlu0 %832, %v739
    %v834 = vpop.permute.xlu0 %833
    %v836 = vsub.f32 %v740, %v759
    %v837 = vsub.f32 %v741, %v764
    %v838 = vsub.f32 %v742, %v769
    %v839 = vsub.f32 %v743, %v774
    %v840 = vsub.f32 %v744, %v779
    %v841 = vsub.f32 %v745, %v784
    %v842 = vsub.f32 %v746, %v789
    %v843 = vsub.f32 %v747, %v794
    %v844 = vsub.f32 %v748, %v799
    %v845 = vsub.f32 %v749, %v804
    %v846 = vsub.f32 %v750, %v809
    %v847 = vsub.f32 %v751, %v814
    %v848 = vsub.f32 %v752, %v819
    %v849 = vsub.f32 %v753, %v824
    %v850 = vsub.f32 %v754, %v829
    %v851 = vsub.f32 %v755, %v834
    %852 = vst [vmem:[%s3] sm:$0xff] %v836
    %853 = vst [vmem:[%s3 + $0x8] sm:$0xff] %v837
    %854 = vst [vmem:[%s3 + $0x10] sm:$0xff] %v838
    %855 = vst [vmem:[%s3 + $0x18] sm:$0xff] %v839
    %856 = vst [vmem:[%s3 + $0x20] sm:$0xff] %v840
    %857 = vst [vmem:[%s3 + $0x28] sm:$0xff] %v841
    %858 = vst [vmem:[%s3 + $0x30] sm:$0xff] %v842
    %859 = vst [vmem:[%s3 + $0x38] sm:$0xff] %v843
    %860 = vst [vmem:[%s3 + $0x40] sm:$0xff] %v844
    %861 = vst [vmem:[%s3 + $0x48] sm:$0xff] %v845
    %862 = vst [vmem:[%s3 + $0x50] sm:$0xff] %v846
    %863 = vst [vmem:[%s3 + $0x58] sm:$0xff] %v847
    %864 = vst [vmem:[%s3 + $0x60] sm:$0xff] %v848
    %865 = vst [vmem:[%s3 + $0x68] sm:$0xff] %v849
    %866 = vst [vmem:[%s3 + $0x70] sm:$0xff] %v850
    %867 = vst [vmem:[%s3 + $0x78] sm:$0xff] %v851
  $region21: #{decoder_rnn_forward.3} parent=0 // pred_fallthru
    _
  // Predicated region
  $region22: #{decoder_rnn_forward.3} parent=0 // pred_check
    _
  $region23: #{decoder_rnn_forward.3} parent=0 // pred_check_branch
    %869 = sbr.rel (0) target = $region25
  $region24: #{decoder_rnn_forward.3} parent=0 // pred_region
    _
  $region25: #{decoder_rnn_forward.3} parent=0 // pred_fallthru
    _
  // Predicated region
  $region26: #{decoder_rnn_forward.3} parent=0 // pred_check
    _
  $region27: #{decoder_rnn_forward.3} parent=0 // pred_check_branch
    %871 = sbr.rel (0) target = $region29
  $region28: #{decoder_rnn_forward.3} parent=0 // pred_region
    _
  $region29: #{decoder_rnn_forward.3} parent=0 // pred_fallthru
    _

// kernel: decoder_rnn_forward.2
$region0: #{decoder_rnn_forward.2}
  #allocation0 [shape = 'u32[]', space=smem, size = 0x4, offset = 0x4, fixed_abs, tag = 'smem constant byte address 0x4 - core index']
  #allocation1 [shape = 'u32[144,128]{1,0:T(1,128)}', space=vmem, size = 0x12000, scoped, tag = 'internal scratch']
  #allocation2 [shape = 'bf16[8,128]{1,0:T(8,128)(2,1)}', space=vmem, size = 0x800, scoped, tag = 'scratch operand']
  #allocation3 [shape = 'f32[8,128]{1,0:T(8,128)}', space=vmem, size = 0x1000, scoped, tag = 'scratch operand']
  %s0 = inlined_call_operand.vmem [shape: bf16[8,16,512], index: 0, kind: input, shape index: {}]
  %s1 = inlined_call_operand.vmem [shape: bf16[128,512], index: 1, kind: input, shape index: {}]
  %s2 = inlined_call_operand.vmem [shape: bf16[8,16,128], index: 2, kind: output, shape index: {}]
  %s3 = sld [smem:[#allocation0]]
  $region22: #{decoder_rnn_forward.2} parent=0
    _
  %s5 = ssub.s32 1, %s3
  %s6 = scalar_select 0, %s5, %s3
  // Predicated region
  $region2: #{decoder_rnn_forward.2} parent=0 // pred_check
    _
  $region3: #{decoder_rnn_forward.2} parent=0 // pred_check_branch
    %8 = sbr.rel (0) target = $region5
  $region4: #{decoder_rnn_forward.2} parent=0 // pred_region
    _
  $region5: #{decoder_rnn_forward.2} parent=0 // pred_fallthru
    _
  // Predicated region
  $region6: #{decoder_rnn_forward.2} parent=0 // pred_check
    _
  $region7: #{decoder_rnn_forward.2} parent=0 // pred_check_branch
    %10 = sbr.rel (0) target = $region9
  $region8: #{decoder_rnn_forward.2} parent=0 // pred_region
    _
  $region9: #{decoder_rnn_forward.2} parent=0 // pred_fallthru
    _
  %p12 = scmp.eq.s32.totalorder 0, 0
  // Predicated region
  $region10: #{decoder_rnn_forward.2} parent=0 // pred_check
    %p13 = pneg %p12
  $region11: #{decoder_rnn_forward.2} parent=0 // pred_check_branch
    %15 = sbr.rel (%p13) target = $region13
  $region12: #{decoder_rnn_forward.2} parent=0 // pred_region
    %16 = vst [vmem:[#allocation2] sm:$0xf] 0
    %17 = vst [vmem:[#allocation3] sm:$0xff] 0.0
  $region13: #{decoder_rnn_forward.2} parent=0 // pred_fallthru
    _
  %v18 = vld [vmem:[%s0] sm:$0x11]
  %v19 = vld [vmem:[%s0 + $0x8] sm:$0x11]
  %v20 = vld [vmem:[%s0 + $0x20] sm:$0x11]
  %v21 = vld [vmem:[%s0 + $0x28] sm:$0x11]
  %v22 = vld [vmem:[%s0 + $0x40] sm:$0x11]
  %v23 = vld [vmem:[%s0 + $0x48] sm:$0x11]
  %v24 = vld [vmem:[%s0 + $0x60] sm:$0x11]
  %v25 = vld [vmem:[%s0 + $0x68] sm:$0x11]
  %v26 = vld [vmem:[%s0 + $0x80] sm:$0x11]
  %v27 = vld [vmem:[%s0 + $0x88] sm:$0x11]
  %v28 = vld [vmem:[%s0 + $0xa0] sm:$0x11]
  %v29 = vld [vmem:[%s0 + $0xa8] sm:$0x11]
  %v30 = vld [vmem:[%s0 + $0xc0] sm:$0x11]
  %v31 = vld [vmem:[%s0 + $0xc8] sm:$0x11]
  %v32 = vld [vmem:[%s0 + $0xe0] sm:$0x11]
  %v33 = vld [vmem:[%s0 + $0xe8] sm:$0x11]
  %v34 = vunpack.c.l.bf16 %v18
  %v35 = vunpack.c.h.bf16 %v18
  %v36 = vunpack.c.l.bf16 %v19
  %v37 = vunpack.c.h.bf16 %v19
  %v38 = vunpack.c.l.bf16 %v20
  %v39 = vunpack.c.h.bf16 %v20
  %v40 = vunpack.c.l.bf16 %v21
  %v41 = vunpack.c.h.bf16 %v21
  %v42 = vunpack.c.l.bf16 %v22
  %v43 = vunpack.c.h.bf16 %v22
  %v44 = vunpack.c.l.bf16 %v23
  %v45 = vunpack.c.h.bf16 %v23
  %v46 = vunpack.c.l.bf16 %v24
  %v47 = vunpack.c.h.bf16 %v24
  %v48 = vunpack.c.l.bf16 %v25
  %v49 = vunpack.c.h.bf16 %v25
  %v50 = vunpack.c.l.bf16 %v26
  %v51 = vunpack.c.h.bf16 %v26
  %v52 = vunpack.c.l.bf16 %v27
  %v53 = vunpack.c.h.bf16 %v27
  %v54 = vunpack.c.l.bf16 %v28
  %v55 = vunpack.c.h.bf16 %v28
  %v56 = vunpack.c.l.bf16 %v29
  %v57 = vunpack.c.h.bf16 %v29
  %v58 = vunpack.c.l.bf16 %v30
  %v59 = vunpack.c.h.bf16 %v30
  %v60 = vunpack.c.l.bf16 %v31
  %v61 = vunpack.c.h.bf16 %v31
  %v62 = vunpack.c.l.bf16 %v32
  %v63 = vunpack.c.h.bf16 %v32
  %v64 = vunpack.c.l.bf16 %v33
  %v65 = vunpack.c.h.bf16 %v33
  %v66 = vld [vmem:[#allocation2] sm:$0xf]
  %v67 = vld [vmem:[%s1] sm:$0xff]
  %v68 = vld [vmem:[%s1 + $0x8] sm:$0xff]
  %v69 = vld [vmem:[%s1 + $0x10] sm:$0xff]
  %v70 = vld [vmem:[%s1 + $0x18] sm:$0xff]
  %v71 = vld [vmem:[%s1 + $0x20] sm:$0xff]
  %v72 = vld [vmem:[%s1 + $0x28] sm:$0xff]
  %v73 = vld [vmem:[%s1 + $0x30] sm:$0xff]
  %v74 = vld [vmem:[%s1 + $0x38] sm:$0xff]
  %v75 = vld [vmem:[%s1 + $0x40] sm:$0xff]
  %v76 = vld [vmem:[%s1 + $0x48] sm:$0xff]
  %v77 = vld [vmem:[%s1 + $0x50] sm:$0xff]
  %v78 = vld [vmem:[%s1 + $0x58] sm:$0xff]
  %v79 = vld [vmem:[%s1 + $0x60] sm:$0xff]
  %v80 = vld [vmem:[%s1 + $0x68] sm:$0xff]
  %v81 = vld [vmem:[%s1 + $0x70] sm:$0xff]
  %v82 = vld [vmem:[%s1 + $0x78] sm:$0xff]
  %v83 = vld [vmem:[%s1 + $0x80] sm:$0xff]
  %v84 = vld [vmem:[%s1 + $0x88] sm:$0xff]
  %v85 = vld [vmem:[%s1 + $0x90] sm:$0xff]
  %v86 = vld [vmem:[%s1 + $0x98] sm:$0xff]
  %v87 = vld [vmem:[%s1 + $0xa0] sm:$0xff]
  %v88 = vld [vmem:[%s1 + $0xa8] sm:$0xff]
  %v89 = vld [vmem:[%s1 + $0xb0] sm:$0xff]
  %v90 = vld [vmem:[%s1 + $0xb8] sm:$0xff]
  %v91 = vld [vmem:[%s1 + $0xc0] sm:$0xff]
  %v92 = vld [vmem:[%s1 + $0xc8] sm:$0xff]
  %v93 = vld [vmem:[%s1 + $0xd0] sm:$0xff]
  %v94 = vld [vmem:[%s1 + $0xd8] sm:$0xff]
  %v95 = vld [vmem:[%s1 + $0xe0] sm:$0xff]
  %v96 = vld [vmem:[%s1 + $0xe8] sm:$0xff]
  %v97 = vld [vmem:[%s1 + $0xf0] sm:$0xff]
  %v98 = vld [vmem:[%s1 + $0xf8] sm:$0xff]
  %v131 = vunpack.c.l.b16 %v67
  %v132 = vunpack.c.h.b16 %v67
  %v133 = vunpack.c.l.b16 %v68
  %v134 = vunpack.c.h.b16 %v68
  %v135 = vunpack.c.l.b16 %v69
  %v136 = vunpack.c.h.b16 %v69
  %v137 = vunpack.c.l.b16 %v70
  %v138 = vunpack.c.h.b16 %v70
  %v139 = vunpack.c.l.b16 %v71
  %v140 = vunpack.c.h.b16 %v71
  %v141 = vunpack.c.l.b16 %v72
  %v142 = vunpack.c.h.b16 %v72
  %v143 = vunpack.c.l.b16 %v73
  %v144 = vunpack.c.h.b16 %v73
  %v145 = vunpack.c.l.b16 %v74
  %v146 = vunpack.c.h.b16 %v74
  %v147 = vunpack.c.l.b16 %v75
  %v148 = vunpack.c.h.b16 %v75
  %v149 = vunpack.c.l.b16 %v76
  %v150 = vunpack.c.h.b16 %v76
  %v151 = vunpack.c.l.b16 %v77
  %v152 = vunpack.c.h.b16 %v77
  %v153 = vunpack.c.l.b16 %v78
  %v154 = vunpack.c.h.b16 %v78
  %v155 = vunpack.c.l.b16 %v79
  %v156 = vunpack.c.h.b16 %v79
  %v157 = vunpack.c.l.b16 %v80
  %v158 = vunpack.c.h.b16 %v80
  %v159 = vunpack.c.l.b16 %v81
  %v160 = vunpack.c.h.b16 %v81
  %v161 = vunpack.c.l.b16 %v82
  %v162 = vunpack.c.h.b16 %v82
  %v163 = vunpack.c.l.b16 %v83
  %v164 = vunpack.c.h.b16 %v83
  %v165 = vunpack.c.l.b16 %v84
  %v166 = vunpack.c.h.b16 %v84
  %v167 = vunpack.c.l.b16 %v85
  %v168 = vunpack.c.h.b16 %v85
  %v169 = vunpack.c.l.b16 %v86
  %v170 = vunpack.c.h.b16 %v86
  %v171 = vunpack.c.l.b16 %v87
  %v172 = vunpack.c.h.b16 %v87
  %v173 = vunpack.c.l.b16 %v88
  %v174 = vunpack.c.h.b16 %v88
  %v175 = vunpack.c.l.b16 %v89
  %v176 = vunpack.c.h.b16 %v89
  %v177 = vunpack.c.l.b16 %v90
  %v178 = vunpack.c.h.b16 %v90
  %v179 = vunpack.c.l.b16 %v91
  %v180 = vunpack.c.h.b16 %v91
  %v181 = vunpack.c.l.b16 %v92
  %v182 = vunpack.c.h.b16 %v92
  %v183 = vunpack.c.l.b16 %v93
  %v184 = vunpack.c.h.b16 %v93
  %v185 = vunpack.c.l.b16 %v94
  %v186 = vunpack.c.h.b16 %v94
  %v187 = vunpack.c.l.b16 %v95
  %v188 = vunpack.c.h.b16 %v95
  %v189 = vunpack.c.l.b16 %v96
  %v190 = vunpack.c.h.b16 %v96
  %v191 = vunpack.c.l.b16 %v97
  %v192 = vunpack.c.h.b16 %v97
  %v193 = vunpack.c.l.b16 %v98
  %v194 = vunpack.c.h.b16 %v98
  %v195 = vpack.c.b16 %v135, %v131
  %v196 = vpack.c.b16 %v136, %v132
  %v197 = vpack.c.b16 %v137, %v133
  %v198 = vpack.c.b16 %v138, %v134
  %v199 = vpack.c.b16 %v143, %v139
  %v200 = vpack.c.b16 %v144, %v140
  %v201 = vpack.c.b16 %v145, %v141
  %v202 = vpack.c.b16 %v146, %v142
  %v203 = vpack.c.b16 %v151, %v147
  %v204 = vpack.c.b16 %v152, %v148
  %v205 = vpack.c.b16 %v153, %v149
  %v206 = vpack.c.b16 %v154, %v150
  %v207 = vpack.c.b16 %v159, %v155
  %v208 = vpack.c.b16 %v160, %v156
  %v209 = vpack.c.b16 %v161, %v157
  %v210 = vpack.c.b16 %v162, %v158
  %v211 = vpack.c.b16 %v167, %v163
  %v212 = vpack.c.b16 %v168, %v164
  %v213 = vpack.c.b16 %v169, %v165
  %v214 = vpack.c.b16 %v170, %v166
  %v215 = vpack.c.b16 %v175, %v171
  %v216 = vpack.c.b16 %v176, %v172
  %v217 = vpack.c.b16 %v177, %v173
  %v218 = vpack.c.b16 %v178, %v174
  %v219 = vpack.c.b16 %v183, %v179
  %v220 = vpack.c.b16 %v184, %v180
  %v221 = vpack.c.b16 %v185, %v181
  %v222 = vpack.c.b16 %v186, %v182
  %v223 = vpack.c.b16 %v191, %v187
  %v224 = vpack.c.b16 %v192, %v188
  %v225 = vpack.c.b16 %v193, %v189
  %v226 = vpack.c.b16 %v194, %v190
  %259 = vmatprep.subr.bf16.mxu0 %v224
  %260 = vmatpush1.bf16.msra.mxu0 %v223
  %261 = vmatprep.subr.bf16.mxu0 %v220
  %262 = vmatpush1.bf16.msra.mxu0 %v219
  %263 = vmatprep.subr.bf16.mxu0 %v216
  %264 = vmatpush1.bf16.msra.mxu0 %v215
  %265 = vmatprep.subr.bf16.mxu0 %v212
  %266 = vmatpush1.bf16.msra.mxu0 %v211
  %267 = vmatprep.subr.bf16.mxu0 %v208
  %268 = vmatpush1.bf16.msra.mxu0 %v207
  %269 = vmatprep.subr.bf16.mxu0 %v204
  %270 = vmatpush1.bf16.msra.mxu0 %v203
  %271 = vmatprep.subr.bf16.mxu0 %v200
  %272 = vmatpush1.bf16.msra.mxu0 %v199
  %273 = vmatprep.subr.bf16.mxu0 %v196
  %274 = vmatpush1.bf16.msra.mxu0 %v195
  %275 = vmatprep.subr.bf16.mxu0 0
  %276 = vmatpush2.bf16.msra.mxu0 0
  %277 = vmatprep.subr.bf16.mxu0 0
  %278 = vmatpush2.bf16.msra.mxu0 0
  %279 = vmatprep.subr.bf16.mxu0 0
  %280 = vmatpush2.bf16.msra.mxu0 0
  %281 = vmatprep.subr.bf16.mxu0 0
  %282 = vmatpush2.bf16.msra.mxu0 0
  %283 = vmatprep.subr.bf16.mxu0 0
  %284 = vmatpush2.bf16.msra.mxu0 0
  %285 = vmatprep.subr.bf16.mxu0 0
  %286 = vmatpush2.bf16.msra.mxu0 0
  %287 = vmatprep.subr.bf16.mxu0 0
  %288 = vmatpush2.bf16.msra.mxu0 0
  %289 = vmatprep.subr.bf16.mxu0 0
  %290 = vmatpush2.bf16.msra.mxu0 0
  %291 = vmatprep.mubr.bf16.mxu0 0
  %292 = vmatmul.mubr.bf16.gmra.mxu0 %v66
  %v293 = vpop.f32.mrf.mxu0
  %v294 = vadd.f32 0.0, %v293
  %v295 = vpop.f32.mrf.mxu0
  %v296 = vadd.f32 0.0, %v295
  %v297 = vpop.f32.mrf.mxu0
  %v298 = vpop.f32.mrf.mxu0
  %299 = vdwg.mxu0
  %300 = vmatprep.subr.bf16.mxu0 %v226
  %301 = vmatpush1.bf16.msra.mxu0 %v225
  %302 = vmatprep.subr.bf16.mxu0 %v222
  %303 = vmatpush1.bf16.msra.mxu0 %v221
  %304 = vmatprep.subr.bf16.mxu0 %v218
  %305 = vmatpush1.bf16.msra.mxu0 %v217
  %306 = vmatprep.subr.bf16.mxu0 %v214
  %307 = vmatpush1.bf16.msra.mxu0 %v213
  %308 = vmatprep.subr.bf16.mxu0 %v210
  %309 = vmatpush1.bf16.msra.mxu0 %v209
  %310 = vmatprep.subr.bf16.mxu0 %v206
  %311 = vmatpush1.bf16.msra.mxu0 %v205
  %312 = vmatprep.subr.bf16.mxu0 %v202
  %313 = vmatpush1.bf16.msra.mxu0 %v201
  %314 = vmatprep.subr.bf16.mxu0 %v198
  %315 = vmatpush1.bf16.msra.mxu0 %v197
  %316 = vmatprep.subr.bf16.mxu0 0
  %317 = vmatpush2.bf16.msra.mxu0 0
  %318 = vmatprep.subr.bf16.mxu0 0
  %319 = vmatpush2.bf16.msra.mxu0 0
  %320 = vmatprep.subr.bf16.mxu0 0
  %321 = vmatpush2.bf16.msra.mxu0 0
  %322 = vmatprep.subr.bf16.mxu0 0
  %323 = vmatpush2.bf16.msra.mxu0 0
  %324 = vmatprep.subr.bf16.mxu0 0
  %325 = vmatpush2.bf16.msra.mxu0 0
  %326 = vmatprep.subr.bf16.mxu0 0
  %327 = vmatpush2.bf16.msra.mxu0 0
  %328 = vmatprep.subr.bf16.mxu0 0
  %329 = vmatpush2.bf16.msra.mxu0 0
  %330 = vmatprep.subr.bf16.mxu0 0
  %331 = vmatpush2.bf16.msra.mxu0 0
  %332 = vmatprep.mubr.bf16.mxu0 0
  %333 = vmatmul.mubr.bf16.gmra.mxu0 %v66
  %v334 = vpop.f32.mrf.mxu0
  %v335 = vadd.f32 0.0, %v334
  %v336 = vpop.f32.mrf.mxu0
  %v337 = vadd.f32 0.0, %v336
  %v338 = vpop.f32.mrf.mxu0
  %v339 = vpop.f32.mrf.mxu0
  %340 = vdwg.mxu0
  %v345 = vrot.slane %v294, 1
  %v346 = vrot.slane %v296, 1
  %v347 = vrot.slane %v335, 1
  %v348 = vrot.slane %v337, 1
  %v349 = vrot.slane %v294, 2
  %v350 = vrot.slane %v296, 2
  %v351 = vrot.slane %v335, 2
  %v352 = vrot.slane %v337, 2
  %v353 = vrot.slane %v294, 3
  %v354 = vrot.slane %v296, 3
  %v355 = vrot.slane %v335, 3
  %v356 = vrot.slane %v337, 3
  %v357 = vrot.slane %v294, 4
  %v358 = vrot.slane %v296, 4
  %v359 = vrot.slane %v335, 4
  %v360 = vrot.slane %v337, 4
  %v361 = vrot.slane %v294, 5
  %v362 = vrot.slane %v296, 5
  %v363 = vrot.slane %v335, 5
  %v364 = vrot.slane %v337, 5
  %v365 = vrot.slane %v294, 6
  %v366 = vrot.slane %v296, 6
  %v367 = vrot.slane %v335, 6
  %v368 = vrot.slane %v337, 6
  %v369 = vrot.slane %v294, 7
  %v370 = vrot.slane %v296, 7
  %v371 = vrot.slane %v335, 7
  %v372 = vrot.slane %v337, 7
  %v405 = vadd.f32 %v34, %v294
  %v406 = vadd.f32 %v35, %v296
  %v407 = vadd.f32 %v36, %v335
  %v408 = vadd.f32 %v37, %v337
  %v409 = vadd.f32 %v38, %v345
  %v410 = vadd.f32 %v39, %v346
  %v411 = vadd.f32 %v40, %v347
  %v412 = vadd.f32 %v41, %v348
  %v413 = vadd.f32 %v42, %v349
  %v414 = vadd.f32 %v43, %v350
  %v415 = vadd.f32 %v44, %v351
  %v416 = vadd.f32 %v45, %v352
  %v417 = vadd.f32 %v46, %v353
  %v418 = vadd.f32 %v47, %v354
  %v419 = vadd.f32 %v48, %v355
  %v420 = vadd.f32 %v49, %v356
  %v421 = vadd.f32 %v50, %v357
  %v422 = vadd.f32 %v51, %v358
  %v423 = vadd.f32 %v52, %v359
  %v424 = vadd.f32 %v53, %v360
  %v425 = vadd.f32 %v54, %v361
  %v426 = vadd.f32 %v55, %v362
  %v427 = vadd.f32 %v56, %v363
  %v428 = vadd.f32 %v57, %v364
  %v429 = vadd.f32 %v58, %v365
  %v430 = vadd.f32 %v59, %v366
  %v431 = vadd.f32 %v60, %v367
  %v432 = vadd.f32 %v61, %v368
  %v433 = vadd.f32 %v62, %v369
  %v434 = vadd.f32 %v63, %v370
  %v435 = vadd.f32 %v64, %v371
  %v436 = vadd.f32 %v65, %v372
  %v437 = vxor.u32 %v405, 2147483648
  %v438 = vxor.u32 %v406, 2147483648
  %v439 = vxor.u32 %v407, 2147483648
  %v440 = vxor.u32 %v409, 2147483648
  %v441 = vxor.u32 %v410, 2147483648
  %v442 = vxor.u32 %v411, 2147483648
  %v443 = vxor.u32 %v413, 2147483648
  %v444 = vxor.u32 %v414, 2147483648
  %v445 = vxor.u32 %v415, 2147483648
  %v446 = vxor.u32 %v417, 2147483648
  %v447 = vxor.u32 %v418, 2147483648
  %v448 = vxor.u32 %v419, 2147483648
  %v449 = vxor.u32 %v421, 2147483648
  %v450 = vxor.u32 %v422, 2147483648
  %v451 = vxor.u32 %v423, 2147483648
  %v452 = vxor.u32 %v425, 2147483648
  %v453 = vxor.u32 %v426, 2147483648
  %v454 = vxor.u32 %v427, 2147483648
  %v455 = vxor.u32 %v429, 2147483648
  %v456 = vxor.u32 %v430, 2147483648
  %v457 = vxor.u32 %v431, 2147483648
  %v458 = vxor.u32 %v433, 2147483648
  %v459 = vxor.u32 %v434, 2147483648
  %v460 = vxor.u32 %v435, 2147483648
  %v461 = vmul.f32 %v437, 1.442695
  %v462 = vpow.pop %v461
  %v463 = vmul.f32 %v438, 1.442695
  %v464 = vpow.pop %v463
  %v465 = vmul.f32 %v439, 1.442695
  %v466 = vpow.pop %v465
  %v467 = vmul.f32 %v440, 1.442695
  %v468 = vpow.pop %v467
  %v469 = vmul.f32 %v441, 1.442695
  %v470 = vpow.pop %v469
  %v471 = vmul.f32 %v442, 1.442695
  %v472 = vpow.pop %v471
  %v473 = vmul.f32 %v443, 1.442695
  %v474 = vpow.pop %v473
  %v475 = vmul.f32 %v444, 1.442695
  %v476 = vpow.pop %v475
  %v477 = vmul.f32 %v445, 1.442695
  %v478 = vpow.pop %v477
  %v479 = vmul.f32 %v446, 1.442695
  %v480 = vpow.pop %v479
  %v481 = vmul.f32 %v447, 1.442695
  %v482 = vpow.pop %v481
  %v483 = vmul.f32 %v448, 1.442695
  %v484 = vpow.pop %v483
  %v485 = vmul.f32 %v449, 1.442695
  %v486 = vpow.pop %v485
  %v487 = vmul.f32 %v450, 1.442695
  %v488 = vpow.pop %v487
  %v489 = vmul.f32 %v451, 1.442695
  %v490 = vpow.pop %v489
  %v491 = vmul.f32 %v452, 1.442695
  %v492 = vpow.pop %v491
  %v493 = vmul.f32 %v453, 1.442695
  %v494 = vpow.pop %v493
  %v495 = vmul.f32 %v454, 1.442695
  %v496 = vpow.pop %v495
  %v497 = vmul.f32 %v455, 1.442695
  %v498 = vpow.pop %v497
  %v499 = vmul.f32 %v456, 1.442695
  %v500 = vpow.pop %v499
  %v501 = vmul.f32 %v457, 1.442695
  %v502 = vpow.pop %v501
  %v503 = vmul.f32 %v458, 1.442695
  %v504 = vpow.pop %v503
  %v505 = vmul.f32 %v459, 1.442695
  %v506 = vpow.pop %v505
  %v507 = vmul.f32 %v460, 1.442695
  %v508 = vpow.pop %v507
  %v509 = vadd.f32 %v462, 1.0
  %v510 = vadd.f32 %v464, 1.0
  %v511 = vadd.f32 %v466, 1.0
  %v512 = vadd.f32 %v468, 1.0
  %v513 = vadd.f32 %v470, 1.0
  %v514 = vadd.f32 %v472, 1.0
  %v515 = vadd.f32 %v474, 1.0
  %v516 = vadd.f32 %v476, 1.0
  %v517 = vadd.f32 %v478, 1.0
  %v518 = vadd.f32 %v480, 1.0
  %v519 = vadd.f32 %v482, 1.0
  %v520 = vadd.f32 %v484, 1.0
  %v521 = vadd.f32 %v486, 1.0
  %v522 = vadd.f32 %v488, 1.0
  %v523 = vadd.f32 %v490, 1.0
  %v524 = vadd.f32 %v492, 1.0
  %v525 = vadd.f32 %v494, 1.0
  %v526 = vadd.f32 %v496, 1.0
  %v527 = vadd.f32 %v498, 1.0
  %v528 = vadd.f32 %v500, 1.0
  %v529 = vadd.f32 %v502, 1.0
  %v530 = vadd.f32 %v504, 1.0
  %v531 = vadd.f32 %v506, 1.0
  %v532 = vadd.f32 %v508, 1.0
  %v533 = vrcp.pop %v509
  %v534 = vmul.f32 1.0, %v533
  %v535 = vrcp.pop %v510
  %v536 = vmul.f32 1.0, %v535
  %v537 = vrcp.pop %v511
  %v538 = vmul.f32 1.0, %v537
  %v539 = vrcp.pop %v512
  %v540 = vmul.f32 1.0, %v539
  %v541 = vrcp.pop %v513
  %v542 = vmul.f32 1.0, %v541
  %v543 = vrcp.pop %v514
  %v544 = vmul.f32 1.0, %v543
  %v545 = vrcp.pop %v515
  %v546 = vmul.f32 1.0, %v545
  %v547 = vrcp.pop %v516
  %v548 = vmul.f32 1.0, %v547
  %v549 = vrcp.pop %v517
  %v550 = vmul.f32 1.0, %v549
  %v551 = vrcp.pop %v518
  %v552 = vmul.f32 1.0, %v551
  %v553 = vrcp.pop %v519
  %v554 = vmul.f32 1.0, %v553
  %v555 = vrcp.pop %v520
  %v556 = vmul.f32 1.0, %v555
  %v557 = vrcp.pop %v521
  %v558 = vmul.f32 1.0, %v557
  %v559 = vrcp.pop %v522
  %v560 = vmul.f32 1.0, %v559
  %v561 = vrcp.pop %v523
  %v562 = vmul.f32 1.0, %v561
  %v563 = vrcp.pop %v524
  %v564 = vmul.f32 1.0, %v563
  %v565 = vrcp.pop %v525
  %v566 = vmul.f32 1.0, %v565
  %v567 = vrcp.pop %v526
  %v568 = vmul.f32 1.0, %v567
  %v569 = vrcp.pop %v527
  %v570 = vmul.f32 1.0, %v569
  %v571 = vrcp.pop %v528
  %v572 = vmul.f32 1.0, %v571
  %v573 = vrcp.pop %v529
  %v574 = vmul.f32 1.0, %v573
  %v575 = vrcp.pop %v530
  %v576 = vmul.f32 1.0, %v575
  %v577 = vrcp.pop %v531
  %v578 = vmul.f32 1.0, %v577
  %v579 = vrcp.pop %v532
  %v580 = vmul.f32 1.0, %v579
  %v581 = vtanh.pop %v408
  %v582 = vtanh.pop %v412
  %v583 = vtanh.pop %v416
  %v584 = vtanh.pop %v420
  %v585 = vtanh.pop %v424
  %v586 = vtanh.pop %v428
  %v587 = vtanh.pop %v432
  %v588 = vtanh.pop %v436
  %v589 = vld [vmem:[#allocation3] sm:$0xff]
  %v591 = vrot.slane %v589, 1
  %v592 = vrot.slane %v589, 2
  %v593 = vrot.slane %v589, 3
  %v594 = vrot.slane %v589, 4
  %v595 = vrot.slane %v589, 5
  %v596 = vrot.slane %v589, 6
  %v597 = vrot.slane %v589, 7
  %v606 = vmul.f32 %v536, %v589
  %v607 = vmul.f32 %v542, %v591
  %v608 = vmul.f32 %v548, %v592
  %v609 = vmul.f32 %v554, %v593
  %v610 = vmul.f32 %v560, %v594
  %v611 = vmul.f32 %v566, %v595
  %v612 = vmul.f32 %v572, %v596
  %v613 = vmul.f32 %v578, %v597
  %v614 = vmul.f32 %v534, %v581
  %v615 = vmul.f32 %v540, %v582
  %v616 = vmul.f32 %v546, %v583
  %v617 = vmul.f32 %v552, %v584
  %v618 = vmul.f32 %v558, %v585
  %v619 = vmul.f32 %v564, %v586
  %v620 = vmul.f32 %v570, %v587
  %v621 = vmul.f32 %v576, %v588
  %v622 = vadd.f32 %v606, %v614
  %v623 = vadd.f32 %v607, %v615
  %v624 = vadd.f32 %v608, %v616
  %v625 = vadd.f32 %v609, %v617
  %v626 = vadd.f32 %v610, %v618
  %v627 = vadd.f32 %v611, %v619
  %v628 = vadd.f32 %v612, %v620
  %v629 = vadd.f32 %v613, %v621
  %v630 = vtanh.pop %v622
  %v631 = vtanh.pop %v623
  %v632 = vtanh.pop %v624
  %v633 = vtanh.pop %v625
  %v634 = vtanh.pop %v626
  %v635 = vtanh.pop %v627
  %v636 = vtanh.pop %v628
  %v637 = vtanh.pop %v629
  %v638 = vmul.f32 %v538, %v630
  %v639 = vmul.f32 %v544, %v631
  %v640 = vmul.f32 %v550, %v632
  %v641 = vmul.f32 %v556, %v633
  %v642 = vmul.f32 %v562, %v634
  %v643 = vmul.f32 %v568, %v635
  %v644 = vmul.f32 %v574, %v636
  %v645 = vmul.f32 %v580, %v637
  %v646 = vpack.c.bf16 %v638, %v638
  %v647 = vpack.c.bf16 %v639, %v639
  %v648 = vpack.c.bf16 %v640, %v640
  %v649 = vpack.c.bf16 %v641, %v641
  %v650 = vpack.c.bf16 %v642, %v642
  %v651 = vpack.c.bf16 %v643, %v643
  %v652 = vpack.c.bf16 %v644, %v644
  %v653 = vpack.c.bf16 %v645, %v645
  %v662 = vrot.slane %v623, 7
  %vm663 = vcmask 1041409
  %v664 = vsel %vm663, %v662, %v622
  %v665 = vrot.slane %v624, 6
  %vm666 = vcmask 1042434
  %v667 = vsel %vm666, %v665, %v664
  %v668 = vrot.slane %v625, 5
  %vm669 = vcmask 1043459
  %v670 = vsel %vm669, %v668, %v667
  %v671 = vrot.slane %v626, 4
  %vm672 = vcmask 1044484
  %v673 = vsel %vm672, %v671, %v670
  %v674 = vrot.slane %v627, 3
  %vm675 = vcmask 1045509
  %v676 = vsel %vm675, %v674, %v673
  %v677 = vrot.slane %v628, 2
  %vm678 = vcmask 1046534
  %v679 = vsel %vm678, %v677, %v676
  %v680 = vrot.slane %v629, 1
  %vm681 = vcmask 1047559
  %v682 = vsel %vm681, %v680, %v679
  %684 = vst [vmem:[#allocation3] sm:$0xff] %v682
  %v693 = vunpack.c.l.b16 %v646
  %v694 = vunpack.c.l.b16 %v647
  %v695 = vunpack.c.l.b16 %v648
  %v696 = vunpack.c.l.b16 %v649
  %v697 = vunpack.c.l.b16 %v650
  %v698 = vunpack.c.l.b16 %v651
  %v699 = vunpack.c.l.b16 %v652
  %v700 = vunpack.c.l.b16 %v653
  %v701 = vpack.c.b16 %v693, %v693
  %v702 = vpack.c.b16 %v694, %v694
  %v703 = vpack.c.b16 %v695, %v695
  %v704 = vpack.c.b16 %v696, %v696
  %v705 = vpack.c.b16 %v697, %v697
  %v706 = vpack.c.b16 %v698, %v698
  %v707 = vpack.c.b16 %v699, %v699
  %v708 = vpack.c.b16 %v700, %v700
  %v709 = vunpack.c.l.b16 %v701
  %v710 = vunpack.c.l.b16 %v702
  %v711 = vunpack.c.l.b16 %v703
  %v712 = vunpack.c.l.b16 %v704
  %v713 = vunpack.c.l.b16 %v705
  %v714 = vunpack.c.l.b16 %v706
  %v715 = vunpack.c.l.b16 %v707
  %v716 = vunpack.c.l.b16 %v708
  %v717 = vrot.slane %v710, 7
  %v718 = vsel %vm663, %v717, %v709
  %v719 = vrot.slane %v711, 6
  %v720 = vsel %vm666, %v719, %v718
  %v721 = vrot.slane %v712, 5
  %v722 = vsel %vm669, %v721, %v720
  %v723 = vrot.slane %v713, 4
  %v724 = vsel %vm672, %v723, %v722
  %v725 = vrot.slane %v714, 3
  %v726 = vsel %vm675, %v725, %v724
  %v727 = vrot.slane %v715, 2
  %v728 = vsel %vm678, %v727, %v726
  %v729 = vrot.slane %v716, 1
  %v730 = vsel %vm681, %v729, %v728
  %v731 = vpack.c.b16 %v730, %v730
  %733 = vst [vmem:[#allocation2] sm:$0xf] %v731
  %vm734 = vcmask 1040384
  %vm735 = vsmask.f32 256
  %vm736 = vmand %vm734, %vm735
  %v737 = vld [vmem:[%s2] sm:$0x1]
  %v738 = vsel %vm736, %v646, %v737
  %739 = vst [vmem:[%s2] sm:$0x1] %v738
  %v740 = vld [vmem:[%s2 + $0x8] sm:$0x1]
  %v741 = vsel %vm736, %v647, %v740
  %742 = vst [vmem:[%s2 + $0x8] sm:$0x1] %v741
  %v743 = vld [vmem:[%s2 + $0x10] sm:$0x1]
  %v744 = vsel %vm736, %v648, %v743
  %745 = vst [vmem:[%s2 + $0x10] sm:$0x1] %v744
  %v746 = vld [vmem:[%s2 + $0x18] sm:$0x1]
  %v747 = vsel %vm736, %v649, %v746
  %748 = vst [vmem:[%s2 + $0x18] sm:$0x1] %v747
  %v749 = vld [vmem:[%s2 + $0x20] sm:$0x1]
  %v750 = vsel %vm736, %v650, %v749
  %751 = vst [vmem:[%s2 + $0x20] sm:$0x1] %v750
  %v752 = vld [vmem:[%s2 + $0x28] sm:$0x1]
  %v753 = vsel %vm736, %v651, %v752
  %754 = vst [vmem:[%s2 + $0x28] sm:$0x1] %v753
  %v755 = vld [vmem:[%s2 + $0x30] sm:$0x1]
  %v756 = vsel %vm736, %v652, %v755
  %757 = vst [vmem:[%s2 + $0x30] sm:$0x1] %v756
  %v758 = vld [vmem:[%s2 + $0x38] sm:$0x1]
  %v759 = vsel %vm736, %v653, %v758
  %760 = vst [vmem:[%s2 + $0x38] sm:$0x1] %v759
  %v761 = vld [vmem:[%s0] sm:$0x11]
  %v762 = vld [vmem:[%s0 + $0x8] sm:$0x11]
  %v763 = vld [vmem:[%s0 + $0x20] sm:$0x11]
  %v764 = vld [vmem:[%s0 + $0x28] sm:$0x11]
  %v765 = vld [vmem:[%s0 + $0x40] sm:$0x11]
  %v766 = vld [vmem:[%s0 + $0x48] sm:$0x11]
  %v767 = vld [vmem:[%s0 + $0x60] sm:$0x11]
  %v768 = vld [vmem:[%s0 + $0x68] sm:$0x11]
  %v769 = vld [vmem:[%s0 + $0x80] sm:$0x11]
  %v770 = vld [vmem:[%s0 + $0x88] sm:$0x11]
  %v771 = vld [vmem:[%s0 + $0xa0] sm:$0x11]
  %v772 = vld [vmem:[%s0 + $0xa8] sm:$0x11]
  %v773 = vld [vmem:[%s0 + $0xc0] sm:$0x11]
  %v774 = vld [vmem:[%s0 + $0xc8] sm:$0x11]
  %v775 = vld [vmem:[%s0 + $0xe0] sm:$0x11]
  %v776 = vld [vmem:[%s0 + $0xe8] sm:$0x11]
  %v777 = vunpack.c.l.bf16 %v761
  %v778 = vunpack.c.h.bf16 %v761
  %v779 = vunpack.c.l.bf16 %v762
  %v780 = vunpack.c.h.bf16 %v762
  %v781 = vunpack.c.l.bf16 %v763
  %v782 = vunpack.c.h.bf16 %v763
  %v783 = vunpack.c.l.bf16 %v764
  %v784 = vunpack.c.h.bf16 %v764
  %v785 = vunpack.c.l.bf16 %v765
  %v786 = vunpack.c.h.bf16 %v765
  %v787 = vunpack.c.l.bf16 %v766
  %v788 = vunpack.c.h.bf16 %v766
  %v789 = vunpack.c.l.bf16 %v767
  %v790 = vunpack.c.h.bf16 %v767
  %v791 = vunpack.c.l.bf16 %v768
  %v792 = vunpack.c.h.bf16 %v768
  %v793 = vunpack.c.l.bf16 %v769
  %v794 = vunpack.c.h.bf16 %v769
  %v795 = vunpack.c.l.bf16 %v770
  %v796 = vunpack.c.h.bf16 %v770
  %v797 = vunpack.c.l.bf16 %v771
  %v798 = vunpack.c.h.bf16 %v771
  %v799 = vunpack.c.l.bf16 %v772
  %v800 = vunpack.c.h.bf16 %v772
  %v801 = vunpack.c.l.bf16 %v773
  %v802 = vunpack.c.h.bf16 %v773
  %v803 = vunpack.c.l.bf16 %v774
  %v804 = vunpack.c.h.bf16 %v774
  %v805 = vunpack.c.l.bf16 %v775
  %v806 = vunpack.c.h.bf16 %v775
  %v807 = vunpack.c.l.bf16 %v776
  %v808 = vunpack.c.h.bf16 %v776
  %v809 = vld [vmem:[#allocation2] sm:$0xf]
  %v810 = vld [vmem:[%s1] sm:$0xff]
  %v811 = vld [vmem:[%s1 + $0x8] sm:$0xff]
  %v812 = vld [vmem:[%s1 + $0x10] sm:$0xff]
  %v813 = vld [vmem:[%s1 + $0x18] sm:$0xff]
  %v814 = vld [vmem:[%s1 + $0x20] sm:$0xff]
  %v815 = vld [vmem:[%s1 + $0x28] sm:$0xff]
  %v816 = vld [vmem:[%s1 + $0x30] sm:$0xff]
  %v817 = vld [vmem:[%s1 + $0x38] sm:$0xff]
  %v818 = vld [vmem:[%s1 + $0x40] sm:$0xff]
  %v819 = vld [vmem:[%s1 + $0x48] sm:$0xff]
  %v820 = vld [vmem:[%s1 + $0x50] sm:$0xff]
  %v821 = vld [vmem:[%s1 + $0x58] sm:$0xff]
  %v822 = vld [vmem:[%s1 + $0x60] sm:$0xff]
  %v823 = vld [vmem:[%s1 + $0x68] sm:$0xff]
  %v824 = vld [vmem:[%s1 + $0x70] sm:$0xff]
  %v825 = vld [vmem:[%s1 + $0x78] sm:$0xff]
  %v826 = vld [vmem:[%s1 + $0x80] sm:$0xff]
  %v827 = vld [vmem:[%s1 + $0x88] sm:$0xff]
  %v828 = vld [vmem:[%s1 + $0x90] sm:$0xff]
  %v829 = vld [vmem:[%s1 + $0x98] sm:$0xff]
  %v830 = vld [vmem:[%s1 + $0xa0] sm:$0xff]
  %v831 = vld [vmem:[%s1 + $0xa8] sm:$0xff]
  %v832 = vld [vmem:[%s1 + $0xb0] sm:$0xff]
  %v833 = vld [vmem:[%s1 + $0xb8] sm:$0xff]
  %v834 = vld [vmem:[%s1 + $0xc0] sm:$0xff]
  %v835 = vld [vmem:[%s1 + $0xc8] sm:$0xff]
  %v836 = vld [vmem:[%s1 + $0xd0] sm:$0xff]
  %v837 = vld [vmem:[%s1 + $0xd8] sm:$0xff]
  %v838 = vld [vmem:[%s1 + $0xe0] sm:$0xff]
  %v839 = vld [vmem:[%s1 + $0xe8] sm:$0xff]
  %v840 = vld [vmem:[%s1 + $0xf0] sm:$0xff]
  %v841 = vld [vmem:[%s1 + $0xf8] sm:$0xff]
  %v874 = vunpack.c.l.b16 %v810
  %v875 = vunpack.c.h.b16 %v810
  %v876 = vunpack.c.l.b16 %v811
  %v877 = vunpack.c.h.b16 %v811
  %v878 = vunpack.c.l.b16 %v812
  %v879 = vunpack.c.h.b16 %v812
  %v880 = vunpack.c.l.b16 %v813
  %v881 = vunpack.c.h.b16 %v813
  %v882 = vunpack.c.l.b16 %v814
  %v883 = vunpack.c.h.b16 %v814
  %v884 = vunpack.c.l.b16 %v815
  %v885 = vunpack.c.h.b16 %v815
  %v886 = vunpack.c.l.b16 %v816
  %v887 = vunpack.c.h.b16 %v816
  %v888 = vunpack.c.l.b16 %v817
  %v889 = vunpack.c.h.b16 %v817
  %v890 = vunpack.c.l.b16 %v818
  %v891 = vunpack.c.h.b16 %v818
  %v892 = vunpack.c.l.b16 %v819
  %v893 = vunpack.c.h.b16 %v819
  %v894 = vunpack.c.l.b16 %v820
  %v895 = vunpack.c.h.b16 %v820
  %v896 = vunpack.c.l.b16 %v821
  %v897 = vunpack.c.h.b16 %v821
  %v898 = vunpack.c.l.b16 %v822
  %v899 = vunpack.c.h.b16 %v822
  %v900 = vunpack.c.l.b16 %v823
  %v901 = vunpack.c.h.b16 %v823
  %v902 = vunpack.c.l.b16 %v824
  %v903 = vunpack.c.h.b16 %v824
  %v904 = vunpack.c.l.b16 %v825
  %v905 = vunpack.c.h.b16 %v825
  %v906 = vunpack.c.l.b16 %v826
  %v907 = vunpack.c.h.b16 %v826
  %v908 = vunpack.c.l.b16 %v827
  %v909 = vunpack.c.h.b16 %v827
  %v910 = vunpack.c.l.b16 %v828
  %v911 = vunpack.c.h.b16 %v828
  %v912 = vunpack.c.l.b16 %v829
  %v913 = vunpack.c.h.b16 %v829
  %v914 = vunpack.c.l.b16 %v830
  %v915 = vunpack.c.h.b16 %v830
  %v916 = vunpack.c.l.b16 %v831
  %v917 = vunpack.c.h.b16 %v831
  %v918 = vunpack.c.l.b16 %v832
  %v919 = vunpack.c.h.b16 %v832
  %v920 = vunpack.c.l.b16 %v833
  %v921 = vunpack.c.h.b16 %v833
  %v922 = vunpack.c.l.b16 %v834
  %v923 = vunpack.c.h.b16 %v834
  %v924 = vunpack.c.l.b16 %v835
  %v925 = vunpack.c.h.b16 %v835
  %v926 = vunpack.c.l.b16 %v836
  %v927 = vunpack.c.h.b16 %v836
  %v928 = vunpack.c.l.b16 %v837
  %v929 = vunpack.c.h.b16 %v837
  %v930 = vunpack.c.l.b16 %v838
  %v931 = vunpack.c.h.b16 %v838
  %v932 = vunpack.c.l.b16 %v839
  %v933 = vunpack.c.h.b16 %v839
  %v934 = vunpack.c.l.b16 %v840
  %v935 = vunpack.c.h.b16 %v840
  %v936 = vunpack.c.l.b16 %v841
  %v937 = vunpack.c.h.b16 %v841
  %v938 = vpack.c.b16 %v878, %v874
  %v939 = vpack.c.b16 %v879, %v875
  %v940 = vpack.c.b16 %v880, %v876
  %v941 = vpack.c.b16 %v881, %v877
  %v942 = vpack.c.b16 %v886, %v882
  %v943 = vpack.c.b16 %v887, %v883
  %v944 = vpack.c.b16 %v888, %v884
  %v945 = vpack.c.b16 %v889, %v885
  %v946 = vpack.c.b16 %v894, %v890
  %v947 = vpack.c.b16 %v895, %v891
  %v948 = vpack.c.b16 %v896, %v892
  %v949 = vpack.c.b16 %v897, %v893
  %v950 = vpack.c.b16 %v902, %v898
  %v951 = vpack.c.b16 %v903, %v899
  %v952 = vpack.c.b16 %v904, %v900
  %v953 = vpack.c.b16 %v905, %v901
  %v954 = vpack.c.b16 %v910, %v906
  %v955 = vpack.c.b16 %v911, %v907
  %v956 = vpack.c.b16 %v912, %v908
  %v957 = vpack.c.b16 %v913, %v909
  %v958 = vpack.c.b16 %v918, %v914
  %v959 = vpack.c.b16 %v919, %v915
  %v960 = vpack.c.b16 %v920, %v916
  %v961 = vpack.c.b16 %v921, %v917
  %v962 = vpack.c.b16 %v926, %v922
  %v963 = vpack.c.b16 %v927, %v923
  %v964 = vpack.c.b16 %v928, %v924
  %v965 = vpack.c.b16 %v929, %v925
  %v966 = vpack.c.b16 %v934, %v930
  %v967 = vpack.c.b16 %v935, %v931
  %v968 = vpack.c.b16 %v936, %v932
  %v969 = vpack.c.b16 %v937, %v933
  %1002 = vmatprep.subr.bf16.mxu0 %v967
  %1003 = vmatpush1.bf16.msra.mxu0 %v966
  %1004 = vmatprep.subr.bf16.mxu0 %v963
  %1005 = vmatpush1.bf16.msra.mxu0 %v962
  %1006 = vmatprep.subr.bf16.mxu0 %v959
  %1007 = vmatpush1.bf16.msra.mxu0 %v958
  %1008 = vmatprep.subr.bf16.mxu0 %v955
  %1009 = vmatpush1.bf16.msra.mxu0 %v954
  %1010 = vmatprep.subr.bf16.mxu0 %v951
  %1011 = vmatpush1.bf16.msra.mxu0 %v950
  %1012 = vmatprep.subr.bf16.mxu0 %v947
  %1013 = vmatpush1.bf16.msra.mxu0 %v946
  %1014 = vmatprep.subr.bf16.mxu0 %v943
  %1015 = vmatpush1.bf16.msra.mxu0 %v942
  %1016 = vmatprep.subr.bf16.mxu0 %v939
  %1017 = vmatpush1.bf16.msra.mxu0 %v938
  %1018 = vmatprep.subr.bf16.mxu0 0
  %1019 = vmatpush2.bf16.msra.mxu0 0
  %1020 = vmatprep.subr.bf16.mxu0 0
  %1021 = vmatpush2.bf16.msra.mxu0 0
  %1022 = vmatprep.subr.bf16.mxu0 0
  %1023 = vmatpush2.bf16.msra.mxu0 0
  %1024 = vmatprep.subr.bf16.mxu0 0
  %1025 = vmatpush2.bf16.msra.mxu0 0
  %1026 = vmatprep.subr.bf16.mxu0 0
  %1027 = vmatpush2.bf16.msra.mxu0 0
  %1028 = vmatprep.subr.bf16.mxu0 0
  %1029 = vmatpush2.bf16.msra.mxu0 0
  %1030 = vmatprep.subr.bf16.mxu0 0
  %1031 = vmatpush2.bf16.msra.mxu0 0
  %1032 = vmatprep.subr.bf16.mxu0 0
  %1033 = vmatpush2.bf16.msra.mxu0 0
  %1034 = vmatprep.mubr.bf16.mxu0 0
  %1035 = vmatmul.mubr.bf16.gmra.mxu0 %v809
  %v1036 = vpop.f32.mrf.mxu0
  %v1037 = vadd.f32 0.0, %v1036
  %v1038 = vpop.f32.mrf.mxu0
  %v1039 = vadd.f32 0.0, %v1038
  %v1040 = vpop.f32.mrf.mxu0
  %v1041 = vpop.f32.mrf.mxu0
  %1042 = vdwg.mxu0
  %1043 = vmatprep.subr.bf16.mxu0 %v969
  %1044 = vmatpush1.bf16.msra.mxu0 %v968
  %1045 = vmatprep.subr.bf16.mxu0 %v965
  %1046 = vmatpush1.bf16.msra.mxu0 %v964
  %1047 = vmatprep.subr.bf16.mxu0 %v961
  %1048 = vmatpush1.bf16.msra.mxu0 %v960
  %1049 = vmatprep.subr.bf16.mxu0 %v957
  %1050 = vmatpush1.bf16.msra.mxu0 %v956
  %1051 = vmatprep.subr.bf16.mxu0 %v953
  %1052 = vmatpush1.bf16.msra.mxu0 %v952
  %1053 = vmatprep.subr.bf16.mxu0 %v949
  %1054 = vmatpush1.bf16.msra.mxu0 %v948
  %1055 = vmatprep.subr.bf16.mxu0 %v945
  %1056 = vmatpush1.bf16.msra.mxu0 %v944
  %1057 = vmatprep.subr.bf16.mxu0 %v941
  %1058 = vmatpush1.bf16.msra.mxu0 %v940
  %1059 = vmatprep.subr.bf16.mxu0 0
  %1060 = vmatpush2.bf16.msra.mxu0 0
  %1061 = vmatprep.subr.bf16.mxu0 0
  %1062 = vmatpush2.bf16.msra.mxu0 0
  %1063 = vmatprep.subr.bf16.mxu0 0
  %1064 = vmatpush2.bf16.msra.mxu0 0
  %1065 = vmatprep.subr.bf16.mxu0 0
  %1066 = vmatpush2.bf16.msra.mxu0 0
  %1067 = vmatprep.subr.bf16.mxu0 0
  %1068 = vmatpush2.bf16.msra.mxu0 0
  %1069 = vmatprep.subr.bf16.mxu0 0
  %1070 = vmatpush2.bf16.msra.mxu0 0
  %1071 = vmatprep.subr.bf16.mxu0 0
  %1072 = vmatpush2.bf16.msra.mxu0 0
  %1073 = vmatprep.subr.bf16.mxu0 0
  %1074 = vmatpush2.bf16.msra.mxu0 0
  %1075 = vmatprep.mubr.bf16.mxu0 0
  %1076 = vmatmul.mubr.bf16.gmra.mxu0 %v809
  %v1077 = vpop.f32.mrf.mxu0
  %v1078 = vadd.f32 0.0, %v1077
  %v1079 = vpop.f32.mrf.mxu0
  %v1080 = vadd.f32 0.0, %v1079
  %v1081 = vpop.f32.mrf.mxu0
  %v1082 = vpop.f32.mrf.mxu0
  %1083 = vdwg.mxu0
  %v1088 = vrot.slane %v1037, 7
  %v1089 = vrot.slane %v1039, 7
  %v1090 = vrot.slane %v1078, 7
  %v1091 = vrot.slane %v1080, 7
  %v1092 = vrot.slane %v1037, 1
  %v1093 = vrot.slane %v1039, 1
  %v1094 = vrot.slane %v1078, 1
  %v1095 = vrot.slane %v1080, 1
  %v1096 = vrot.slane %v1037, 2
  %v1097 = vrot.slane %v1039, 2
  %v1098 = vrot.slane %v1078, 2
  %v1099 = vrot.slane %v1080, 2
  %v1100 = vrot.slane %v1037, 3
  %v1101 = vrot.slane %v1039, 3
  %v1102 = vrot.slane %v1078, 3
  %v1103 = vrot.slane %v1080, 3
  %v1104 = vrot.slane %v1037, 4
  %v1105 = vrot.slane %v1039, 4
  %v1106 = vrot.slane %v1078, 4
  %v1107 = vrot.slane %v1080, 4
  %v1108 = vrot.slane %v1037, 5
  %v1109 = vrot.slane %v1039, 5
  %v1110 = vrot.slane %v1078, 5
  %v1111 = vrot.slane %v1080, 5
  %v1112 = vrot.slane %v1037, 6
  %v1113 = vrot.slane %v1039, 6
  %v1114 = vrot.slane %v1078, 6
  %v1115 = vrot.slane %v1080, 6
  %v1148 = vadd.f32 %v777, %v1088
  %v1149 = vadd.f32 %v778, %v1089
  %v1150 = vadd.f32 %v779, %v1090
  %v1151 = vadd.f32 %v780, %v1091
  %v1152 = vadd.f32 %v781, %v1037
  %v1153 = vadd.f32 %v782, %v1039
  %v1154 = vadd.f32 %v783, %v1078
  %v1155 = vadd.f32 %v784, %v1080
  %v1156 = vadd.f32 %v785, %v1092
  %v1157 = vadd.f32 %v786, %v1093
  %v1158 = vadd.f32 %v787, %v1094
  %v1159 = vadd.f32 %v788, %v1095
  %v1160 = vadd.f32 %v789, %v1096
  %v1161 = vadd.f32 %v790, %v1097
  %v1162 = vadd.f32 %v791, %v1098
  %v1163 = vadd.f32 %v792, %v1099
  %v1164 = vadd.f32 %v793, %v1100
  %v1165 = vadd.f32 %v794, %v1101
  %v1166 = vadd.f32 %v795, %v1102
  %v1167 = vadd.f32 %v796, %v1103
  %v1168 = vadd.f32 %v797, %v1104
  %v1169 = vadd.f32 %v798, %v1105
  %v1170 = vadd.f32 %v799, %v1106
  %v1171 = vadd.f32 %v800, %v1107
  %v1172 = vadd.f32 %v801, %v1108
  %v1173 = vadd.f32 %v802, %v1109
  %v1174 = vadd.f32 %v803, %v1110
  %v1175 = vadd.f32 %v804, %v1111
  %v1176 = vadd.f32 %v805, %v1112
  %v1177 = vadd.f32 %v806, %v1113
  %v1178 = vadd.f32 %v807, %v1114
  %v1179 = vadd.f32 %v808, %v1115
  %v1180 = vxor.u32 %v1148, 2147483648
  %v1181 = vxor.u32 %v1149, 2147483648
  %v1182 = vxor.u32 %v1150, 2147483648
  %v1183 = vxor.u32 %v1152, 2147483648
  %v1184 = vxor.u32 %v1153, 2147483648
  %v1185 = vxor.u32 %v1154, 2147483648
  %v1186 = vxor.u32 %v1156, 2147483648
  %v1187 = vxor.u32 %v1157, 2147483648
  %v1188 = vxor.u32 %v1158, 2147483648
  %v1189 = vxor.u32 %v1160, 2147483648
  %v1190 = vxor.u32 %v1161, 2147483648
  %v1191 = vxor.u32 %v1162, 2147483648
  %v1192 = vxor.u32 %v1164, 2147483648
  %v1193 = vxor.u32 %v1165, 2147483648
  %v1194 = vxor.u32 %v1166, 2147483648
  %v1195 = vxor.u32 %v1168, 2147483648
  %v1196 = vxor.u32 %v1169, 2147483648
  %v1197 = vxor.u32 %v1170, 2147483648
  %v1198 = vxor.u32 %v1172, 2147483648
  %v1199 = vxor.u32 %v1173, 2147483648
  %v1200 = vxor.u32 %v1174, 2147483648
  %v1201 = vxor.u32 %v1176, 2147483648
  %v1202 = vxor.u32 %v1177, 2147483648
  %v1203 = vxor.u32 %v1178, 2147483648
  %v1204 = vmul.f32 %v1180, 1.442695
  %v1205 = vpow.pop %v1204
  %v1206 = vmul.f32 %v1181, 1.442695
  %v1207 = vpow.pop %v1206
  %v1208 = vmul.f32 %v1182, 1.442695
  %v1209 = vpow.pop %v1208
  %v1210 = vmul.f32 %v1183, 1.442695
  %v1211 = vpow.pop %v1210
  %v1212 = vmul.f32 %v1184, 1.442695
  %v1213 = vpow.pop %v1212
  %v1214 = vmul.f32 %v1185, 1.442695
  %v1215 = vpow.pop %v1214
  %v1216 = vmul.f32 %v1186, 1.442695
  %v1217 = vpow.pop %v1216
  %v1218 = vmul.f32 %v1187, 1.442695
  %v1219 = vpow.pop %v1218
  %v1220 = vmul.f32 %v1188, 1.442695
  %v1221 = vpow.pop %v1220
  %v1222 = vmul.f32 %v1189, 1.442695
  %v1223 = vpow.pop %v1222
  %v1224 = vmul.f32 %v1190, 1.442695
  %v1225 = vpow.pop %v1224
  %v1226 = vmul.f32 %v1191, 1.442695
  %v1227 = vpow.pop %v1226
  %v1228 = vmul.f32 %v1192, 1.442695
  %v1229 = vpow.pop %v1228
  %v1230 = vmul.f32 %v1193, 1.442695
  %v1231 = vpow.pop %v1230
  %v1232 = vmul.f32 %v1194, 1.442695
  %v1233 = vpow.pop %v1232
  %v1234 = vmul.f32 %v1195, 1.442695
  %v1235 = vpow.pop %v1234
  %v1236 = vmul.f32 %v1196, 1.442695
  %v1237 = vpow.pop %v1236
  %v1238 = vmul.f32 %v1197, 1.442695
  %v1239 = vpow.pop %v1238
  %v1240 = vmul.f32 %v1198, 1.442695
  %v1241 = vpow.pop %v1240
  %v1242 = vmul.f32 %v1199, 1.442695
  %v1243 = vpow.pop %v1242
  %v1244 = vmul.f32 %v1200, 1.442695
  %v1245 = vpow.pop %v1244
  %v1246 = vmul.f32 %v1201, 1.442695
  %v1247 = vpow.pop %v1246
  %v1248 = vmul.f32 %v1202, 1.442695
  %v1249 = vpow.pop %v1248
  %v1250 = vmul.f32 %v1203, 1.442695
  %v1251 = vpow.pop %v1250
  %v1252 = vadd.f32 %v1205, 1.0
  %v1253 = vadd.f32 %v1207, 1.0
  %v1254 = vadd.f32 %v1209, 1.0
  %v1255 = vadd.f32 %v1211, 1.0
  %v1256 = vadd.f32 %v1213, 1.0
  %v1257 = vadd.f32 %v1215, 1.0
  %v1258 = vadd.f32 %v1217, 1.0
  %v1259 = vadd.f32 %v1219, 1.0
  %v1260 = vadd.f32 %v1221, 1.0
  %v1261 = vadd.f32 %v1223, 1.0
  %v1262 = vadd.f32 %v1225, 1.0
  %v1263 = vadd.f32 %v1227, 1.0
  %v1264 = vadd.f32 %v1229, 1.0
  %v1265 = vadd.f32 %v1231, 1.0
  %v1266 = vadd.f32 %v1233, 1.0
  %v1267 = vadd.f32 %v1235, 1.0
  %v1268 = vadd.f32 %v1237, 1.0
  %v1269 = vadd.f32 %v1239, 1.0
  %v1270 = vadd.f32 %v1241, 1.0
  %v1271 = vadd.f32 %v1243, 1.0
  %v1272 = vadd.f32 %v1245, 1.0
  %v1273 = vadd.f32 %v1247, 1.0
  %v1274 = vadd.f32 %v1249, 1.0
  %v1275 = vadd.f32 %v1251, 1.0
  %v1276 = vrcp.pop %v1252
  %v1277 = vmul.f32 1.0, %v1276
  %v1278 = vrcp.pop %v1253
  %v1279 = vmul.f32 1.0, %v1278
  %v1280 = vrcp.pop %v1254
  %v1281 = vmul.f32 1.0, %v1280
  %v1282 = vrcp.pop %v1255
  %v1283 = vmul.f32 1.0, %v1282
  %v1284 = vrcp.pop %v1256
  %v1285 = vmul.f32 1.0, %v1284
  %v1286 = vrcp.pop %v1257
  %v1287 = vmul.f32 1.0, %v1286
  %v1288 = vrcp.pop %v1258
  %v1289 = vmul.f32 1.0, %v1288
  %v1290 = vrcp.pop %v1259
  %v1291 = vmul.f32 1.0, %v1290
  %v1292 = vrcp.pop %v1260
  %v1293 = vmul.f32 1.0, %v1292
  %v1294 = vrcp.pop %v1261
  %v1295 = vmul.f32 1.0, %v1294
  %v1296 = vrcp.pop %v1262
  %v1297 = vmul.f32 1.0, %v1296
  %v1298 = vrcp.pop %v1263
  %v1299 = vmul.f32 1.0, %v1298
  %v1300 = vrcp.pop %v1264
  %v1301 = vmul.f32 1.0, %v1300
  %v1302 = vrcp.pop %v1265
  %v1303 = vmul.f32 1.0, %v1302
  %v1304 = vrcp.pop %v1266
  %v1305 = vmul.f32 1.0, %v1304
  %v1306 = vrcp.pop %v1267
  %v1307 = vmul.f32 1.0, %v1306
  %v1308 = vrcp.pop %v1268
  %v1309 = vmul.f32 1.0, %v1308
  %v1310 = vrcp.pop %v1269
  %v1311 = vmul.f32 1.0, %v1310
  %v1312 = vrcp.pop %v1270
  %v1313 = vmul.f32 1.0, %v1312
  %v1314 = vrcp.pop %v1271
  %v1315 = vmul.f32 1.0, %v1314
  %v1316 = vrcp.pop %v1272
  %v1317 = vmul.f32 1.0, %v1316
  %v1318 = vrcp.pop %v1273
  %v1319 = vmul.f32 1.0, %v1318
  %v1320 = vrcp.pop %v1274
  %v1321 = vmul.f32 1.0, %v1320
  %v1322 = vrcp.pop %v1275
  %v1323 = vmul.f32 1.0, %v1322
  %v1324 = vtanh.pop %v1151
  %v1325 = vtanh.pop %v1155
  %v1326 = vtanh.pop %v1159
  %v1327 = vtanh.pop %v1163
  %v1328 = vtanh.pop %v1167
  %v1329 = vtanh.pop %v1171
  %v1330 = vtanh.pop %v1175
  %v1331 = vtanh.pop %v1179
  %v1332 = vld [vmem:[#allocation3] sm:$0xff]
  %v1334 = vrot.slane %v1332, 7
  %v1335 = vrot.slane %v1332, 1
  %v1336 = vrot.slane %v1332, 2
  %v1337 = vrot.slane %v1332, 3
  %v1338 = vrot.slane %v1332, 4
  %v1339 = vrot.slane %v1332, 5
  %v1340 = vrot.slane %v1332, 6
  %v1349 = vmul.f32 %v1279, %v1334
  %v1350 = vmul.f32 %v1285, %v1332
  %v1351 = vmul.f32 %v1291, %v1335
  %v1352 = vmul.f32 %v1297, %v1336
  %v1353 = vmul.f32 %v1303, %v1337
  %v1354 = vmul.f32 %v1309, %v1338
  %v1355 = vmul.f32 %v1315, %v1339
  %v1356 = vmul.f32 %v1321, %v1340
  %v1357 = vmul.f32 %v1277, %v1324
  %v1358 = vmul.f32 %v1283, %v1325
  %v1359 = vmul.f32 %v1289, %v1326
  %v1360 = vmul.f32 %v1295, %v1327
  %v1361 = vmul.f32 %v1301, %v1328
  %v1362 = vmul.f32 %v1307, %v1329
  %v1363 = vmul.f32 %v1313, %v1330
  %v1364 = vmul.f32 %v1319, %v1331
  %v1365 = vadd.f32 %v1349, %v1357
  %v1366 = vadd.f32 %v1350, %v1358
  %v1367 = vadd.f32 %v1351, %v1359
  %v1368 = vadd.f32 %v1352, %v1360
  %v1369 = vadd.f32 %v1353, %v1361
  %v1370 = vadd.f32 %v1354, %v1362
  %v1371 = vadd.f32 %v1355, %v1363
  %v1372 = vadd.f32 %v1356, %v1364
  %v1373 = vtanh.pop %v1365
  %v1374 = vtanh.pop %v1366
  %v1375 = vtanh.pop %v1367
  %v1376 = vtanh.pop %v1368
  %v1377 = vtanh.pop %v1369
  %v1378 = vtanh.pop %v1370
  %v1379 = vtanh.pop %v1371
  %v1380 = vtanh.pop %v1372
  %v1381 = vmul.f32 %v1281, %v1373
  %v1382 = vmul.f32 %v1287, %v1374
  %v1383 = vmul.f32 %v1293, %v1375
  %v1384 = vmul.f32 %v1299, %v1376
  %v1385 = vmul.f32 %v1305, %v1377
  %v1386 = vmul.f32 %v1311, %v1378
  %v1387 = vmul.f32 %v1317, %v1379
  %v1388 = vmul.f32 %v1323, %v1380
  %v1389 = vpack.c.bf16 %v1381, %v1381
  %v1390 = vpack.c.bf16 %v1382, %v1382
  %v1391 = vpack.c.bf16 %v1383, %v1383
  %v1392 = vpack.c.bf16 %v1384, %v1384
  %v1393 = vpack.c.bf16 %v1385, %v1385
  %v1394 = vpack.c.bf16 %v1386, %v1386
  %v1395 = vpack.c.bf16 %v1387, %v1387
  %v1396 = vpack.c.bf16 %v1388, %v1388
  %v1405 = vrot.slane %v1366, 7
  %v1406 = vsel %vm666, %v1405, %v1365
  %v1407 = vrot.slane %v1367, 6
  %v1408 = vsel %vm669, %v1407, %v1406
  %v1409 = vrot.slane %v1368, 5
  %v1410 = vsel %vm672, %v1409, %v1408
  %v1411 = vrot.slane %v1369, 4
  %v1412 = vsel %vm675, %v1411, %v1410
  %v1413 = vrot.slane %v1370, 3
  %v1414 = vsel %vm678, %v1413, %v1412
  %v1415 = vrot.slane %v1371, 2
  %v1416 = vsel %vm681, %v1415, %v1414
  %v1417 = vrot.slane %v1372, 1
  %1420 = vst [vmem:[#allocation3 - $0x1] sm:$0xfe] %v1416
  %1421 = vst [vmem:[#allocation3 + $0x7] sm:$0x1] %v1417
  %v1430 = vunpack.c.l.b16 %v1389
  %v1431 = vunpack.c.l.b16 %v1390
  %v1432 = vunpack.c.l.b16 %v1391
  %v1433 = vunpack.c.l.b16 %v1392
  %v1434 = vunpack.c.l.b16 %v1393
  %v1435 = vunpack.c.l.b16 %v1394
  %v1436 = vunpack.c.l.b16 %v1395
  %v1437 = vunpack.c.l.b16 %v1396
  %v1438 = vpack.c.b16 %v1430, %v1430
  %v1439 = vpack.c.b16 %v1431, %v1431
  %v1440 = vpack.c.b16 %v1432, %v1432
  %v1441 = vpack.c.b16 %v1433, %v1433
  %v1442 = vpack.c.b16 %v1434, %v1434
  %v1443 = vpack.c.b16 %v1435, %v1435
  %v1444 = vpack.c.b16 %v1436, %v1436
  %v1445 = vpack.c.b16 %v1437, %v1437
  %v1446 = vunpack.c.l.b16 %v1438
  %v1447 = vunpack.c.l.b16 %v1439
  %v1448 = vunpack.c.l.b16 %v1440
  %v1449 = vunpack.c.l.b16 %v1441
  %v1450 = vunpack.c.l.b16 %v1442
  %v1451 = vunpack.c.l.b16 %v1443
  %v1452 = vunpack.c.l.b16 %v1444
  %v1453 = vunpack.c.l.b16 %v1445
  %v1454 = vrot.slane %v1446, 1
  %v1455 = vsel %vm663, %v1447, %v1454
  %v1456 = vrot.slane %v1448, 7
  %v1457 = vsel %vm666, %v1456, %v1455
  %v1458 = vrot.slane %v1449, 6
  %v1459 = vsel %vm669, %v1458, %v1457
  %v1460 = vrot.slane %v1450, 5
  %v1461 = vsel %vm672, %v1460, %v1459
  %v1462 = vrot.slane %v1451, 4
  %v1463 = vsel %vm675, %v1462, %v1461
  %v1464 = vrot.slane %v1452, 3
  %v1465 = vsel %vm678, %v1464, %v1463
  %v1466 = vrot.slane %v1453, 2
  %v1467 = vsel %vm681, %v1466, %v1465
  %v1468 = vpack.c.b16 %v1467, %v1467
  %1470 = vst [vmem:[#allocation2] sm:$0xf] %v1468
  %vm1471 = vsmask.f32 7938
  %vm1472 = vmand %vm734, %vm1471
  %v1473 = vld [vmem:[%s2] sm:$0x1]
  %v1474 = vsel %vm1472, %v1389, %v1473
  %1475 = vst [vmem:[%s2] sm:$0x1] %v1474
  %v1476 = vld [vmem:[%s2 + $0x8] sm:$0x1]
  %v1477 = vsel %vm1472, %v1390, %v1476
  %1478 = vst [vmem:[%s2 + $0x8] sm:$0x1] %v1477
  %v1479 = vld [vmem:[%s2 + $0x10] sm:$0x1]
  %v1480 = vsel %vm1472, %v1391, %v1479
  %1481 = vst [vmem:[%s2 + $0x10] sm:$0x1] %v1480
  %v1482 = vld [vmem:[%s2 + $0x18] sm:$0x1]
  %v1483 = vsel %vm1472, %v1392, %v1482
  %1484 = vst [vmem:[%s2 + $0x18] sm:$0x1] %v1483
  %v1485 = vld [vmem:[%s2 + $0x20] sm:$0x1]
  %v1486 = vsel %vm1472, %v1393, %v1485
  %1487 = vst [vmem:[%s2 + $0x20] sm:$0x1] %v1486
  %v1488 = vld [vmem:[%s2 + $0x28] sm:$0x1]
  %v1489 = vsel %vm1472, %v1394, %v1488
  %1490 = vst [vmem:[%s2 + $0x28] sm:$0x1] %v1489
  %v1491 = vld [vmem:[%s2 + $0x30] sm:$0x1]
  %v1492 = vsel %vm1472, %v1395, %v1491
  %1493 = vst [vmem:[%s2 + $0x30] sm:$0x1] %v1492
  %v1494 = vld [vmem:[%s2 + $0x38] sm:$0x1]
  %v1495 = vsel %vm1472, %v1396, %v1494
  %1496 = vst [vmem:[%s2 + $0x38] sm:$0x1] %v1495
  %v1497 = vld [vmem:[%s0] sm:$0x22]
  %v1498 = vld [vmem:[%s0 + $0x8] sm:$0x22]
  %v1499 = vld [vmem:[%s0 + $0x20] sm:$0x22]
  %v1500 = vld [vmem:[%s0 + $0x28] sm:$0x22]
  %v1501 = vld [vmem:[%s0 + $0x40] sm:$0x22]
  %v1502 = vld [vmem:[%s0 + $0x48] sm:$0x22]
  %v1503 = vld [vmem:[%s0 + $0x60] sm:$0x22]
  %v1504 = vld [vmem:[%s0 + $0x68] sm:$0x22]
  %v1505 = vld [vmem:[%s0 + $0x80] sm:$0x22]
  %v1506 = vld [vmem:[%s0 + $0x88] sm:$0x22]
  %v1507 = vld [vmem:[%s0 + $0xa0] sm:$0x22]
  %v1508 = vld [vmem:[%s0 + $0xa8] sm:$0x22]
  %v1509 = vld [vmem:[%s0 + $0xc0] sm:$0x22]
  %v1510 = vld [vmem:[%s0 + $0xc8] sm:$0x22]
  %v1511 = vld [vmem:[%s0 + $0xe0] sm:$0x22]
  %v1512 = vld [vmem:[%s0 + $0xe8] sm:$0x22]
  %v1513 = vunpack.c.l.bf16 %v1497
  %v1514 = vunpack.c.h.bf16 %v1497
  %v1515 = vunpack.c.l.bf16 %v1498
  %v1516 = vunpack.c.h.bf16 %v1498
  %v1517 = vunpack.c.l.bf16 %v1499
  %v1518 = vunpack.c.h.bf16 %v1499
  %v1519 = vunpack.c.l.bf16 %v1500
  %v1520 = vunpack.c.h.bf16 %v1500
  %v1521 = vunpack.c.l.bf16 %v1501
  %v1522 = vunpack.c.h.bf16 %v1501
  %v1523 = vunpack.c.l.bf16 %v1502
  %v1524 = vunpack.c.h.bf16 %v1502
  %v1525 = vunpack.c.l.bf16 %v1503
  %v1526 = vunpack.c.h.bf16 %v1503
  %v1527 = vunpack.c.l.bf16 %v1504
  %v1528 = vunpack.c.h.bf16 %v1504
  %v1529 = vunpack.c.l.bf16 %v1505
  %v1530 = vunpack.c.h.bf16 %v1505
  %v1531 = vunpack.c.l.bf16 %v1506
  %v1532 = vunpack.c.h.bf16 %v1506
  %v1533 = vunpack.c.l.bf16 %v1507
  %v1534 = vunpack.c.h.bf16 %v1507
  %v1535 = vunpack.c.l.bf16 %v1508
  %v1536 = vunpack.c.h.bf16 %v1508
  %v1537 = vunpack.c.l.bf16 %v1509
  %v1538 = vunpack.c.h.bf16 %v1509
  %v1539 = vunpack.c.l.bf16 %v1510
  %v1540 = vunpack.c.h.bf16 %v1510
  %v1541 = vunpack.c.l.bf16 %v1511
  %v1542 = vunpack.c.h.bf16 %v1511
  %v1543 = vunpack.c.l.bf16 %v1512
  %v1544 = vunpack.c.h.bf16 %v1512
  %v1545 = vld [vmem:[#allocation2] sm:$0xf]
  %v1546 = vld [vmem:[%s1] sm:$0xff]
  %v1547 = vld [vmem:[%s1 + $0x8] sm:$0xff]
  %v1548 = vld [vmem:[%s1 + $0x10] sm:$0xff]
  %v1549 = vld [vmem:[%s1 + $0x18] sm:$0xff]
  %v1550 = vld [vmem:[%s1 + $0x20] sm:$0xff]
  %v1551 = vld [vmem:[%s1 + $0x28] sm:$0xff]
  %v1552 = vld [vmem:[%s1 + $0x30] sm:$0xff]
  %v1553 = vld [vmem:[%s1 + $0x38] sm:$0xff]
  %v1554 = vld [vmem:[%s1 + $0x40] sm:$0xff]
  %v1555 = vld [vmem:[%s1 + $0x48] sm:$0xff]
  %v1556 = vld [vmem:[%s1 + $0x50] sm:$0xff]
  %v1557 = vld [vmem:[%s1 + $0x58] sm:$0xff]
  %v1558 = vld [vmem:[%s1 + $0x60] sm:$0xff]
  %v1559 = vld [vmem:[%s1 + $0x68] sm:$0xff]
  %v1560 = vld [vmem:[%s1 + $0x70] sm:$0xff]
  %v1561 = vld [vmem:[%s1 + $0x78] sm:$0xff]
  %v1562 = vld [vmem:[%s1 + $0x80] sm:$0xff]
  %v1563 = vld [vmem:[%s1 + $0x88] sm:$0xff]
  %v1564 = vld [vmem:[%s1 + $0x90] sm:$0xff]
  %v1565 = vld [vmem:[%s1 + $0x98] sm:$0xff]
  %v1566 = vld [vmem:[%s1 + $0xa0] sm:$0xff]
  %v1567 = vld [vmem:[%s1 + $0xa8] sm:$0xff]
  %v1568 = vld [vmem:[%s1 + $0xb0] sm:$0xff]
  %v1569 = vld [vmem:[%s1 + $0xb8] sm:$0xff]
  %v1570 = vld [vmem:[%s1 + $0xc0] sm:$0xff]
  %v1571 = vld [vmem:[%s1 + $0xc8] sm:$0xff]
  %v1572 = vld [vmem:[%s1 + $0xd0] sm:$0xff]
  %v1573 = vld [vmem:[%s1 + $0xd8] sm:$0xff]
  %v1574 = vld [vmem:[%s1 + $0xe0] sm:$0xff]
  %v1575 = vld [vmem:[%s1 + $0xe8] sm:$0xff]
  %v1576 = vld [vmem:[%s1 + $0xf0] sm:$0xff]
  %v1577 = vld [vmem:[%s1 + $0xf8] sm:$0xff]
  %v1610 = vunpack.c.l.b16 %v1546
  %v1611 = vunpack.c.h.b16 %v1546
  %v1612 = vunpack.c.l.b16 %v1547
  %v1613 = vunpack.c.h.b16 %v1547
  %v1614 = vunpack.c.l.b16 %v1548
  %v1615 = vunpack.c.h.b16 %v1548
  %v1616 = vunpack.c.l.b16 %v1549
  %v1617 = vunpack.c.h.b16 %v1549
  %v1618 = vunpack.c.l.b16 %v1550
  %v1619 = vunpack.c.h.b16 %v1550
  %v1620 = vunpack.c.l.b16 %v1551
  %v1621 = vunpack.c.h.b16 %v1551
  %v1622 = vunpack.c.l.b16 %v1552
  %v1623 = vunpack.c.h.b16 %v1552
  %v1624 = vunpack.c.l.b16 %v1553
  %v1625 = vunpack.c.h.b16 %v1553
  %v1626 = vunpack.c.l.b16 %v1554
  %v1627 = vunpack.c.h.b16 %v1554
  %v1628 = vunpack.c.l.b16 %v1555
  %v1629 = vunpack.c.h.b16 %v1555
  %v1630 = vunpack.c.l.b16 %v1556
  %v1631 = vunpack.c.h.b16 %v1556
  %v1632 = vunpack.c.l.b16 %v1557
  %v1633 = vunpack.c.h.b16 %v1557
  %v1634 = vunpack.c.l.b16 %v1558
  %v1635 = vunpack.c.h.b16 %v1558
  %v1636 = vunpack.c.l.b16 %v1559
  %v1637 = vunpack.c.h.b16 %v1559
  %v1638 = vunpack.c.l.b16 %v1560
  %v1639 = vunpack.c.h.b16 %v1560
  %v1640 = vunpack.c.l.b16 %v1561
  %v1641 = vunpack.c.h.b16 %v1561
  %v1642 = vunpack.c.l.b16 %v1562
  %v1643 = vunpack.c.h.b16 %v1562
  %v1644 = vunpack.c.l.b16 %v1563
  %v1645 = vunpack.c.h.b16 %v1563
  %v1646 = vunpack.c.l.b16 %v1564
  %v1647 = vunpack.c.h.b16 %v1564
  %v1648 = vunpack.c.l.b16 %v1565
  %v1649 = vunpack.c.h.b16 %v1565
  %v1650 = vunpack.c.l.b16 %v1566
  %v1651 = vunpack.c.h.b16 %v1566
  %v1652 = vunpack.c.l.b16 %v1567
  %v1653 = vunpack.c.h.b16 %v1567
  %v1654 = vunpack.c.l.b16 %v1568
  %v1655 = vunpack.c.h.b16 %v1568
  %v1656 = vunpack.c.l.b16 %v1569
  %v1657 = vunpack.c.h.b16 %v1569
  %v1658 = vunpack.c.l.b16 %v1570
  %v1659 = vunpack.c.h.b16 %v1570
  %v1660 = vunpack.c.l.b16 %v1571
  %v1661 = vunpack.c.h.b16 %v1571
  %v1662 = vunpack.c.l.b16 %v1572
  %v1663 = vunpack.c.h.b16 %v1572
  %v1664 = vunpack.c.l.b16 %v1573
  %v1665 = vunpack.c.h.b16 %v1573
  %v1666 = vunpack.c.l.b16 %v1574
  %v1667 = vunpack.c.h.b16 %v1574
  %v1668 = vunpack.c.l.b16 %v1575
  %v1669 = vunpack.c.h.b16 %v1575
  %v1670 = vunpack.c.l.b16 %v1576
  %v1671 = vunpack.c.h.b16 %v1576
  %v1672 = vunpack.c.l.b16 %v1577
  %v1673 = vunpack.c.h.b16 %v1577
  %v1674 = vpack.c.b16 %v1614, %v1610
  %v1675 = vpack.c.b16 %v1615, %v1611
  %v1676 = vpack.c.b16 %v1616, %v1612
  %v1677 = vpack.c.b16 %v1617, %v1613
  %v1678 = vpack.c.b16 %v1622, %v1618
  %v1679 = vpack.c.b16 %v1623, %v1619
  %v1680 = vpack.c.b16 %v1624, %v1620
  %v1681 = vpack.c.b16 %v1625, %v1621
  %v1682 = vpack.c.b16 %v1630, %v1626
  %v1683 = vpack.c.b16 %v1631, %v1627
  %v1684 = vpack.c.b16 %v1632, %v1628
  %v1685 = vpack.c.b16 %v1633, %v1629
  %v1686 = vpack.c.b16 %v1638, %v1634
  %v1687 = vpack.c.b16 %v1639, %v1635
  %v1688 = vpack.c.b16 %v1640, %v1636
  %v1689 = vpack.c.b16 %v1641, %v1637
  %v1690 = vpack.c.b16 %v1646, %v1642
  %v1691 = vpack.c.b16 %v1647, %v1643
  %v1692 = vpack.c.b16 %v1648, %v1644
  %v1693 = vpack.c.b16 %v1649, %v1645
  %v1694 = vpack.c.b16 %v1654, %v1650
  %v1695 = vpack.c.b16 %v1655, %v1651
  %v1696 = vpack.c.b16 %v1656, %v1652
  %v1697 = vpack.c.b16 %v1657, %v1653
  %v1698 = vpack.c.b16 %v1662, %v1658
  %v1699 = vpack.c.b16 %v1663, %v1659
  %v1700 = vpack.c.b16 %v1664, %v1660
  %v1701 = vpack.c.b16 %v1665, %v1661
  %v1702 = vpack.c.b16 %v1670, %v1666
  %v1703 = vpack.c.b16 %v1671, %v1667
  %v1704 = vpack.c.b16 %v1672, %v1668
  %v1705 = vpack.c.b16 %v1673, %v1669
  %1738 = vmatprep.subr.bf16.mxu0 %v1703
  %1739 = vmatpush1.bf16.msra.mxu0 %v1702
  %1740 = vmatprep.subr.bf16.mxu0 %v1699
  %1741 = vmatpush1.bf16.msra.mxu0 %v1698
  %1742 = vmatprep.subr.bf16.mxu0 %v1695
  %1743 = vmatpush1.bf16.msra.mxu0 %v1694
  %1744 = vmatprep.subr.bf16.mxu0 %v1691
  %1745 = vmatpush1.bf16.msra.mxu0 %v1690
  %1746 = vmatprep.subr.bf16.mxu0 %v1687
  %1747 = vmatpush1.bf16.msra.mxu0 %v1686
  %1748 = vmatprep.subr.bf16.mxu0 %v1683
  %1749 = vmatpush1.bf16.msra.mxu0 %v1682
  %1750 = vmatprep.subr.bf16.mxu0 %v1679
  %1751 = vmatpush1.bf16.msra.mxu0 %v1678
  %1752 = vmatprep.subr.bf16.mxu0 %v1675
  %1753 = vmatpush1.bf16.msra.mxu0 %v1674
  %1754 = vmatprep.subr.bf16.mxu0 0
  %1755 = vmatpush2.bf16.msra.mxu0 0
  %1756 = vmatprep.subr.bf16.mxu0 0
  %1757 = vmatpush2.bf16.msra.mxu0 0
  %1758 = vmatprep.subr.bf16.mxu0 0
  %1759 = vmatpush2.bf16.msra.mxu0 0
  %1760 = vmatprep.subr.bf16.mxu0 0
  %1761 = vmatpush2.bf16.msra.mxu0 0
  %1762 = vmatprep.subr.bf16.mxu0 0
  %1763 = vmatpush2.bf16.msra.mxu0 0
  %1764 = vmatprep.subr.bf16.mxu0 0
  %1765 = vmatpush2.bf16.msra.mxu0 0
  %1766 = vmatprep.subr.bf16.mxu0 0
  %1767 = vmatpush2.bf16.msra.mxu0 0
  %1768 = vmatprep.subr.bf16.mxu0 0
  %1769 = vmatpush2.bf16.msra.mxu0 0
  %1770 = vmatprep.mubr.bf16.mxu0 0
  %1771 = vmatmul.mubr.bf16.gmra.mxu0 %v1545
  %v1772 = vpop.f32.mrf.mxu0
  %v1773 = vadd.f32 0.0, %v1772
  %v1774 = vpop.f32.mrf.mxu0
  %v1775 = vadd.f32 0.0, %v1774
  %v1776 = vpop.f32.mrf.mxu0
  %v1777 = vpop.f32.mrf.mxu0
  %1778 = vdwg.mxu0
  %1779 = vmatprep.subr.bf16.mxu0 %v1705
  %1780 = vmatpush1.bf16.msra.mxu0 %v1704
  %1781 = vmatprep.subr.bf16.mxu0 %v1701
  %1782 = vmatpush1.bf16.msra.mxu0 %v1700
  %1783 = vmatprep.subr.bf16.mxu0 %v1697
  %1784 = vmatpush1.bf16.msra.mxu0 %v1696
  %1785 = vmatprep.subr.bf16.mxu0 %v1693
  %1786 = vmatpush1.bf16.msra.mxu0 %v1692
  %1787 = vmatprep.subr.bf16.mxu0 %v1689
  %1788 = vmatpush1.bf16.msra.mxu0 %v1688
  %1789 = vmatprep.subr.bf16.mxu0 %v1685
  %1790 = vmatpush1.bf16.msra.mxu0 %v1684
  %1791 = vmatprep.subr.bf16.mxu0 %v1681
  %1792 = vmatpush1.bf16.msra.mxu0 %v1680
  %1793 = vmatprep.subr.bf16.mxu0 %v1677
  %1794 = vmatpush1.bf16.msra.mxu0 %v1676
  %1795 = vmatprep.subr.bf16.mxu0 0
  %1796 = vmatpush2.bf16.msra.mxu0 0
  %1797 = vmatprep.subr.bf16.mxu0 0
  %1798 = vmatpush2.bf16.msra.mxu0 0
  %1799 = vmatprep.subr.bf16.mxu0 0
  %1800 = vmatpush2.bf16.msra.mxu0 0
  %1801 = vmatprep.subr.bf16.mxu0 0
  %1802 = vmatpush2.bf16.msra.mxu0 0
  %1803 = vmatprep.subr.bf16.mxu0 0
  %1804 = vmatpush2.bf16.msra.mxu0 0
  %1805 = vmatprep.subr.bf16.mxu0 0
  %1806 = vmatpush2.bf16.msra.mxu0 0
  %1807 = vmatprep.subr.bf16.mxu0 0
  %1808 = vmatpush2.bf16.msra.mxu0 0
  %1809 = vmatprep.subr.bf16.mxu0 0
  %1810 = vmatpush2.bf16.msra.mxu0 0
  %1811 = vmatprep.mubr.bf16.mxu0 0
  %1812 = vmatmul.mubr.bf16.gmra.mxu0 %v1545
  %v1813 = vpop.f32.mrf.mxu0
  %v1814 = vadd.f32 0.0, %v1813
  %v1815 = vpop.f32.mrf.mxu0
  %v1816 = vadd.f32 0.0, %v1815
  %v1817 = vpop.f32.mrf.mxu0
  %v1818 = vpop.f32.mrf.mxu0
  %1819 = vdwg.mxu0
  %v1824 = vrot.slane %v1773, 6
  %v1825 = vrot.slane %v1775, 6
  %v1826 = vrot.slane %v1814, 6
  %v1827 = vrot.slane %v1816, 6
  %v1828 = vrot.slane %v1773, 7
  %v1829 = vrot.slane %v1775, 7
  %v1830 = vrot.slane %v1814, 7
  %v1831 = vrot.slane %v1816, 7
  %v1832 = vrot.slane %v1773, 1
  %v1833 = vrot.slane %v1775, 1
  %v1834 = vrot.slane %v1814, 1
  %v1835 = vrot.slane %v1816, 1
  %v1836 = vrot.slane %v1773, 2
  %v1837 = vrot.slane %v1775, 2
  %v1838 = vrot.slane %v1814, 2
  %v1839 = vrot.slane %v1816, 2
  %v1840 = vrot.slane %v1773, 3
  %v1841 = vrot.slane %v1775, 3
  %v1842 = vrot.slane %v1814, 3
  %v1843 = vrot.slane %v1816, 3
  %v1844 = vrot.slane %v1773, 4
  %v1845 = vrot.slane %v1775, 4
  %v1846 = vrot.slane %v1814, 4
  %v1847 = vrot.slane %v1816, 4
  %v1848 = vrot.slane %v1773, 5
  %v1849 = vrot.slane %v1775, 5
  %v1850 = vrot.slane %v1814, 5
  %v1851 = vrot.slane %v1816, 5
  %v1884 = vadd.f32 %v1513, %v1824
  %v1885 = vadd.f32 %v1514, %v1825
  %v1886 = vadd.f32 %v1515, %v1826
  %v1887 = vadd.f32 %v1516, %v1827
  %v1888 = vadd.f32 %v1517, %v1828
  %v1889 = vadd.f32 %v1518, %v1829
  %v1890 = vadd.f32 %v1519, %v1830
  %v1891 = vadd.f32 %v1520, %v1831
  %v1892 = vadd.f32 %v1521, %v1773
  %v1893 = vadd.f32 %v1522, %v1775
  %v1894 = vadd.f32 %v1523, %v1814
  %v1895 = vadd.f32 %v1524, %v1816
  %v1896 = vadd.f32 %v1525, %v1832
  %v1897 = vadd.f32 %v1526, %v1833
  %v1898 = vadd.f32 %v1527, %v1834
  %v1899 = vadd.f32 %v1528, %v1835
  %v1900 = vadd.f32 %v1529, %v1836
  %v1901 = vadd.f32 %v1530, %v1837
  %v1902 = vadd.f32 %v1531, %v1838
  %v1903 = vadd.f32 %v1532, %v1839
  %v1904 = vadd.f32 %v1533, %v1840
  %v1905 = vadd.f32 %v1534, %v1841
  %v1906 = vadd.f32 %v1535, %v1842
  %v1907 = vadd.f32 %v1536, %v1843
  %v1908 = vadd.f32 %v1537, %v1844
  %v1909 = vadd.f32 %v1538, %v1845
  %v1910 = vadd.f32 %v1539, %v1846
  %v1911 = vadd.f32 %v1540, %v1847
  %v1912 = vadd.f32 %v1541, %v1848
  %v1913 = vadd.f32 %v1542, %v1849
  %v1914 = vadd.f32 %v1543, %v1850
  %v1915 = vadd.f32 %v1544, %v1851
  %v1916 = vxor.u32 %v1884, 2147483648
  %v1917 = vxor.u32 %v1885, 2147483648
  %v1918 = vxor.u32 %v1886, 2147483648
  %v1919 = vxor.u32 %v1888, 2147483648
  %v1920 = vxor.u32 %v1889, 2147483648
  %v1921 = vxor.u32 %v1890, 2147483648
  %v1922 = vxor.u32 %v1892, 2147483648
  %v1923 = vxor.u32 %v1893, 2147483648
  %v1924 = vxor.u32 %v1894, 2147483648
  %v1925 = vxor.u32 %v1896, 2147483648
  %v1926 = vxor.u32 %v1897, 2147483648
  %v1927 = vxor.u32 %v1898, 2147483648
  %v1928 = vxor.u32 %v1900, 2147483648
  %v1929 = vxor.u32 %v1901, 2147483648
  %v1930 = vxor.u32 %v1902, 2147483648
  %v1931 = vxor.u32 %v1904, 2147483648
  %v1932 = vxor.u32 %v1905, 2147483648
  %v1933 = vxor.u32 %v1906, 2147483648
  %v1934 = vxor.u32 %v1908, 2147483648
  %v1935 = vxor.u32 %v1909, 2147483648
  %v1936 = vxor.u32 %v1910, 2147483648
  %v1937 = vxor.u32 %v1912, 2147483648
  %v1938 = vxor.u32 %v1913, 2147483648
  %v1939 = vxor.u32 %v1914, 2147483648
  %v1940 = vmul.f32 %v1916, 1.442695
  %v1941 = vpow.pop %v1940
  %v1942 = vmul.f32 %v1917, 1.442695
  %v1943 = vpow.pop %v1942
  %v1944 = vmul.f32 %v1918, 1.442695
  %v1945 = vpow.pop %v1944
  %v1946 = vmul.f32 %v1919, 1.442695
  %v1947 = vpow.pop %v1946
  %v1948 = vmul.f32 %v1920, 1.442695
  %v1949 = vpow.pop %v1948
  %v1950 = vmul.f32 %v1921, 1.442695
  %v1951 = vpow.pop %v1950
  %v1952 = vmul.f32 %v1922, 1.442695
  %v1953 = vpow.pop %v1952
  %v1954 = vmul.f32 %v1923, 1.442695
  %v1955 = vpow.pop %v1954
  %v1956 = vmul.f32 %v1924, 1.442695
  %v1957 = vpow.pop %v1956
  %v1958 = vmul.f32 %v1925, 1.442695
  %v1959 = vpow.pop %v1958
  %v1960 = vmul.f32 %v1926, 1.442695
  %v1961 = vpow.pop %v1960
  %v1962 = vmul.f32 %v1927, 1.442695
  %v1963 = vpow.pop %v1962
  %v1964 = vmul.f32 %v1928, 1.442695
  %v1965 = vpow.pop %v1964
  %v1966 = vmul.f32 %v1929, 1.442695
  %v1967 = vpow.pop %v1966
  %v1968 = vmul.f32 %v1930, 1.442695
  %v1969 = vpow.pop %v1968
  %v1970 = vmul.f32 %v1931, 1.442695
  %v1971 = vpow.pop %v1970
  %v1972 = vmul.f32 %v1932, 1.442695
  %v1973 = vpow.pop %v1972
  %v1974 = vmul.f32 %v1933, 1.442695
  %v1975 = vpow.pop %v1974
  %v1976 = vmul.f32 %v1934, 1.442695
  %v1977 = vpow.pop %v1976
  %v1978 = vmul.f32 %v1935, 1.442695
  %v1979 = vpow.pop %v1978
  %v1980 = vmul.f32 %v1936, 1.442695
  %v1981 = vpow.pop %v1980
  %v1982 = vmul.f32 %v1937, 1.442695
  %v1983 = vpow.pop %v1982
  %v1984 = vmul.f32 %v1938, 1.442695
  %v1985 = vpow.pop %v1984
  %v1986 = vmul.f32 %v1939, 1.442695
  %v1987 = vpow.pop %v1986
  %v1988 = vadd.f32 %v1941, 1.0
  %v1989 = vadd.f32 %v1943, 1.0
  %v1990 = vadd.f32 %v1945, 1.0
  %v1991 = vadd.f32 %v1947, 1.0
  %v1992 = vadd.f32 %v1949, 1.0
  %v1993 = vadd.f32 %v1951, 1.0
  %v1994 = vadd.f32 %v1953, 1.0
  %v1995 = vadd.f32 %v1955, 1.0
  %v1996 = vadd.f32 %v1957, 1.0
  %v1997 = vadd.f32 %v1959, 1.0
  %v1998 = vadd.f32 %v1961, 1.0
  %v1999 = vadd.f32 %v1963, 1.0
  %v2000 = vadd.f32 %v1965, 1.0
  %v2001 = vadd.f32 %v1967, 1.0
  %v2002 = vadd.f32 %v1969, 1.0
  %v2003 = vadd.f32 %v1971, 1.0
  %v2004 = vadd.f32 %v1973, 1.0
  %v2005 = vadd.f32 %v1975, 1.0
  %v2006 = vadd.f32 %v1977, 1.0
  %v2007 = vadd.f32 %v1979, 1.0
  %v2008 = vadd.f32 %v1981, 1.0
  %v2009 = vadd.f32 %v1983, 1.0
  %v2010 = vadd.f32 %v1985, 1.0
  %v2011 = vadd.f32 %v1987, 1.0
  %v2012 = vrcp.pop %v1988
  %v2013 = vmul.f32 1.0, %v2012
  %v2014 = vrcp.pop %v1989
  %v2015 = vmul.f32 1.0, %v2014
  %v2016 = vrcp.pop %v1990
  %v2017 = vmul.f32 1.0, %v2016
  %v2018 = vrcp.pop %v1991
  %v2019 = vmul.f32 1.0, %v2018
  %v2020 = vrcp.pop %v1992
  %v2021 = vmul.f32 1.0, %v2020
  %v2022 = vrcp.pop %v1993
  %v2023 = vmul.f32 1.0, %v2022
  %v2024 = vrcp.pop %v1994
  %v2025 = vmul.f32 1.0, %v2024
  %v2026 = vrcp.pop %v1995
  %v2027 = vmul.f32 1.0, %v2026
  %v2028 = vrcp.pop %v1996
  %v2029 = vmul.f32 1.0, %v2028
  %v2030 = vrcp.pop %v1997
  %v2031 = vmul.f32 1.0, %v2030
  %v2032 = vrcp.pop %v1998
  %v2033 = vmul.f32 1.0, %v2032
  %v2034 = vrcp.pop %v1999
  %v2035 = vmul.f32 1.0, %v2034
  %v2036 = vrcp.pop %v2000
  %v2037 = vmul.f32 1.0, %v2036
  %v2038 = vrcp.pop %v2001
  %v2039 = vmul.f32 1.0, %v2038
  %v2040 = vrcp.pop %v2002
  %v2041 = vmul.f32 1.0, %v2040
  %v2042 = vrcp.pop %v2003
  %v2043 = vmul.f32 1.0, %v2042
  %v2044 = vrcp.pop %v2004
  %v2045 = vmul.f32 1.0, %v2044
  %v2046 = vrcp.pop %v2005
  %v2047 = vmul.f32 1.0, %v2046
  %v2048 = vrcp.pop %v2006
  %v2049 = vmul.f32 1.0, %v2048
  %v2050 = vrcp.pop %v2007
  %v2051 = vmul.f32 1.0, %v2050
  %v2052 = vrcp.pop %v2008
  %v2053 = vmul.f32 1.0, %v2052
  %v2054 = vrcp.pop %v2009
  %v2055 = vmul.f32 1.0, %v2054
  %v2056 = vrcp.pop %v2010
  %v2057 = vmul.f32 1.0, %v2056
  %v2058 = vrcp.pop %v2011
  %v2059 = vmul.f32 1.0, %v2058
  %v2060 = vtanh.pop %v1887
  %v2061 = vtanh.pop %v1891
  %v2062 = vtanh.pop %v1895
  %v2063 = vtanh.pop %v1899
  %v2064 = vtanh.pop %v1903
  %v2065 = vtanh.pop %v1907
  %v2066 = vtanh.pop %v1911
  %v2067 = vtanh.pop %v1915
  %v2068 = vld [vmem:[#allocation3] sm:$0xff]
  %v2070 = vrot.slane %v2068, 6
  %v2071 = vrot.slane %v2068, 7
  %v2072 = vrot.slane %v2068, 1
  %v2073 = vrot.slane %v2068, 2
  %v2074 = vrot.slane %v2068, 3
  %v2075 = vrot.slane %v2068, 4
  %v2076 = vrot.slane %v2068, 5
  %v2085 = vmul.f32 %v2015, %v2070
  %v2086 = vmul.f32 %v2021, %v2071
  %v2087 = vmul.f32 %v2027, %v2068
  %v2088 = vmul.f32 %v2033, %v2072
  %v2089 = vmul.f32 %v2039, %v2073
  %v2090 = vmul.f32 %v2045, %v2074
  %v2091 = vmul.f32 %v2051, %v2075
  %v2092 = vmul.f32 %v2057, %v2076
  %v2093 = vmul.f32 %v2013, %v2060
  %v2094 = vmul.f32 %v2019, %v2061
  %v2095 = vmul.f32 %v2025, %v2062
  %v2096 = vmul.f32 %v2031, %v2063
  %v2097 = vmul.f32 %v2037, %v2064
  %v2098 = vmul.f32 %v2043, %v2065
  %v2099 = vmul.f32 %v2049, %v2066
  %v2100 = vmul.f32 %v2055, %v2067
  %v2101 = vadd.f32 %v2085, %v2093
  %v2102 = vadd.f32 %v2086, %v2094
  %v2103 = vadd.f32 %v2087, %v2095
  %v2104 = vadd.f32 %v2088, %v2096
  %v2105 = vadd.f32 %v2089, %v2097
  %v2106 = vadd.f32 %v2090, %v2098
  %v2107 = vadd.f32 %v2091, %v2099
  %v2108 = vadd.f32 %v2092, %v2100
  %v2109 = vtanh.pop %v2101
  %v2110 = vtanh.pop %v2102
  %v2111 = vtanh.pop %v2103
  %v2112 = vtanh.pop %v2104
  %v2113 = vtanh.pop %v2105
  %v2114 = vtanh.pop %v2106
  %v2115 = vtanh.pop %v2107
  %v2116 = vtanh.pop %v2108
  %v2117 = vmul.f32 %v2017, %v2109
  %v2118 = vmul.f32 %v2023, %v2110
  %v2119 = vmul.f32 %v2029, %v2111
  %v2120 = vmul.f32 %v2035, %v2112
  %v2121 = vmul.f32 %v2041, %v2113
  %v2122 = vmul.f32 %v2047, %v2114
  %v2123 = vmul.f32 %v2053, %v2115
  %v2124 = vmul.f32 %v2059, %v2116
  %v2125 = vpack.c.bf16 %v2117, %v2117
  %v2126 = vpack.c.bf16 %v2118, %v2118
  %v2127 = vpack.c.bf16 %v2119, %v2119
  %v2128 = vpack.c.bf16 %v2120, %v2120
  %v2129 = vpack.c.bf16 %v2121, %v2121
  %v2130 = vpack.c.bf16 %v2122, %v2122
  %v2131 = vpack.c.bf16 %v2123, %v2123
  %v2132 = vpack.c.bf16 %v2124, %v2124
  %v2141 = vrot.slane %v2102, 7
  %v2142 = vsel %vm669, %v2141, %v2101
  %v2143 = vrot.slane %v2103, 6
  %v2144 = vsel %vm672, %v2143, %v2142
  %v2145 = vrot.slane %v2104, 5
  %v2146 = vsel %vm675, %v2145, %v2144
  %v2147 = vrot.slane %v2105, 4
  %v2148 = vsel %vm678, %v2147, %v2146
  %v2149 = vrot.slane %v2106, 3
  %v2150 = vsel %vm681, %v2149, %v2148
  %v2151 = vrot.slane %v2107, 2
  %v2152 = vrot.slane %v2108, 1
  %v2153 = vsel %vm663, %v2152, %v2151
  %2156 = vst [vmem:[#allocation3 - $0x2] sm:$0xfc] %v2150
  %2157 = vst [vmem:[#allocation3 + $0x6] sm:$0x3] %v2153
  %v2166 = vunpack.c.l.b16 %v2125
  %v2167 = vunpack.c.l.b16 %v2126
  %v2168 = vunpack.c.l.b16 %v2127
  %v2169 = vunpack.c.l.b16 %v2128
  %v2170 = vunpack.c.l.b16 %v2129
  %v2171 = vunpack.c.l.b16 %v2130
  %v2172 = vunpack.c.l.b16 %v2131
  %v2173 = vunpack.c.l.b16 %v2132
  %v2174 = vpack.c.b16 %v2166, %v2166
  %v2175 = vpack.c.b16 %v2167, %v2167
  %v2176 = vpack.c.b16 %v2168, %v2168
  %v2177 = vpack.c.b16 %v2169, %v2169
  %v2178 = vpack.c.b16 %v2170, %v2170
  %v2179 = vpack.c.b16 %v2171, %v2171
  %v2180 = vpack.c.b16 %v2172, %v2172
  %v2181 = vpack.c.b16 %v2173, %v2173
  %v2182 = vunpack.c.l.b16 %v2174
  %v2183 = vunpack.c.l.b16 %v2175
  %v2184 = vunpack.c.l.b16 %v2176
  %v2185 = vunpack.c.l.b16 %v2177
  %v2186 = vunpack.c.l.b16 %v2178
  %v2187 = vunpack.c.l.b16 %v2179
  %v2188 = vunpack.c.l.b16 %v2180
  %v2189 = vunpack.c.l.b16 %v2181
  %v2190 = vrot.slane %v2182, 2
  %v2191 = vrot.slane %v2183, 1
  %v2192 = vsel %vm663, %v2191, %v2190
  %v2193 = vsel %vm666, %v2184, %v2192
  %v2194 = vrot.slane %v2185, 7
  %v2195 = vsel %vm669, %v2194, %v2193
  %v2196 = vrot.slane %v2186, 6
  %v2197 = vsel %vm672, %v2196, %v2195
  %v2198 = vrot.slane %v2187, 5
  %v2199 = vsel %vm675, %v2198, %v2197
  %v2200 = vrot.slane %v2188, 4
  %v2201 = vsel %vm678, %v2200, %v2199
  %v2202 = vrot.slane %v2189, 3
  %v2203 = vsel %vm681, %v2202, %v2201
  %v2204 = vpack.c.b16 %v2203, %v2203
  %2206 = vst [vmem:[#allocation2] sm:$0xf] %v2204
  %vm2207 = vcmask 1041409
  %vm2208 = vsmask.f32 1280
  %vm2209 = vmand %vm2207, %vm2208
  %v2210 = vld [vmem:[%s2] sm:$0x2]
  %v2211 = vsel %vm2209, %v2125, %v2210
  %2212 = vst [vmem:[%s2] sm:$0x2] %v2211
  %v2213 = vld [vmem:[%s2 + $0x8] sm:$0x2]
  %v2214 = vsel %vm2209, %v2126, %v2213
  %2215 = vst [vmem:[%s2 + $0x8] sm:$0x2] %v2214
  %v2216 = vld [vmem:[%s2 + $0x10] sm:$0x2]
  %v2217 = vsel %vm2209, %v2127, %v2216
  %2218 = vst [vmem:[%s2 + $0x10] sm:$0x2] %v2217
  %v2219 = vld [vmem:[%s2 + $0x18] sm:$0x2]
  %v2220 = vsel %vm2209, %v2128, %v2219
  %2221 = vst [vmem:[%s2 + $0x18] sm:$0x2] %v2220
  %v2222 = vld [vmem:[%s2 + $0x20] sm:$0x2]
  %v2223 = vsel %vm2209, %v2129, %v2222
  %2224 = vst [vmem:[%s2 + $0x20] sm:$0x2] %v2223
  %v2225 = vld [vmem:[%s2 + $0x28] sm:$0x2]
  %v2226 = vsel %vm2209, %v2130, %v2225
  %2227 = vst [vmem:[%s2 + $0x28] sm:$0x2] %v2226
  %v2228 = vld [vmem:[%s2 + $0x30] sm:$0x2]
  %v2229 = vsel %vm2209, %v2131, %v2228
  %2230 = vst [vmem:[%s2 + $0x30] sm:$0x2] %v2229
  %v2231 = vld [vmem:[%s2 + $0x38] sm:$0x2]
  %v2232 = vsel %vm2209, %v2132, %v2231
  %2233 = vst [vmem:[%s2 + $0x38] sm:$0x2] %v2232
  %v2234 = vld [vmem:[%s0] sm:$0x22]
  %v2235 = vld [vmem:[%s0 + $0x8] sm:$0x22]
  %v2236 = vld [vmem:[%s0 + $0x20] sm:$0x22]
  %v2237 = vld [vmem:[%s0 + $0x28] sm:$0x22]
  %v2238 = vld [vmem:[%s0 + $0x40] sm:$0x22]
  %v2239 = vld [vmem:[%s0 + $0x48] sm:$0x22]
  %v2240 = vld [vmem:[%s0 + $0x60] sm:$0x22]
  %v2241 = vld [vmem:[%s0 + $0x68] sm:$0x22]
  %v2242 = vld [vmem:[%s0 + $0x80] sm:$0x22]
  %v2243 = vld [vmem:[%s0 + $0x88] sm:$0x22]
  %v2244 = vld [vmem:[%s0 + $0xa0] sm:$0x22]
  %v2245 = vld [vmem:[%s0 + $0xa8] sm:$0x22]
  %v2246 = vld [vmem:[%s0 + $0xc0] sm:$0x22]
  %v2247 = vld [vmem:[%s0 + $0xc8] sm:$0x22]
  %v2248 = vld [vmem:[%s0 + $0xe0] sm:$0x22]
  %v2249 = vld [vmem:[%s0 + $0xe8] sm:$0x22]
  %v2250 = vunpack.c.l.bf16 %v2234
  %v2251 = vunpack.c.h.bf16 %v2234
  %v2252 = vunpack.c.l.bf16 %v2235
  %v2253 = vunpack.c.h.bf16 %v2235
  %v2254 = vunpack.c.l.bf16 %v2236
  %v2255 = vunpack.c.h.bf16 %v2236
  %v2256 = vunpack.c.l.bf16 %v2237
  %v2257 = vunpack.c.h.bf16 %v2237
  %v2258 = vunpack.c.l.bf16 %v2238
  %v2259 = vunpack.c.h.bf16 %v2238
  %v2260 = vunpack.c.l.bf16 %v2239
  %v2261 = vunpack.c.h.bf16 %v2239
  %v2262 = vunpack.c.l.bf16 %v2240
  %v2263 = vunpack.c.h.bf16 %v2240
  %v2264 = vunpack.c.l.bf16 %v2241
  %v2265 = vunpack.c.h.bf16 %v2241
  %v2266 = vunpack.c.l.bf16 %v2242
  %v2267 = vunpack.c.h.bf16 %v2242
  %v2268 = vunpack.c.l.bf16 %v2243
  %v2269 = vunpack.c.h.bf16 %v2243
  %v2270 = vunpack.c.l.bf16 %v2244
  %v2271 = vunpack.c.h.bf16 %v2244
  %v2272 = vunpack.c.l.bf16 %v2245
  %v2273 = vunpack.c.h.bf16 %v2245
  %v2274 = vunpack.c.l.bf16 %v2246
  %v2275 = vunpack.c.h.bf16 %v2246
  %v2276 = vunpack.c.l.bf16 %v2247
  %v2277 = vunpack.c.h.bf16 %v2247
  %v2278 = vunpack.c.l.bf16 %v2248
  %v2279 = vunpack.c.h.bf16 %v2248
  %v2280 = vunpack.c.l.bf16 %v2249
  %v2281 = vunpack.c.h.bf16 %v2249
  %v2282 = vld [vmem:[#allocation2] sm:$0xf]
  %v2283 = vld [vmem:[%s1] sm:$0xff]
  %v2284 = vld [vmem:[%s1 + $0x8] sm:$0xff]
  %v2285 = vld [vmem:[%s1 + $0x10] sm:$0xff]
  %v2286 = vld [vmem:[%s1 + $0x18] sm:$0xff]
  %v2287 = vld [vmem:[%s1 + $0x20] sm:$0xff]
  %v2288 = vld [vmem:[%s1 + $0x28] sm:$0xff]
  %v2289 = vld [vmem:[%s1 + $0x30] sm:$0xff]
  %v2290 = vld [vmem:[%s1 + $0x38] sm:$0xff]
  %v2291 = vld [vmem:[%s1 + $0x40] sm:$0xff]
  %v2292 = vld [vmem:[%s1 + $0x48] sm:$0xff]
  %v2293 = vld [vmem:[%s1 + $0x50] sm:$0xff]
  %v2294 = vld [vmem:[%s1 + $0x58] sm:$0xff]
  %v2295 = vld [vmem:[%s1 + $0x60] sm:$0xff]
  %v2296 = vld [vmem:[%s1 + $0x68] sm:$0xff]
  %v2297 = vld [vmem:[%s1 + $0x70] sm:$0xff]
  %v2298 = vld [vmem:[%s1 + $0x78] sm:$0xff]
  %v2299 = vld [vmem:[%s1 + $0x80] sm:$0xff]
  %v2300 = vld [vmem:[%s1 + $0x88] sm:$0xff]
  %v2301 = vld [vmem:[%s1 + $0x90] sm:$0xff]
  %v2302 = vld [vmem:[%s1 + $0x98] sm:$0xff]
  %v2303 = vld [vmem:[%s1 + $0xa0] sm:$0xff]
  %v2304 = vld [vmem:[%s1 + $0xa8] sm:$0xff]
  %v2305 = vld [vmem:[%s1 + $0xb0] sm:$0xff]
  %v2306 = vld [vmem:[%s1 + $0xb8] sm:$0xff]
  %v2307 = vld [vmem:[%s1 + $0xc0] sm:$0xff]
  %v2308 = vld [vmem:[%s1 + $0xc8] sm:$0xff]
  %v2309 = vld [vmem:[%s1 + $0xd0] sm:$0xff]
  %v2310 = vld [vmem:[%s1 + $0xd8] sm:$0xff]
  %v2311 = vld [vmem:[%s1 + $0xe0] sm:$0xff]
  %v2312 = vld [vmem:[%s1 + $0xe8] sm:$0xff]
  %v2313 = vld [vmem:[%s1 + $0xf0] sm:$0xff]
  %v2314 = vld [vmem:[%s1 + $0xf8] sm:$0xff]
  %v2347 = vunpack.c.l.b16 %v2283
  %v2348 = vunpack.c.h.b16 %v2283
  %v2349 = vunpack.c.l.b16 %v2284
  %v2350 = vunpack.c.h.b16 %v2284
  %v2351 = vunpack.c.l.b16 %v2285
  %v2352 = vunpack.c.h.b16 %v2285
  %v2353 = vunpack.c.l.b16 %v2286
  %v2354 = vunpack.c.h.b16 %v2286
  %v2355 = vunpack.c.l.b16 %v2287
  %v2356 = vunpack.c.h.b16 %v2287
  %v2357 = vunpack.c.l.b16 %v2288
  %v2358 = vunpack.c.h.b16 %v2288
  %v2359 = vunpack.c.l.b16 %v2289
  %v2360 = vunpack.c.h.b16 %v2289
  %v2361 = vunpack.c.l.b16 %v2290
  %v2362 = vunpack.c.h.b16 %v2290
  %v2363 = vunpack.c.l.b16 %v2291
  %v2364 = vunpack.c.h.b16 %v2291
  %v2365 = vunpack.c.l.b16 %v2292
  %v2366 = vunpack.c.h.b16 %v2292
  %v2367 = vunpack.c.l.b16 %v2293
  %v2368 = vunpack.c.h.b16 %v2293
  %v2369 = vunpack.c.l.b16 %v2294
  %v2370 = vunpack.c.h.b16 %v2294
  %v2371 = vunpack.c.l.b16 %v2295
  %v2372 = vunpack.c.h.b16 %v2295
  %v2373 = vunpack.c.l.b16 %v2296
  %v2374 = vunpack.c.h.b16 %v2296
  %v2375 = vunpack.c.l.b16 %v2297
  %v2376 = vunpack.c.h.b16 %v2297
  %v2377 = vunpack.c.l.b16 %v2298
  %v2378 = vunpack.c.h.b16 %v2298
  %v2379 = vunpack.c.l.b16 %v2299
  %v2380 = vunpack.c.h.b16 %v2299
  %v2381 = vunpack.c.l.b16 %v2300
  %v2382 = vunpack.c.h.b16 %v2300
  %v2383 = vunpack.c.l.b16 %v2301
  %v2384 = vunpack.c.h.b16 %v2301
  %v2385 = vunpack.c.l.b16 %v2302
  %v2386 = vunpack.c.h.b16 %v2302
  %v2387 = vunpack.c.l.b16 %v2303
  %v2388 = vunpack.c.h.b16 %v2303
  %v2389 = vunpack.c.l.b16 %v2304
  %v2390 = vunpack.c.h.b16 %v2304
  %v2391 = vunpack.c.l.b16 %v2305
  %v2392 = vunpack.c.h.b16 %v2305
  %v2393 = vunpack.c.l.b16 %v2306
  %v2394 = vunpack.c.h.b16 %v2306
  %v2395 = vunpack.c.l.b16 %v2307
  %v2396 = vunpack.c.h.b16 %v2307
  %v2397 = vunpack.c.l.b16 %v2308
  %v2398 = vunpack.c.h.b16 %v2308
  %v2399 = vunpack.c.l.b16 %v2309
  %v2400 = vunpack.c.h.b16 %v2309
  %v2401 = vunpack.c.l.b16 %v2310
  %v2402 = vunpack.c.h.b16 %v2310
  %v2403 = vunpack.c.l.b16 %v2311
  %v2404 = vunpack.c.h.b16 %v2311
  %v2405 = vunpack.c.l.b16 %v2312
  %v2406 = vunpack.c.h.b16 %v2312
  %v2407 = vunpack.c.l.b16 %v2313
  %v2408 = vunpack.c.h.b16 %v2313
  %v2409 = vunpack.c.l.b16 %v2314
  %v2410 = vunpack.c.h.b16 %v2314
  %v2411 = vpack.c.b16 %v2351, %v2347
  %v2412 = vpack.c.b16 %v2352, %v2348
  %v2413 = vpack.c.b16 %v2353, %v2349
  %v2414 = vpack.c.b16 %v2354, %v2350
  %v2415 = vpack.c.b16 %v2359, %v2355
  %v2416 = vpack.c.b16 %v2360, %v2356
  %v2417 = vpack.c.b16 %v2361, %v2357
  %v2418 = vpack.c.b16 %v2362, %v2358
  %v2419 = vpack.c.b16 %v2367, %v2363
  %v2420 = vpack.c.b16 %v2368, %v2364
  %v2421 = vpack.c.b16 %v2369, %v2365
  %v2422 = vpack.c.b16 %v2370, %v2366
  %v2423 = vpack.c.b16 %v2375, %v2371
  %v2424 = vpack.c.b16 %v2376, %v2372
  %v2425 = vpack.c.b16 %v2377, %v2373
  %v2426 = vpack.c.b16 %v2378, %v2374
  %v2427 = vpack.c.b16 %v2383, %v2379
  %v2428 = vpack.c.b16 %v2384, %v2380
  %v2429 = vpack.c.b16 %v2385, %v2381
  %v2430 = vpack.c.b16 %v2386, %v2382
  %v2431 = vpack.c.b16 %v2391, %v2387
  %v2432 = vpack.c.b16 %v2392, %v2388
  %v2433 = vpack.c.b16 %v2393, %v2389
  %v2434 = vpack.c.b16 %v2394, %v2390
  %v2435 = vpack.c.b16 %v2399, %v2395
  %v2436 = vpack.c.b16 %v2400, %v2396
  %v2437 = vpack.c.b16 %v2401, %v2397
  %v2438 = vpack.c.b16 %v2402, %v2398
  %v2439 = vpack.c.b16 %v2407, %v2403
  %v2440 = vpack.c.b16 %v2408, %v2404
  %v2441 = vpack.c.b16 %v2409, %v2405
  %v2442 = vpack.c.b16 %v2410, %v2406
  %2475 = vmatprep.subr.bf16.mxu0 %v2440
  %2476 = vmatpush1.bf16.msra.mxu0 %v2439
  %2477 = vmatprep.subr.bf16.mxu0 %v2436
  %2478 = vmatpush1.bf16.msra.mxu0 %v2435
  %2479 = vmatprep.subr.bf16.mxu0 %v2432
  %2480 = vmatpush1.bf16.msra.mxu0 %v2431
  %2481 = vmatprep.subr.bf16.mxu0 %v2428
  %2482 = vmatpush1.bf16.msra.mxu0 %v2427
  %2483 = vmatprep.subr.bf16.mxu0 %v2424
  %2484 = vmatpush1.bf16.msra.mxu0 %v2423
  %2485 = vmatprep.subr.bf16.mxu0 %v2420
  %2486 = vmatpush1.bf16.msra.mxu0 %v2419
  %2487 = vmatprep.subr.bf16.mxu0 %v2416
  %2488 = vmatpush1.bf16.msra.mxu0 %v2415
  %2489 = vmatprep.subr.bf16.mxu0 %v2412
  %2490 = vmatpush1.bf16.msra.mxu0 %v2411
  %2491 = vmatprep.subr.bf16.mxu0 0
  %2492 = vmatpush2.bf16.msra.mxu0 0
  %2493 = vmatprep.subr.bf16.mxu0 0
  %2494 = vmatpush2.bf16.msra.mxu0 0
  %2495 = vmatprep.subr.bf16.mxu0 0
  %2496 = vmatpush2.bf16.msra.mxu0 0
  %2497 = vmatprep.subr.bf16.mxu0 0
  %2498 = vmatpush2.bf16.msra.mxu0 0
  %2499 = vmatprep.subr.bf16.mxu0 0
  %2500 = vmatpush2.bf16.msra.mxu0 0
  %2501 = vmatprep.subr.bf16.mxu0 0
  %2502 = vmatpush2.bf16.msra.mxu0 0
  %2503 = vmatprep.subr.bf16.mxu0 0
  %2504 = vmatpush2.bf16.msra.mxu0 0
  %2505 = vmatprep.subr.bf16.mxu0 0
  %2506 = vmatpush2.bf16.msra.mxu0 0
  %2507 = vmatprep.mubr.bf16.mxu0 0
  %2508 = vmatmul.mubr.bf16.gmra.mxu0 %v2282
  %v2509 = vpop.f32.mrf.mxu0
  %v2510 = vadd.f32 0.0, %v2509
  %v2511 = vpop.f32.mrf.mxu0
  %v2512 = vadd.f32 0.0, %v2511
  %v2513 = vpop.f32.mrf.mxu0
  %v2514 = vpop.f32.mrf.mxu0
  %2515 = vdwg.mxu0
  %2516 = vmatprep.subr.bf16.mxu0 %v2442
  %2517 = vmatpush1.bf16.msra.mxu0 %v2441
  %2518 = vmatprep.subr.bf16.mxu0 %v2438
  %2519 = vmatpush1.bf16.msra.mxu0 %v2437
  %2520 = vmatprep.subr.bf16.mxu0 %v2434
  %2521 = vmatpush1.bf16.msra.mxu0 %v2433
  %2522 = vmatprep.subr.bf16.mxu0 %v2430
  %2523 = vmatpush1.bf16.msra.mxu0 %v2429
  %2524 = vmatprep.subr.bf16.mxu0 %v2426
  %2525 = vmatpush1.bf16.msra.mxu0 %v2425
  %2526 = vmatprep.subr.bf16.mxu0 %v2422
  %2527 = vmatpush1.bf16.msra.mxu0 %v2421
  %2528 = vmatprep.subr.bf16.mxu0 %v2418
  %2529 = vmatpush1.bf16.msra.mxu0 %v2417
  %2530 = vmatprep.subr.bf16.mxu0 %v2414
  %2531 = vmatpush1.bf16.msra.mxu0 %v2413
  %2532 = vmatprep.subr.bf16.mxu0 0
  %2533 = vmatpush2.bf16.msra.mxu0 0
  %2534 = vmatprep.subr.bf16.mxu0 0
  %2535 = vmatpush2.bf16.msra.mxu0 0
  %2536 = vmatprep.subr.bf16.mxu0 0
  %2537 = vmatpush2.bf16.msra.mxu0 0
  %2538 = vmatprep.subr.bf16.mxu0 0
  %2539 = vmatpush2.bf16.msra.mxu0 0
  %2540 = vmatprep.subr.bf16.mxu0 0
  %2541 = vmatpush2.bf16.msra.mxu0 0
  %2542 = vmatprep.subr.bf16.mxu0 0
  %2543 = vmatpush2.bf16.msra.mxu0 0
  %2544 = vmatprep.subr.bf16.mxu0 0
  %2545 = vmatpush2.bf16.msra.mxu0 0
  %2546 = vmatprep.subr.bf16.mxu0 0
  %2547 = vmatpush2.bf16.msra.mxu0 0
  %2548 = vmatprep.mubr.bf16.mxu0 0
  %2549 = vmatmul.mubr.bf16.gmra.mxu0 %v2282
  %v2550 = vpop.f32.mrf.mxu0
  %v2551 = vadd.f32 0.0, %v2550
  %v2552 = vpop.f32.mrf.mxu0
  %v2553 = vadd.f32 0.0, %v2552
  %v2554 = vpop.f32.mrf.mxu0
  %v2555 = vpop.f32.mrf.mxu0
  %2556 = vdwg.mxu0
  %v2561 = vrot.slane %v2510, 5
  %v2562 = vrot.slane %v2512, 5
  %v2563 = vrot.slane %v2551, 5
  %v2564 = vrot.slane %v2553, 5
  %v2565 = vrot.slane %v2510, 6
  %v2566 = vrot.slane %v2512, 6
  %v2567 = vrot.slane %v2551, 6
  %v2568 = vrot.slane %v2553, 6
  %v2569 = vrot.slane %v2510, 7
  %v2570 = vrot.slane %v2512, 7
  %v2571 = vrot.slane %v2551, 7
  %v2572 = vrot.slane %v2553, 7
  %v2573 = vrot.slane %v2510, 1
  %v2574 = vrot.slane %v2512, 1
  %v2575 = vrot.slane %v2551, 1
  %v2576 = vrot.slane %v2553, 1
  %v2577 = vrot.slane %v2510, 2
  %v2578 = vrot.slane %v2512, 2
  %v2579 = vrot.slane %v2551, 2
  %v2580 = vrot.slane %v2553, 2
  %v2581 = vrot.slane %v2510, 3
  %v2582 = vrot.slane %v2512, 3
  %v2583 = vrot.slane %v2551, 3
  %v2584 = vrot.slane %v2553, 3
  %v2585 = vrot.slane %v2510, 4
  %v2586 = vrot.slane %v2512, 4
  %v2587 = vrot.slane %v2551, 4
  %v2588 = vrot.slane %v2553, 4
  %v2621 = vadd.f32 %v2250, %v2561
  %v2622 = vadd.f32 %v2251, %v2562
  %v2623 = vadd.f32 %v2252, %v2563
  %v2624 = vadd.f32 %v2253, %v2564
  %v2625 = vadd.f32 %v2254, %v2565
  %v2626 = vadd.f32 %v2255, %v2566
  %v2627 = vadd.f32 %v2256, %v2567
  %v2628 = vadd.f32 %v2257, %v2568
  %v2629 = vadd.f32 %v2258, %v2569
  %v2630 = vadd.f32 %v2259, %v2570
  %v2631 = vadd.f32 %v2260, %v2571
  %v2632 = vadd.f32 %v2261, %v2572
  %v2633 = vadd.f32 %v2262, %v2510
  %v2634 = vadd.f32 %v2263, %v2512
  %v2635 = vadd.f32 %v2264, %v2551
  %v2636 = vadd.f32 %v2265, %v2553
  %v2637 = vadd.f32 %v2266, %v2573
  %v2638 = vadd.f32 %v2267, %v2574
  %v2639 = vadd.f32 %v2268, %v2575
  %v2640 = vadd.f32 %v2269, %v2576
  %v2641 = vadd.f32 %v2270, %v2577
  %v2642 = vadd.f32 %v2271, %v2578
  %v2643 = vadd.f32 %v2272, %v2579
  %v2644 = vadd.f32 %v2273, %v2580
  %v2645 = vadd.f32 %v2274, %v2581
  %v2646 = vadd.f32 %v2275, %v2582
  %v2647 = vadd.f32 %v2276, %v2583
  %v2648 = vadd.f32 %v2277, %v2584
  %v2649 = vadd.f32 %v2278, %v2585
  %v2650 = vadd.f32 %v2279, %v2586
  %v2651 = vadd.f32 %v2280, %v2587
  %v2652 = vadd.f32 %v2281, %v2588
  %v2653 = vxor.u32 %v2621, 2147483648
  %v2654 = vxor.u32 %v2622, 2147483648
  %v2655 = vxor.u32 %v2623, 2147483648
  %v2656 = vxor.u32 %v2625, 2147483648
  %v2657 = vxor.u32 %v2626, 2147483648
  %v2658 = vxor.u32 %v2627, 2147483648
  %v2659 = vxor.u32 %v2629, 2147483648
  %v2660 = vxor.u32 %v2630, 2147483648
  %v2661 = vxor.u32 %v2631, 2147483648
  %v2662 = vxor.u32 %v2633, 2147483648
  %v2663 = vxor.u32 %v2634, 2147483648
  %v2664 = vxor.u32 %v2635, 2147483648
  %v2665 = vxor.u32 %v2637, 2147483648
  %v2666 = vxor.u32 %v2638, 2147483648
  %v2667 = vxor.u32 %v2639, 2147483648
  %v2668 = vxor.u32 %v2641, 2147483648
  %v2669 = vxor.u32 %v2642, 2147483648
  %v2670 = vxor.u32 %v2643, 2147483648
  %v2671 = vxor.u32 %v2645, 2147483648
  %v2672 = vxor.u32 %v2646, 2147483648
  %v2673 = vxor.u32 %v2647, 2147483648
  %v2674 = vxor.u32 %v2649, 2147483648
  %v2675 = vxor.u32 %v2650, 2147483648
  %v2676 = vxor.u32 %v2651, 2147483648
  %v2677 = vmul.f32 %v2653, 1.442695
  %v2678 = vpow.pop %v2677
  %v2679 = vmul.f32 %v2654, 1.442695
  %v2680 = vpow.pop %v2679
  %v2681 = vmul.f32 %v2655, 1.442695
  %v2682 = vpow.pop %v2681
  %v2683 = vmul.f32 %v2656, 1.442695
  %v2684 = vpow.pop %v2683
  %v2685 = vmul.f32 %v2657, 1.442695
  %v2686 = vpow.pop %v2685
  %v2687 = vmul.f32 %v2658, 1.442695
  %v2688 = vpow.pop %v2687
  %v2689 = vmul.f32 %v2659, 1.442695
  %v2690 = vpow.pop %v2689
  %v2691 = vmul.f32 %v2660, 1.442695
  %v2692 = vpow.pop %v2691
  %v2693 = vmul.f32 %v2661, 1.442695
  %v2694 = vpow.pop %v2693
  %v2695 = vmul.f32 %v2662, 1.442695
  %v2696 = vpow.pop %v2695
  %v2697 = vmul.f32 %v2663, 1.442695
  %v2698 = vpow.pop %v2697
  %v2699 = vmul.f32 %v2664, 1.442695
  %v2700 = vpow.pop %v2699
  %v2701 = vmul.f32 %v2665, 1.442695
  %v2702 = vpow.pop %v2701
  %v2703 = vmul.f32 %v2666, 1.442695
  %v2704 = vpow.pop %v2703
  %v2705 = vmul.f32 %v2667, 1.442695
  %v2706 = vpow.pop %v2705
  %v2707 = vmul.f32 %v2668, 1.442695
  %v2708 = vpow.pop %v2707
  %v2709 = vmul.f32 %v2669, 1.442695
  %v2710 = vpow.pop %v2709
  %v2711 = vmul.f32 %v2670, 1.442695
  %v2712 = vpow.pop %v2711
  %v2713 = vmul.f32 %v2671, 1.442695
  %v2714 = vpow.pop %v2713
  %v2715 = vmul.f32 %v2672, 1.442695
  %v2716 = vpow.pop %v2715
  %v2717 = vmul.f32 %v2673, 1.442695
  %v2718 = vpow.pop %v2717
  %v2719 = vmul.f32 %v2674, 1.442695
  %v2720 = vpow.pop %v2719
  %v2721 = vmul.f32 %v2675, 1.442695
  %v2722 = vpow.pop %v2721
  %v2723 = vmul.f32 %v2676, 1.442695
  %v2724 = vpow.pop %v2723
  %v2725 = vadd.f32 %v2678, 1.0
  %v2726 = vadd.f32 %v2680, 1.0
  %v2727 = vadd.f32 %v2682, 1.0
  %v2728 = vadd.f32 %v2684, 1.0
  %v2729 = vadd.f32 %v2686, 1.0
  %v2730 = vadd.f32 %v2688, 1.0
  %v2731 = vadd.f32 %v2690, 1.0
  %v2732 = vadd.f32 %v2692, 1.0
  %v2733 = vadd.f32 %v2694, 1.0
  %v2734 = vadd.f32 %v2696, 1.0
  %v2735 = vadd.f32 %v2698, 1.0
  %v2736 = vadd.f32 %v2700, 1.0
  %v2737 = vadd.f32 %v2702, 1.0
  %v2738 = vadd.f32 %v2704, 1.0
  %v2739 = vadd.f32 %v2706, 1.0
  %v2740 = vadd.f32 %v2708, 1.0
  %v2741 = vadd.f32 %v2710, 1.0
  %v2742 = vadd.f32 %v2712, 1.0
  %v2743 = vadd.f32 %v2714, 1.0
  %v2744 = vadd.f32 %v2716, 1.0
  %v2745 = vadd.f32 %v2718, 1.0
  %v2746 = vadd.f32 %v2720, 1.0
  %v2747 = vadd.f32 %v2722, 1.0
  %v2748 = vadd.f32 %v2724, 1.0
  %v2749 = vrcp.pop %v2725
  %v2750 = vmul.f32 1.0, %v2749
  %v2751 = vrcp.pop %v2726
  %v2752 = vmul.f32 1.0, %v2751
  %v2753 = vrcp.pop %v2727
  %v2754 = vmul.f32 1.0, %v2753
  %v2755 = vrcp.pop %v2728
  %v2756 = vmul.f32 1.0, %v2755
  %v2757 = vrcp.pop %v2729
  %v2758 = vmul.f32 1.0, %v2757
  %v2759 = vrcp.pop %v2730
  %v2760 = vmul.f32 1.0, %v2759
  %v2761 = vrcp.pop %v2731
  %v2762 = vmul.f32 1.0, %v2761
  %v2763 = vrcp.pop %v2732
  %v2764 = vmul.f32 1.0, %v2763
  %v2765 = vrcp.pop %v2733
  %v2766 = vmul.f32 1.0, %v2765
  %v2767 = vrcp.pop %v2734
  %v2768 = vmul.f32 1.0, %v2767
  %v2769 = vrcp.pop %v2735
  %v2770 = vmul.f32 1.0, %v2769
  %v2771 = vrcp.pop %v2736
  %v2772 = vmul.f32 1.0, %v2771
  %v2773 = vrcp.pop %v2737
  %v2774 = vmul.f32 1.0, %v2773
  %v2775 = vrcp.pop %v2738
  %v2776 = vmul.f32 1.0, %v2775
  %v2777 = vrcp.pop %v2739
  %v2778 = vmul.f32 1.0, %v2777
  %v2779 = vrcp.pop %v2740
  %v2780 = vmul.f32 1.0, %v2779
  %v2781 = vrcp.pop %v2741
  %v2782 = vmul.f32 1.0, %v2781
  %v2783 = vrcp.pop %v2742
  %v2784 = vmul.f32 1.0, %v2783
  %v2785 = vrcp.pop %v2743
  %v2786 = vmul.f32 1.0, %v2785
  %v2787 = vrcp.pop %v2744
  %v2788 = vmul.f32 1.0, %v2787
  %v2789 = vrcp.pop %v2745
  %v2790 = vmul.f32 1.0, %v2789
  %v2791 = vrcp.pop %v2746
  %v2792 = vmul.f32 1.0, %v2791
  %v2793 = vrcp.pop %v2747
  %v2794 = vmul.f32 1.0, %v2793
  %v2795 = vrcp.pop %v2748
  %v2796 = vmul.f32 1.0, %v2795
  %v2797 = vtanh.pop %v2624
  %v2798 = vtanh.pop %v2628
  %v2799 = vtanh.pop %v2632
  %v2800 = vtanh.pop %v2636
  %v2801 = vtanh.pop %v2640
  %v2802 = vtanh.pop %v2644
  %v2803 = vtanh.pop %v2648
  %v2804 = vtanh.pop %v2652
  %v2805 = vld [vmem:[#allocation3] sm:$0xff]
  %v2807 = vrot.slane %v2805, 5
  %v2808 = vrot.slane %v2805, 6
  %v2809 = vrot.slane %v2805, 7
  %v2810 = vrot.slane %v2805, 1
  %v2811 = vrot.slane %v2805, 2
  %v2812 = vrot.slane %v2805, 3
  %v2813 = vrot.slane %v2805, 4
  %v2822 = vmul.f32 %v2752, %v2807
  %v2823 = vmul.f32 %v2758, %v2808
  %v2824 = vmul.f32 %v2764, %v2809
  %v2825 = vmul.f32 %v2770, %v2805
  %v2826 = vmul.f32 %v2776, %v2810
  %v2827 = vmul.f32 %v2782, %v2811
  %v2828 = vmul.f32 %v2788, %v2812
  %v2829 = vmul.f32 %v2794, %v2813
  %v2830 = vmul.f32 %v2750, %v2797
  %v2831 = vmul.f32 %v2756, %v2798
  %v2832 = vmul.f32 %v2762, %v2799
  %v2833 = vmul.f32 %v2768, %v2800
  %v2834 = vmul.f32 %v2774, %v2801
  %v2835 = vmul.f32 %v2780, %v2802
  %v2836 = vmul.f32 %v2786, %v2803
  %v2837 = vmul.f32 %v2792, %v2804
  %v2838 = vadd.f32 %v2822, %v2830
  %v2839 = vadd.f32 %v2823, %v2831
  %v2840 = vadd.f32 %v2824, %v2832
  %v2841 = vadd.f32 %v2825, %v2833
  %v2842 = vadd.f32 %v2826, %v2834
  %v2843 = vadd.f32 %v2827, %v2835
  %v2844 = vadd.f32 %v2828, %v2836
  %v2845 = vadd.f32 %v2829, %v2837
  %v2846 = vtanh.pop %v2838
  %v2847 = vtanh.pop %v2839
  %v2848 = vtanh.pop %v2840
  %v2849 = vtanh.pop %v2841
  %v2850 = vtanh.pop %v2842
  %v2851 = vtanh.pop %v2843
  %v2852 = vtanh.pop %v2844
  %v2853 = vtanh.pop %v2845
  %v2854 = vmul.f32 %v2754, %v2846
  %v2855 = vmul.f32 %v2760, %v2847
  %v2856 = vmul.f32 %v2766, %v2848
  %v2857 = vmul.f32 %v2772, %v2849
  %v2858 = vmul.f32 %v2778, %v2850
  %v2859 = vmul.f32 %v2784, %v2851
  %v2860 = vmul.f32 %v2790, %v2852
  %v2861 = vmul.f32 %v2796, %v2853
  %v2862 = vpack.c.bf16 %v2854, %v2854
  %v2863 = vpack.c.bf16 %v2855, %v2855
  %v2864 = vpack.c.bf16 %v2856, %v2856
  %v2865 = vpack.c.bf16 %v2857, %v2857
  %v2866 = vpack.c.bf16 %v2858, %v2858
  %v2867 = vpack.c.bf16 %v2859, %v2859
  %v2868 = vpack.c.bf16 %v2860, %v2860
  %v2869 = vpack.c.bf16 %v2861, %v2861
  %v2878 = vrot.slane %v2839, 7
  %v2879 = vsel %vm672, %v2878, %v2838
  %v2880 = vrot.slane %v2840, 6
  %v2881 = vsel %vm675, %v2880, %v2879
  %v2882 = vrot.slane %v2841, 5
  %v2883 = vsel %vm678, %v2882, %v2881
  %v2884 = vrot.slane %v2842, 4
  %v2885 = vsel %vm681, %v2884, %v2883
  %v2886 = vrot.slane %v2843, 3
  %v2887 = vrot.slane %v2844, 2
  %v2888 = vsel %vm663, %v2887, %v2886
  %v2889 = vrot.slane %v2845, 1
  %v2890 = vsel %vm666, %v2889, %v2888
  %2893 = vst [vmem:[#allocation3 - $0x3] sm:$0xf8] %v2885
  %2894 = vst [vmem:[#allocation3 + $0x5] sm:$0x7] %v2890
  %v2903 = vunpack.c.l.b16 %v2862
  %v2904 = vunpack.c.l.b16 %v2863
  %v2905 = vunpack.c.l.b16 %v2864
  %v2906 = vunpack.c.l.b16 %v2865
  %v2907 = vunpack.c.l.b16 %v2866
  %v2908 = vunpack.c.l.b16 %v2867
  %v2909 = vunpack.c.l.b16 %v2868
  %v2910 = vunpack.c.l.b16 %v2869
  %v2911 = vpack.c.b16 %v2903, %v2903
  %v2912 = vpack.c.b16 %v2904, %v2904
  %v2913 = vpack.c.b16 %v2905, %v2905
  %v2914 = vpack.c.b16 %v2906, %v2906
  %v2915 = vpack.c.b16 %v2907, %v2907
  %v2916 = vpack.c.b16 %v2908, %v2908
  %v2917 = vpack.c.b16 %v2909, %v2909
  %v2918 = vpack.c.b16 %v2910, %v2910
  %v2919 = vunpack.c.l.b16 %v2911
  %v2920 = vunpack.c.l.b16 %v2912
  %v2921 = vunpack.c.l.b16 %v2913
  %v2922 = vunpack.c.l.b16 %v2914
  %v2923 = vunpack.c.l.b16 %v2915
  %v2924 = vunpack.c.l.b16 %v2916
  %v2925 = vunpack.c.l.b16 %v2917
  %v2926 = vunpack.c.l.b16 %v2918
  %v2927 = vrot.slane %v2919, 3
  %v2928 = vrot.slane %v2920, 2
  %v2929 = vsel %vm663, %v2928, %v2927
  %v2930 = vrot.slane %v2921, 1
  %v2931 = vsel %vm666, %v2930, %v2929
  %v2932 = vsel %vm669, %v2922, %v2931
  %v2933 = vrot.slane %v2923, 7
  %v2934 = vsel %vm672, %v2933, %v2932
  %v2935 = vrot.slane %v2924, 6
  %v2936 = vsel %vm675, %v2935, %v2934
  %v2937 = vrot.slane %v2925, 5
  %v2938 = vsel %vm678, %v2937, %v2936
  %v2939 = vrot.slane %v2926, 4
  %v2940 = vsel %vm681, %v2939, %v2938
  %v2941 = vpack.c.b16 %v2940, %v2940
  %2943 = vst [vmem:[#allocation2] sm:$0xf] %v2941
  %vm2944 = vsmask.f32 7942
  %vm2945 = vmand %vm2207, %vm2944
  %v2946 = vld [vmem:[%s2] sm:$0x2]
  %v2947 = vsel %vm2945, %v2862, %v2946
  %2948 = vst [vmem:[%s2] sm:$0x2] %v2947
  %v2949 = vld [vmem:[%s2 + $0x8] sm:$0x2]
  %v2950 = vsel %vm2945, %v2863, %v2949
  %2951 = vst [vmem:[%s2 + $0x8] sm:$0x2] %v2950
  %v2952 = vld [vmem:[%s2 + $0x10] sm:$0x2]
  %v2953 = vsel %vm2945, %v2864, %v2952
  %2954 = vst [vmem:[%s2 + $0x10] sm:$0x2] %v2953
  %v2955 = vld [vmem:[%s2 + $0x18] sm:$0x2]
  %v2956 = vsel %vm2945, %v2865, %v2955
  %2957 = vst [vmem:[%s2 + $0x18] sm:$0x2] %v2956
  %v2958 = vld [vmem:[%s2 + $0x20] sm:$0x2]
  %v2959 = vsel %vm2945, %v2866, %v2958
  %2960 = vst [vmem:[%s2 + $0x20] sm:$0x2] %v2959
  %v2961 = vld [vmem:[%s2 + $0x28] sm:$0x2]
  %v2962 = vsel %vm2945, %v2867, %v2961
  %2963 = vst [vmem:[%s2 + $0x28] sm:$0x2] %v2962
  %v2964 = vld [vmem:[%s2 + $0x30] sm:$0x2]
  %v2965 = vsel %vm2945, %v2868, %v2964
  %2966 = vst [vmem:[%s2 + $0x30] sm:$0x2] %v2965
  %v2967 = vld [vmem:[%s2 + $0x38] sm:$0x2]
  %v2968 = vsel %vm2945, %v2869, %v2967
  %2969 = vst [vmem:[%s2 + $0x38] sm:$0x2] %v2968
  %v2970 = vld [vmem:[%s0] sm:$0x44]
  %v2971 = vld [vmem:[%s0 + $0x8] sm:$0x44]
  %v2972 = vld [vmem:[%s0 + $0x20] sm:$0x44]
  %v2973 = vld [vmem:[%s0 + $0x28] sm:$0x44]
  %v2974 = vld [vmem:[%s0 + $0x40] sm:$0x44]
  %v2975 = vld [vmem:[%s0 + $0x48] sm:$0x44]
  %v2976 = vld [vmem:[%s0 + $0x60] sm:$0x44]
  %v2977 = vld [vmem:[%s0 + $0x68] sm:$0x44]
  %v2978 = vld [vmem:[%s0 + $0x80] sm:$0x44]
  %v2979 = vld [vmem:[%s0 + $0x88] sm:$0x44]
  %v2980 = vld [vmem:[%s0 + $0xa0] sm:$0x44]
  %v2981 = vld [vmem:[%s0 + $0xa8] sm:$0x44]
  %v2982 = vld [vmem:[%s0 + $0xc0] sm:$0x44]
  %v2983 = vld [vmem:[%s0 + $0xc8] sm:$0x44]
  %v2984 = vld [vmem:[%s0 + $0xe0] sm:$0x44]
  %v2985 = vld [vmem:[%s0 + $0xe8] sm:$0x44]
  %v2986 = vunpack.c.l.bf16 %v2970
  %v2987 = vunpack.c.h.bf16 %v2970
  %v2988 = vunpack.c.l.bf16 %v2971
  %v2989 = vunpack.c.h.bf16 %v2971
  %v2990 = vunpack.c.l.bf16 %v2972
  %v2991 = vunpack.c.h.bf16 %v2972
  %v2992 = vunpack.c.l.bf16 %v2973
  %v2993 = vunpack.c.h.bf16 %v2973
  %v2994 = vunpack.c.l.bf16 %v2974
  %v2995 = vunpack.c.h.bf16 %v2974
  %v2996 = vunpack.c.l.bf16 %v2975
  %v2997 = vunpack.c.h.bf16 %v2975
  %v2998 = vunpack.c.l.bf16 %v2976
  %v2999 = vunpack.c.h.bf16 %v2976
  %v3000 = vunpack.c.l.bf16 %v2977
  %v3001 = vunpack.c.h.bf16 %v2977
  %v3002 = vunpack.c.l.bf16 %v2978
  %v3003 = vunpack.c.h.bf16 %v2978
  %v3004 = vunpack.c.l.bf16 %v2979
  %v3005 = vunpack.c.h.bf16 %v2979
  %v3006 = vunpack.c.l.bf16 %v2980
  %v3007 = vunpack.c.h.bf16 %v2980
  %v3008 = vunpack.c.l.bf16 %v2981
  %v3009 = vunpack.c.h.bf16 %v2981
  %v3010 = vunpack.c.l.bf16 %v2982
  %v3011 = vunpack.c.h.bf16 %v2982
  %v3012 = vunpack.c.l.bf16 %v2983
  %v3013 = vunpack.c.h.bf16 %v2983
  %v3014 = vunpack.c.l.bf16 %v2984
  %v3015 = vunpack.c.h.bf16 %v2984
  %v3016 = vunpack.c.l.bf16 %v2985
  %v3017 = vunpack.c.h.bf16 %v2985
  %v3018 = vld [vmem:[#allocation2] sm:$0xf]
  %v3019 = vld [vmem:[%s1] sm:$0xff]
  %v3020 = vld [vmem:[%s1 + $0x8] sm:$0xff]
  %v3021 = vld [vmem:[%s1 + $0x10] sm:$0xff]
  %v3022 = vld [vmem:[%s1 + $0x18] sm:$0xff]
  %v3023 = vld [vmem:[%s1 + $0x20] sm:$0xff]
  %v3024 = vld [vmem:[%s1 + $0x28] sm:$0xff]
  %v3025 = vld [vmem:[%s1 + $0x30] sm:$0xff]
  %v3026 = vld [vmem:[%s1 + $0x38] sm:$0xff]
  %v3027 = vld [vmem:[%s1 + $0x40] sm:$0xff]
  %v3028 = vld [vmem:[%s1 + $0x48] sm:$0xff]
  %v3029 = vld [vmem:[%s1 + $0x50] sm:$0xff]
  %v3030 = vld [vmem:[%s1 + $0x58] sm:$0xff]
  %v3031 = vld [vmem:[%s1 + $0x60] sm:$0xff]
  %v3032 = vld [vmem:[%s1 + $0x68] sm:$0xff]
  %v3033 = vld [vmem:[%s1 + $0x70] sm:$0xff]
  %v3034 = vld [vmem:[%s1 + $0x78] sm:$0xff]
  %v3035 = vld [vmem:[%s1 + $0x80] sm:$0xff]
  %v3036 = vld [vmem:[%s1 + $0x88] sm:$0xff]
  %v3037 = vld [vmem:[%s1 + $0x90] sm:$0xff]
  %v3038 = vld [vmem:[%s1 + $0x98] sm:$0xff]
  %v3039 = vld [vmem:[%s1 + $0xa0] sm:$0xff]
  %v3040 = vld [vmem:[%s1 + $0xa8] sm:$0xff]
  %v3041 = vld [vmem:[%s1 + $0xb0] sm:$0xff]
  %v3042 = vld [vmem:[%s1 + $0xb8] sm:$0xff]
  %v3043 = vld [vmem:[%s1 + $0xc0] sm:$0xff]
  %v3044 = vld [vmem:[%s1 + $0xc8] sm:$0xff]
  %v3045 = vld [vmem:[%s1 + $0xd0] sm:$0xff]
  %v3046 = vld [vmem:[%s1 + $0xd8] sm:$0xff]
  %v3047 = vld [vmem:[%s1 + $0xe0] sm:$0xff]
  %v3048 = vld [vmem:[%s1 + $0xe8] sm:$0xff]
  %v3049 = vld [vmem:[%s1 + $0xf0] sm:$0xff]
  %v3050 = vld [vmem:[%s1 + $0xf8] sm:$0xff]
  %v3083 = vunpack.c.l.b16 %v3019
  %v3084 = vunpack.c.h.b16 %v3019
  %v3085 = vunpack.c.l.b16 %v3020
  %v3086 = vunpack.c.h.b16 %v3020
  %v3087 = vunpack.c.l.b16 %v3021
  %v3088 = vunpack.c.h.b16 %v3021
  %v3089 = vunpack.c.l.b16 %v3022
  %v3090 = vunpack.c.h.b16 %v3022
  %v3091 = vunpack.c.l.b16 %v3023
  %v3092 = vunpack.c.h.b16 %v3023
  %v3093 = vunpack.c.l.b16 %v3024
  %v3094 = vunpack.c.h.b16 %v3024
  %v3095 = vunpack.c.l.b16 %v3025
  %v3096 = vunpack.c.h.b16 %v3025
  %v3097 = vunpack.c.l.b16 %v3026
  %v3098 = vunpack.c.h.b16 %v3026
  %v3099 = vunpack.c.l.b16 %v3027
  %v3100 = vunpack.c.h.b16 %v3027
  %v3101 = vunpack.c.l.b16 %v3028
  %v3102 = vunpack.c.h.b16 %v3028
  %v3103 = vunpack.c.l.b16 %v3029
  %v3104 = vunpack.c.h.b16 %v3029
  %v3105 = vunpack.c.l.b16 %v3030
  %v3106 = vunpack.c.h.b16 %v3030
  %v3107 = vunpack.c.l.b16 %v3031
  %v3108 = vunpack.c.h.b16 %v3031
  %v3109 = vunpack.c.l.b16 %v3032
  %v3110 = vunpack.c.h.b16 %v3032
  %v3111 = vunpack.c.l.b16 %v3033
  %v3112 = vunpack.c.h.b16 %v3033
  %v3113 = vunpack.c.l.b16 %v3034
  %v3114 = vunpack.c.h.b16 %v3034
  %v3115 = vunpack.c.l.b16 %v3035
  %v3116 = vunpack.c.h.b16 %v3035
  %v3117 = vunpack.c.l.b16 %v3036
  %v3118 = vunpack.c.h.b16 %v3036
  %v3119 = vunpack.c.l.b16 %v3037
  %v3120 = vunpack.c.h.b16 %v3037
  %v3121 = vunpack.c.l.b16 %v3038
  %v3122 = vunpack.c.h.b16 %v3038
  %v3123 = vunpack.c.l.b16 %v3039
  %v3124 = vunpack.c.h.b16 %v3039
  %v3125 = vunpack.c.l.b16 %v3040
  %v3126 = vunpack.c.h.b16 %v3040
  %v3127 = vunpack.c.l.b16 %v3041
  %v3128 = vunpack.c.h.b16 %v3041
  %v3129 = vunpack.c.l.b16 %v3042
  %v3130 = vunpack.c.h.b16 %v3042
  %v3131 = vunpack.c.l.b16 %v3043
  %v3132 = vunpack.c.h.b16 %v3043
  %v3133 = vunpack.c.l.b16 %v3044
  %v3134 = vunpack.c.h.b16 %v3044
  %v3135 = vunpack.c.l.b16 %v3045
  %v3136 = vunpack.c.h.b16 %v3045
  %v3137 = vunpack.c.l.b16 %v3046
  %v3138 = vunpack.c.h.b16 %v3046
  %v3139 = vunpack.c.l.b16 %v3047
  %v3140 = vunpack.c.h.b16 %v3047
  %v3141 = vunpack.c.l.b16 %v3048
  %v3142 = vunpack.c.h.b16 %v3048
  %v3143 = vunpack.c.l.b16 %v3049
  %v3144 = vunpack.c.h.b16 %v3049
  %v3145 = vunpack.c.l.b16 %v3050
  %v3146 = vunpack.c.h.b16 %v3050
  %v3147 = vpack.c.b16 %v3087, %v3083
  %v3148 = vpack.c.b16 %v3088, %v3084
  %v3149 = vpack.c.b16 %v3089, %v3085
  %v3150 = vpack.c.b16 %v3090, %v3086
  %v3151 = vpack.c.b16 %v3095, %v3091
  %v3152 = vpack.c.b16 %v3096, %v3092
  %v3153 = vpack.c.b16 %v3097, %v3093
  %v3154 = vpack.c.b16 %v3098, %v3094
  %v3155 = vpack.c.b16 %v3103, %v3099
  %v3156 = vpack.c.b16 %v3104, %v3100
  %v3157 = vpack.c.b16 %v3105, %v3101
  %v3158 = vpack.c.b16 %v3106, %v3102
  %v3159 = vpack.c.b16 %v3111, %v3107
  %v3160 = vpack.c.b16 %v3112, %v3108
  %v3161 = vpack.c.b16 %v3113, %v3109
  %v3162 = vpack.c.b16 %v3114, %v3110
  %v3163 = vpack.c.b16 %v3119, %v3115
  %v3164 = vpack.c.b16 %v3120, %v3116
  %v3165 = vpack.c.b16 %v3121, %v3117
  %v3166 = vpack.c.b16 %v3122, %v3118
  %v3167 = vpack.c.b16 %v3127, %v3123
  %v3168 = vpack.c.b16 %v3128, %v3124
  %v3169 = vpack.c.b16 %v3129, %v3125
  %v3170 = vpack.c.b16 %v3130, %v3126
  %v3171 = vpack.c.b16 %v3135, %v3131
  %v3172 = vpack.c.b16 %v3136, %v3132
  %v3173 = vpack.c.b16 %v3137, %v3133
  %v3174 = vpack.c.b16 %v3138, %v3134
  %v3175 = vpack.c.b16 %v3143, %v3139
  %v3176 = vpack.c.b16 %v3144, %v3140
  %v3177 = vpack.c.b16 %v3145, %v3141
  %v3178 = vpack.c.b16 %v3146, %v3142
  %3211 = vmatprep.subr.bf16.mxu0 %v3176
  %3212 = vmatpush1.bf16.msra.mxu0 %v3175
  %3213 = vmatprep.subr.bf16.mxu0 %v3172
  %3214 = vmatpush1.bf16.msra.mxu0 %v3171
  %3215 = vmatprep.subr.bf16.mxu0 %v3168
  %3216 = vmatpush1.bf16.msra.mxu0 %v3167
  %3217 = vmatprep.subr.bf16.mxu0 %v3164
  %3218 = vmatpush1.bf16.msra.mxu0 %v3163
  %3219 = vmatprep.subr.bf16.mxu0 %v3160
  %3220 = vmatpush1.bf16.msra.mxu0 %v3159
  %3221 = vmatprep.subr.bf16.mxu0 %v3156
  %3222 = vmatpush1.bf16.msra.mxu0 %v3155
  %3223 = vmatprep.subr.bf16.mxu0 %v3152
  %3224 = vmatpush1.bf16.msra.mxu0 %v3151
  %3225 = vmatprep.subr.bf16.mxu0 %v3148
  %3226 = vmatpush1.bf16.msra.mxu0 %v3147
  %3227 = vmatprep.subr.bf16.mxu0 0
  %3228 = vmatpush2.bf16.msra.mxu0 0
  %3229 = vmatprep.subr.bf16.mxu0 0
  %3230 = vmatpush2.bf16.msra.mxu0 0
  %3231 = vmatprep.subr.bf16.mxu0 0
  %3232 = vmatpush2.bf16.msra.mxu0 0
  %3233 = vmatprep.subr.bf16.mxu0 0
  %3234 = vmatpush2.bf16.msra.mxu0 0
  %3235 = vmatprep.subr.bf16.mxu0 0
  %3236 = vmatpush2.bf16.msra.mxu0 0
  %3237 = vmatprep.subr.bf16.mxu0 0
  %3238 = vmatpush2.bf16.msra.mxu0 0
  %3239 = vmatprep.subr.bf16.mxu0 0
  %3240 = vmatpush2.bf16.msra.mxu0 0
  %3241 = vmatprep.subr.bf16.mxu0 0
  %3242 = vmatpush2.bf16.msra.mxu0 0
  %3243 = vmatprep.mubr.bf16.mxu0 0
  %3244 = vmatmul.mubr.bf16.gmra.mxu0 %v3018
  %v3245 = vpop.f32.mrf.mxu0
  %v3246 = vadd.f32 0.0, %v3245
  %v3247 = vpop.f32.mrf.mxu0
  %v3248 = vadd.f32 0.0, %v3247
  %v3249 = vpop.f32.mrf.mxu0
  %v3250 = vpop.f32.mrf.mxu0
  %3251 = vdwg.mxu0
  %3252 = vmatprep.subr.bf16.mxu0 %v3178
  %3253 = vmatpush1.bf16.msra.mxu0 %v3177
  %3254 = vmatprep.subr.bf16.mxu0 %v3174
  %3255 = vmatpush1.bf16.msra.mxu0 %v3173
  %3256 = vmatprep.subr.bf16.mxu0 %v3170
  %3257 = vmatpush1.bf16.msra.mxu0 %v3169
  %3258 = vmatprep.subr.bf16.mxu0 %v3166
  %3259 = vmatpush1.bf16.msra.mxu0 %v3165
  %3260 = vmatprep.subr.bf16.mxu0 %v3162
  %3261 = vmatpush1.bf16.msra.mxu0 %v3161
  %3262 = vmatprep.subr.bf16.mxu0 %v3158
  %3263 = vmatpush1.bf16.msra.mxu0 %v3157
  %3264 = vmatprep.subr.bf16.mxu0 %v3154
  %3265 = vmatpush1.bf16.msra.mxu0 %v3153
  %3266 = vmatprep.subr.bf16.mxu0 %v3150
  %3267 = vmatpush1.bf16.msra.mxu0 %v3149
  %3268 = vmatprep.subr.bf16.mxu0 0
  %3269 = vmatpush2.bf16.msra.mxu0 0
  %3270 = vmatprep.subr.bf16.mxu0 0
  %3271 = vmatpush2.bf16.msra.mxu0 0
  %3272 = vmatprep.subr.bf16.mxu0 0
  %3273 = vmatpush2.bf16.msra.mxu0 0
  %3274 = vmatprep.subr.bf16.mxu0 0
  %3275 = vmatpush2.bf16.msra.mxu0 0
  %3276 = vmatprep.subr.bf16.mxu0 0
  %3277 = vmatpush2.bf16.msra.mxu0 0
  %3278 = vmatprep.subr.bf16.mxu0 0
  %3279 = vmatpush2.bf16.msra.mxu0 0
  %3280 = vmatprep.subr.bf16.mxu0 0
  %3281 = vmatpush2.bf16.msra.mxu0 0
  %3282 = vmatprep.subr.bf16.mxu0 0
  %3283 = vmatpush2.bf16.msra.mxu0 0
  %3284 = vmatprep.mubr.bf16.mxu0 0
  %3285 = vmatmul.mubr.bf16.gmra.mxu0 %v3018
  %v3286 = vpop.f32.mrf.mxu0
  %v3287 = vadd.f32 0.0, %v3286
  %v3288 = vpop.f32.mrf.mxu0
  %v3289 = vadd.f32 0.0, %v3288
  %v3290 = vpop.f32.mrf.mxu0
  %v3291 = vpop.f32.mrf.mxu0
  %3292 = vdwg.mxu0
  %v3297 = vrot.slane %v3246, 4
  %v3298 = vrot.slane %v3248, 4
  %v3299 = vrot.slane %v3287, 4
  %v3300 = vrot.slane %v3289, 4
  %v3301 = vrot.slane %v3246, 5
  %v3302 = vrot.slane %v3248, 5
  %v3303 = vrot.slane %v3287, 5
  %v3304 = vrot.slane %v3289, 5
  %v3305 = vrot.slane %v3246, 6
  %v3306 = vrot.slane %v3248, 6
  %v3307 = vrot.slane %v3287, 6
  %v3308 = vrot.slane %v3289, 6
  %v3309 = vrot.slane %v3246, 7
  %v3310 = vrot.slane %v3248, 7
  %v3311 = vrot.slane %v3287, 7
  %v3312 = vrot.slane %v3289, 7
  %v3313 = vrot.slane %v3246, 1
  %v3314 = vrot.slane %v3248, 1
  %v3315 = vrot.slane %v3287, 1
  %v3316 = vrot.slane %v3289, 1
  %v3317 = vrot.slane %v3246, 2
  %v3318 = vrot.slane %v3248, 2
  %v3319 = vrot.slane %v3287, 2
  %v3320 = vrot.slane %v3289, 2
  %v3321 = vrot.slane %v3246, 3
  %v3322 = vrot.slane %v3248, 3
  %v3323 = vrot.slane %v3287, 3
  %v3324 = vrot.slane %v3289, 3
  %v3357 = vadd.f32 %v2986, %v3297
  %v3358 = vadd.f32 %v2987, %v3298
  %v3359 = vadd.f32 %v2988, %v3299
  %v3360 = vadd.f32 %v2989, %v3300
  %v3361 = vadd.f32 %v2990, %v3301
  %v3362 = vadd.f32 %v2991, %v3302
  %v3363 = vadd.f32 %v2992, %v3303
  %v3364 = vadd.f32 %v2993, %v3304
  %v3365 = vadd.f32 %v2994, %v3305
  %v3366 = vadd.f32 %v2995, %v3306
  %v3367 = vadd.f32 %v2996, %v3307
  %v3368 = vadd.f32 %v2997, %v3308
  %v3369 = vadd.f32 %v2998, %v3309
  %v3370 = vadd.f32 %v2999, %v3310
  %v3371 = vadd.f32 %v3000, %v3311
  %v3372 = vadd.f32 %v3001, %v3312
  %v3373 = vadd.f32 %v3002, %v3246
  %v3374 = vadd.f32 %v3003, %v3248
  %v3375 = vadd.f32 %v3004, %v3287
  %v3376 = vadd.f32 %v3005, %v3289
  %v3377 = vadd.f32 %v3006, %v3313
  %v3378 = vadd.f32 %v3007, %v3314
  %v3379 = vadd.f32 %v3008, %v3315
  %v3380 = vadd.f32 %v3009, %v3316
  %v3381 = vadd.f32 %v3010, %v3317
  %v3382 = vadd.f32 %v3011, %v3318
  %v3383 = vadd.f32 %v3012, %v3319
  %v3384 = vadd.f32 %v3013, %v3320
  %v3385 = vadd.f32 %v3014, %v3321
  %v3386 = vadd.f32 %v3015, %v3322
  %v3387 = vadd.f32 %v3016, %v3323
  %v3388 = vadd.f32 %v3017, %v3324
  %v3389 = vxor.u32 %v3357, 2147483648
  %v3390 = vxor.u32 %v3358, 2147483648
  %v3391 = vxor.u32 %v3359, 2147483648
  %v3392 = vxor.u32 %v3361, 2147483648
  %v3393 = vxor.u32 %v3362, 2147483648
  %v3394 = vxor.u32 %v3363, 2147483648
  %v3395 = vxor.u32 %v3365, 2147483648
  %v3396 = vxor.u32 %v3366, 2147483648
  %v3397 = vxor.u32 %v3367, 2147483648
  %v3398 = vxor.u32 %v3369, 2147483648
  %v3399 = vxor.u32 %v3370, 2147483648
  %v3400 = vxor.u32 %v3371, 2147483648
  %v3401 = vxor.u32 %v3373, 2147483648
  %v3402 = vxor.u32 %v3374, 2147483648
  %v3403 = vxor.u32 %v3375, 2147483648
  %v3404 = vxor.u32 %v3377, 2147483648
  %v3405 = vxor.u32 %v3378, 2147483648
  %v3406 = vxor.u32 %v3379, 2147483648
  %v3407 = vxor.u32 %v3381, 2147483648
  %v3408 = vxor.u32 %v3382, 2147483648
  %v3409 = vxor.u32 %v3383, 2147483648
  %v3410 = vxor.u32 %v3385, 2147483648
  %v3411 = vxor.u32 %v3386, 2147483648
  %v3412 = vxor.u32 %v3387, 2147483648
  %v3413 = vmul.f32 %v3389, 1.442695
  %v3414 = vpow.pop %v3413
  %v3415 = vmul.f32 %v3390, 1.442695
  %v3416 = vpow.pop %v3415
  %v3417 = vmul.f32 %v3391, 1.442695
  %v3418 = vpow.pop %v3417
  %v3419 = vmul.f32 %v3392, 1.442695
  %v3420 = vpow.pop %v3419
  %v3421 = vmul.f32 %v3393, 1.442695
  %v3422 = vpow.pop %v3421
  %v3423 = vmul.f32 %v3394, 1.442695
  %v3424 = vpow.pop %v3423
  %v3425 = vmul.f32 %v3395, 1.442695
  %v3426 = vpow.pop %v3425
  %v3427 = vmul.f32 %v3396, 1.442695
  %v3428 = vpow.pop %v3427
  %v3429 = vmul.f32 %v3397, 1.442695
  %v3430 = vpow.pop %v3429
  %v3431 = vmul.f32 %v3398, 1.442695
  %v3432 = vpow.pop %v3431
  %v3433 = vmul.f32 %v3399, 1.442695
  %v3434 = vpow.pop %v3433
  %v3435 = vmul.f32 %v3400, 1.442695
  %v3436 = vpow.pop %v3435
  %v3437 = vmul.f32 %v3401, 1.442695
  %v3438 = vpow.pop %v3437
  %v3439 = vmul.f32 %v3402, 1.442695
  %v3440 = vpow.pop %v3439
  %v3441 = vmul.f32 %v3403, 1.442695
  %v3442 = vpow.pop %v3441
  %v3443 = vmul.f32 %v3404, 1.442695
  %v3444 = vpow.pop %v3443
  %v3445 = vmul.f32 %v3405, 1.442695
  %v3446 = vpow.pop %v3445
  %v3447 = vmul.f32 %v3406, 1.442695
  %v3448 = vpow.pop %v3447
  %v3449 = vmul.f32 %v3407, 1.442695
  %v3450 = vpow.pop %v3449
  %v3451 = vmul.f32 %v3408, 1.442695
  %v3452 = vpow.pop %v3451
  %v3453 = vmul.f32 %v3409, 1.442695
  %v3454 = vpow.pop %v3453
  %v3455 = vmul.f32 %v3410, 1.442695
  %v3456 = vpow.pop %v3455
  %v3457 = vmul.f32 %v3411, 1.442695
  %v3458 = vpow.pop %v3457
  %v3459 = vmul.f32 %v3412, 1.442695
  %v3460 = vpow.pop %v3459
  %v3461 = vadd.f32 %v3414, 1.0
  %v3462 = vadd.f32 %v3416, 1.0
  %v3463 = vadd.f32 %v3418, 1.0
  %v3464 = vadd.f32 %v3420, 1.0
  %v3465 = vadd.f32 %v3422, 1.0
  %v3466 = vadd.f32 %v3424, 1.0
  %v3467 = vadd.f32 %v3426, 1.0
  %v3468 = vadd.f32 %v3428, 1.0
  %v3469 = vadd.f32 %v3430, 1.0
  %v3470 = vadd.f32 %v3432, 1.0
  %v3471 = vadd.f32 %v3434, 1.0
  %v3472 = vadd.f32 %v3436, 1.0
  %v3473 = vadd.f32 %v3438, 1.0
  %v3474 = vadd.f32 %v3440, 1.0
  %v3475 = vadd.f32 %v3442, 1.0
  %v3476 = vadd.f32 %v3444, 1.0
  %v3477 = vadd.f32 %v3446, 1.0
  %v3478 = vadd.f32 %v3448, 1.0
  %v3479 = vadd.f32 %v3450, 1.0
  %v3480 = vadd.f32 %v3452, 1.0
  %v3481 = vadd.f32 %v3454, 1.0
  %v3482 = vadd.f32 %v3456, 1.0
  %v3483 = vadd.f32 %v3458, 1.0
  %v3484 = vadd.f32 %v3460, 1.0
  %v3485 = vrcp.pop %v3461
  %v3486 = vmul.f32 1.0, %v3485
  %v3487 = vrcp.pop %v3462
  %v3488 = vmul.f32 1.0, %v3487
  %v3489 = vrcp.pop %v3463
  %v3490 = vmul.f32 1.0, %v3489
  %v3491 = vrcp.pop %v3464
  %v3492 = vmul.f32 1.0, %v3491
  %v3493 = vrcp.pop %v3465
  %v3494 = vmul.f32 1.0, %v3493
  %v3495 = vrcp.pop %v3466
  %v3496 = vmul.f32 1.0, %v3495
  %v3497 = vrcp.pop %v3467
  %v3498 = vmul.f32 1.0, %v3497
  %v3499 = vrcp.pop %v3468
  %v3500 = vmul.f32 1.0, %v3499
  %v3501 = vrcp.pop %v3469
  %v3502 = vmul.f32 1.0, %v3501
  %v3503 = vrcp.pop %v3470
  %v3504 = vmul.f32 1.0, %v3503
  %v3505 = vrcp.pop %v3471
  %v3506 = vmul.f32 1.0, %v3505
  %v3507 = vrcp.pop %v3472
  %v3508 = vmul.f32 1.0, %v3507
  %v3509 = vrcp.pop %v3473
  %v3510 = vmul.f32 1.0, %v3509
  %v3511 = vrcp.pop %v3474
  %v3512 = vmul.f32 1.0, %v3511
  %v3513 = vrcp.pop %v3475
  %v3514 = vmul.f32 1.0, %v3513
  %v3515 = vrcp.pop %v3476
  %v3516 = vmul.f32 1.0, %v3515
  %v3517 = vrcp.pop %v3477
  %v3518 = vmul.f32 1.0, %v3517
  %v3519 = vrcp.pop %v3478
  %v3520 = vmul.f32 1.0, %v3519
  %v3521 = vrcp.pop %v3479
  %v3522 = vmul.f32 1.0, %v3521
  %v3523 = vrcp.pop %v3480
  %v3524 = vmul.f32 1.0, %v3523
  %v3525 = vrcp.pop %v3481
  %v3526 = vmul.f32 1.0, %v3525
  %v3527 = vrcp.pop %v3482
  %v3528 = vmul.f32 1.0, %v3527
  %v3529 = vrcp.pop %v3483
  %v3530 = vmul.f32 1.0, %v3529
  %v3531 = vrcp.pop %v3484
  %v3532 = vmul.f32 1.0, %v3531
  %v3533 = vtanh.pop %v3360
  %v3534 = vtanh.pop %v3364
  %v3535 = vtanh.pop %v3368
  %v3536 = vtanh.pop %v3372
  %v3537 = vtanh.pop %v3376
  %v3538 = vtanh.pop %v3380
  %v3539 = vtanh.pop %v3384
  %v3540 = vtanh.pop %v3388
  %v3541 = vld [vmem:[#allocation3] sm:$0xff]
  %v3543 = vrot.slane %v3541, 4
  %v3544 = vrot.slane %v3541, 5
  %v3545 = vrot.slane %v3541, 6
  %v3546 = vrot.slane %v3541, 7
  %v3547 = vrot.slane %v3541, 1
  %v3548 = vrot.slane %v3541, 2
  %v3549 = vrot.slane %v3541, 3
  %v3558 = vmul.f32 %v3488, %v3543
  %v3559 = vmul.f32 %v3494, %v3544
  %v3560 = vmul.f32 %v3500, %v3545
  %v3561 = vmul.f32 %v3506, %v3546
  %v3562 = vmul.f32 %v3512, %v3541
  %v3563 = vmul.f32 %v3518, %v3547
  %v3564 = vmul.f32 %v3524, %v3548
  %v3565 = vmul.f32 %v3530, %v3549
  %v3566 = vmul.f32 %v3486, %v3533
  %v3567 = vmul.f32 %v3492, %v3534
  %v3568 = vmul.f32 %v3498, %v3535
  %v3569 = vmul.f32 %v3504, %v3536
  %v3570 = vmul.f32 %v3510, %v3537
  %v3571 = vmul.f32 %v3516, %v3538
  %v3572 = vmul.f32 %v3522, %v3539
  %v3573 = vmul.f32 %v3528, %v3540
  %v3574 = vadd.f32 %v3558, %v3566
  %v3575 = vadd.f32 %v3559, %v3567
  %v3576 = vadd.f32 %v3560, %v3568
  %v3577 = vadd.f32 %v3561, %v3569
  %v3578 = vadd.f32 %v3562, %v3570
  %v3579 = vadd.f32 %v3563, %v3571
  %v3580 = vadd.f32 %v3564, %v3572
  %v3581 = vadd.f32 %v3565, %v3573
  %v3582 = vtanh.pop %v3574
  %v3583 = vtanh.pop %v3575
  %v3584 = vtanh.pop %v3576
  %v3585 = vtanh.pop %v3577
  %v3586 = vtanh.pop %v3578
  %v3587 = vtanh.pop %v3579
  %v3588 = vtanh.pop %v3580
  %v3589 = vtanh.pop %v3581
  %v3590 = vmul.f32 %v3490, %v3582
  %v3591 = vmul.f32 %v3496, %v3583
  %v3592 = vmul.f32 %v3502, %v3584
  %v3593 = vmul.f32 %v3508, %v3585
  %v3594 = vmul.f32 %v3514, %v3586
  %v3595 = vmul.f32 %v3520, %v3587
  %v3596 = vmul.f32 %v3526, %v3588
  %v3597 = vmul.f32 %v3532, %v3589
  %v3598 = vpack.c.bf16 %v3590, %v3590
  %v3599 = vpack.c.bf16 %v3591, %v3591
  %v3600 = vpack.c.bf16 %v3592, %v3592
  %v3601 = vpack.c.bf16 %v3593, %v3593
  %v3602 = vpack.c.bf16 %v3594, %v3594
  %v3603 = vpack.c.bf16 %v3595, %v3595
  %v3604 = vpack.c.bf16 %v3596, %v3596
  %v3605 = vpack.c.bf16 %v3597, %v3597
  %v3614 = vrot.slane %v3575, 7
  %v3615 = vsel %vm675, %v3614, %v3574
  %v3616 = vrot.slane %v3576, 6
  %v3617 = vsel %vm678, %v3616, %v3615
  %v3618 = vrot.slane %v3577, 5
  %v3619 = vsel %vm681, %v3618, %v3617
  %v3620 = vrot.slane %v3578, 4
  %v3621 = vrot.slane %v3579, 3
  %v3622 = vsel %vm663, %v3621, %v3620
  %v3623 = vrot.slane %v3580, 2
  %v3624 = vsel %vm666, %v3623, %v3622
  %v3625 = vrot.slane %v3581, 1
  %v3626 = vsel %vm669, %v3625, %v3624
  %3629 = vst [vmem:[#allocation3 - $0x4] sm:$0xf0] %v3619
  %3630 = vst [vmem:[#allocation3 + $0x4] sm:$0xf] %v3626
  %v3639 = vunpack.c.l.b16 %v3598
  %v3640 = vunpack.c.l.b16 %v3599
  %v3641 = vunpack.c.l.b16 %v3600
  %v3642 = vunpack.c.l.b16 %v3601
  %v3643 = vunpack.c.l.b16 %v3602
  %v3644 = vunpack.c.l.b16 %v3603
  %v3645 = vunpack.c.l.b16 %v3604
  %v3646 = vunpack.c.l.b16 %v3605
  %v3647 = vpack.c.b16 %v3639, %v3639
  %v3648 = vpack.c.b16 %v3640, %v3640
  %v3649 = vpack.c.b16 %v3641, %v3641
  %v3650 = vpack.c.b16 %v3642, %v3642
  %v3651 = vpack.c.b16 %v3643, %v3643
  %v3652 = vpack.c.b16 %v3644, %v3644
  %v3653 = vpack.c.b16 %v3645, %v3645
  %v3654 = vpack.c.b16 %v3646, %v3646
  %v3655 = vunpack.c.l.b16 %v3647
  %v3656 = vunpack.c.l.b16 %v3648
  %v3657 = vunpack.c.l.b16 %v3649
  %v3658 = vunpack.c.l.b16 %v3650
  %v3659 = vunpack.c.l.b16 %v3651
  %v3660 = vunpack.c.l.b16 %v3652
  %v3661 = vunpack.c.l.b16 %v3653
  %v3662 = vunpack.c.l.b16 %v3654
  %v3663 = vrot.slane %v3655, 4
  %v3664 = vrot.slane %v3656, 3
  %v3665 = vsel %vm663, %v3664, %v3663
  %v3666 = vrot.slane %v3657, 2
  %v3667 = vsel %vm666, %v3666, %v3665
  %v3668 = vrot.slane %v3658, 1
  %v3669 = vsel %vm669, %v3668, %v3667
  %v3670 = vsel %vm672, %v3659, %v3669
  %v3671 = vrot.slane %v3660, 7
  %v3672 = vsel %vm675, %v3671, %v3670
  %v3673 = vrot.slane %v3661, 6
  %v3674 = vsel %vm678, %v3673, %v3672
  %v3675 = vrot.slane %v3662, 5
  %v3676 = vsel %vm681, %v3675, %v3674
  %v3677 = vpack.c.b16 %v3676, %v3676
  %3679 = vst [vmem:[#allocation2] sm:$0xf] %v3677
  %vm3680 = vcmask 1042434
  %vm3681 = vsmask.f32 2304
  %vm3682 = vmand %vm3680, %vm3681
  %v3683 = vld [vmem:[%s2] sm:$0x4]
  %v3684 = vsel %vm3682, %v3598, %v3683
  %3685 = vst [vmem:[%s2] sm:$0x4] %v3684
  %v3686 = vld [vmem:[%s2 + $0x8] sm:$0x4]
  %v3687 = vsel %vm3682, %v3599, %v3686
  %3688 = vst [vmem:[%s2 + $0x8] sm:$0x4] %v3687
  %v3689 = vld [vmem:[%s2 + $0x10] sm:$0x4]
  %v3690 = vsel %vm3682, %v3600, %v3689
  %3691 = vst [vmem:[%s2 + $0x10] sm:$0x4] %v3690
  %v3692 = vld [vmem:[%s2 + $0x18] sm:$0x4]
  %v3693 = vsel %vm3682, %v3601, %v3692
  %3694 = vst [vmem:[%s2 + $0x18] sm:$0x4] %v3693
  %v3695 = vld [vmem:[%s2 + $0x20] sm:$0x4]
  %v3696 = vsel %vm3682, %v3602, %v3695
  %3697 = vst [vmem:[%s2 + $0x20] sm:$0x4] %v3696
  %v3698 = vld [vmem:[%s2 + $0x28] sm:$0x4]
  %v3699 = vsel %vm3682, %v3603, %v3698
  %3700 = vst [vmem:[%s2 + $0x28] sm:$0x4] %v3699
  %v3701 = vld [vmem:[%s2 + $0x30] sm:$0x4]
  %v3702 = vsel %vm3682, %v3604, %v3701
  %3703 = vst [vmem:[%s2 + $0x30] sm:$0x4] %v3702
  %v3704 = vld [vmem:[%s2 + $0x38] sm:$0x4]
  %v3705 = vsel %vm3682, %v3605, %v3704
  %3706 = vst [vmem:[%s2 + $0x38] sm:$0x4] %v3705
  %v3707 = vld [vmem:[%s0] sm:$0x44]
  %v3708 = vld [vmem:[%s0 + $0x8] sm:$0x44]
  %v3709 = vld [vmem:[%s0 + $0x20] sm:$0x44]
  %v3710 = vld [vmem:[%s0 + $0x28] sm:$0x44]
  %v3711 = vld [vmem:[%s0 + $0x40] sm:$0x44]
  %v3712 = vld [vmem:[%s0 + $0x48] sm:$0x44]
  %v3713 = vld [vmem:[%s0 + $0x60] sm:$0x44]
  %v3714 = vld [vmem:[%s0 + $0x68] sm:$0x44]
  %v3715 = vld [vmem:[%s0 + $0x80] sm:$0x44]
  %v3716 = vld [vmem:[%s0 + $0x88] sm:$0x44]
  %v3717 = vld [vmem:[%s0 + $0xa0] sm:$0x44]
  %v3718 = vld [vmem:[%s0 + $0xa8] sm:$0x44]
  %v3719 = vld [vmem:[%s0 + $0xc0] sm:$0x44]
  %v3720 = vld [vmem:[%s0 + $0xc8] sm:$0x44]
  %v3721 = vld [vmem:[%s0 + $0xe0] sm:$0x44]
  %v3722 = vld [vmem:[%s0 + $0xe8] sm:$0x44]
  %v3723 = vunpack.c.l.bf16 %v3707
  %v3724 = vunpack.c.h.bf16 %v3707
  %v3725 = vunpack.c.l.bf16 %v3708
  %v3726 = vunpack.c.h.bf16 %v3708
  %v3727 = vunpack.c.l.bf16 %v3709
  %v3728 = vunpack.c.h.bf16 %v3709
  %v3729 = vunpack.c.l.bf16 %v3710
  %v3730 = vunpack.c.h.bf16 %v3710
  %v3731 = vunpack.c.l.bf16 %v3711
  %v3732 = vunpack.c.h.bf16 %v3711
  %v3733 = vunpack.c.l.bf16 %v3712
  %v3734 = vunpack.c.h.bf16 %v3712
  %v3735 = vunpack.c.l.bf16 %v3713
  %v3736 = vunpack.c.h.bf16 %v3713
  %v3737 = vunpack.c.l.bf16 %v3714
  %v3738 = vunpack.c.h.bf16 %v3714
  %v3739 = vunpack.c.l.bf16 %v3715
  %v3740 = vunpack.c.h.bf16 %v3715
  %v3741 = vunpack.c.l.bf16 %v3716
  %v3742 = vunpack.c.h.bf16 %v3716
  %v3743 = vunpack.c.l.bf16 %v3717
  %v3744 = vunpack.c.h.bf16 %v3717
  %v3745 = vunpack.c.l.bf16 %v3718
  %v3746 = vunpack.c.h.bf16 %v3718
  %v3747 = vunpack.c.l.bf16 %v3719
  %v3748 = vunpack.c.h.bf16 %v3719
  %v3749 = vunpack.c.l.bf16 %v3720
  %v3750 = vunpack.c.h.bf16 %v3720
  %v3751 = vunpack.c.l.bf16 %v3721
  %v3752 = vunpack.c.h.bf16 %v3721
  %v3753 = vunpack.c.l.bf16 %v3722
  %v3754 = vunpack.c.h.bf16 %v3722
  %v3755 = vld [vmem:[#allocation2] sm:$0xf]
  %v3756 = vld [vmem:[%s1] sm:$0xff]
  %v3757 = vld [vmem:[%s1 + $0x8] sm:$0xff]
  %v3758 = vld [vmem:[%s1 + $0x10] sm:$0xff]
  %v3759 = vld [vmem:[%s1 + $0x18] sm:$0xff]
  %v3760 = vld [vmem:[%s1 + $0x20] sm:$0xff]
  %v3761 = vld [vmem:[%s1 + $0x28] sm:$0xff]
  %v3762 = vld [vmem:[%s1 + $0x30] sm:$0xff]
  %v3763 = vld [vmem:[%s1 + $0x38] sm:$0xff]
  %v3764 = vld [vmem:[%s1 + $0x40] sm:$0xff]
  %v3765 = vld [vmem:[%s1 + $0x48] sm:$0xff]
  %v3766 = vld [vmem:[%s1 + $0x50] sm:$0xff]
  %v3767 = vld [vmem:[%s1 + $0x58] sm:$0xff]
  %v3768 = vld [vmem:[%s1 + $0x60] sm:$0xff]
  %v3769 = vld [vmem:[%s1 + $0x68] sm:$0xff]
  %v3770 = vld [vmem:[%s1 + $0x70] sm:$0xff]
  %v3771 = vld [vmem:[%s1 + $0x78] sm:$0xff]
  %v3772 = vld [vmem:[%s1 + $0x80] sm:$0xff]
  %v3773 = vld [vmem:[%s1 + $0x88] sm:$0xff]
  %v3774 = vld [vmem:[%s1 + $0x90] sm:$0xff]
  %v3775 = vld [vmem:[%s1 + $0x98] sm:$0xff]
  %v3776 = vld [vmem:[%s1 + $0xa0] sm:$0xff]
  %v3777 = vld [vmem:[%s1 + $0xa8] sm:$0xff]
  %v3778 = vld [vmem:[%s1 + $0xb0] sm:$0xff]
  %v3779 = vld [vmem:[%s1 + $0xb8] sm:$0xff]
  %v3780 = vld [vmem:[%s1 + $0xc0] sm:$0xff]
  %v3781 = vld [vmem:[%s1 + $0xc8] sm:$0xff]
  %v3782 = vld [vmem:[%s1 + $0xd0] sm:$0xff]
  %v3783 = vld [vmem:[%s1 + $0xd8] sm:$0xff]
  %v3784 = vld [vmem:[%s1 + $0xe0] sm:$0xff]
  %v3785 = vld [vmem:[%s1 + $0xe8] sm:$0xff]
  %v3786 = vld [vmem:[%s1 + $0xf0] sm:$0xff]
  %v3787 = vld [vmem:[%s1 + $0xf8] sm:$0xff]
  %v3820 = vunpack.c.l.b16 %v3756
  %v3821 = vunpack.c.h.b16 %v3756
  %v3822 = vunpack.c.l.b16 %v3757
  %v3823 = vunpack.c.h.b16 %v3757
  %v3824 = vunpack.c.l.b16 %v3758
  %v3825 = vunpack.c.h.b16 %v3758
  %v3826 = vunpack.c.l.b16 %v3759
  %v3827 = vunpack.c.h.b16 %v3759
  %v3828 = vunpack.c.l.b16 %v3760
  %v3829 = vunpack.c.h.b16 %v3760
  %v3830 = vunpack.c.l.b16 %v3761
  %v3831 = vunpack.c.h.b16 %v3761
  %v3832 = vunpack.c.l.b16 %v3762
  %v3833 = vunpack.c.h.b16 %v3762
  %v3834 = vunpack.c.l.b16 %v3763
  %v3835 = vunpack.c.h.b16 %v3763
  %v3836 = vunpack.c.l.b16 %v3764
  %v3837 = vunpack.c.h.b16 %v3764
  %v3838 = vunpack.c.l.b16 %v3765
  %v3839 = vunpack.c.h.b16 %v3765
  %v3840 = vunpack.c.l.b16 %v3766
  %v3841 = vunpack.c.h.b16 %v3766
  %v3842 = vunpack.c.l.b16 %v3767
  %v3843 = vunpack.c.h.b16 %v3767
  %v3844 = vunpack.c.l.b16 %v3768
  %v3845 = vunpack.c.h.b16 %v3768
  %v3846 = vunpack.c.l.b16 %v3769
  %v3847 = vunpack.c.h.b16 %v3769
  %v3848 = vunpack.c.l.b16 %v3770
  %v3849 = vunpack.c.h.b16 %v3770
  %v3850 = vunpack.c.l.b16 %v3771
  %v3851 = vunpack.c.h.b16 %v3771
  %v3852 = vunpack.c.l.b16 %v3772
  %v3853 = vunpack.c.h.b16 %v3772
  %v3854 = vunpack.c.l.b16 %v3773
  %v3855 = vunpack.c.h.b16 %v3773
  %v3856 = vunpack.c.l.b16 %v3774
  %v3857 = vunpack.c.h.b16 %v3774
  %v3858 = vunpack.c.l.b16 %v3775
  %v3859 = vunpack.c.h.b16 %v3775
  %v3860 = vunpack.c.l.b16 %v3776
  %v3861 = vunpack.c.h.b16 %v3776
  %v3862 = vunpack.c.l.b16 %v3777
  %v3863 = vunpack.c.h.b16 %v3777
  %v3864 = vunpack.c.l.b16 %v3778
  %v3865 = vunpack.c.h.b16 %v3778
  %v3866 = vunpack.c.l.b16 %v3779
  %v3867 = vunpack.c.h.b16 %v3779
  %v3868 = vunpack.c.l.b16 %v3780
  %v3869 = vunpack.c.h.b16 %v3780
  %v3870 = vunpack.c.l.b16 %v3781
  %v3871 = vunpack.c.h.b16 %v3781
  %v3872 = vunpack.c.l.b16 %v3782
  %v3873 = vunpack.c.h.b16 %v3782
  %v3874 = vunpack.c.l.b16 %v3783
  %v3875 = vunpack.c.h.b16 %v3783
  %v3876 = vunpack.c.l.b16 %v3784
  %v3877 = vunpack.c.h.b16 %v3784
  %v3878 = vunpack.c.l.b16 %v3785
  %v3879 = vunpack.c.h.b16 %v3785
  %v3880 = vunpack.c.l.b16 %v3786
  %v3881 = vunpack.c.h.b16 %v3786
  %v3882 = vunpack.c.l.b16 %v3787
  %v3883 = vunpack.c.h.b16 %v3787
  %v3884 = vpack.c.b16 %v3824, %v3820
  %v3885 = vpack.c.b16 %v3825, %v3821
  %v3886 = vpack.c.b16 %v3826, %v3822
  %v3887 = vpack.c.b16 %v3827, %v3823
  %v3888 = vpack.c.b16 %v3832, %v3828
  %v3889 = vpack.c.b16 %v3833, %v3829
  %v3890 = vpack.c.b16 %v3834, %v3830
  %v3891 = vpack.c.b16 %v3835, %v3831
  %v3892 = vpack.c.b16 %v3840, %v3836
  %v3893 = vpack.c.b16 %v3841, %v3837
  %v3894 = vpack.c.b16 %v3842, %v3838
  %v3895 = vpack.c.b16 %v3843, %v3839
  %v3896 = vpack.c.b16 %v3848, %v3844
  %v3897 = vpack.c.b16 %v3849, %v3845
  %v3898 = vpack.c.b16 %v3850, %v3846
  %v3899 = vpack.c.b16 %v3851, %v3847
  %v3900 = vpack.c.b16 %v3856, %v3852
  %v3901 = vpack.c.b16 %v3857, %v3853
  %v3902 = vpack.c.b16 %v3858, %v3854
  %v3903 = vpack.c.b16 %v3859, %v3855
  %v3904 = vpack.c.b16 %v3864, %v3860
  %v3905 = vpack.c.b16 %v3865, %v3861
  %v3906 = vpack.c.b16 %v3866, %v3862
  %v3907 = vpack.c.b16 %v3867, %v3863
  %v3908 = vpack.c.b16 %v3872, %v3868
  %v3909 = vpack.c.b16 %v3873, %v3869
  %v3910 = vpack.c.b16 %v3874, %v3870
  %v3911 = vpack.c.b16 %v3875, %v3871
  %v3912 = vpack.c.b16 %v3880, %v3876
  %v3913 = vpack.c.b16 %v3881, %v3877
  %v3914 = vpack.c.b16 %v3882, %v3878
  %v3915 = vpack.c.b16 %v3883, %v3879
  %3948 = vmatprep.subr.bf16.mxu0 %v3913
  %3949 = vmatpush1.bf16.msra.mxu0 %v3912
  %3950 = vmatprep.subr.bf16.mxu0 %v3909
  %3951 = vmatpush1.bf16.msra.mxu0 %v3908
  %3952 = vmatprep.subr.bf16.mxu0 %v3905
  %3953 = vmatpush1.bf16.msra.mxu0 %v3904
  %3954 = vmatprep.subr.bf16.mxu0 %v3901
  %3955 = vmatpush1.bf16.msra.mxu0 %v3900
  %3956 = vmatprep.subr.bf16.mxu0 %v3897
  %3957 = vmatpush1.bf16.msra.mxu0 %v3896
  %3958 = vmatprep.subr.bf16.mxu0 %v3893
  %3959 = vmatpush1.bf16.msra.mxu0 %v3892
  %3960 = vmatprep.subr.bf16.mxu0 %v3889
  %3961 = vmatpush1.bf16.msra.mxu0 %v3888
  %3962 = vmatprep.subr.bf16.mxu0 %v3885
  %3963 = vmatpush1.bf16.msra.mxu0 %v3884
  %3964 = vmatprep.subr.bf16.mxu0 0
  %3965 = vmatpush2.bf16.msra.mxu0 0
  %3966 = vmatprep.subr.bf16.mxu0 0
  %3967 = vmatpush2.bf16.msra.mxu0 0
  %3968 = vmatprep.subr.bf16.mxu0 0
  %3969 = vmatpush2.bf16.msra.mxu0 0
  %3970 = vmatprep.subr.bf16.mxu0 0
  %3971 = vmatpush2.bf16.msra.mxu0 0
  %3972 = vmatprep.subr.bf16.mxu0 0
  %3973 = vmatpush2.bf16.msra.mxu0 0
  %3974 = vmatprep.subr.bf16.mxu0 0
  %3975 = vmatpush2.bf16.msra.mxu0 0
  %3976 = vmatprep.subr.bf16.mxu0 0
  %3977 = vmatpush2.bf16.msra.mxu0 0
  %3978 = vmatprep.subr.bf16.mxu0 0
  %3979 = vmatpush2.bf16.msra.mxu0 0
  %3980 = vmatprep.mubr.bf16.mxu0 0
  %3981 = vmatmul.mubr.bf16.gmra.mxu0 %v3755
  %v3982 = vpop.f32.mrf.mxu0
  %v3983 = vadd.f32 0.0, %v3982
  %v3984 = vpop.f32.mrf.mxu0
  %v3985 = vadd.f32 0.0, %v3984
  %v3986 = vpop.f32.mrf.mxu0
  %v3987 = vpop.f32.mrf.mxu0
  %3988 = vdwg.mxu0
  %3989 = vmatprep.subr.bf16.mxu0 %v3915
  %3990 = vmatpush1.bf16.msra.mxu0 %v3914
  %3991 = vmatprep.subr.bf16.mxu0 %v3911
  %3992 = vmatpush1.bf16.msra.mxu0 %v3910
  %3993 = vmatprep.subr.bf16.mxu0 %v3907
  %3994 = vmatpush1.bf16.msra.mxu0 %v3906
  %3995 = vmatprep.subr.bf16.mxu0 %v3903
  %3996 = vmatpush1.bf16.msra.mxu0 %v3902
  %3997 = vmatprep.subr.bf16.mxu0 %v3899
  %3998 = vmatpush1.bf16.msra.mxu0 %v3898
  %3999 = vmatprep.subr.bf16.mxu0 %v3895
  %4000 = vmatpush1.bf16.msra.mxu0 %v3894
  %4001 = vmatprep.subr.bf16.mxu0 %v3891
  %4002 = vmatpush1.bf16.msra.mxu0 %v3890
  %4003 = vmatprep.subr.bf16.mxu0 %v3887
  %4004 = vmatpush1.bf16.msra.mxu0 %v3886
  %4005 = vmatprep.subr.bf16.mxu0 0
  %4006 = vmatpush2.bf16.msra.mxu0 0
  %4007 = vmatprep.subr.bf16.mxu0 0
  %4008 = vmatpush2.bf16.msra.mxu0 0
  %4009 = vmatprep.subr.bf16.mxu0 0
  %4010 = vmatpush2.bf16.msra.mxu0 0
  %4011 = vmatprep.subr.bf16.mxu0 0
  %4012 = vmatpush2.bf16.msra.mxu0 0
  %4013 = vmatprep.subr.bf16.mxu0 0
  %4014 = vmatpush2.bf16.msra.mxu0 0
  %4015 = vmatprep.subr.bf16.mxu0 0
  %4016 = vmatpush2.bf16.msra.mxu0 0
  %4017 = vmatprep.subr.bf16.mxu0 0
  %4018 = vmatpush2.bf16.msra.mxu0 0
  %4019 = vmatprep.subr.bf16.mxu0 0
  %4020 = vmatpush2.bf16.msra.mxu0 0
  %4021 = vmatprep.mubr.bf16.mxu0 0
  %4022 = vmatmul.mubr.bf16.gmra.mxu0 %v3755
  %v4023 = vpop.f32.mrf.mxu0
  %v4024 = vadd.f32 0.0, %v4023
  %v4025 = vpop.f32.mrf.mxu0
  %v4026 = vadd.f32 0.0, %v4025
  %v4027 = vpop.f32.mrf.mxu0
  %v4028 = vpop.f32.mrf.mxu0
  %4029 = vdwg.mxu0
  %v4034 = vrot.slane %v3983, 3
  %v4035 = vrot.slane %v3985, 3
  %v4036 = vrot.slane %v4024, 3
  %v4037 = vrot.slane %v4026, 3
  %v4038 = vrot.slane %v3983, 4
  %v4039 = vrot.slane %v3985, 4
  %v4040 = vrot.slane %v4024, 4
  %v4041 = vrot.slane %v4026, 4
  %v4042 = vrot.slane %v3983, 5
  %v4043 = vrot.slane %v3985, 5
  %v4044 = vrot.slane %v4024, 5
  %v4045 = vrot.slane %v4026, 5
  %v4046 = vrot.slane %v3983, 6
  %v4047 = vrot.slane %v3985, 6
  %v4048 = vrot.slane %v4024, 6
  %v4049 = vrot.slane %v4026, 6
  %v4050 = vrot.slane %v3983, 7
  %v4051 = vrot.slane %v3985, 7
  %v4052 = vrot.slane %v4024, 7
  %v4053 = vrot.slane %v4026, 7
  %v4054 = vrot.slane %v3983, 1
  %v4055 = vrot.slane %v3985, 1
  %v4056 = vrot.slane %v4024, 1
  %v4057 = vrot.slane %v4026, 1
  %v4058 = vrot.slane %v3983, 2
  %v4059 = vrot.slane %v3985, 2
  %v4060 = vrot.slane %v4024, 2
  %v4061 = vrot.slane %v4026, 2
  %v4094 = vadd.f32 %v3723, %v4034
  %v4095 = vadd.f32 %v3724, %v4035
  %v4096 = vadd.f32 %v3725, %v4036
  %v4097 = vadd.f32 %v3726, %v4037
  %v4098 = vadd.f32 %v3727, %v4038
  %v4099 = vadd.f32 %v3728, %v4039
  %v4100 = vadd.f32 %v3729, %v4040
  %v4101 = vadd.f32 %v3730, %v4041
  %v4102 = vadd.f32 %v3731, %v4042
  %v4103 = vadd.f32 %v3732, %v4043
  %v4104 = vadd.f32 %v3733, %v4044
  %v4105 = vadd.f32 %v3734, %v4045
  %v4106 = vadd.f32 %v3735, %v4046
  %v4107 = vadd.f32 %v3736, %v4047
  %v4108 = vadd.f32 %v3737, %v4048
  %v4109 = vadd.f32 %v3738, %v4049
  %v4110 = vadd.f32 %v3739, %v4050
  %v4111 = vadd.f32 %v3740, %v4051
  %v4112 = vadd.f32 %v3741, %v4052
  %v4113 = vadd.f32 %v3742, %v4053
  %v4114 = vadd.f32 %v3743, %v3983
  %v4115 = vadd.f32 %v3744, %v3985
  %v4116 = vadd.f32 %v3745, %v4024
  %v4117 = vadd.f32 %v3746, %v4026
  %v4118 = vadd.f32 %v3747, %v4054
  %v4119 = vadd.f32 %v3748, %v4055
  %v4120 = vadd.f32 %v3749, %v4056
  %v4121 = vadd.f32 %v3750, %v4057
  %v4122 = vadd.f32 %v3751, %v4058
  %v4123 = vadd.f32 %v3752, %v4059
  %v4124 = vadd.f32 %v3753, %v4060
  %v4125 = vadd.f32 %v3754, %v4061
  %v4126 = vxor.u32 %v4094, 2147483648
  %v4127 = vxor.u32 %v4095, 2147483648
  %v4128 = vxor.u32 %v4096, 2147483648
  %v4129 = vxor.u32 %v4098, 2147483648
  %v4130 = vxor.u32 %v4099, 2147483648
  %v4131 = vxor.u32 %v4100, 2147483648
  %v4132 = vxor.u32 %v4102, 2147483648
  %v4133 = vxor.u32 %v4103, 2147483648
  %v4134 = vxor.u32 %v4104, 2147483648
  %v4135 = vxor.u32 %v4106, 2147483648
  %v4136 = vxor.u32 %v4107, 2147483648
  %v4137 = vxor.u32 %v4108, 2147483648
  %v4138 = vxor.u32 %v4110, 2147483648
  %v4139 = vxor.u32 %v4111, 2147483648
  %v4140 = vxor.u32 %v4112, 2147483648
  %v4141 = vxor.u32 %v4114, 2147483648
  %v4142 = vxor.u32 %v4115, 2147483648
  %v4143 = vxor.u32 %v4116, 2147483648
  %v4144 = vxor.u32 %v4118, 2147483648
  %v4145 = vxor.u32 %v4119, 2147483648
  %v4146 = vxor.u32 %v4120, 2147483648
  %v4147 = vxor.u32 %v4122, 2147483648
  %v4148 = vxor.u32 %v4123, 2147483648
  %v4149 = vxor.u32 %v4124, 2147483648
  %v4150 = vmul.f32 %v4126, 1.442695
  %v4151 = vpow.pop %v4150
  %v4152 = vmul.f32 %v4127, 1.442695
  %v4153 = vpow.pop %v4152
  %v4154 = vmul.f32 %v4128, 1.442695
  %v4155 = vpow.pop %v4154
  %v4156 = vmul.f32 %v4129, 1.442695
  %v4157 = vpow.pop %v4156
  %v4158 = vmul.f32 %v4130, 1.442695
  %v4159 = vpow.pop %v4158
  %v4160 = vmul.f32 %v4131, 1.442695
  %v4161 = vpow.pop %v4160
  %v4162 = vmul.f32 %v4132, 1.442695
  %v4163 = vpow.pop %v4162
  %v4164 = vmul.f32 %v4133, 1.442695
  %v4165 = vpow.pop %v4164
  %v4166 = vmul.f32 %v4134, 1.442695
  %v4167 = vpow.pop %v4166
  %v4168 = vmul.f32 %v4135, 1.442695
  %v4169 = vpow.pop %v4168
  %v4170 = vmul.f32 %v4136, 1.442695
  %v4171 = vpow.pop %v4170
  %v4172 = vmul.f32 %v4137, 1.442695
  %v4173 = vpow.pop %v4172
  %v4174 = vmul.f32 %v4138, 1.442695
  %v4175 = vpow.pop %v4174
  %v4176 = vmul.f32 %v4139, 1.442695
  %v4177 = vpow.pop %v4176
  %v4178 = vmul.f32 %v4140, 1.442695
  %v4179 = vpow.pop %v4178
  %v4180 = vmul.f32 %v4141, 1.442695
  %v4181 = vpow.pop %v4180
  %v4182 = vmul.f32 %v4142, 1.442695
  %v4183 = vpow.pop %v4182
  %v4184 = vmul.f32 %v4143, 1.442695
  %v4185 = vpow.pop %v4184
  %v4186 = vmul.f32 %v4144, 1.442695
  %v4187 = vpow.pop %v4186
  %v4188 = vmul.f32 %v4145, 1.442695
  %v4189 = vpow.pop %v4188
  %v4190 = vmul.f32 %v4146, 1.442695
  %v4191 = vpow.pop %v4190
  %v4192 = vmul.f32 %v4147, 1.442695
  %v4193 = vpow.pop %v4192
  %v4194 = vmul.f32 %v4148, 1.442695
  %v4195 = vpow.pop %v4194
  %v4196 = vmul.f32 %v4149, 1.442695
  %v4197 = vpow.pop %v4196
  %v4198 = vadd.f32 %v4151, 1.0
  %v4199 = vadd.f32 %v4153, 1.0
  %v4200 = vadd.f32 %v4155, 1.0
  %v4201 = vadd.f32 %v4157, 1.0
  %v4202 = vadd.f32 %v4159, 1.0
  %v4203 = vadd.f32 %v4161, 1.0
  %v4204 = vadd.f32 %v4163, 1.0
  %v4205 = vadd.f32 %v4165, 1.0
  %v4206 = vadd.f32 %v4167, 1.0
  %v4207 = vadd.f32 %v4169, 1.0
  %v4208 = vadd.f32 %v4171, 1.0
  %v4209 = vadd.f32 %v4173, 1.0
  %v4210 = vadd.f32 %v4175, 1.0
  %v4211 = vadd.f32 %v4177, 1.0
  %v4212 = vadd.f32 %v4179, 1.0
  %v4213 = vadd.f32 %v4181, 1.0
  %v4214 = vadd.f32 %v4183, 1.0
  %v4215 = vadd.f32 %v4185, 1.0
  %v4216 = vadd.f32 %v4187, 1.0
  %v4217 = vadd.f32 %v4189, 1.0
  %v4218 = vadd.f32 %v4191, 1.0
  %v4219 = vadd.f32 %v4193, 1.0
  %v4220 = vadd.f32 %v4195, 1.0
  %v4221 = vadd.f32 %v4197, 1.0
  %v4222 = vrcp.pop %v4198
  %v4223 = vmul.f32 1.0, %v4222
  %v4224 = vrcp.pop %v4199
  %v4225 = vmul.f32 1.0, %v4224
  %v4226 = vrcp.pop %v4200
  %v4227 = vmul.f32 1.0, %v4226
  %v4228 = vrcp.pop %v4201
  %v4229 = vmul.f32 1.0, %v4228
  %v4230 = vrcp.pop %v4202
  %v4231 = vmul.f32 1.0, %v4230
  %v4232 = vrcp.pop %v4203
  %v4233 = vmul.f32 1.0, %v4232
  %v4234 = vrcp.pop %v4204
  %v4235 = vmul.f32 1.0, %v4234
  %v4236 = vrcp.pop %v4205
  %v4237 = vmul.f32 1.0, %v4236
  %v4238 = vrcp.pop %v4206
  %v4239 = vmul.f32 1.0, %v4238
  %v4240 = vrcp.pop %v4207
  %v4241 = vmul.f32 1.0, %v4240
  %v4242 = vrcp.pop %v4208
  %v4243 = vmul.f32 1.0, %v4242
  %v4244 = vrcp.pop %v4209
  %v4245 = vmul.f32 1.0, %v4244
  %v4246 = vrcp.pop %v4210
  %v4247 = vmul.f32 1.0, %v4246
  %v4248 = vrcp.pop %v4211
  %v4249 = vmul.f32 1.0, %v4248
  %v4250 = vrcp.pop %v4212
  %v4251 = vmul.f32 1.0, %v4250
  %v4252 = vrcp.pop %v4213
  %v4253 = vmul.f32 1.0, %v4252
  %v4254 = vrcp.pop %v4214
  %v4255 = vmul.f32 1.0, %v4254
  %v4256 = vrcp.pop %v4215
  %v4257 = vmul.f32 1.0, %v4256
  %v4258 = vrcp.pop %v4216
  %v4259 = vmul.f32 1.0, %v4258
  %v4260 = vrcp.pop %v4217
  %v4261 = vmul.f32 1.0, %v4260
  %v4262 = vrcp.pop %v4218
  %v4263 = vmul.f32 1.0, %v4262
  %v4264 = vrcp.pop %v4219
  %v4265 = vmul.f32 1.0, %v4264
  %v4266 = vrcp.pop %v4220
  %v4267 = vmul.f32 1.0, %v4266
  %v4268 = vrcp.pop %v4221
  %v4269 = vmul.f32 1.0, %v4268
  %v4270 = vtanh.pop %v4097
  %v4271 = vtanh.pop %v4101
  %v4272 = vtanh.pop %v4105
  %v4273 = vtanh.pop %v4109
  %v4274 = vtanh.pop %v4113
  %v4275 = vtanh.pop %v4117
  %v4276 = vtanh.pop %v4121
  %v4277 = vtanh.pop %v4125
  %v4278 = vld [vmem:[#allocation3] sm:$0xff]
  %v4280 = vrot.slane %v4278, 3
  %v4281 = vrot.slane %v4278, 4
  %v4282 = vrot.slane %v4278, 5
  %v4283 = vrot.slane %v4278, 6
  %v4284 = vrot.slane %v4278, 7
  %v4285 = vrot.slane %v4278, 1
  %v4286 = vrot.slane %v4278, 2
  %v4295 = vmul.f32 %v4225, %v4280
  %v4296 = vmul.f32 %v4231, %v4281
  %v4297 = vmul.f32 %v4237, %v4282
  %v4298 = vmul.f32 %v4243, %v4283
  %v4299 = vmul.f32 %v4249, %v4284
  %v4300 = vmul.f32 %v4255, %v4278
  %v4301 = vmul.f32 %v4261, %v4285
  %v4302 = vmul.f32 %v4267, %v4286
  %v4303 = vmul.f32 %v4223, %v4270
  %v4304 = vmul.f32 %v4229, %v4271
  %v4305 = vmul.f32 %v4235, %v4272
  %v4306 = vmul.f32 %v4241, %v4273
  %v4307 = vmul.f32 %v4247, %v4274
  %v4308 = vmul.f32 %v4253, %v4275
  %v4309 = vmul.f32 %v4259, %v4276
  %v4310 = vmul.f32 %v4265, %v4277
  %v4311 = vadd.f32 %v4295, %v4303
  %v4312 = vadd.f32 %v4296, %v4304
  %v4313 = vadd.f32 %v4297, %v4305
  %v4314 = vadd.f32 %v4298, %v4306
  %v4315 = vadd.f32 %v4299, %v4307
  %v4316 = vadd.f32 %v4300, %v4308
  %v4317 = vadd.f32 %v4301, %v4309
  %v4318 = vadd.f32 %v4302, %v4310
  %v4319 = vtanh.pop %v4311
  %v4320 = vtanh.pop %v4312
  %v4321 = vtanh.pop %v4313
  %v4322 = vtanh.pop %v4314
  %v4323 = vtanh.pop %v4315
  %v4324 = vtanh.pop %v4316
  %v4325 = vtanh.pop %v4317
  %v4326 = vtanh.pop %v4318
  %v4327 = vmul.f32 %v4227, %v4319
  %v4328 = vmul.f32 %v4233, %v4320
  %v4329 = vmul.f32 %v4239, %v4321
  %v4330 = vmul.f32 %v4245, %v4322
  %v4331 = vmul.f32 %v4251, %v4323
  %v4332 = vmul.f32 %v4257, %v4324
  %v4333 = vmul.f32 %v4263, %v4325
  %v4334 = vmul.f32 %v4269, %v4326
  %v4335 = vpack.c.bf16 %v4327, %v4327
  %v4336 = vpack.c.bf16 %v4328, %v4328
  %v4337 = vpack.c.bf16 %v4329, %v4329
  %v4338 = vpack.c.bf16 %v4330, %v4330
  %v4339 = vpack.c.bf16 %v4331, %v4331
  %v4340 = vpack.c.bf16 %v4332, %v4332
  %v4341 = vpack.c.bf16 %v4333, %v4333
  %v4342 = vpack.c.bf16 %v4334, %v4334
  %v4351 = vrot.slane %v4312, 7
  %v4352 = vsel %vm678, %v4351, %v4311
  %v4353 = vrot.slane %v4313, 6
  %v4354 = vsel %vm681, %v4353, %v4352
  %v4355 = vrot.slane %v4314, 5
  %v4356 = vrot.slane %v4315, 4
  %v4357 = vsel %vm663, %v4356, %v4355
  %v4358 = vrot.slane %v4316, 3
  %v4359 = vsel %vm666, %v4358, %v4357
  %v4360 = vrot.slane %v4317, 2
  %v4361 = vsel %vm669, %v4360, %v4359
  %v4362 = vrot.slane %v4318, 1
  %v4363 = vsel %vm672, %v4362, %v4361
  %4366 = vst [vmem:[#allocation3 - $0x5] sm:$0xe0] %v4354
  %4367 = vst [vmem:[#allocation3 + $0x3] sm:$0x1f] %v4363
  %v4376 = vunpack.c.l.b16 %v4335
  %v4377 = vunpack.c.l.b16 %v4336
  %v4378 = vunpack.c.l.b16 %v4337
  %v4379 = vunpack.c.l.b16 %v4338
  %v4380 = vunpack.c.l.b16 %v4339
  %v4381 = vunpack.c.l.b16 %v4340
  %v4382 = vunpack.c.l.b16 %v4341
  %v4383 = vunpack.c.l.b16 %v4342
  %v4384 = vpack.c.b16 %v4376, %v4376
  %v4385 = vpack.c.b16 %v4377, %v4377
  %v4386 = vpack.c.b16 %v4378, %v4378
  %v4387 = vpack.c.b16 %v4379, %v4379
  %v4388 = vpack.c.b16 %v4380, %v4380
  %v4389 = vpack.c.b16 %v4381, %v4381
  %v4390 = vpack.c.b16 %v4382, %v4382
  %v4391 = vpack.c.b16 %v4383, %v4383
  %v4392 = vunpack.c.l.b16 %v4384
  %v4393 = vunpack.c.l.b16 %v4385
  %v4394 = vunpack.c.l.b16 %v4386
  %v4395 = vunpack.c.l.b16 %v4387
  %v4396 = vunpack.c.l.b16 %v4388
  %v4397 = vunpack.c.l.b16 %v4389
  %v4398 = vunpack.c.l.b16 %v4390
  %v4399 = vunpack.c.l.b16 %v4391
  %v4400 = vrot.slane %v4392, 5
  %v4401 = vrot.slane %v4393, 4
  %v4402 = vsel %vm663, %v4401, %v4400
  %v4403 = vrot.slane %v4394, 3
  %v4404 = vsel %vm666, %v4403, %v4402
  %v4405 = vrot.slane %v4395, 2
  %v4406 = vsel %vm669, %v4405, %v4404
  %v4407 = vrot.slane %v4396, 1
  %v4408 = vsel %vm672, %v4407, %v4406
  %v4409 = vsel %vm675, %v4397, %v4408
  %v4410 = vrot.slane %v4398, 7
  %v4411 = vsel %vm678, %v4410, %v4409
  %v4412 = vrot.slane %v4399, 6
  %v4413 = vsel %vm681, %v4412, %v4411
  %v4414 = vpack.c.b16 %v4413, %v4413
  %4416 = vst [vmem:[#allocation2] sm:$0xf] %v4414
  %vm4417 = vsmask.f32 7946
  %vm4418 = vmand %vm3680, %vm4417
  %v4419 = vld [vmem:[%s2] sm:$0x4]
  %v4420 = vsel %vm4418, %v4335, %v4419
  %4421 = vst [vmem:[%s2] sm:$0x4] %v4420
  %v4422 = vld [vmem:[%s2 + $0x8] sm:$0x4]
  %v4423 = vsel %vm4418, %v4336, %v4422
  %4424 = vst [vmem:[%s2 + $0x8] sm:$0x4] %v4423
  %v4425 = vld [vmem:[%s2 + $0x10] sm:$0x4]
  %v4426 = vsel %vm4418, %v4337, %v4425
  %4427 = vst [vmem:[%s2 + $0x10] sm:$0x4] %v4426
  %v4428 = vld [vmem:[%s2 + $0x18] sm:$0x4]
  %v4429 = vsel %vm4418, %v4338, %v4428
  %4430 = vst [vmem:[%s2 + $0x18] sm:$0x4] %v4429
  %v4431 = vld [vmem:[%s2 + $0x20] sm:$0x4]
  %v4432 = vsel %vm4418, %v4339, %v4431
  %4433 = vst [vmem:[%s2 + $0x20] sm:$0x4] %v4432
  %v4434 = vld [vmem:[%s2 + $0x28] sm:$0x4]
  %v4435 = vsel %vm4418, %v4340, %v4434
  %4436 = vst [vmem:[%s2 + $0x28] sm:$0x4] %v4435
  %v4437 = vld [vmem:[%s2 + $0x30] sm:$0x4]
  %v4438 = vsel %vm4418, %v4341, %v4437
  %4439 = vst [vmem:[%s2 + $0x30] sm:$0x4] %v4438
  %v4440 = vld [vmem:[%s2 + $0x38] sm:$0x4]
  %v4441 = vsel %vm4418, %v4342, %v4440
  %4442 = vst [vmem:[%s2 + $0x38] sm:$0x4] %v4441
  %v4443 = vld [vmem:[%s0] sm:$0x88]
  %v4444 = vld [vmem:[%s0 + $0x8] sm:$0x88]
  %v4445 = vld [vmem:[%s0 + $0x20] sm:$0x88]
  %v4446 = vld [vmem:[%s0 + $0x28] sm:$0x88]
  %v4447 = vld [vmem:[%s0 + $0x40] sm:$0x88]
  %v4448 = vld [vmem:[%s0 + $0x48] sm:$0x88]
  %v4449 = vld [vmem:[%s0 + $0x60] sm:$0x88]
  %v4450 = vld [vmem:[%s0 + $0x68] sm:$0x88]
  %v4451 = vld [vmem:[%s0 + $0x80] sm:$0x88]
  %v4452 = vld [vmem:[%s0 + $0x88] sm:$0x88]
  %v4453 = vld [vmem:[%s0 + $0xa0] sm:$0x88]
  %v4454 = vld [vmem:[%s0 + $0xa8] sm:$0x88]
  %v4455 = vld [vmem:[%s0 + $0xc0] sm:$0x88]
  %v4456 = vld [vmem:[%s0 + $0xc8] sm:$0x88]
  %v4457 = vld [vmem:[%s0 + $0xe0] sm:$0x88]
  %v4458 = vld [vmem:[%s0 + $0xe8] sm:$0x88]
  %v4459 = vunpack.c.l.bf16 %v4443
  %v4460 = vunpack.c.h.bf16 %v4443
  %v4461 = vunpack.c.l.bf16 %v4444
  %v4462 = vunpack.c.h.bf16 %v4444
  %v4463 = vunpack.c.l.bf16 %v4445
  %v4464 = vunpack.c.h.bf16 %v4445
  %v4465 = vunpack.c.l.bf16 %v4446
  %v4466 = vunpack.c.h.bf16 %v4446
  %v4467 = vunpack.c.l.bf16 %v4447
  %v4468 = vunpack.c.h.bf16 %v4447
  %v4469 = vunpack.c.l.bf16 %v4448
  %v4470 = vunpack.c.h.bf16 %v4448
  %v4471 = vunpack.c.l.bf16 %v4449
  %v4472 = vunpack.c.h.bf16 %v4449
  %v4473 = vunpack.c.l.bf16 %v4450
  %v4474 = vunpack.c.h.bf16 %v4450
  %v4475 = vunpack.c.l.bf16 %v4451
  %v4476 = vunpack.c.h.bf16 %v4451
  %v4477 = vunpack.c.l.bf16 %v4452
  %v4478 = vunpack.c.h.bf16 %v4452
  %v4479 = vunpack.c.l.bf16 %v4453
  %v4480 = vunpack.c.h.bf16 %v4453
  %v4481 = vunpack.c.l.bf16 %v4454
  %v4482 = vunpack.c.h.bf16 %v4454
  %v4483 = vunpack.c.l.bf16 %v4455
  %v4484 = vunpack.c.h.bf16 %v4455
  %v4485 = vunpack.c.l.bf16 %v4456
  %v4486 = vunpack.c.h.bf16 %v4456
  %v4487 = vunpack.c.l.bf16 %v4457
  %v4488 = vunpack.c.h.bf16 %v4457
  %v4489 = vunpack.c.l.bf16 %v4458
  %v4490 = vunpack.c.h.bf16 %v4458
  %v4491 = vld [vmem:[#allocation2] sm:$0xf]
  %v4492 = vld [vmem:[%s1] sm:$0xff]
  %v4493 = vld [vmem:[%s1 + $0x8] sm:$0xff]
  %v4494 = vld [vmem:[%s1 + $0x10] sm:$0xff]
  %v4495 = vld [vmem:[%s1 + $0x18] sm:$0xff]
  %v4496 = vld [vmem:[%s1 + $0x20] sm:$0xff]
  %v4497 = vld [vmem:[%s1 + $0x28] sm:$0xff]
  %v4498 = vld [vmem:[%s1 + $0x30] sm:$0xff]
  %v4499 = vld [vmem:[%s1 + $0x38] sm:$0xff]
  %v4500 = vld [vmem:[%s1 + $0x40] sm:$0xff]
  %v4501 = vld [vmem:[%s1 + $0x48] sm:$0xff]
  %v4502 = vld [vmem:[%s1 + $0x50] sm:$0xff]
  %v4503 = vld [vmem:[%s1 + $0x58] sm:$0xff]
  %v4504 = vld [vmem:[%s1 + $0x60] sm:$0xff]
  %v4505 = vld [vmem:[%s1 + $0x68] sm:$0xff]
  %v4506 = vld [vmem:[%s1 + $0x70] sm:$0xff]
  %v4507 = vld [vmem:[%s1 + $0x78] sm:$0xff]
  %v4508 = vld [vmem:[%s1 + $0x80] sm:$0xff]
  %v4509 = vld [vmem:[%s1 + $0x88] sm:$0xff]
  %v4510 = vld [vmem:[%s1 + $0x90] sm:$0xff]
  %v4511 = vld [vmem:[%s1 + $0x98] sm:$0xff]
  %v4512 = vld [vmem:[%s1 + $0xa0] sm:$0xff]
  %v4513 = vld [vmem:[%s1 + $0xa8] sm:$0xff]
  %v4514 = vld [vmem:[%s1 + $0xb0] sm:$0xff]
  %v4515 = vld [vmem:[%s1 + $0xb8] sm:$0xff]
  %v4516 = vld [vmem:[%s1 + $0xc0] sm:$0xff]
  %v4517 = vld [vmem:[%s1 + $0xc8] sm:$0xff]
  %v4518 = vld [vmem:[%s1 + $0xd0] sm:$0xff]
  %v4519 = vld [vmem:[%s1 + $0xd8] sm:$0xff]
  %v4520 = vld [vmem:[%s1 + $0xe0] sm:$0xff]
  %v4521 = vld [vmem:[%s1 + $0xe8] sm:$0xff]
  %v4522 = vld [vmem:[%s1 + $0xf0] sm:$0xff]
  %v4523 = vld [vmem:[%s1 + $0xf8] sm:$0xff]
  %v4556 = vunpack.c.l.b16 %v4492
  %v4557 = vunpack.c.h.b16 %v4492
  %v4558 = vunpack.c.l.b16 %v4493
  %v4559 = vunpack.c.h.b16 %v4493
  %v4560 = vunpack.c.l.b16 %v4494
  %v4561 = vunpack.c.h.b16 %v4494
  %v4562 = vunpack.c.l.b16 %v4495
  %v4563 = vunpack.c.h.b16 %v4495
  %v4564 = vunpack.c.l.b16 %v4496
  %v4565 = vunpack.c.h.b16 %v4496
  %v4566 = vunpack.c.l.b16 %v4497
  %v4567 = vunpack.c.h.b16 %v4497
  %v4568 = vunpack.c.l.b16 %v4498
  %v4569 = vunpack.c.h.b16 %v4498
  %v4570 = vunpack.c.l.b16 %v4499
  %v4571 = vunpack.c.h.b16 %v4499
  %v4572 = vunpack.c.l.b16 %v4500
  %v4573 = vunpack.c.h.b16 %v4500
  %v4574 = vunpack.c.l.b16 %v4501
  %v4575 = vunpack.c.h.b16 %v4501
  %v4576 = vunpack.c.l.b16 %v4502
  %v4577 = vunpack.c.h.b16 %v4502
  %v4578 = vunpack.c.l.b16 %v4503
  %v4579 = vunpack.c.h.b16 %v4503
  %v4580 = vunpack.c.l.b16 %v4504
  %v4581 = vunpack.c.h.b16 %v4504
  %v4582 = vunpack.c.l.b16 %v4505
  %v4583 = vunpack.c.h.b16 %v4505
  %v4584 = vunpack.c.l.b16 %v4506
  %v4585 = vunpack.c.h.b16 %v4506
  %v4586 = vunpack.c.l.b16 %v4507
  %v4587 = vunpack.c.h.b16 %v4507
  %v4588 = vunpack.c.l.b16 %v4508
  %v4589 = vunpack.c.h.b16 %v4508
  %v4590 = vunpack.c.l.b16 %v4509
  %v4591 = vunpack.c.h.b16 %v4509
  %v4592 = vunpack.c.l.b16 %v4510
  %v4593 = vunpack.c.h.b16 %v4510
  %v4594 = vunpack.c.l.b16 %v4511
  %v4595 = vunpack.c.h.b16 %v4511
  %v4596 = vunpack.c.l.b16 %v4512
  %v4597 = vunpack.c.h.b16 %v4512
  %v4598 = vunpack.c.l.b16 %v4513
  %v4599 = vunpack.c.h.b16 %v4513
  %v4600 = vunpack.c.l.b16 %v4514
  %v4601 = vunpack.c.h.b16 %v4514
  %v4602 = vunpack.c.l.b16 %v4515
  %v4603 = vunpack.c.h.b16 %v4515
  %v4604 = vunpack.c.l.b16 %v4516
  %v4605 = vunpack.c.h.b16 %v4516
  %v4606 = vunpack.c.l.b16 %v4517
  %v4607 = vunpack.c.h.b16 %v4517
  %v4608 = vunpack.c.l.b16 %v4518
  %v4609 = vunpack.c.h.b16 %v4518
  %v4610 = vunpack.c.l.b16 %v4519
  %v4611 = vunpack.c.h.b16 %v4519
  %v4612 = vunpack.c.l.b16 %v4520
  %v4613 = vunpack.c.h.b16 %v4520
  %v4614 = vunpack.c.l.b16 %v4521
  %v4615 = vunpack.c.h.b16 %v4521
  %v4616 = vunpack.c.l.b16 %v4522
  %v4617 = vunpack.c.h.b16 %v4522
  %v4618 = vunpack.c.l.b16 %v4523
  %v4619 = vunpack.c.h.b16 %v4523
  %v4620 = vpack.c.b16 %v4560, %v4556
  %v4621 = vpack.c.b16 %v4561, %v4557
  %v4622 = vpack.c.b16 %v4562, %v4558
  %v4623 = vpack.c.b16 %v4563, %v4559
  %v4624 = vpack.c.b16 %v4568, %v4564
  %v4625 = vpack.c.b16 %v4569, %v4565
  %v4626 = vpack.c.b16 %v4570, %v4566
  %v4627 = vpack.c.b16 %v4571, %v4567
  %v4628 = vpack.c.b16 %v4576, %v4572
  %v4629 = vpack.c.b16 %v4577, %v4573
  %v4630 = vpack.c.b16 %v4578, %v4574
  %v4631 = vpack.c.b16 %v4579, %v4575
  %v4632 = vpack.c.b16 %v4584, %v4580
  %v4633 = vpack.c.b16 %v4585, %v4581
  %v4634 = vpack.c.b16 %v4586, %v4582
  %v4635 = vpack.c.b16 %v4587, %v4583
  %v4636 = vpack.c.b16 %v4592, %v4588
  %v4637 = vpack.c.b16 %v4593, %v4589
  %v4638 = vpack.c.b16 %v4594, %v4590
  %v4639 = vpack.c.b16 %v4595, %v4591
  %v4640 = vpack.c.b16 %v4600, %v4596
  %v4641 = vpack.c.b16 %v4601, %v4597
  %v4642 = vpack.c.b16 %v4602, %v4598
  %v4643 = vpack.c.b16 %v4603, %v4599
  %v4644 = vpack.c.b16 %v4608, %v4604
  %v4645 = vpack.c.b16 %v4609, %v4605
  %v4646 = vpack.c.b16 %v4610, %v4606
  %v4647 = vpack.c.b16 %v4611, %v4607
  %v4648 = vpack.c.b16 %v4616, %v4612
  %v4649 = vpack.c.b16 %v4617, %v4613
  %v4650 = vpack.c.b16 %v4618, %v4614
  %v4651 = vpack.c.b16 %v4619, %v4615
  %4684 = vmatprep.subr.bf16.mxu0 %v4649
  %4685 = vmatpush1.bf16.msra.mxu0 %v4648
  %4686 = vmatprep.subr.bf16.mxu0 %v4645
  %4687 = vmatpush1.bf16.msra.mxu0 %v4644
  %4688 = vmatprep.subr.bf16.mxu0 %v4641
  %4689 = vmatpush1.bf16.msra.mxu0 %v4640
  %4690 = vmatprep.subr.bf16.mxu0 %v4637
  %4691 = vmatpush1.bf16.msra.mxu0 %v4636
  %4692 = vmatprep.subr.bf16.mxu0 %v4633
  %4693 = vmatpush1.bf16.msra.mxu0 %v4632
  %4694 = vmatprep.subr.bf16.mxu0 %v4629
  %4695 = vmatpush1.bf16.msra.mxu0 %v4628
  %4696 = vmatprep.subr.bf16.mxu0 %v4625
  %4697 = vmatpush1.bf16.msra.mxu0 %v4624
  %4698 = vmatprep.subr.bf16.mxu0 %v4621
  %4699 = vmatpush1.bf16.msra.mxu0 %v4620
  %4700 = vmatprep.subr.bf16.mxu0 0
  %4701 = vmatpush2.bf16.msra.mxu0 0
  %4702 = vmatprep.subr.bf16.mxu0 0
  %4703 = vmatpush2.bf16.msra.mxu0 0
  %4704 = vmatprep.subr.bf16.mxu0 0
  %4705 = vmatpush2.bf16.msra.mxu0 0
  %4706 = vmatprep.subr.bf16.mxu0 0
  %4707 = vmatpush2.bf16.msra.mxu0 0
  %4708 = vmatprep.subr.bf16.mxu0 0
  %4709 = vmatpush2.bf16.msra.mxu0 0
  %4710 = vmatprep.subr.bf16.mxu0 0
  %4711 = vmatpush2.bf16.msra.mxu0 0
  %4712 = vmatprep.subr.bf16.mxu0 0
  %4713 = vmatpush2.bf16.msra.mxu0 0
  %4714 = vmatprep.subr.bf16.mxu0 0
  %4715 = vmatpush2.bf16.msra.mxu0 0
  %4716 = vmatprep.mubr.bf16.mxu0 0
  %4717 = vmatmul.mubr.bf16.gmra.mxu0 %v4491
  %v4718 = vpop.f32.mrf.mxu0
  %v4719 = vadd.f32 0.0, %v4718
  %v4720 = vpop.f32.mrf.mxu0
  %v4721 = vadd.f32 0.0, %v4720
  %v4722 = vpop.f32.mrf.mxu0
  %v4723 = vpop.f32.mrf.mxu0
  %4724 = vdwg.mxu0
  %4725 = vmatprep.subr.bf16.mxu0 %v4651
  %4726 = vmatpush1.bf16.msra.mxu0 %v4650
  %4727 = vmatprep.subr.bf16.mxu0 %v4647
  %4728 = vmatpush1.bf16.msra.mxu0 %v4646
  %4729 = vmatprep.subr.bf16.mxu0 %v4643
  %4730 = vmatpush1.bf16.msra.mxu0 %v4642
  %4731 = vmatprep.subr.bf16.mxu0 %v4639
  %4732 = vmatpush1.bf16.msra.mxu0 %v4638
  %4733 = vmatprep.subr.bf16.mxu0 %v4635
  %4734 = vmatpush1.bf16.msra.mxu0 %v4634
  %4735 = vmatprep.subr.bf16.mxu0 %v4631
  %4736 = vmatpush1.bf16.msra.mxu0 %v4630
  %4737 = vmatprep.subr.bf16.mxu0 %v4627
  %4738 = vmatpush1.bf16.msra.mxu0 %v4626
  %4739 = vmatprep.subr.bf16.mxu0 %v4623
  %4740 = vmatpush1.bf16.msra.mxu0 %v4622
  %4741 = vmatprep.subr.bf16.mxu0 0
  %4742 = vmatpush2.bf16.msra.mxu0 0
  %4743 = vmatprep.subr.bf16.mxu0 0
  %4744 = vmatpush2.bf16.msra.mxu0 0
  %4745 = vmatprep.subr.bf16.mxu0 0
  %4746 = vmatpush2.bf16.msra.mxu0 0
  %4747 = vmatprep.subr.bf16.mxu0 0
  %4748 = vmatpush2.bf16.msra.mxu0 0
  %4749 = vmatprep.subr.bf16.mxu0 0
  %4750 = vmatpush2.bf16.msra.mxu0 0
  %4751 = vmatprep.subr.bf16.mxu0 0
  %4752 = vmatpush2.bf16.msra.mxu0 0
  %4753 = vmatprep.subr.bf16.mxu0 0
  %4754 = vmatpush2.bf16.msra.mxu0 0
  %4755 = vmatprep.subr.bf16.mxu0 0
  %4756 = vmatpush2.bf16.msra.mxu0 0
  %4757 = vmatprep.mubr.bf16.mxu0 0
  %4758 = vmatmul.mubr.bf16.gmra.mxu0 %v4491
  %v4759 = vpop.f32.mrf.mxu0
  %v4760 = vadd.f32 0.0, %v4759
  %v4761 = vpop.f32.mrf.mxu0
  %v4762 = vadd.f32 0.0, %v4761
  %v4763 = vpop.f32.mrf.mxu0
  %v4764 = vpop.f32.mrf.mxu0
  %4765 = vdwg.mxu0
  %v4770 = vrot.slane %v4719, 2
  %v4771 = vrot.slane %v4721, 2
  %v4772 = vrot.slane %v4760, 2
  %v4773 = vrot.slane %v4762, 2
  %v4774 = vrot.slane %v4719, 3
  %v4775 = vrot.slane %v4721, 3
  %v4776 = vrot.slane %v4760, 3
  %v4777 = vrot.slane %v4762, 3
  %v4778 = vrot.slane %v4719, 4
  %v4779 = vrot.slane %v4721, 4
  %v4780 = vrot.slane %v4760, 4
  %v4781 = vrot.slane %v4762, 4
  %v4782 = vrot.slane %v4719, 5
  %v4783 = vrot.slane %v4721, 5
  %v4784 = vrot.slane %v4760, 5
  %v4785 = vrot.slane %v4762, 5
  %v4786 = vrot.slane %v4719, 6
  %v4787 = vrot.slane %v4721, 6
  %v4788 = vrot.slane %v4760, 6
  %v4789 = vrot.slane %v4762, 6
  %v4790 = vrot.slane %v4719, 7
  %v4791 = vrot.slane %v4721, 7
  %v4792 = vrot.slane %v4760, 7
  %v4793 = vrot.slane %v4762, 7
  %v4794 = vrot.slane %v4719, 1
  %v4795 = vrot.slane %v4721, 1
  %v4796 = vrot.slane %v4760, 1
  %v4797 = vrot.slane %v4762, 1
  %v4830 = vadd.f32 %v4459, %v4770
  %v4831 = vadd.f32 %v4460, %v4771
  %v4832 = vadd.f32 %v4461, %v4772
  %v4833 = vadd.f32 %v4462, %v4773
  %v4834 = vadd.f32 %v4463, %v4774
  %v4835 = vadd.f32 %v4464, %v4775
  %v4836 = vadd.f32 %v4465, %v4776
  %v4837 = vadd.f32 %v4466, %v4777
  %v4838 = vadd.f32 %v4467, %v4778
  %v4839 = vadd.f32 %v4468, %v4779
  %v4840 = vadd.f32 %v4469, %v4780
  %v4841 = vadd.f32 %v4470, %v4781
  %v4842 = vadd.f32 %v4471, %v4782
  %v4843 = vadd.f32 %v4472, %v4783
  %v4844 = vadd.f32 %v4473, %v4784
  %v4845 = vadd.f32 %v4474, %v4785
  %v4846 = vadd.f32 %v4475, %v4786
  %v4847 = vadd.f32 %v4476, %v4787
  %v4848 = vadd.f32 %v4477, %v4788
  %v4849 = vadd.f32 %v4478, %v4789
  %v4850 = vadd.f32 %v4479, %v4790
  %v4851 = vadd.f32 %v4480, %v4791
  %v4852 = vadd.f32 %v4481, %v4792
  %v4853 = vadd.f32 %v4482, %v4793
  %v4854 = vadd.f32 %v4483, %v4719
  %v4855 = vadd.f32 %v4484, %v4721
  %v4856 = vadd.f32 %v4485, %v4760
  %v4857 = vadd.f32 %v4486, %v4762
  %v4858 = vadd.f32 %v4487, %v4794
  %v4859 = vadd.f32 %v4488, %v4795
  %v4860 = vadd.f32 %v4489, %v4796
  %v4861 = vadd.f32 %v4490, %v4797
  %v4862 = vxor.u32 %v4830, 2147483648
  %v4863 = vxor.u32 %v4831, 2147483648
  %v4864 = vxor.u32 %v4832, 2147483648
  %v4865 = vxor.u32 %v4834, 2147483648
  %v4866 = vxor.u32 %v4835, 2147483648
  %v4867 = vxor.u32 %v4836, 2147483648
  %v4868 = vxor.u32 %v4838, 2147483648
  %v4869 = vxor.u32 %v4839, 2147483648
  %v4870 = vxor.u32 %v4840, 2147483648
  %v4871 = vxor.u32 %v4842, 2147483648
  %v4872 = vxor.u32 %v4843, 2147483648
  %v4873 = vxor.u32 %v4844, 2147483648
  %v4874 = vxor.u32 %v4846, 2147483648
  %v4875 = vxor.u32 %v4847, 2147483648
  %v4876 = vxor.u32 %v4848, 2147483648
  %v4877 = vxor.u32 %v4850, 2147483648
  %v4878 = vxor.u32 %v4851, 2147483648
  %v4879 = vxor.u32 %v4852, 2147483648
  %v4880 = vxor.u32 %v4854, 2147483648
  %v4881 = vxor.u32 %v4855, 2147483648
  %v4882 = vxor.u32 %v4856, 2147483648
  %v4883 = vxor.u32 %v4858, 2147483648
  %v4884 = vxor.u32 %v4859, 2147483648
  %v4885 = vxor.u32 %v4860, 2147483648
  %v4886 = vmul.f32 %v4862, 1.442695
  %v4887 = vpow.pop %v4886
  %v4888 = vmul.f32 %v4863, 1.442695
  %v4889 = vpow.pop %v4888
  %v4890 = vmul.f32 %v4864, 1.442695
  %v4891 = vpow.pop %v4890
  %v4892 = vmul.f32 %v4865, 1.442695
  %v4893 = vpow.pop %v4892
  %v4894 = vmul.f32 %v4866, 1.442695
  %v4895 = vpow.pop %v4894
  %v4896 = vmul.f32 %v4867, 1.442695
  %v4897 = vpow.pop %v4896
  %v4898 = vmul.f32 %v4868, 1.442695
  %v4899 = vpow.pop %v4898
  %v4900 = vmul.f32 %v4869, 1.442695
  %v4901 = vpow.pop %v4900
  %v4902 = vmul.f32 %v4870, 1.442695
  %v4903 = vpow.pop %v4902
  %v4904 = vmul.f32 %v4871, 1.442695
  %v4905 = vpow.pop %v4904
  %v4906 = vmul.f32 %v4872, 1.442695
  %v4907 = vpow.pop %v4906
  %v4908 = vmul.f32 %v4873, 1.442695
  %v4909 = vpow.pop %v4908
  %v4910 = vmul.f32 %v4874, 1.442695
  %v4911 = vpow.pop %v4910
  %v4912 = vmul.f32 %v4875, 1.442695
  %v4913 = vpow.pop %v4912
  %v4914 = vmul.f32 %v4876, 1.442695
  %v4915 = vpow.pop %v4914
  %v4916 = vmul.f32 %v4877, 1.442695
  %v4917 = vpow.pop %v4916
  %v4918 = vmul.f32 %v4878, 1.442695
  %v4919 = vpow.pop %v4918
  %v4920 = vmul.f32 %v4879, 1.442695
  %v4921 = vpow.pop %v4920
  %v4922 = vmul.f32 %v4880, 1.442695
  %v4923 = vpow.pop %v4922
  %v4924 = vmul.f32 %v4881, 1.442695
  %v4925 = vpow.pop %v4924
  %v4926 = vmul.f32 %v4882, 1.442695
  %v4927 = vpow.pop %v4926
  %v4928 = vmul.f32 %v4883, 1.442695
  %v4929 = vpow.pop %v4928
  %v4930 = vmul.f32 %v4884, 1.442695
  %v4931 = vpow.pop %v4930
  %v4932 = vmul.f32 %v4885, 1.442695
  %v4933 = vpow.pop %v4932
  %v4934 = vadd.f32 %v4887, 1.0
  %v4935 = vadd.f32 %v4889, 1.0
  %v4936 = vadd.f32 %v4891, 1.0
  %v4937 = vadd.f32 %v4893, 1.0
  %v4938 = vadd.f32 %v4895, 1.0
  %v4939 = vadd.f32 %v4897, 1.0
  %v4940 = vadd.f32 %v4899, 1.0
  %v4941 = vadd.f32 %v4901, 1.0
  %v4942 = vadd.f32 %v4903, 1.0
  %v4943 = vadd.f32 %v4905, 1.0
  %v4944 = vadd.f32 %v4907, 1.0
  %v4945 = vadd.f32 %v4909, 1.0
  %v4946 = vadd.f32 %v4911, 1.0
  %v4947 = vadd.f32 %v4913, 1.0
  %v4948 = vadd.f32 %v4915, 1.0
  %v4949 = vadd.f32 %v4917, 1.0
  %v4950 = vadd.f32 %v4919, 1.0
  %v4951 = vadd.f32 %v4921, 1.0
  %v4952 = vadd.f32 %v4923, 1.0
  %v4953 = vadd.f32 %v4925, 1.0
  %v4954 = vadd.f32 %v4927, 1.0
  %v4955 = vadd.f32 %v4929, 1.0
  %v4956 = vadd.f32 %v4931, 1.0
  %v4957 = vadd.f32 %v4933, 1.0
  %v4958 = vrcp.pop %v4934
  %v4959 = vmul.f32 1.0, %v4958
  %v4960 = vrcp.pop %v4935
  %v4961 = vmul.f32 1.0, %v4960
  %v4962 = vrcp.pop %v4936
  %v4963 = vmul.f32 1.0, %v4962
  %v4964 = vrcp.pop %v4937
  %v4965 = vmul.f32 1.0, %v4964
  %v4966 = vrcp.pop %v4938
  %v4967 = vmul.f32 1.0, %v4966
  %v4968 = vrcp.pop %v4939
  %v4969 = vmul.f32 1.0, %v4968
  %v4970 = vrcp.pop %v4940
  %v4971 = vmul.f32 1.0, %v4970
  %v4972 = vrcp.pop %v4941
  %v4973 = vmul.f32 1.0, %v4972
  %v4974 = vrcp.pop %v4942
  %v4975 = vmul.f32 1.0, %v4974
  %v4976 = vrcp.pop %v4943
  %v4977 = vmul.f32 1.0, %v4976
  %v4978 = vrcp.pop %v4944
  %v4979 = vmul.f32 1.0, %v4978
  %v4980 = vrcp.pop %v4945
  %v4981 = vmul.f32 1.0, %v4980
  %v4982 = vrcp.pop %v4946
  %v4983 = vmul.f32 1.0, %v4982
  %v4984 = vrcp.pop %v4947
  %v4985 = vmul.f32 1.0, %v4984
  %v4986 = vrcp.pop %v4948
  %v4987 = vmul.f32 1.0, %v4986
  %v4988 = vrcp.pop %v4949
  %v4989 = vmul.f32 1.0, %v4988
  %v4990 = vrcp.pop %v4950
  %v4991 = vmul.f32 1.0, %v4990
  %v4992 = vrcp.pop %v4951
  %v4993 = vmul.f32 1.0, %v4992
  %v4994 = vrcp.pop %v4952
  %v4995 = vmul.f32 1.0, %v4994
  %v4996 = vrcp.pop %v4953
  %v4997 = vmul.f32 1.0, %v4996
  %v4998 = vrcp.pop %v4954
  %v4999 = vmul.f32 1.0, %v4998
  %v5000 = vrcp.pop %v4955
  %v5001 = vmul.f32 1.0, %v5000
  %v5002 = vrcp.pop %v4956
  %v5003 = vmul.f32 1.0, %v5002
  %v5004 = vrcp.pop %v4957
  %v5005 = vmul.f32 1.0, %v5004
  %v5006 = vtanh.pop %v4833
  %v5007 = vtanh.pop %v4837
  %v5008 = vtanh.pop %v4841
  %v5009 = vtanh.pop %v4845
  %v5010 = vtanh.pop %v4849
  %v5011 = vtanh.pop %v4853
  %v5012 = vtanh.pop %v4857
  %v5013 = vtanh.pop %v4861
  %v5014 = vld [vmem:[#allocation3] sm:$0xff]
  %v5016 = vrot.slane %v5014, 2
  %v5017 = vrot.slane %v5014, 3
  %v5018 = vrot.slane %v5014, 4
  %v5019 = vrot.slane %v5014, 5
  %v5020 = vrot.slane %v5014, 6
  %v5021 = vrot.slane %v5014, 7
  %v5022 = vrot.slane %v5014, 1
  %v5031 = vmul.f32 %v4961, %v5016
  %v5032 = vmul.f32 %v4967, %v5017
  %v5033 = vmul.f32 %v4973, %v5018
  %v5034 = vmul.f32 %v4979, %v5019
  %v5035 = vmul.f32 %v4985, %v5020
  %v5036 = vmul.f32 %v4991, %v5021
  %v5037 = vmul.f32 %v4997, %v5014
  %v5038 = vmul.f32 %v5003, %v5022
  %v5039 = vmul.f32 %v4959, %v5006
  %v5040 = vmul.f32 %v4965, %v5007
  %v5041 = vmul.f32 %v4971, %v5008
  %v5042 = vmul.f32 %v4977, %v5009
  %v5043 = vmul.f32 %v4983, %v5010
  %v5044 = vmul.f32 %v4989, %v5011
  %v5045 = vmul.f32 %v4995, %v5012
  %v5046 = vmul.f32 %v5001, %v5013
  %v5047 = vadd.f32 %v5031, %v5039
  %v5048 = vadd.f32 %v5032, %v5040
  %v5049 = vadd.f32 %v5033, %v5041
  %v5050 = vadd.f32 %v5034, %v5042
  %v5051 = vadd.f32 %v5035, %v5043
  %v5052 = vadd.f32 %v5036, %v5044
  %v5053 = vadd.f32 %v5037, %v5045
  %v5054 = vadd.f32 %v5038, %v5046
  %v5055 = vtanh.pop %v5047
  %v5056 = vtanh.pop %v5048
  %v5057 = vtanh.pop %v5049
  %v5058 = vtanh.pop %v5050
  %v5059 = vtanh.pop %v5051
  %v5060 = vtanh.pop %v5052
  %v5061 = vtanh.pop %v5053
  %v5062 = vtanh.pop %v5054
  %v5063 = vmul.f32 %v4963, %v5055
  %v5064 = vmul.f32 %v4969, %v5056
  %v5065 = vmul.f32 %v4975, %v5057
  %v5066 = vmul.f32 %v4981, %v5058
  %v5067 = vmul.f32 %v4987, %v5059
  %v5068 = vmul.f32 %v4993, %v5060
  %v5069 = vmul.f32 %v4999, %v5061
  %v5070 = vmul.f32 %v5005, %v5062
  %v5071 = vpack.c.bf16 %v5063, %v5063
  %v5072 = vpack.c.bf16 %v5064, %v5064
  %v5073 = vpack.c.bf16 %v5065, %v5065
  %v5074 = vpack.c.bf16 %v5066, %v5066
  %v5075 = vpack.c.bf16 %v5067, %v5067
  %v5076 = vpack.c.bf16 %v5068, %v5068
  %v5077 = vpack.c.bf16 %v5069, %v5069
  %v5078 = vpack.c.bf16 %v5070, %v5070
  %v5087 = vrot.slane %v5048, 7
  %v5088 = vsel %vm681, %v5087, %v5047
  %v5089 = vrot.slane %v5049, 6
  %v5090 = vrot.slane %v5050, 5
  %v5091 = vsel %vm663, %v5090, %v5089
  %v5092 = vrot.slane %v5051, 4
  %v5093 = vsel %vm666, %v5092, %v5091
  %v5094 = vrot.slane %v5052, 3
  %v5095 = vsel %vm669, %v5094, %v5093
  %v5096 = vrot.slane %v5053, 2
  %v5097 = vsel %vm672, %v5096, %v5095
  %v5098 = vrot.slane %v5054, 1
  %v5099 = vsel %vm675, %v5098, %v5097
  %5102 = vst [vmem:[#allocation3 - $0x6] sm:$0xc0] %v5088
  %5103 = vst [vmem:[#allocation3 + $0x2] sm:$0x3f] %v5099
  %v5112 = vunpack.c.l.b16 %v5071
  %v5113 = vunpack.c.l.b16 %v5072
  %v5114 = vunpack.c.l.b16 %v5073
  %v5115 = vunpack.c.l.b16 %v5074
  %v5116 = vunpack.c.l.b16 %v5075
  %v5117 = vunpack.c.l.b16 %v5076
  %v5118 = vunpack.c.l.b16 %v5077
  %v5119 = vunpack.c.l.b16 %v5078
  %v5120 = vpack.c.b16 %v5112, %v5112
  %v5121 = vpack.c.b16 %v5113, %v5113
  %v5122 = vpack.c.b16 %v5114, %v5114
  %v5123 = vpack.c.b16 %v5115, %v5115
  %v5124 = vpack.c.b16 %v5116, %v5116
  %v5125 = vpack.c.b16 %v5117, %v5117
  %v5126 = vpack.c.b16 %v5118, %v5118
  %v5127 = vpack.c.b16 %v5119, %v5119
  %v5128 = vunpack.c.l.b16 %v5120
  %v5129 = vunpack.c.l.b16 %v5121
  %v5130 = vunpack.c.l.b16 %v5122
  %v5131 = vunpack.c.l.b16 %v5123
  %v5132 = vunpack.c.l.b16 %v5124
  %v5133 = vunpack.c.l.b16 %v5125
  %v5134 = vunpack.c.l.b16 %v5126
  %v5135 = vunpack.c.l.b16 %v5127
  %v5136 = vrot.slane %v5128, 6
  %v5137 = vrot.slane %v5129, 5
  %v5138 = vsel %vm663, %v5137, %v5136
  %v5139 = vrot.slane %v5130, 4
  %v5140 = vsel %vm666, %v5139, %v5138
  %v5141 = vrot.slane %v5131, 3
  %v5142 = vsel %vm669, %v5141, %v5140
  %v5143 = vrot.slane %v5132, 2
  %v5144 = vsel %vm672, %v5143, %v5142
  %v5145 = vrot.slane %v5133, 1
  %v5146 = vsel %vm675, %v5145, %v5144
  %v5147 = vsel %vm678, %v5134, %v5146
  %v5148 = vrot.slane %v5135, 7
  %v5149 = vsel %vm681, %v5148, %v5147
  %v5150 = vpack.c.b16 %v5149, %v5149
  %5152 = vst [vmem:[#allocation2] sm:$0xf] %v5150
  %vm5153 = vcmask 1043459
  %vm5154 = vsmask.f32 3328
  %vm5155 = vmand %vm5153, %vm5154
  %v5156 = vld [vmem:[%s2] sm:$0x8]
  %v5157 = vsel %vm5155, %v5071, %v5156
  %5158 = vst [vmem:[%s2] sm:$0x8] %v5157
  %v5159 = vld [vmem:[%s2 + $0x8] sm:$0x8]
  %v5160 = vsel %vm5155, %v5072, %v5159
  %5161 = vst [vmem:[%s2 + $0x8] sm:$0x8] %v5160
  %v5162 = vld [vmem:[%s2 + $0x10] sm:$0x8]
  %v5163 = vsel %vm5155, %v5073, %v5162
  %5164 = vst [vmem:[%s2 + $0x10] sm:$0x8] %v5163
  %v5165 = vld [vmem:[%s2 + $0x18] sm:$0x8]
  %v5166 = vsel %vm5155, %v5074, %v5165
  %5167 = vst [vmem:[%s2 + $0x18] sm:$0x8] %v5166
  %v5168 = vld [vmem:[%s2 + $0x20] sm:$0x8]
  %v5169 = vsel %vm5155, %v5075, %v5168
  %5170 = vst [vmem:[%s2 + $0x20] sm:$0x8] %v5169
  %v5171 = vld [vmem:[%s2 + $0x28] sm:$0x8]
  %v5172 = vsel %vm5155, %v5076, %v5171
  %5173 = vst [vmem:[%s2 + $0x28] sm:$0x8] %v5172
  %v5174 = vld [vmem:[%s2 + $0x30] sm:$0x8]
  %v5175 = vsel %vm5155, %v5077, %v5174
  %5176 = vst [vmem:[%s2 + $0x30] sm:$0x8] %v5175
  %v5177 = vld [vmem:[%s2 + $0x38] sm:$0x8]
  %v5178 = vsel %vm5155, %v5078, %v5177
  %5179 = vst [vmem:[%s2 + $0x38] sm:$0x8] %v5178
  %v5180 = vld [vmem:[%s0] sm:$0x88]
  %v5181 = vld [vmem:[%s0 + $0x8] sm:$0x88]
  %v5182 = vld [vmem:[%s0 + $0x20] sm:$0x88]
  %v5183 = vld [vmem:[%s0 + $0x28] sm:$0x88]
  %v5184 = vld [vmem:[%s0 + $0x40] sm:$0x88]
  %v5185 = vld [vmem:[%s0 + $0x48] sm:$0x88]
  %v5186 = vld [vmem:[%s0 + $0x60] sm:$0x88]
  %v5187 = vld [vmem:[%s0 + $0x68] sm:$0x88]
  %v5188 = vld [vmem:[%s0 + $0x80] sm:$0x88]
  %v5189 = vld [vmem:[%s0 + $0x88] sm:$0x88]
  %v5190 = vld [vmem:[%s0 + $0xa0] sm:$0x88]
  %v5191 = vld [vmem:[%s0 + $0xa8] sm:$0x88]
  %v5192 = vld [vmem:[%s0 + $0xc0] sm:$0x88]
  %v5193 = vld [vmem:[%s0 + $0xc8] sm:$0x88]
  %v5194 = vld [vmem:[%s0 + $0xe0] sm:$0x88]
  %v5195 = vld [vmem:[%s0 + $0xe8] sm:$0x88]
  %v5196 = vunpack.c.l.bf16 %v5180
  %v5197 = vunpack.c.h.bf16 %v5180
  %v5198 = vunpack.c.l.bf16 %v5181
  %v5199 = vunpack.c.h.bf16 %v5181
  %v5200 = vunpack.c.l.bf16 %v5182
  %v5201 = vunpack.c.h.bf16 %v5182
  %v5202 = vunpack.c.l.bf16 %v5183
  %v5203 = vunpack.c.h.bf16 %v5183
  %v5204 = vunpack.c.l.bf16 %v5184
  %v5205 = vunpack.c.h.bf16 %v5184
  %v5206 = vunpack.c.l.bf16 %v5185
  %v5207 = vunpack.c.h.bf16 %v5185
  %v5208 = vunpack.c.l.bf16 %v5186
  %v5209 = vunpack.c.h.bf16 %v5186
  %v5210 = vunpack.c.l.bf16 %v5187
  %v5211 = vunpack.c.h.bf16 %v5187
  %v5212 = vunpack.c.l.bf16 %v5188
  %v5213 = vunpack.c.h.bf16 %v5188
  %v5214 = vunpack.c.l.bf16 %v5189
  %v5215 = vunpack.c.h.bf16 %v5189
  %v5216 = vunpack.c.l.bf16 %v5190
  %v5217 = vunpack.c.h.bf16 %v5190
  %v5218 = vunpack.c.l.bf16 %v5191
  %v5219 = vunpack.c.h.bf16 %v5191
  %v5220 = vunpack.c.l.bf16 %v5192
  %v5221 = vunpack.c.h.bf16 %v5192
  %v5222 = vunpack.c.l.bf16 %v5193
  %v5223 = vunpack.c.h.bf16 %v5193
  %v5224 = vunpack.c.l.bf16 %v5194
  %v5225 = vunpack.c.h.bf16 %v5194
  %v5226 = vunpack.c.l.bf16 %v5195
  %v5227 = vunpack.c.h.bf16 %v5195
  %v5228 = vld [vmem:[#allocation2] sm:$0xf]
  %v5229 = vld [vmem:[%s1] sm:$0xff]
  %v5230 = vld [vmem:[%s1 + $0x8] sm:$0xff]
  %v5231 = vld [vmem:[%s1 + $0x10] sm:$0xff]
  %v5232 = vld [vmem:[%s1 + $0x18] sm:$0xff]
  %v5233 = vld [vmem:[%s1 + $0x20] sm:$0xff]
  %v5234 = vld [vmem:[%s1 + $0x28] sm:$0xff]
  %v5235 = vld [vmem:[%s1 + $0x30] sm:$0xff]
  %v5236 = vld [vmem:[%s1 + $0x38] sm:$0xff]
  %v5237 = vld [vmem:[%s1 + $0x40] sm:$0xff]
  %v5238 = vld [vmem:[%s1 + $0x48] sm:$0xff]
  %v5239 = vld [vmem:[%s1 + $0x50] sm:$0xff]
  %v5240 = vld [vmem:[%s1 + $0x58] sm:$0xff]
  %v5241 = vld [vmem:[%s1 + $0x60] sm:$0xff]
  %v5242 = vld [vmem:[%s1 + $0x68] sm:$0xff]
  %v5243 = vld [vmem:[%s1 + $0x70] sm:$0xff]
  %v5244 = vld [vmem:[%s1 + $0x78] sm:$0xff]
  %v5245 = vld [vmem:[%s1 + $0x80] sm:$0xff]
  %v5246 = vld [vmem:[%s1 + $0x88] sm:$0xff]
  %v5247 = vld [vmem:[%s1 + $0x90] sm:$0xff]
  %v5248 = vld [vmem:[%s1 + $0x98] sm:$0xff]
  %v5249 = vld [vmem:[%s1 + $0xa0] sm:$0xff]
  %v5250 = vld [vmem:[%s1 + $0xa8] sm:$0xff]
  %v5251 = vld [vmem:[%s1 + $0xb0] sm:$0xff]
  %v5252 = vld [vmem:[%s1 + $0xb8] sm:$0xff]
  %v5253 = vld [vmem:[%s1 + $0xc0] sm:$0xff]
  %v5254 = vld [vmem:[%s1 + $0xc8] sm:$0xff]
  %v5255 = vld [vmem:[%s1 + $0xd0] sm:$0xff]
  %v5256 = vld [vmem:[%s1 + $0xd8] sm:$0xff]
  %v5257 = vld [vmem:[%s1 + $0xe0] sm:$0xff]
  %v5258 = vld [vmem:[%s1 + $0xe8] sm:$0xff]
  %v5259 = vld [vmem:[%s1 + $0xf0] sm:$0xff]
  %v5260 = vld [vmem:[%s1 + $0xf8] sm:$0xff]
  %v5293 = vunpack.c.l.b16 %v5229
  %v5294 = vunpack.c.h.b16 %v5229
  %v5295 = vunpack.c.l.b16 %v5230
  %v5296 = vunpack.c.h.b16 %v5230
  %v5297 = vunpack.c.l.b16 %v5231
  %v5298 = vunpack.c.h.b16 %v5231
  %v5299 = vunpack.c.l.b16 %v5232
  %v5300 = vunpack.c.h.b16 %v5232
  %v5301 = vunpack.c.l.b16 %v5233
  %v5302 = vunpack.c.h.b16 %v5233
  %v5303 = vunpack.c.l.b16 %v5234
  %v5304 = vunpack.c.h.b16 %v5234
  %v5305 = vunpack.c.l.b16 %v5235
  %v5306 = vunpack.c.h.b16 %v5235
  %v5307 = vunpack.c.l.b16 %v5236
  %v5308 = vunpack.c.h.b16 %v5236
  %v5309 = vunpack.c.l.b16 %v5237
  %v5310 = vunpack.c.h.b16 %v5237
  %v5311 = vunpack.c.l.b16 %v5238
  %v5312 = vunpack.c.h.b16 %v5238
  %v5313 = vunpack.c.l.b16 %v5239
  %v5314 = vunpack.c.h.b16 %v5239
  %v5315 = vunpack.c.l.b16 %v5240
  %v5316 = vunpack.c.h.b16 %v5240
  %v5317 = vunpack.c.l.b16 %v5241
  %v5318 = vunpack.c.h.b16 %v5241
  %v5319 = vunpack.c.l.b16 %v5242
  %v5320 = vunpack.c.h.b16 %v5242
  %v5321 = vunpack.c.l.b16 %v5243
  %v5322 = vunpack.c.h.b16 %v5243
  %v5323 = vunpack.c.l.b16 %v5244
  %v5324 = vunpack.c.h.b16 %v5244
  %v5325 = vunpack.c.l.b16 %v5245
  %v5326 = vunpack.c.h.b16 %v5245
  %v5327 = vunpack.c.l.b16 %v5246
  %v5328 = vunpack.c.h.b16 %v5246
  %v5329 = vunpack.c.l.b16 %v5247
  %v5330 = vunpack.c.h.b16 %v5247
  %v5331 = vunpack.c.l.b16 %v5248
  %v5332 = vunpack.c.h.b16 %v5248
  %v5333 = vunpack.c.l.b16 %v5249
  %v5334 = vunpack.c.h.b16 %v5249
  %v5335 = vunpack.c.l.b16 %v5250
  %v5336 = vunpack.c.h.b16 %v5250
  %v5337 = vunpack.c.l.b16 %v5251
  %v5338 = vunpack.c.h.b16 %v5251
  %v5339 = vunpack.c.l.b16 %v5252
  %v5340 = vunpack.c.h.b16 %v5252
  %v5341 = vunpack.c.l.b16 %v5253
  %v5342 = vunpack.c.h.b16 %v5253
  %v5343 = vunpack.c.l.b16 %v5254
  %v5344 = vunpack.c.h.b16 %v5254
  %v5345 = vunpack.c.l.b16 %v5255
  %v5346 = vunpack.c.h.b16 %v5255
  %v5347 = vunpack.c.l.b16 %v5256
  %v5348 = vunpack.c.h.b16 %v5256
  %v5349 = vunpack.c.l.b16 %v5257
  %v5350 = vunpack.c.h.b16 %v5257
  %v5351 = vunpack.c.l.b16 %v5258
  %v5352 = vunpack.c.h.b16 %v5258
  %v5353 = vunpack.c.l.b16 %v5259
  %v5354 = vunpack.c.h.b16 %v5259
  %v5355 = vunpack.c.l.b16 %v5260
  %v5356 = vunpack.c.h.b16 %v5260
  %v5357 = vpack.c.b16 %v5297, %v5293
  %v5358 = vpack.c.b16 %v5298, %v5294
  %v5359 = vpack.c.b16 %v5299, %v5295
  %v5360 = vpack.c.b16 %v5300, %v5296
  %v5361 = vpack.c.b16 %v5305, %v5301
  %v5362 = vpack.c.b16 %v5306, %v5302
  %v5363 = vpack.c.b16 %v5307, %v5303
  %v5364 = vpack.c.b16 %v5308, %v5304
  %v5365 = vpack.c.b16 %v5313, %v5309
  %v5366 = vpack.c.b16 %v5314, %v5310
  %v5367 = vpack.c.b16 %v5315, %v5311
  %v5368 = vpack.c.b16 %v5316, %v5312
  %v5369 = vpack.c.b16 %v5321, %v5317
  %v5370 = vpack.c.b16 %v5322, %v5318
  %v5371 = vpack.c.b16 %v5323, %v5319
  %v5372 = vpack.c.b16 %v5324, %v5320
  %v5373 = vpack.c.b16 %v5329, %v5325
  %v5374 = vpack.c.b16 %v5330, %v5326
  %v5375 = vpack.c.b16 %v5331, %v5327
  %v5376 = vpack.c.b16 %v5332, %v5328
  %v5377 = vpack.c.b16 %v5337, %v5333
  %v5378 = vpack.c.b16 %v5338, %v5334
  %v5379 = vpack.c.b16 %v5339, %v5335
  %v5380 = vpack.c.b16 %v5340, %v5336
  %v5381 = vpack.c.b16 %v5345, %v5341
  %v5382 = vpack.c.b16 %v5346, %v5342
  %v5383 = vpack.c.b16 %v5347, %v5343
  %v5384 = vpack.c.b16 %v5348, %v5344
  %v5385 = vpack.c.b16 %v5353, %v5349
  %v5386 = vpack.c.b16 %v5354, %v5350
  %v5387 = vpack.c.b16 %v5355, %v5351
  %v5388 = vpack.c.b16 %v5356, %v5352
  %5421 = vmatprep.subr.bf16.mxu0 %v5386
  %5422 = vmatpush1.bf16.msra.mxu0 %v5385
  %5423 = vmatprep.subr.bf16.mxu0 %v5382
  %5424 = vmatpush1.bf16.msra.mxu0 %v5381
  %5425 = vmatprep.subr.bf16.mxu0 %v5378
  %5426 = vmatpush1.bf16.msra.mxu0 %v5377
  %5427 = vmatprep.subr.bf16.mxu0 %v5374
  %5428 = vmatpush1.bf16.msra.mxu0 %v5373
  %5429 = vmatprep.subr.bf16.mxu0 %v5370
  %5430 = vmatpush1.bf16.msra.mxu0 %v5369
  %5431 = vmatprep.subr.bf16.mxu0 %v5366
  %5432 = vmatpush1.bf16.msra.mxu0 %v5365
  %5433 = vmatprep.subr.bf16.mxu0 %v5362
  %5434 = vmatpush1.bf16.msra.mxu0 %v5361
  %5435 = vmatprep.subr.bf16.mxu0 %v5358
  %5436 = vmatpush1.bf16.msra.mxu0 %v5357
  %5437 = vmatprep.subr.bf16.mxu0 0
  %5438 = vmatpush2.bf16.msra.mxu0 0
  %5439 = vmatprep.subr.bf16.mxu0 0
  %5440 = vmatpush2.bf16.msra.mxu0 0
  %5441 = vmatprep.subr.bf16.mxu0 0
  %5442 = vmatpush2.bf16.msra.mxu0 0
  %5443 = vmatprep.subr.bf16.mxu0 0
  %5444 = vmatpush2.bf16.msra.mxu0 0
  %5445 = vmatprep.subr.bf16.mxu0 0
  %5446 = vmatpush2.bf16.msra.mxu0 0
  %5447 = vmatprep.subr.bf16.mxu0 0
  %5448 = vmatpush2.bf16.msra.mxu0 0
  %5449 = vmatprep.subr.bf16.mxu0 0
  %5450 = vmatpush2.bf16.msra.mxu0 0
  %5451 = vmatprep.subr.bf16.mxu0 0
  %5452 = vmatpush2.bf16.msra.mxu0 0
  %5453 = vmatprep.mubr.bf16.mxu0 0
  %5454 = vmatmul.mubr.bf16.gmra.mxu0 %v5228
  %v5455 = vpop.f32.mrf.mxu0
  %v5456 = vadd.f32 0.0, %v5455
  %v5457 = vpop.f32.mrf.mxu0
  %v5458 = vadd.f32 0.0, %v5457
  %v5459 = vpop.f32.mrf.mxu0
  %v5460 = vpop.f32.mrf.mxu0
  %5461 = vdwg.mxu0
  %5462 = vmatprep.subr.bf16.mxu0 %v5388
  %5463 = vmatpush1.bf16.msra.mxu0 %v5387
  %5464 = vmatprep.subr.bf16.mxu0 %v5384
  %5465 = vmatpush1.bf16.msra.mxu0 %v5383
  %5466 = vmatprep.subr.bf16.mxu0 %v5380
  %5467 = vmatpush1.bf16.msra.mxu0 %v5379
  %5468 = vmatprep.subr.bf16.mxu0 %v5376
  %5469 = vmatpush1.bf16.msra.mxu0 %v5375
  %5470 = vmatprep.subr.bf16.mxu0 %v5372
  %5471 = vmatpush1.bf16.msra.mxu0 %v5371
  %5472 = vmatprep.subr.bf16.mxu0 %v5368
  %5473 = vmatpush1.bf16.msra.mxu0 %v5367
  %5474 = vmatprep.subr.bf16.mxu0 %v5364
  %5475 = vmatpush1.bf16.msra.mxu0 %v5363
  %5476 = vmatprep.subr.bf16.mxu0 %v5360
  %5477 = vmatpush1.bf16.msra.mxu0 %v5359
  %5478 = vmatprep.subr.bf16.mxu0 0
  %5479 = vmatpush2.bf16.msra.mxu0 0
  %5480 = vmatprep.subr.bf16.mxu0 0
  %5481 = vmatpush2.bf16.msra.mxu0 0
  %5482 = vmatprep.subr.bf16.mxu0 0
  %5483 = vmatpush2.bf16.msra.mxu0 0
  %5484 = vmatprep.subr.bf16.mxu0 0
  %5485 = vmatpush2.bf16.msra.mxu0 0
  %5486 = vmatprep.subr.bf16.mxu0 0
  %5487 = vmatpush2.bf16.msra.mxu0 0
  %5488 = vmatprep.subr.bf16.mxu0 0
  %5489 = vmatpush2.bf16.msra.mxu0 0
  %5490 = vmatprep.subr.bf16.mxu0 0
  %5491 = vmatpush2.bf16.msra.mxu0 0
  %5492 = vmatprep.subr.bf16.mxu0 0
  %5493 = vmatpush2.bf16.msra.mxu0 0
  %5494 = vmatprep.mubr.bf16.mxu0 0
  %5495 = vmatmul.mubr.bf16.gmra.mxu0 %v5228
  %v5496 = vpop.f32.mrf.mxu0
  %v5497 = vadd.f32 0.0, %v5496
  %v5498 = vpop.f32.mrf.mxu0
  %v5499 = vadd.f32 0.0, %v5498
  %v5500 = vpop.f32.mrf.mxu0
  %v5501 = vpop.f32.mrf.mxu0
  %5502 = vdwg.mxu0
  %v5507 = vrot.slane %v5456, 1
  %v5508 = vrot.slane %v5458, 1
  %v5509 = vrot.slane %v5497, 1
  %v5510 = vrot.slane %v5499, 1
  %v5511 = vrot.slane %v5456, 2
  %v5512 = vrot.slane %v5458, 2
  %v5513 = vrot.slane %v5497, 2
  %v5514 = vrot.slane %v5499, 2
  %v5515 = vrot.slane %v5456, 3
  %v5516 = vrot.slane %v5458, 3
  %v5517 = vrot.slane %v5497, 3
  %v5518 = vrot.slane %v5499, 3
  %v5519 = vrot.slane %v5456, 4
  %v5520 = vrot.slane %v5458, 4
  %v5521 = vrot.slane %v5497, 4
  %v5522 = vrot.slane %v5499, 4
  %v5523 = vrot.slane %v5456, 5
  %v5524 = vrot.slane %v5458, 5
  %v5525 = vrot.slane %v5497, 5
  %v5526 = vrot.slane %v5499, 5
  %v5527 = vrot.slane %v5456, 6
  %v5528 = vrot.slane %v5458, 6
  %v5529 = vrot.slane %v5497, 6
  %v5530 = vrot.slane %v5499, 6
  %v5531 = vrot.slane %v5456, 7
  %v5532 = vrot.slane %v5458, 7
  %v5533 = vrot.slane %v5497, 7
  %v5534 = vrot.slane %v5499, 7
  %v5567 = vadd.f32 %v5196, %v5507
  %v5568 = vadd.f32 %v5197, %v5508
  %v5569 = vadd.f32 %v5198, %v5509
  %v5570 = vadd.f32 %v5199, %v5510
  %v5571 = vadd.f32 %v5200, %v5511
  %v5572 = vadd.f32 %v5201, %v5512
  %v5573 = vadd.f32 %v5202, %v5513
  %v5574 = vadd.f32 %v5203, %v5514
  %v5575 = vadd.f32 %v5204, %v5515
  %v5576 = vadd.f32 %v5205, %v5516
  %v5577 = vadd.f32 %v5206, %v5517
  %v5578 = vadd.f32 %v5207, %v5518
  %v5579 = vadd.f32 %v5208, %v5519
  %v5580 = vadd.f32 %v5209, %v5520
  %v5581 = vadd.f32 %v5210, %v5521
  %v5582 = vadd.f32 %v5211, %v5522
  %v5583 = vadd.f32 %v5212, %v5523
  %v5584 = vadd.f32 %v5213, %v5524
  %v5585 = vadd.f32 %v5214, %v5525
  %v5586 = vadd.f32 %v5215, %v5526
  %v5587 = vadd.f32 %v5216, %v5527
  %v5588 = vadd.f32 %v5217, %v5528
  %v5589 = vadd.f32 %v5218, %v5529
  %v5590 = vadd.f32 %v5219, %v5530
  %v5591 = vadd.f32 %v5220, %v5531
  %v5592 = vadd.f32 %v5221, %v5532
  %v5593 = vadd.f32 %v5222, %v5533
  %v5594 = vadd.f32 %v5223, %v5534
  %v5595 = vadd.f32 %v5224, %v5456
  %v5596 = vadd.f32 %v5225, %v5458
  %v5597 = vadd.f32 %v5226, %v5497
  %v5598 = vadd.f32 %v5227, %v5499
  %v5599 = vxor.u32 %v5567, 2147483648
  %v5600 = vxor.u32 %v5568, 2147483648
  %v5601 = vxor.u32 %v5569, 2147483648
  %v5602 = vxor.u32 %v5571, 2147483648
  %v5603 = vxor.u32 %v5572, 2147483648
  %v5604 = vxor.u32 %v5573, 2147483648
  %v5605 = vxor.u32 %v5575, 2147483648
  %v5606 = vxor.u32 %v5576, 2147483648
  %v5607 = vxor.u32 %v5577, 2147483648
  %v5608 = vxor.u32 %v5579, 2147483648
  %v5609 = vxor.u32 %v5580, 2147483648
  %v5610 = vxor.u32 %v5581, 2147483648
  %v5611 = vxor.u32 %v5583, 2147483648
  %v5612 = vxor.u32 %v5584, 2147483648
  %v5613 = vxor.u32 %v5585, 2147483648
  %v5614 = vxor.u32 %v5587, 2147483648
  %v5615 = vxor.u32 %v5588, 2147483648
  %v5616 = vxor.u32 %v5589, 2147483648
  %v5617 = vxor.u32 %v5591, 2147483648
  %v5618 = vxor.u32 %v5592, 2147483648
  %v5619 = vxor.u32 %v5593, 2147483648
  %v5620 = vxor.u32 %v5595, 2147483648
  %v5621 = vxor.u32 %v5596, 2147483648
  %v5622 = vxor.u32 %v5597, 2147483648
  %v5623 = vmul.f32 %v5599, 1.442695
  %v5624 = vpow.pop %v5623
  %v5625 = vmul.f32 %v5600, 1.442695
  %v5626 = vpow.pop %v5625
  %v5627 = vmul.f32 %v5601, 1.442695
  %v5628 = vpow.pop %v5627
  %v5629 = vmul.f32 %v5602, 1.442695
  %v5630 = vpow.pop %v5629
  %v5631 = vmul.f32 %v5603, 1.442695
  %v5632 = vpow.pop %v5631
  %v5633 = vmul.f32 %v5604, 1.442695
  %v5634 = vpow.pop %v5633
  %v5635 = vmul.f32 %v5605, 1.442695
  %v5636 = vpow.pop %v5635
  %v5637 = vmul.f32 %v5606, 1.442695
  %v5638 = vpow.pop %v5637
  %v5639 = vmul.f32 %v5607, 1.442695
  %v5640 = vpow.pop %v5639
  %v5641 = vmul.f32 %v5608, 1.442695
  %v5642 = vpow.pop %v5641
  %v5643 = vmul.f32 %v5609, 1.442695
  %v5644 = vpow.pop %v5643
  %v5645 = vmul.f32 %v5610, 1.442695
  %v5646 = vpow.pop %v5645
  %v5647 = vmul.f32 %v5611, 1.442695
  %v5648 = vpow.pop %v5647
  %v5649 = vmul.f32 %v5612, 1.442695
  %v5650 = vpow.pop %v5649
  %v5651 = vmul.f32 %v5613, 1.442695
  %v5652 = vpow.pop %v5651
  %v5653 = vmul.f32 %v5614, 1.442695
  %v5654 = vpow.pop %v5653
  %v5655 = vmul.f32 %v5615, 1.442695
  %v5656 = vpow.pop %v5655
  %v5657 = vmul.f32 %v5616, 1.442695
  %v5658 = vpow.pop %v5657
  %v5659 = vmul.f32 %v5617, 1.442695
  %v5660 = vpow.pop %v5659
  %v5661 = vmul.f32 %v5618, 1.442695
  %v5662 = vpow.pop %v5661
  %v5663 = vmul.f32 %v5619, 1.442695
  %v5664 = vpow.pop %v5663
  %v5665 = vmul.f32 %v5620, 1.442695
  %v5666 = vpow.pop %v5665
  %v5667 = vmul.f32 %v5621, 1.442695
  %v5668 = vpow.pop %v5667
  %v5669 = vmul.f32 %v5622, 1.442695
  %v5670 = vpow.pop %v5669
  %v5671 = vadd.f32 %v5624, 1.0
  %v5672 = vadd.f32 %v5626, 1.0
  %v5673 = vadd.f32 %v5628, 1.0
  %v5674 = vadd.f32 %v5630, 1.0
  %v5675 = vadd.f32 %v5632, 1.0
  %v5676 = vadd.f32 %v5634, 1.0
  %v5677 = vadd.f32 %v5636, 1.0
  %v5678 = vadd.f32 %v5638, 1.0
  %v5679 = vadd.f32 %v5640, 1.0
  %v5680 = vadd.f32 %v5642, 1.0
  %v5681 = vadd.f32 %v5644, 1.0
  %v5682 = vadd.f32 %v5646, 1.0
  %v5683 = vadd.f32 %v5648, 1.0
  %v5684 = vadd.f32 %v5650, 1.0
  %v5685 = vadd.f32 %v5652, 1.0
  %v5686 = vadd.f32 %v5654, 1.0
  %v5687 = vadd.f32 %v5656, 1.0
  %v5688 = vadd.f32 %v5658, 1.0
  %v5689 = vadd.f32 %v5660, 1.0
  %v5690 = vadd.f32 %v5662, 1.0
  %v5691 = vadd.f32 %v5664, 1.0
  %v5692 = vadd.f32 %v5666, 1.0
  %v5693 = vadd.f32 %v5668, 1.0
  %v5694 = vadd.f32 %v5670, 1.0
  %v5695 = vrcp.pop %v5671
  %v5696 = vmul.f32 1.0, %v5695
  %v5697 = vrcp.pop %v5672
  %v5698 = vmul.f32 1.0, %v5697
  %v5699 = vrcp.pop %v5673
  %v5700 = vmul.f32 1.0, %v5699
  %v5701 = vrcp.pop %v5674
  %v5702 = vmul.f32 1.0, %v5701
  %v5703 = vrcp.pop %v5675
  %v5704 = vmul.f32 1.0, %v5703
  %v5705 = vrcp.pop %v5676
  %v5706 = vmul.f32 1.0, %v5705
  %v5707 = vrcp.pop %v5677
  %v5708 = vmul.f32 1.0, %v5707
  %v5709 = vrcp.pop %v5678
  %v5710 = vmul.f32 1.0, %v5709
  %v5711 = vrcp.pop %v5679
  %v5712 = vmul.f32 1.0, %v5711
  %v5713 = vrcp.pop %v5680
  %v5714 = vmul.f32 1.0, %v5713
  %v5715 = vrcp.pop %v5681
  %v5716 = vmul.f32 1.0, %v5715
  %v5717 = vrcp.pop %v5682
  %v5718 = vmul.f32 1.0, %v5717
  %v5719 = vrcp.pop %v5683
  %v5720 = vmul.f32 1.0, %v5719
  %v5721 = vrcp.pop %v5684
  %v5722 = vmul.f32 1.0, %v5721
  %v5723 = vrcp.pop %v5685
  %v5724 = vmul.f32 1.0, %v5723
  %v5725 = vrcp.pop %v5686
  %v5726 = vmul.f32 1.0, %v5725
  %v5727 = vrcp.pop %v5687
  %v5728 = vmul.f32 1.0, %v5727
  %v5729 = vrcp.pop %v5688
  %v5730 = vmul.f32 1.0, %v5729
  %v5731 = vrcp.pop %v5689
  %v5732 = vmul.f32 1.0, %v5731
  %v5733 = vrcp.pop %v5690
  %v5734 = vmul.f32 1.0, %v5733
  %v5735 = vrcp.pop %v5691
  %v5736 = vmul.f32 1.0, %v5735
  %v5737 = vrcp.pop %v5692
  %v5738 = vmul.f32 1.0, %v5737
  %v5739 = vrcp.pop %v5693
  %v5740 = vmul.f32 1.0, %v5739
  %v5741 = vrcp.pop %v5694
  %v5742 = vmul.f32 1.0, %v5741
  %v5743 = vtanh.pop %v5570
  %v5744 = vtanh.pop %v5574
  %v5745 = vtanh.pop %v5578
  %v5746 = vtanh.pop %v5582
  %v5747 = vtanh.pop %v5586
  %v5748 = vtanh.pop %v5590
  %v5749 = vtanh.pop %v5594
  %v5750 = vtanh.pop %v5598
  %v5751 = vld [vmem:[#allocation3] sm:$0xff]
  %v5753 = vrot.slane %v5751, 1
  %v5754 = vrot.slane %v5751, 2
  %v5755 = vrot.slane %v5751, 3
  %v5756 = vrot.slane %v5751, 4
  %v5757 = vrot.slane %v5751, 5
  %v5758 = vrot.slane %v5751, 6
  %v5759 = vrot.slane %v5751, 7
  %v5768 = vmul.f32 %v5698, %v5753
  %v5769 = vmul.f32 %v5704, %v5754
  %v5770 = vmul.f32 %v5710, %v5755
  %v5771 = vmul.f32 %v5716, %v5756
  %v5772 = vmul.f32 %v5722, %v5757
  %v5773 = vmul.f32 %v5728, %v5758
  %v5774 = vmul.f32 %v5734, %v5759
  %v5775 = vmul.f32 %v5740, %v5751
  %v5776 = vmul.f32 %v5696, %v5743
  %v5777 = vmul.f32 %v5702, %v5744
  %v5778 = vmul.f32 %v5708, %v5745
  %v5779 = vmul.f32 %v5714, %v5746
  %v5780 = vmul.f32 %v5720, %v5747
  %v5781 = vmul.f32 %v5726, %v5748
  %v5782 = vmul.f32 %v5732, %v5749
  %v5783 = vmul.f32 %v5738, %v5750
  %v5784 = vadd.f32 %v5768, %v5776
  %v5785 = vadd.f32 %v5769, %v5777
  %v5786 = vadd.f32 %v5770, %v5778
  %v5787 = vadd.f32 %v5771, %v5779
  %v5788 = vadd.f32 %v5772, %v5780
  %v5789 = vadd.f32 %v5773, %v5781
  %v5790 = vadd.f32 %v5774, %v5782
  %v5791 = vadd.f32 %v5775, %v5783
  %v5792 = vtanh.pop %v5784
  %v5793 = vtanh.pop %v5785
  %v5794 = vtanh.pop %v5786
  %v5795 = vtanh.pop %v5787
  %v5796 = vtanh.pop %v5788
  %v5797 = vtanh.pop %v5789
  %v5798 = vtanh.pop %v5790
  %v5799 = vtanh.pop %v5791
  %v5800 = vmul.f32 %v5700, %v5792
  %v5801 = vmul.f32 %v5706, %v5793
  %v5802 = vmul.f32 %v5712, %v5794
  %v5803 = vmul.f32 %v5718, %v5795
  %v5804 = vmul.f32 %v5724, %v5796
  %v5805 = vmul.f32 %v5730, %v5797
  %v5806 = vmul.f32 %v5736, %v5798
  %v5807 = vmul.f32 %v5742, %v5799
  %v5808 = vpack.c.bf16 %v5800, %v5800
  %v5809 = vpack.c.bf16 %v5801, %v5801
  %v5810 = vpack.c.bf16 %v5802, %v5802
  %v5811 = vpack.c.bf16 %v5803, %v5803
  %v5812 = vpack.c.bf16 %v5804, %v5804
  %v5813 = vpack.c.bf16 %v5805, %v5805
  %v5814 = vpack.c.bf16 %v5806, %v5806
  %v5815 = vpack.c.bf16 %v5807, %v5807
  %v5824 = vrot.slane %v5785, 7
  %v5825 = vrot.slane %v5786, 6
  %v5826 = vsel %vm663, %v5825, %v5824
  %v5827 = vrot.slane %v5787, 5
  %v5828 = vsel %vm666, %v5827, %v5826
  %v5829 = vrot.slane %v5788, 4
  %v5830 = vsel %vm669, %v5829, %v5828
  %v5831 = vrot.slane %v5789, 3
  %v5832 = vsel %vm672, %v5831, %v5830
  %v5833 = vrot.slane %v5790, 2
  %v5834 = vsel %vm675, %v5833, %v5832
  %v5835 = vrot.slane %v5791, 1
  %v5836 = vsel %vm678, %v5835, %v5834
  %5839 = vst [vmem:[#allocation3 - $0x7] sm:$0x80] %v5784
  %5840 = vst [vmem:[#allocation3 + $0x1] sm:$0x7f] %v5836
  %v5849 = vunpack.c.l.b16 %v5808
  %v5850 = vunpack.c.l.b16 %v5809
  %v5851 = vunpack.c.l.b16 %v5810
  %v5852 = vunpack.c.l.b16 %v5811
  %v5853 = vunpack.c.l.b16 %v5812
  %v5854 = vunpack.c.l.b16 %v5813
  %v5855 = vunpack.c.l.b16 %v5814
  %v5856 = vunpack.c.l.b16 %v5815
  %v5857 = vpack.c.b16 %v5849, %v5849
  %v5858 = vpack.c.b16 %v5850, %v5850
  %v5859 = vpack.c.b16 %v5851, %v5851
  %v5860 = vpack.c.b16 %v5852, %v5852
  %v5861 = vpack.c.b16 %v5853, %v5853
  %v5862 = vpack.c.b16 %v5854, %v5854
  %v5863 = vpack.c.b16 %v5855, %v5855
  %v5864 = vpack.c.b16 %v5856, %v5856
  %v5865 = vunpack.c.l.b16 %v5857
  %v5866 = vunpack.c.l.b16 %v5858
  %v5867 = vunpack.c.l.b16 %v5859
  %v5868 = vunpack.c.l.b16 %v5860
  %v5869 = vunpack.c.l.b16 %v5861
  %v5870 = vunpack.c.l.b16 %v5862
  %v5871 = vunpack.c.l.b16 %v5863
  %v5872 = vunpack.c.l.b16 %v5864
  %v5873 = vrot.slane %v5865, 7
  %v5874 = vrot.slane %v5866, 6
  %v5875 = vsel %vm663, %v5874, %v5873
  %v5876 = vrot.slane %v5867, 5
  %v5877 = vsel %vm666, %v5876, %v5875
  %v5878 = vrot.slane %v5868, 4
  %v5879 = vsel %vm669, %v5878, %v5877
  %v5880 = vrot.slane %v5869, 3
  %v5881 = vsel %vm672, %v5880, %v5879
  %v5882 = vrot.slane %v5870, 2
  %v5883 = vsel %vm675, %v5882, %v5881
  %v5884 = vrot.slane %v5871, 1
  %v5885 = vsel %vm678, %v5884, %v5883
  %v5886 = vsel %vm681, %v5872, %v5885
  %v5887 = vpack.c.b16 %v5886, %v5886
  %5889 = vst [vmem:[#allocation2] sm:$0xf] %v5887
  %vm5890 = vsmask.f32 7950
  %vm5891 = vmand %vm5153, %vm5890
  %v5892 = vld [vmem:[%s2] sm:$0x8]
  %v5893 = vsel %vm5891, %v5808, %v5892
  %5894 = vst [vmem:[%s2] sm:$0x8] %v5893
  %v5895 = vld [vmem:[%s2 + $0x8] sm:$0x8]
  %v5896 = vsel %vm5891, %v5809, %v5895
  %5897 = vst [vmem:[%s2 + $0x8] sm:$0x8] %v5896
  %v5898 = vld [vmem:[%s2 + $0x10] sm:$0x8]
  %v5899 = vsel %vm5891, %v5810, %v5898
  %5900 = vst [vmem:[%s2 + $0x10] sm:$0x8] %v5899
  %v5901 = vld [vmem:[%s2 + $0x18] sm:$0x8]
  %v5902 = vsel %vm5891, %v5811, %v5901
  %5903 = vst [vmem:[%s2 + $0x18] sm:$0x8] %v5902
  %v5904 = vld [vmem:[%s2 + $0x20] sm:$0x8]
  %v5905 = vsel %vm5891, %v5812, %v5904
  %5906 = vst [vmem:[%s2 + $0x20] sm:$0x8] %v5905
  %v5907 = vld [vmem:[%s2 + $0x28] sm:$0x8]
  %v5908 = vsel %vm5891, %v5813, %v5907
  %5909 = vst [vmem:[%s2 + $0x28] sm:$0x8] %v5908
  %v5910 = vld [vmem:[%s2 + $0x30] sm:$0x8]
  %v5911 = vsel %vm5891, %v5814, %v5910
  %5912 = vst [vmem:[%s2 + $0x30] sm:$0x8] %v5911
  %v5913 = vld [vmem:[%s2 + $0x38] sm:$0x8]
  %v5914 = vsel %vm5891, %v5815, %v5913
  %5915 = vst [vmem:[%s2 + $0x38] sm:$0x8] %v5914
  %v5916 = vld [vmem:[%s0 + $0x10] sm:$0x11]
  %v5917 = vld [vmem:[%s0 + $0x18] sm:$0x11]
  %v5918 = vld [vmem:[%s0 + $0x30] sm:$0x11]
  %v5919 = vld [vmem:[%s0 + $0x38] sm:$0x11]
  %v5920 = vld [vmem:[%s0 + $0x50] sm:$0x11]
  %v5921 = vld [vmem:[%s0 + $0x58] sm:$0x11]
  %v5922 = vld [vmem:[%s0 + $0x70] sm:$0x11]
  %v5923 = vld [vmem:[%s0 + $0x78] sm:$0x11]
  %v5924 = vld [vmem:[%s0 + $0x90] sm:$0x11]
  %v5925 = vld [vmem:[%s0 + $0x98] sm:$0x11]
  %v5926 = vld [vmem:[%s0 + $0xb0] sm:$0x11]
  %v5927 = vld [vmem:[%s0 + $0xb8] sm:$0x11]
  %v5928 = vld [vmem:[%s0 + $0xd0] sm:$0x11]
  %v5929 = vld [vmem:[%s0 + $0xd8] sm:$0x11]
  %v5930 = vld [vmem:[%s0 + $0xf0] sm:$0x11]
  %v5931 = vld [vmem:[%s0 + $0xf8] sm:$0x11]
  %v5932 = vunpack.c.l.bf16 %v5916
  %v5933 = vunpack.c.h.bf16 %v5916
  %v5934 = vunpack.c.l.bf16 %v5917
  %v5935 = vunpack.c.h.bf16 %v5917
  %v5936 = vunpack.c.l.bf16 %v5918
  %v5937 = vunpack.c.h.bf16 %v5918
  %v5938 = vunpack.c.l.bf16 %v5919
  %v5939 = vunpack.c.h.bf16 %v5919
  %v5940 = vunpack.c.l.bf16 %v5920
  %v5941 = vunpack.c.h.bf16 %v5920
  %v5942 = vunpack.c.l.bf16 %v5921
  %v5943 = vunpack.c.h.bf16 %v5921
  %v5944 = vunpack.c.l.bf16 %v5922
  %v5945 = vunpack.c.h.bf16 %v5922
  %v5946 = vunpack.c.l.bf16 %v5923
  %v5947 = vunpack.c.h.bf16 %v5923
  %v5948 = vunpack.c.l.bf16 %v5924
  %v5949 = vunpack.c.h.bf16 %v5924
  %v5950 = vunpack.c.l.bf16 %v5925
  %v5951 = vunpack.c.h.bf16 %v5925
  %v5952 = vunpack.c.l.bf16 %v5926
  %v5953 = vunpack.c.h.bf16 %v5926
  %v5954 = vunpack.c.l.bf16 %v5927
  %v5955 = vunpack.c.h.bf16 %v5927
  %v5956 = vunpack.c.l.bf16 %v5928
  %v5957 = vunpack.c.h.bf16 %v5928
  %v5958 = vunpack.c.l.bf16 %v5929
  %v5959 = vunpack.c.h.bf16 %v5929
  %v5960 = vunpack.c.l.bf16 %v5930
  %v5961 = vunpack.c.h.bf16 %v5930
  %v5962 = vunpack.c.l.bf16 %v5931
  %v5963 = vunpack.c.h.bf16 %v5931
  %v5964 = vld [vmem:[#allocation2] sm:$0xf]
  %v5965 = vld [vmem:[%s1] sm:$0xff]
  %v5966 = vld [vmem:[%s1 + $0x8] sm:$0xff]
  %v5967 = vld [vmem:[%s1 + $0x10] sm:$0xff]
  %v5968 = vld [vmem:[%s1 + $0x18] sm:$0xff]
  %v5969 = vld [vmem:[%s1 + $0x20] sm:$0xff]
  %v5970 = vld [vmem:[%s1 + $0x28] sm:$0xff]
  %v5971 = vld [vmem:[%s1 + $0x30] sm:$0xff]
  %v5972 = vld [vmem:[%s1 + $0x38] sm:$0xff]
  %v5973 = vld [vmem:[%s1 + $0x40] sm:$0xff]
  %v5974 = vld [vmem:[%s1 + $0x48] sm:$0xff]
  %v5975 = vld [vmem:[%s1 + $0x50] sm:$0xff]
  %v5976 = vld [vmem:[%s1 + $0x58] sm:$0xff]
  %v5977 = vld [vmem:[%s1 + $0x60] sm:$0xff]
  %v5978 = vld [vmem:[%s1 + $0x68] sm:$0xff]
  %v5979 = vld [vmem:[%s1 + $0x70] sm:$0xff]
  %v5980 = vld [vmem:[%s1 + $0x78] sm:$0xff]
  %v5981 = vld [vmem:[%s1 + $0x80] sm:$0xff]
  %v5982 = vld [vmem:[%s1 + $0x88] sm:$0xff]
  %v5983 = vld [vmem:[%s1 + $0x90] sm:$0xff]
  %v5984 = vld [vmem:[%s1 + $0x98] sm:$0xff]
  %v5985 = vld [vmem:[%s1 + $0xa0] sm:$0xff]
  %v5986 = vld [vmem:[%s1 + $0xa8] sm:$0xff]
  %v5987 = vld [vmem:[%s1 + $0xb0] sm:$0xff]
  %v5988 = vld [vmem:[%s1 + $0xb8] sm:$0xff]
  %v5989 = vld [vmem:[%s1 + $0xc0] sm:$0xff]
  %v5990 = vld [vmem:[%s1 + $0xc8] sm:$0xff]
  %v5991 = vld [vmem:[%s1 + $0xd0] sm:$0xff]
  %v5992 = vld [vmem:[%s1 + $0xd8] sm:$0xff]
  %v5993 = vld [vmem:[%s1 + $0xe0] sm:$0xff]
  %v5994 = vld [vmem:[%s1 + $0xe8] sm:$0xff]
  %v5995 = vld [vmem:[%s1 + $0xf0] sm:$0xff]
  %v5996 = vld [vmem:[%s1 + $0xf8] sm:$0xff]
  %v6029 = vunpack.c.l.b16 %v5965
  %v6030 = vunpack.c.h.b16 %v5965
  %v6031 = vunpack.c.l.b16 %v5966
  %v6032 = vunpack.c.h.b16 %v5966
  %v6033 = vunpack.c.l.b16 %v5967
  %v6034 = vunpack.c.h.b16 %v5967
  %v6035 = vunpack.c.l.b16 %v5968
  %v6036 = vunpack.c.h.b16 %v5968
  %v6037 = vunpack.c.l.b16 %v5969
  %v6038 = vunpack.c.h.b16 %v5969
  %v6039 = vunpack.c.l.b16 %v5970
  %v6040 = vunpack.c.h.b16 %v5970
  %v6041 = vunpack.c.l.b16 %v5971
  %v6042 = vunpack.c.h.b16 %v5971
  %v6043 = vunpack.c.l.b16 %v5972
  %v6044 = vunpack.c.h.b16 %v5972
  %v6045 = vunpack.c.l.b16 %v5973
  %v6046 = vunpack.c.h.b16 %v5973
  %v6047 = vunpack.c.l.b16 %v5974
  %v6048 = vunpack.c.h.b16 %v5974
  %v6049 = vunpack.c.l.b16 %v5975
  %v6050 = vunpack.c.h.b16 %v5975
  %v6051 = vunpack.c.l.b16 %v5976
  %v6052 = vunpack.c.h.b16 %v5976
  %v6053 = vunpack.c.l.b16 %v5977
  %v6054 = vunpack.c.h.b16 %v5977
  %v6055 = vunpack.c.l.b16 %v5978
  %v6056 = vunpack.c.h.b16 %v5978
  %v6057 = vunpack.c.l.b16 %v5979
  %v6058 = vunpack.c.h.b16 %v5979
  %v6059 = vunpack.c.l.b16 %v5980
  %v6060 = vunpack.c.h.b16 %v5980
  %v6061 = vunpack.c.l.b16 %v5981
  %v6062 = vunpack.c.h.b16 %v5981
  %v6063 = vunpack.c.l.b16 %v5982
  %v6064 = vunpack.c.h.b16 %v5982
  %v6065 = vunpack.c.l.b16 %v5983
  %v6066 = vunpack.c.h.b16 %v5983
  %v6067 = vunpack.c.l.b16 %v5984
  %v6068 = vunpack.c.h.b16 %v5984
  %v6069 = vunpack.c.l.b16 %v5985
  %v6070 = vunpack.c.h.b16 %v5985
  %v6071 = vunpack.c.l.b16 %v5986
  %v6072 = vunpack.c.h.b16 %v5986
  %v6073 = vunpack.c.l.b16 %v5987
  %v6074 = vunpack.c.h.b16 %v5987
  %v6075 = vunpack.c.l.b16 %v5988
  %v6076 = vunpack.c.h.b16 %v5988
  %v6077 = vunpack.c.l.b16 %v5989
  %v6078 = vunpack.c.h.b16 %v5989
  %v6079 = vunpack.c.l.b16 %v5990
  %v6080 = vunpack.c.h.b16 %v5990
  %v6081 = vunpack.c.l.b16 %v5991
  %v6082 = vunpack.c.h.b16 %v5991
  %v6083 = vunpack.c.l.b16 %v5992
  %v6084 = vunpack.c.h.b16 %v5992
  %v6085 = vunpack.c.l.b16 %v5993
  %v6086 = vunpack.c.h.b16 %v5993
  %v6087 = vunpack.c.l.b16 %v5994
  %v6088 = vunpack.c.h.b16 %v5994
  %v6089 = vunpack.c.l.b16 %v5995
  %v6090 = vunpack.c.h.b16 %v5995
  %v6091 = vunpack.c.l.b16 %v5996
  %v6092 = vunpack.c.h.b16 %v5996
  %v6093 = vpack.c.b16 %v6033, %v6029
  %v6094 = vpack.c.b16 %v6034, %v6030
  %v6095 = vpack.c.b16 %v6035, %v6031
  %v6096 = vpack.c.b16 %v6036, %v6032
  %v6097 = vpack.c.b16 %v6041, %v6037
  %v6098 = vpack.c.b16 %v6042, %v6038
  %v6099 = vpack.c.b16 %v6043, %v6039
  %v6100 = vpack.c.b16 %v6044, %v6040
  %v6101 = vpack.c.b16 %v6049, %v6045
  %v6102 = vpack.c.b16 %v6050, %v6046
  %v6103 = vpack.c.b16 %v6051, %v6047
  %v6104 = vpack.c.b16 %v6052, %v6048
  %v6105 = vpack.c.b16 %v6057, %v6053
  %v6106 = vpack.c.b16 %v6058, %v6054
  %v6107 = vpack.c.b16 %v6059, %v6055
  %v6108 = vpack.c.b16 %v6060, %v6056
  %v6109 = vpack.c.b16 %v6065, %v6061
  %v6110 = vpack.c.b16 %v6066, %v6062
  %v6111 = vpack.c.b16 %v6067, %v6063
  %v6112 = vpack.c.b16 %v6068, %v6064
  %v6113 = vpack.c.b16 %v6073, %v6069
  %v6114 = vpack.c.b16 %v6074, %v6070
  %v6115 = vpack.c.b16 %v6075, %v6071
  %v6116 = vpack.c.b16 %v6076, %v6072
  %v6117 = vpack.c.b16 %v6081, %v6077
  %v6118 = vpack.c.b16 %v6082, %v6078
  %v6119 = vpack.c.b16 %v6083, %v6079
  %v6120 = vpack.c.b16 %v6084, %v6080
  %v6121 = vpack.c.b16 %v6089, %v6085
  %v6122 = vpack.c.b16 %v6090, %v6086
  %v6123 = vpack.c.b16 %v6091, %v6087
  %v6124 = vpack.c.b16 %v6092, %v6088
  %6157 = vmatprep.subr.bf16.mxu0 %v6122
  %6158 = vmatpush1.bf16.msra.mxu0 %v6121
  %6159 = vmatprep.subr.bf16.mxu0 %v6118
  %6160 = vmatpush1.bf16.msra.mxu0 %v6117
  %6161 = vmatprep.subr.bf16.mxu0 %v6114
  %6162 = vmatpush1.bf16.msra.mxu0 %v6113
  %6163 = vmatprep.subr.bf16.mxu0 %v6110
  %6164 = vmatpush1.bf16.msra.mxu0 %v6109
  %6165 = vmatprep.subr.bf16.mxu0 %v6106
  %6166 = vmatpush1.bf16.msra.mxu0 %v6105
  %6167 = vmatprep.subr.bf16.mxu0 %v6102
  %6168 = vmatpush1.bf16.msra.mxu0 %v6101
  %6169 = vmatprep.subr.bf16.mxu0 %v6098
  %6170 = vmatpush1.bf16.msra.mxu0 %v6097
  %6171 = vmatprep.subr.bf16.mxu0 %v6094
  %6172 = vmatpush1.bf16.msra.mxu0 %v6093
  %6173 = vmatprep.subr.bf16.mxu0 0
  %6174 = vmatpush2.bf16.msra.mxu0 0
  %6175 = vmatprep.subr.bf16.mxu0 0
  %6176 = vmatpush2.bf16.msra.mxu0 0
  %6177 = vmatprep.subr.bf16.mxu0 0
  %6178 = vmatpush2.bf16.msra.mxu0 0
  %6179 = vmatprep.subr.bf16.mxu0 0
  %6180 = vmatpush2.bf16.msra.mxu0 0
  %6181 = vmatprep.subr.bf16.mxu0 0
  %6182 = vmatpush2.bf16.msra.mxu0 0
  %6183 = vmatprep.subr.bf16.mxu0 0
  %6184 = vmatpush2.bf16.msra.mxu0 0
  %6185 = vmatprep.subr.bf16.mxu0 0
  %6186 = vmatpush2.bf16.msra.mxu0 0
  %6187 = vmatprep.subr.bf16.mxu0 0
  %6188 = vmatpush2.bf16.msra.mxu0 0
  %6189 = vmatprep.mubr.bf16.mxu0 0
  %6190 = vmatmul.mubr.bf16.gmra.mxu0 %v5964
  %v6191 = vpop.f32.mrf.mxu0
  %v6192 = vadd.f32 0.0, %v6191
  %v6193 = vpop.f32.mrf.mxu0
  %v6194 = vadd.f32 0.0, %v6193
  %v6195 = vpop.f32.mrf.mxu0
  %v6196 = vpop.f32.mrf.mxu0
  %6197 = vdwg.mxu0
  %6198 = vmatprep.subr.bf16.mxu0 %v6124
  %6199 = vmatpush1.bf16.msra.mxu0 %v6123
  %6200 = vmatprep.subr.bf16.mxu0 %v6120
  %6201 = vmatpush1.bf16.msra.mxu0 %v6119
  %6202 = vmatprep.subr.bf16.mxu0 %v6116
  %6203 = vmatpush1.bf16.msra.mxu0 %v6115
  %6204 = vmatprep.subr.bf16.mxu0 %v6112
  %6205 = vmatpush1.bf16.msra.mxu0 %v6111
  %6206 = vmatprep.subr.bf16.mxu0 %v6108
  %6207 = vmatpush1.bf16.msra.mxu0 %v6107
  %6208 = vmatprep.subr.bf16.mxu0 %v6104
  %6209 = vmatpush1.bf16.msra.mxu0 %v6103
  %6210 = vmatprep.subr.bf16.mxu0 %v6100
  %6211 = vmatpush1.bf16.msra.mxu0 %v6099
  %6212 = vmatprep.subr.bf16.mxu0 %v6096
  %6213 = vmatpush1.bf16.msra.mxu0 %v6095
  %6214 = vmatprep.subr.bf16.mxu0 0
  %6215 = vmatpush2.bf16.msra.mxu0 0
  %6216 = vmatprep.subr.bf16.mxu0 0
  %6217 = vmatpush2.bf16.msra.mxu0 0
  %6218 = vmatprep.subr.bf16.mxu0 0
  %6219 = vmatpush2.bf16.msra.mxu0 0
  %6220 = vmatprep.subr.bf16.mxu0 0
  %6221 = vmatpush2.bf16.msra.mxu0 0
  %6222 = vmatprep.subr.bf16.mxu0 0
  %6223 = vmatpush2.bf16.msra.mxu0 0
  %6224 = vmatprep.subr.bf16.mxu0 0
  %6225 = vmatpush2.bf16.msra.mxu0 0
  %6226 = vmatprep.subr.bf16.mxu0 0
  %6227 = vmatpush2.bf16.msra.mxu0 0
  %6228 = vmatprep.subr.bf16.mxu0 0
  %6229 = vmatpush2.bf16.msra.mxu0 0
  %6230 = vmatprep.mubr.bf16.mxu0 0
  %6231 = vmatmul.mubr.bf16.gmra.mxu0 %v5964
  %v6232 = vpop.f32.mrf.mxu0
  %v6233 = vadd.f32 0.0, %v6232
  %v6234 = vpop.f32.mrf.mxu0
  %v6235 = vadd.f32 0.0, %v6234
  %v6236 = vpop.f32.mrf.mxu0
  %v6237 = vpop.f32.mrf.mxu0
  %6238 = vdwg.mxu0
  %v6243 = vrot.slane %v6192, 1
  %v6244 = vrot.slane %v6194, 1
  %v6245 = vrot.slane %v6233, 1
  %v6246 = vrot.slane %v6235, 1
  %v6247 = vrot.slane %v6192, 2
  %v6248 = vrot.slane %v6194, 2
  %v6249 = vrot.slane %v6233, 2
  %v6250 = vrot.slane %v6235, 2
  %v6251 = vrot.slane %v6192, 3
  %v6252 = vrot.slane %v6194, 3
  %v6253 = vrot.slane %v6233, 3
  %v6254 = vrot.slane %v6235, 3
  %v6255 = vrot.slane %v6192, 4
  %v6256 = vrot.slane %v6194, 4
  %v6257 = vrot.slane %v6233, 4
  %v6258 = vrot.slane %v6235, 4
  %v6259 = vrot.slane %v6192, 5
  %v6260 = vrot.slane %v6194, 5
  %v6261 = vrot.slane %v6233, 5
  %v6262 = vrot.slane %v6235, 5
  %v6263 = vrot.slane %v6192, 6
  %v6264 = vrot.slane %v6194, 6
  %v6265 = vrot.slane %v6233, 6
  %v6266 = vrot.slane %v6235, 6
  %v6267 = vrot.slane %v6192, 7
  %v6268 = vrot.slane %v6194, 7
  %v6269 = vrot.slane %v6233, 7
  %v6270 = vrot.slane %v6235, 7
  %v6303 = vadd.f32 %v5932, %v6192
  %v6304 = vadd.f32 %v5933, %v6194
  %v6305 = vadd.f32 %v5934, %v6233
  %v6306 = vadd.f32 %v5935, %v6235
  %v6307 = vadd.f32 %v5936, %v6243
  %v6308 = vadd.f32 %v5937, %v6244
  %v6309 = vadd.f32 %v5938, %v6245
  %v6310 = vadd.f32 %v5939, %v6246
  %v6311 = vadd.f32 %v5940, %v6247
  %v6312 = vadd.f32 %v5941, %v6248
  %v6313 = vadd.f32 %v5942, %v6249
  %v6314 = vadd.f32 %v5943, %v6250
  %v6315 = vadd.f32 %v5944, %v6251
  %v6316 = vadd.f32 %v5945, %v6252
  %v6317 = vadd.f32 %v5946, %v6253
  %v6318 = vadd.f32 %v5947, %v6254
  %v6319 = vadd.f32 %v5948, %v6255
  %v6320 = vadd.f32 %v5949, %v6256
  %v6321 = vadd.f32 %v5950, %v6257
  %v6322 = vadd.f32 %v5951, %v6258
  %v6323 = vadd.f32 %v5952, %v6259
  %v6324 = vadd.f32 %v5953, %v6260
  %v6325 = vadd.f32 %v5954, %v6261
  %v6326 = vadd.f32 %v5955, %v6262
  %v6327 = vadd.f32 %v5956, %v6263
  %v6328 = vadd.f32 %v5957, %v6264
  %v6329 = vadd.f32 %v5958, %v6265
  %v6330 = vadd.f32 %v5959, %v6266
  %v6331 = vadd.f32 %v5960, %v6267
  %v6332 = vadd.f32 %v5961, %v6268
  %v6333 = vadd.f32 %v5962, %v6269
  %v6334 = vadd.f32 %v5963, %v6270
  %v6335 = vxor.u32 %v6303, 2147483648
  %v6336 = vxor.u32 %v6304, 2147483648
  %v6337 = vxor.u32 %v6305, 2147483648
  %v6338 = vxor.u32 %v6307, 2147483648
  %v6339 = vxor.u32 %v6308, 2147483648
  %v6340 = vxor.u32 %v6309, 2147483648
  %v6341 = vxor.u32 %v6311, 2147483648
  %v6342 = vxor.u32 %v6312, 2147483648
  %v6343 = vxor.u32 %v6313, 2147483648
  %v6344 = vxor.u32 %v6315, 2147483648
  %v6345 = vxor.u32 %v6316, 2147483648
  %v6346 = vxor.u32 %v6317, 2147483648
  %v6347 = vxor.u32 %v6319, 2147483648
  %v6348 = vxor.u32 %v6320, 2147483648
  %v6349 = vxor.u32 %v6321, 2147483648
  %v6350 = vxor.u32 %v6323, 2147483648
  %v6351 = vxor.u32 %v6324, 2147483648
  %v6352 = vxor.u32 %v6325, 2147483648
  %v6353 = vxor.u32 %v6327, 2147483648
  %v6354 = vxor.u32 %v6328, 2147483648
  %v6355 = vxor.u32 %v6329, 2147483648
  %v6356 = vxor.u32 %v6331, 2147483648
  %v6357 = vxor.u32 %v6332, 2147483648
  %v6358 = vxor.u32 %v6333, 2147483648
  %v6359 = vmul.f32 %v6335, 1.442695
  %v6360 = vpow.pop %v6359
  %v6361 = vmul.f32 %v6336, 1.442695
  %v6362 = vpow.pop %v6361
  %v6363 = vmul.f32 %v6337, 1.442695
  %v6364 = vpow.pop %v6363
  %v6365 = vmul.f32 %v6338, 1.442695
  %v6366 = vpow.pop %v6365
  %v6367 = vmul.f32 %v6339, 1.442695
  %v6368 = vpow.pop %v6367
  %v6369 = vmul.f32 %v6340, 1.442695
  %v6370 = vpow.pop %v6369
  %v6371 = vmul.f32 %v6341, 1.442695
  %v6372 = vpow.pop %v6371
  %v6373 = vmul.f32 %v6342, 1.442695
  %v6374 = vpow.pop %v6373
  %v6375 = vmul.f32 %v6343, 1.442695
  %v6376 = vpow.pop %v6375
  %v6377 = vmul.f32 %v6344, 1.442695
  %v6378 = vpow.pop %v6377
  %v6379 = vmul.f32 %v6345, 1.442695
  %v6380 = vpow.pop %v6379
  %v6381 = vmul.f32 %v6346, 1.442695
  %v6382 = vpow.pop %v6381
  %v6383 = vmul.f32 %v6347, 1.442695
  %v6384 = vpow.pop %v6383
  %v6385 = vmul.f32 %v6348, 1.442695
  %v6386 = vpow.pop %v6385
  %v6387 = vmul.f32 %v6349, 1.442695
  %v6388 = vpow.pop %v6387
  %v6389 = vmul.f32 %v6350, 1.442695
  %v6390 = vpow.pop %v6389
  %v6391 = vmul.f32 %v6351, 1.442695
  %v6392 = vpow.pop %v6391
  %v6393 = vmul.f32 %v6352, 1.442695
  %v6394 = vpow.pop %v6393
  %v6395 = vmul.f32 %v6353, 1.442695
  %v6396 = vpow.pop %v6395
  %v6397 = vmul.f32 %v6354, 1.442695
  %v6398 = vpow.pop %v6397
  %v6399 = vmul.f32 %v6355, 1.442695
  %v6400 = vpow.pop %v6399
  %v6401 = vmul.f32 %v6356, 1.442695
  %v6402 = vpow.pop %v6401
  %v6403 = vmul.f32 %v6357, 1.442695
  %v6404 = vpow.pop %v6403
  %v6405 = vmul.f32 %v6358, 1.442695
  %v6406 = vpow.pop %v6405
  %v6407 = vadd.f32 %v6360, 1.0
  %v6408 = vadd.f32 %v6362, 1.0
  %v6409 = vadd.f32 %v6364, 1.0
  %v6410 = vadd.f32 %v6366, 1.0
  %v6411 = vadd.f32 %v6368, 1.0
  %v6412 = vadd.f32 %v6370, 1.0
  %v6413 = vadd.f32 %v6372, 1.0
  %v6414 = vadd.f32 %v6374, 1.0
  %v6415 = vadd.f32 %v6376, 1.0
  %v6416 = vadd.f32 %v6378, 1.0
  %v6417 = vadd.f32 %v6380, 1.0
  %v6418 = vadd.f32 %v6382, 1.0
  %v6419 = vadd.f32 %v6384, 1.0
  %v6420 = vadd.f32 %v6386, 1.0
  %v6421 = vadd.f32 %v6388, 1.0
  %v6422 = vadd.f32 %v6390, 1.0
  %v6423 = vadd.f32 %v6392, 1.0
  %v6424 = vadd.f32 %v6394, 1.0
  %v6425 = vadd.f32 %v6396, 1.0
  %v6426 = vadd.f32 %v6398, 1.0
  %v6427 = vadd.f32 %v6400, 1.0
  %v6428 = vadd.f32 %v6402, 1.0
  %v6429 = vadd.f32 %v6404, 1.0
  %v6430 = vadd.f32 %v6406, 1.0
  %v6431 = vrcp.pop %v6407
  %v6432 = vmul.f32 1.0, %v6431
  %v6433 = vrcp.pop %v6408
  %v6434 = vmul.f32 1.0, %v6433
  %v6435 = vrcp.pop %v6409
  %v6436 = vmul.f32 1.0, %v6435
  %v6437 = vrcp.pop %v6410
  %v6438 = vmul.f32 1.0, %v6437
  %v6439 = vrcp.pop %v6411
  %v6440 = vmul.f32 1.0, %v6439
  %v6441 = vrcp.pop %v6412
  %v6442 = vmul.f32 1.0, %v6441
  %v6443 = vrcp.pop %v6413
  %v6444 = vmul.f32 1.0, %v6443
  %v6445 = vrcp.pop %v6414
  %v6446 = vmul.f32 1.0, %v6445
  %v6447 = vrcp.pop %v6415
  %v6448 = vmul.f32 1.0, %v6447
  %v6449 = vrcp.pop %v6416
  %v6450 = vmul.f32 1.0, %v6449
  %v6451 = vrcp.pop %v6417
  %v6452 = vmul.f32 1.0, %v6451
  %v6453 = vrcp.pop %v6418
  %v6454 = vmul.f32 1.0, %v6453
  %v6455 = vrcp.pop %v6419
  %v6456 = vmul.f32 1.0, %v6455
  %v6457 = vrcp.pop %v6420
  %v6458 = vmul.f32 1.0, %v6457
  %v6459 = vrcp.pop %v6421
  %v6460 = vmul.f32 1.0, %v6459
  %v6461 = vrcp.pop %v6422
  %v6462 = vmul.f32 1.0, %v6461
  %v6463 = vrcp.pop %v6423
  %v6464 = vmul.f32 1.0, %v6463
  %v6465 = vrcp.pop %v6424
  %v6466 = vmul.f32 1.0, %v6465
  %v6467 = vrcp.pop %v6425
  %v6468 = vmul.f32 1.0, %v6467
  %v6469 = vrcp.pop %v6426
  %v6470 = vmul.f32 1.0, %v6469
  %v6471 = vrcp.pop %v6427
  %v6472 = vmul.f32 1.0, %v6471
  %v6473 = vrcp.pop %v6428
  %v6474 = vmul.f32 1.0, %v6473
  %v6475 = vrcp.pop %v6429
  %v6476 = vmul.f32 1.0, %v6475
  %v6477 = vrcp.pop %v6430
  %v6478 = vmul.f32 1.0, %v6477
  %v6479 = vtanh.pop %v6306
  %v6480 = vtanh.pop %v6310
  %v6481 = vtanh.pop %v6314
  %v6482 = vtanh.pop %v6318
  %v6483 = vtanh.pop %v6322
  %v6484 = vtanh.pop %v6326
  %v6485 = vtanh.pop %v6330
  %v6486 = vtanh.pop %v6334
  %v6487 = vld [vmem:[#allocation3] sm:$0xff]
  %v6489 = vrot.slane %v6487, 1
  %v6490 = vrot.slane %v6487, 2
  %v6491 = vrot.slane %v6487, 3
  %v6492 = vrot.slane %v6487, 4
  %v6493 = vrot.slane %v6487, 5
  %v6494 = vrot.slane %v6487, 6
  %v6495 = vrot.slane %v6487, 7
  %v6504 = vmul.f32 %v6434, %v6487
  %v6505 = vmul.f32 %v6440, %v6489
  %v6506 = vmul.f32 %v6446, %v6490
  %v6507 = vmul.f32 %v6452, %v6491
  %v6508 = vmul.f32 %v6458, %v6492
  %v6509 = vmul.f32 %v6464, %v6493
  %v6510 = vmul.f32 %v6470, %v6494
  %v6511 = vmul.f32 %v6476, %v6495
  %v6512 = vmul.f32 %v6432, %v6479
  %v6513 = vmul.f32 %v6438, %v6480
  %v6514 = vmul.f32 %v6444, %v6481
  %v6515 = vmul.f32 %v6450, %v6482
  %v6516 = vmul.f32 %v6456, %v6483
  %v6517 = vmul.f32 %v6462, %v6484
  %v6518 = vmul.f32 %v6468, %v6485
  %v6519 = vmul.f32 %v6474, %v6486
  %v6520 = vadd.f32 %v6504, %v6512
  %v6521 = vadd.f32 %v6505, %v6513
  %v6522 = vadd.f32 %v6506, %v6514
  %v6523 = vadd.f32 %v6507, %v6515
  %v6524 = vadd.f32 %v6508, %v6516
  %v6525 = vadd.f32 %v6509, %v6517
  %v6526 = vadd.f32 %v6510, %v6518
  %v6527 = vadd.f32 %v6511, %v6519
  %v6528 = vtanh.pop %v6520
  %v6529 = vtanh.pop %v6521
  %v6530 = vtanh.pop %v6522
  %v6531 = vtanh.pop %v6523
  %v6532 = vtanh.pop %v6524
  %v6533 = vtanh.pop %v6525
  %v6534 = vtanh.pop %v6526
  %v6535 = vtanh.pop %v6527
  %v6536 = vmul.f32 %v6436, %v6528
  %v6537 = vmul.f32 %v6442, %v6529
  %v6538 = vmul.f32 %v6448, %v6530
  %v6539 = vmul.f32 %v6454, %v6531
  %v6540 = vmul.f32 %v6460, %v6532
  %v6541 = vmul.f32 %v6466, %v6533
  %v6542 = vmul.f32 %v6472, %v6534
  %v6543 = vmul.f32 %v6478, %v6535
  %v6544 = vpack.c.bf16 %v6536, %v6536
  %v6545 = vpack.c.bf16 %v6537, %v6537
  %v6546 = vpack.c.bf16 %v6538, %v6538
  %v6547 = vpack.c.bf16 %v6539, %v6539
  %v6548 = vpack.c.bf16 %v6540, %v6540
  %v6549 = vpack.c.bf16 %v6541, %v6541
  %v6550 = vpack.c.bf16 %v6542, %v6542
  %v6551 = vpack.c.bf16 %v6543, %v6543
  %v6560 = vrot.slane %v6521, 7
  %v6561 = vsel %vm663, %v6560, %v6520
  %v6562 = vrot.slane %v6522, 6
  %v6563 = vsel %vm666, %v6562, %v6561
  %v6564 = vrot.slane %v6523, 5
  %v6565 = vsel %vm669, %v6564, %v6563
  %v6566 = vrot.slane %v6524, 4
  %v6567 = vsel %vm672, %v6566, %v6565
  %v6568 = vrot.slane %v6525, 3
  %v6569 = vsel %vm675, %v6568, %v6567
  %v6570 = vrot.slane %v6526, 2
  %v6571 = vsel %vm678, %v6570, %v6569
  %v6572 = vrot.slane %v6527, 1
  %v6573 = vsel %vm681, %v6572, %v6571
  %6575 = vst [vmem:[#allocation3] sm:$0xff] %v6573
  %v6584 = vunpack.c.l.b16 %v6544
  %v6585 = vunpack.c.l.b16 %v6545
  %v6586 = vunpack.c.l.b16 %v6546
  %v6587 = vunpack.c.l.b16 %v6547
  %v6588 = vunpack.c.l.b16 %v6548
  %v6589 = vunpack.c.l.b16 %v6549
  %v6590 = vunpack.c.l.b16 %v6550
  %v6591 = vunpack.c.l.b16 %v6551
  %v6592 = vpack.c.b16 %v6584, %v6584
  %v6593 = vpack.c.b16 %v6585, %v6585
  %v6594 = vpack.c.b16 %v6586, %v6586
  %v6595 = vpack.c.b16 %v6587, %v6587
  %v6596 = vpack.c.b16 %v6588, %v6588
  %v6597 = vpack.c.b16 %v6589, %v6589
  %v6598 = vpack.c.b16 %v6590, %v6590
  %v6599 = vpack.c.b16 %v6591, %v6591
  %v6600 = vunpack.c.l.b16 %v6592
  %v6601 = vunpack.c.l.b16 %v6593
  %v6602 = vunpack.c.l.b16 %v6594
  %v6603 = vunpack.c.l.b16 %v6595
  %v6604 = vunpack.c.l.b16 %v6596
  %v6605 = vunpack.c.l.b16 %v6597
  %v6606 = vunpack.c.l.b16 %v6598
  %v6607 = vunpack.c.l.b16 %v6599
  %v6608 = vrot.slane %v6601, 7
  %v6609 = vsel %vm663, %v6608, %v6600
  %v6610 = vrot.slane %v6602, 6
  %v6611 = vsel %vm666, %v6610, %v6609
  %v6612 = vrot.slane %v6603, 5
  %v6613 = vsel %vm669, %v6612, %v6611
  %v6614 = vrot.slane %v6604, 4
  %v6615 = vsel %vm672, %v6614, %v6613
  %v6616 = vrot.slane %v6605, 3
  %v6617 = vsel %vm675, %v6616, %v6615
  %v6618 = vrot.slane %v6606, 2
  %v6619 = vsel %vm678, %v6618, %v6617
  %v6620 = vrot.slane %v6607, 1
  %v6621 = vsel %vm681, %v6620, %v6619
  %v6622 = vpack.c.b16 %v6621, %v6621
  %6624 = vst [vmem:[#allocation2] sm:$0xf] %v6622
  %v6625 = vld [vmem:[%s2 + $0x4] sm:$0x1]
  %v6626 = vsel %vm736, %v6544, %v6625
  %6627 = vst [vmem:[%s2 + $0x4] sm:$0x1] %v6626
  %v6628 = vld [vmem:[%s2 + $0xc] sm:$0x1]
  %v6629 = vsel %vm736, %v6545, %v6628
  %6630 = vst [vmem:[%s2 + $0xc] sm:$0x1] %v6629
  %v6631 = vld [vmem:[%s2 + $0x14] sm:$0x1]
  %v6632 = vsel %vm736, %v6546, %v6631
  %6633 = vst [vmem:[%s2 + $0x14] sm:$0x1] %v6632
  %v6634 = vld [vmem:[%s2 + $0x1c] sm:$0x1]
  %v6635 = vsel %vm736, %v6547, %v6634
  %6636 = vst [vmem:[%s2 + $0x1c] sm:$0x1] %v6635
  %v6637 = vld [vmem:[%s2 + $0x24] sm:$0x1]
  %v6638 = vsel %vm736, %v6548, %v6637
  %6639 = vst [vmem:[%s2 + $0x24] sm:$0x1] %v6638
  %v6640 = vld [vmem:[%s2 + $0x2c] sm:$0x1]
  %v6641 = vsel %vm736, %v6549, %v6640
  %6642 = vst [vmem:[%s2 + $0x2c] sm:$0x1] %v6641
  %v6643 = vld [vmem:[%s2 + $0x34] sm:$0x1]
  %v6644 = vsel %vm736, %v6550, %v6643
  %6645 = vst [vmem:[%s2 + $0x34] sm:$0x1] %v6644
  %v6646 = vld [vmem:[%s2 + $0x3c] sm:$0x1]
  %v6647 = vsel %vm736, %v6551, %v6646
  %6648 = vst [vmem:[%s2 + $0x3c] sm:$0x1] %v6647
  %v6649 = vld [vmem:[%s0 + $0x10] sm:$0x11]
  %v6650 = vld [vmem:[%s0 + $0x18] sm:$0x11]
  %v6651 = vld [vmem:[%s0 + $0x30] sm:$0x11]
  %v6652 = vld [vmem:[%s0 + $0x38] sm:$0x11]
  %v6653 = vld [vmem:[%s0 + $0x50] sm:$0x11]
  %v6654 = vld [vmem:[%s0 + $0x58] sm:$0x11]
  %v6655 = vld [vmem:[%s0 + $0x70] sm:$0x11]
  %v6656 = vld [vmem:[%s0 + $0x78] sm:$0x11]
  %v6657 = vld [vmem:[%s0 + $0x90] sm:$0x11]
  %v6658 = vld [vmem:[%s0 + $0x98] sm:$0x11]
  %v6659 = vld [vmem:[%s0 + $0xb0] sm:$0x11]
  %v6660 = vld [vmem:[%s0 + $0xb8] sm:$0x11]
  %v6661 = vld [vmem:[%s0 + $0xd0] sm:$0x11]
  %v6662 = vld [vmem:[%s0 + $0xd8] sm:$0x11]
  %v6663 = vld [vmem:[%s0 + $0xf0] sm:$0x11]
  %v6664 = vld [vmem:[%s0 + $0xf8] sm:$0x11]
  %v6665 = vunpack.c.l.bf16 %v6649
  %v6666 = vunpack.c.h.bf16 %v6649
  %v6667 = vunpack.c.l.bf16 %v6650
  %v6668 = vunpack.c.h.bf16 %v6650
  %v6669 = vunpack.c.l.bf16 %v6651
  %v6670 = vunpack.c.h.bf16 %v6651
  %v6671 = vunpack.c.l.bf16 %v6652
  %v6672 = vunpack.c.h.bf16 %v6652
  %v6673 = vunpack.c.l.bf16 %v6653
  %v6674 = vunpack.c.h.bf16 %v6653
  %v6675 = vunpack.c.l.bf16 %v6654
  %v6676 = vunpack.c.h.bf16 %v6654
  %v6677 = vunpack.c.l.bf16 %v6655
  %v6678 = vunpack.c.h.bf16 %v6655
  %v6679 = vunpack.c.l.bf16 %v6656
  %v6680 = vunpack.c.h.bf16 %v6656
  %v6681 = vunpack.c.l.bf16 %v6657
  %v6682 = vunpack.c.h.bf16 %v6657
  %v6683 = vunpack.c.l.bf16 %v6658
  %v6684 = vunpack.c.h.bf16 %v6658
  %v6685 = vunpack.c.l.bf16 %v6659
  %v6686 = vunpack.c.h.bf16 %v6659
  %v6687 = vunpack.c.l.bf16 %v6660
  %v6688 = vunpack.c.h.bf16 %v6660
  %v6689 = vunpack.c.l.bf16 %v6661
  %v6690 = vunpack.c.h.bf16 %v6661
  %v6691 = vunpack.c.l.bf16 %v6662
  %v6692 = vunpack.c.h.bf16 %v6662
  %v6693 = vunpack.c.l.bf16 %v6663
  %v6694 = vunpack.c.h.bf16 %v6663
  %v6695 = vunpack.c.l.bf16 %v6664
  %v6696 = vunpack.c.h.bf16 %v6664
  %v6697 = vld [vmem:[#allocation2] sm:$0xf]
  %v6698 = vld [vmem:[%s1] sm:$0xff]
  %v6699 = vld [vmem:[%s1 + $0x8] sm:$0xff]
  %v6700 = vld [vmem:[%s1 + $0x10] sm:$0xff]
  %v6701 = vld [vmem:[%s1 + $0x18] sm:$0xff]
  %v6702 = vld [vmem:[%s1 + $0x20] sm:$0xff]
  %v6703 = vld [vmem:[%s1 + $0x28] sm:$0xff]
  %v6704 = vld [vmem:[%s1 + $0x30] sm:$0xff]
  %v6705 = vld [vmem:[%s1 + $0x38] sm:$0xff]
  %v6706 = vld [vmem:[%s1 + $0x40] sm:$0xff]
  %v6707 = vld [vmem:[%s1 + $0x48] sm:$0xff]
  %v6708 = vld [vmem:[%s1 + $0x50] sm:$0xff]
  %v6709 = vld [vmem:[%s1 + $0x58] sm:$0xff]
  %v6710 = vld [vmem:[%s1 + $0x60] sm:$0xff]
  %v6711 = vld [vmem:[%s1 + $0x68] sm:$0xff]
  %v6712 = vld [vmem:[%s1 + $0x70] sm:$0xff]
  %v6713 = vld [vmem:[%s1 + $0x78] sm:$0xff]
  %v6714 = vld [vmem:[%s1 + $0x80] sm:$0xff]
  %v6715 = vld [vmem:[%s1 + $0x88] sm:$0xff]
  %v6716 = vld [vmem:[%s1 + $0x90] sm:$0xff]
  %v6717 = vld [vmem:[%s1 + $0x98] sm:$0xff]
  %v6718 = vld [vmem:[%s1 + $0xa0] sm:$0xff]
  %v6719 = vld [vmem:[%s1 + $0xa8] sm:$0xff]
  %v6720 = vld [vmem:[%s1 + $0xb0] sm:$0xff]
  %v6721 = vld [vmem:[%s1 + $0xb8] sm:$0xff]
  %v6722 = vld [vmem:[%s1 + $0xc0] sm:$0xff]
  %v6723 = vld [vmem:[%s1 + $0xc8] sm:$0xff]
  %v6724 = vld [vmem:[%s1 + $0xd0] sm:$0xff]
  %v6725 = vld [vmem:[%s1 + $0xd8] sm:$0xff]
  %v6726 = vld [vmem:[%s1 + $0xe0] sm:$0xff]
  %v6727 = vld [vmem:[%s1 + $0xe8] sm:$0xff]
  %v6728 = vld [vmem:[%s1 + $0xf0] sm:$0xff]
  %v6729 = vld [vmem:[%s1 + $0xf8] sm:$0xff]
  %v6762 = vunpack.c.l.b16 %v6698
  %v6763 = vunpack.c.h.b16 %v6698
  %v6764 = vunpack.c.l.b16 %v6699
  %v6765 = vunpack.c.h.b16 %v6699
  %v6766 = vunpack.c.l.b16 %v6700
  %v6767 = vunpack.c.h.b16 %v6700
  %v6768 = vunpack.c.l.b16 %v6701
  %v6769 = vunpack.c.h.b16 %v6701
  %v6770 = vunpack.c.l.b16 %v6702
  %v6771 = vunpack.c.h.b16 %v6702
  %v6772 = vunpack.c.l.b16 %v6703
  %v6773 = vunpack.c.h.b16 %v6703
  %v6774 = vunpack.c.l.b16 %v6704
  %v6775 = vunpack.c.h.b16 %v6704
  %v6776 = vunpack.c.l.b16 %v6705
  %v6777 = vunpack.c.h.b16 %v6705
  %v6778 = vunpack.c.l.b16 %v6706
  %v6779 = vunpack.c.h.b16 %v6706
  %v6780 = vunpack.c.l.b16 %v6707
  %v6781 = vunpack.c.h.b16 %v6707
  %v6782 = vunpack.c.l.b16 %v6708
  %v6783 = vunpack.c.h.b16 %v6708
  %v6784 = vunpack.c.l.b16 %v6709
  %v6785 = vunpack.c.h.b16 %v6709
  %v6786 = vunpack.c.l.b16 %v6710
  %v6787 = vunpack.c.h.b16 %v6710
  %v6788 = vunpack.c.l.b16 %v6711
  %v6789 = vunpack.c.h.b16 %v6711
  %v6790 = vunpack.c.l.b16 %v6712
  %v6791 = vunpack.c.h.b16 %v6712
  %v6792 = vunpack.c.l.b16 %v6713
  %v6793 = vunpack.c.h.b16 %v6713
  %v6794 = vunpack.c.l.b16 %v6714
  %v6795 = vunpack.c.h.b16 %v6714
  %v6796 = vunpack.c.l.b16 %v6715
  %v6797 = vunpack.c.h.b16 %v6715
  %v6798 = vunpack.c.l.b16 %v6716
  %v6799 = vunpack.c.h.b16 %v6716
  %v6800 = vunpack.c.l.b16 %v6717
  %v6801 = vunpack.c.h.b16 %v6717
  %v6802 = vunpack.c.l.b16 %v6718
  %v6803 = vunpack.c.h.b16 %v6718
  %v6804 = vunpack.c.l.b16 %v6719
  %v6805 = vunpack.c.h.b16 %v6719
  %v6806 = vunpack.c.l.b16 %v6720
  %v6807 = vunpack.c.h.b16 %v6720
  %v6808 = vunpack.c.l.b16 %v6721
  %v6809 = vunpack.c.h.b16 %v6721
  %v6810 = vunpack.c.l.b16 %v6722
  %v6811 = vunpack.c.h.b16 %v6722
  %v6812 = vunpack.c.l.b16 %v6723
  %v6813 = vunpack.c.h.b16 %v6723
  %v6814 = vunpack.c.l.b16 %v6724
  %v6815 = vunpack.c.h.b16 %v6724
  %v6816 = vunpack.c.l.b16 %v6725
  %v6817 = vunpack.c.h.b16 %v6725
  %v6818 = vunpack.c.l.b16 %v6726
  %v6819 = vunpack.c.h.b16 %v6726
  %v6820 = vunpack.c.l.b16 %v6727
  %v6821 = vunpack.c.h.b16 %v6727
  %v6822 = vunpack.c.l.b16 %v6728
  %v6823 = vunpack.c.h.b16 %v6728
  %v6824 = vunpack.c.l.b16 %v6729
  %v6825 = vunpack.c.h.b16 %v6729
  %v6826 = vpack.c.b16 %v6766, %v6762
  %v6827 = vpack.c.b16 %v6767, %v6763
  %v6828 = vpack.c.b16 %v6768, %v6764
  %v6829 = vpack.c.b16 %v6769, %v6765
  %v6830 = vpack.c.b16 %v6774, %v6770
  %v6831 = vpack.c.b16 %v6775, %v6771
  %v6832 = vpack.c.b16 %v6776, %v6772
  %v6833 = vpack.c.b16 %v6777, %v6773
  %v6834 = vpack.c.b16 %v6782, %v6778
  %v6835 = vpack.c.b16 %v6783, %v6779
  %v6836 = vpack.c.b16 %v6784, %v6780
  %v6837 = vpack.c.b16 %v6785, %v6781
  %v6838 = vpack.c.b16 %v6790, %v6786
  %v6839 = vpack.c.b16 %v6791, %v6787
  %v6840 = vpack.c.b16 %v6792, %v6788
  %v6841 = vpack.c.b16 %v6793, %v6789
  %v6842 = vpack.c.b16 %v6798, %v6794
  %v6843 = vpack.c.b16 %v6799, %v6795
  %v6844 = vpack.c.b16 %v6800, %v6796
  %v6845 = vpack.c.b16 %v6801, %v6797
  %v6846 = vpack.c.b16 %v6806, %v6802
  %v6847 = vpack.c.b16 %v6807, %v6803
  %v6848 = vpack.c.b16 %v6808, %v6804
  %v6849 = vpack.c.b16 %v6809, %v6805
  %v6850 = vpack.c.b16 %v6814, %v6810
  %v6851 = vpack.c.b16 %v6815, %v6811
  %v6852 = vpack.c.b16 %v6816, %v6812
  %v6853 = vpack.c.b16 %v6817, %v6813
  %v6854 = vpack.c.b16 %v6822, %v6818
  %v6855 = vpack.c.b16 %v6823, %v6819
  %v6856 = vpack.c.b16 %v6824, %v6820
  %v6857 = vpack.c.b16 %v6825, %v6821
  %6890 = vmatprep.subr.bf16.mxu0 %v6855
  %6891 = vmatpush1.bf16.msra.mxu0 %v6854
  %6892 = vmatprep.subr.bf16.mxu0 %v6851
  %6893 = vmatpush1.bf16.msra.mxu0 %v6850
  %6894 = vmatprep.subr.bf16.mxu0 %v6847
  %6895 = vmatpush1.bf16.msra.mxu0 %v6846
  %6896 = vmatprep.subr.bf16.mxu0 %v6843
  %6897 = vmatpush1.bf16.msra.mxu0 %v6842
  %6898 = vmatprep.subr.bf16.mxu0 %v6839
  %6899 = vmatpush1.bf16.msra.mxu0 %v6838
  %6900 = vmatprep.subr.bf16.mxu0 %v6835
  %6901 = vmatpush1.bf16.msra.mxu0 %v6834
  %6902 = vmatprep.subr.bf16.mxu0 %v6831
  %6903 = vmatpush1.bf16.msra.mxu0 %v6830
  %6904 = vmatprep.subr.bf16.mxu0 %v6827
  %6905 = vmatpush1.bf16.msra.mxu0 %v6826
  %6906 = vmatprep.subr.bf16.mxu0 0
  %6907 = vmatpush2.bf16.msra.mxu0 0
  %6908 = vmatprep.subr.bf16.mxu0 0
  %6909 = vmatpush2.bf16.msra.mxu0 0
  %6910 = vmatprep.subr.bf16.mxu0 0
  %6911 = vmatpush2.bf16.msra.mxu0 0
  %6912 = vmatprep.subr.bf16.mxu0 0
  %6913 = vmatpush2.bf16.msra.mxu0 0
  %6914 = vmatprep.subr.bf16.mxu0 0
  %6915 = vmatpush2.bf16.msra.mxu0 0
  %6916 = vmatprep.subr.bf16.mxu0 0
  %6917 = vmatpush2.bf16.msra.mxu0 0
  %6918 = vmatprep.subr.bf16.mxu0 0
  %6919 = vmatpush2.bf16.msra.mxu0 0
  %6920 = vmatprep.subr.bf16.mxu0 0
  %6921 = vmatpush2.bf16.msra.mxu0 0
  %6922 = vmatprep.mubr.bf16.mxu0 0
  %6923 = vmatmul.mubr.bf16.gmra.mxu0 %v6697
  %v6924 = vpop.f32.mrf.mxu0
  %v6925 = vadd.f32 0.0, %v6924
  %v6926 = vpop.f32.mrf.mxu0
  %v6927 = vadd.f32 0.0, %v6926
  %v6928 = vpop.f32.mrf.mxu0
  %v6929 = vpop.f32.mrf.mxu0
  %6930 = vdwg.mxu0
  %6931 = vmatprep.subr.bf16.mxu0 %v6857
  %6932 = vmatpush1.bf16.msra.mxu0 %v6856
  %6933 = vmatprep.subr.bf16.mxu0 %v6853
  %6934 = vmatpush1.bf16.msra.mxu0 %v6852
  %6935 = vmatprep.subr.bf16.mxu0 %v6849
  %6936 = vmatpush1.bf16.msra.mxu0 %v6848
  %6937 = vmatprep.subr.bf16.mxu0 %v6845
  %6938 = vmatpush1.bf16.msra.mxu0 %v6844
  %6939 = vmatprep.subr.bf16.mxu0 %v6841
  %6940 = vmatpush1.bf16.msra.mxu0 %v6840
  %6941 = vmatprep.subr.bf16.mxu0 %v6837
  %6942 = vmatpush1.bf16.msra.mxu0 %v6836
  %6943 = vmatprep.subr.bf16.mxu0 %v6833
  %6944 = vmatpush1.bf16.msra.mxu0 %v6832
  %6945 = vmatprep.subr.bf16.mxu0 %v6829
  %6946 = vmatpush1.bf16.msra.mxu0 %v6828
  %6947 = vmatprep.subr.bf16.mxu0 0
  %6948 = vmatpush2.bf16.msra.mxu0 0
  %6949 = vmatprep.subr.bf16.mxu0 0
  %6950 = vmatpush2.bf16.msra.mxu0 0
  %6951 = vmatprep.subr.bf16.mxu0 0
  %6952 = vmatpush2.bf16.msra.mxu0 0
  %6953 = vmatprep.subr.bf16.mxu0 0
  %6954 = vmatpush2.bf16.msra.mxu0 0
  %6955 = vmatprep.subr.bf16.mxu0 0
  %6956 = vmatpush2.bf16.msra.mxu0 0
  %6957 = vmatprep.subr.bf16.mxu0 0
  %6958 = vmatpush2.bf16.msra.mxu0 0
  %6959 = vmatprep.subr.bf16.mxu0 0
  %6960 = vmatpush2.bf16.msra.mxu0 0
  %6961 = vmatprep.subr.bf16.mxu0 0
  %6962 = vmatpush2.bf16.msra.mxu0 0
  %6963 = vmatprep.mubr.bf16.mxu0 0
  %6964 = vmatmul.mubr.bf16.gmra.mxu0 %v6697
  %v6965 = vpop.f32.mrf.mxu0
  %v6966 = vadd.f32 0.0, %v6965
  %v6967 = vpop.f32.mrf.mxu0
  %v6968 = vadd.f32 0.0, %v6967
  %v6969 = vpop.f32.mrf.mxu0
  %v6970 = vpop.f32.mrf.mxu0
  %6971 = vdwg.mxu0
  %v6976 = vrot.slane %v6925, 7
  %v6977 = vrot.slane %v6927, 7
  %v6978 = vrot.slane %v6966, 7
  %v6979 = vrot.slane %v6968, 7
  %v6980 = vrot.slane %v6925, 1
  %v6981 = vrot.slane %v6927, 1
  %v6982 = vrot.slane %v6966, 1
  %v6983 = vrot.slane %v6968, 1
  %v6984 = vrot.slane %v6925, 2
  %v6985 = vrot.slane %v6927, 2
  %v6986 = vrot.slane %v6966, 2
  %v6987 = vrot.slane %v6968, 2
  %v6988 = vrot.slane %v6925, 3
  %v6989 = vrot.slane %v6927, 3
  %v6990 = vrot.slane %v6966, 3
  %v6991 = vrot.slane %v6968, 3
  %v6992 = vrot.slane %v6925, 4
  %v6993 = vrot.slane %v6927, 4
  %v6994 = vrot.slane %v6966, 4
  %v6995 = vrot.slane %v6968, 4
  %v6996 = vrot.slane %v6925, 5
  %v6997 = vrot.slane %v6927, 5
  %v6998 = vrot.slane %v6966, 5
  %v6999 = vrot.slane %v6968, 5
  %v7000 = vrot.slane %v6925, 6
  %v7001 = vrot.slane %v6927, 6
  %v7002 = vrot.slane %v6966, 6
  %v7003 = vrot.slane %v6968, 6
  %v7036 = vadd.f32 %v6665, %v6976
  %v7037 = vadd.f32 %v6666, %v6977
  %v7038 = vadd.f32 %v6667, %v6978
  %v7039 = vadd.f32 %v6668, %v6979
  %v7040 = vadd.f32 %v6669, %v6925
  %v7041 = vadd.f32 %v6670, %v6927
  %v7042 = vadd.f32 %v6671, %v6966
  %v7043 = vadd.f32 %v6672, %v6968
  %v7044 = vadd.f32 %v6673, %v6980
  %v7045 = vadd.f32 %v6674, %v6981
  %v7046 = vadd.f32 %v6675, %v6982
  %v7047 = vadd.f32 %v6676, %v6983
  %v7048 = vadd.f32 %v6677, %v6984
  %v7049 = vadd.f32 %v6678, %v6985
  %v7050 = vadd.f32 %v6679, %v6986
  %v7051 = vadd.f32 %v6680, %v6987
  %v7052 = vadd.f32 %v6681, %v6988
  %v7053 = vadd.f32 %v6682, %v6989
  %v7054 = vadd.f32 %v6683, %v6990
  %v7055 = vadd.f32 %v6684, %v6991
  %v7056 = vadd.f32 %v6685, %v6992
  %v7057 = vadd.f32 %v6686, %v6993
  %v7058 = vadd.f32 %v6687, %v6994
  %v7059 = vadd.f32 %v6688, %v6995
  %v7060 = vadd.f32 %v6689, %v6996
  %v7061 = vadd.f32 %v6690, %v6997
  %v7062 = vadd.f32 %v6691, %v6998
  %v7063 = vadd.f32 %v6692, %v6999
  %v7064 = vadd.f32 %v6693, %v7000
  %v7065 = vadd.f32 %v6694, %v7001
  %v7066 = vadd.f32 %v6695, %v7002
  %v7067 = vadd.f32 %v6696, %v7003
  %v7068 = vxor.u32 %v7036, 2147483648
  %v7069 = vxor.u32 %v7037, 2147483648
  %v7070 = vxor.u32 %v7038, 2147483648
  %v7071 = vxor.u32 %v7040, 2147483648
  %v7072 = vxor.u32 %v7041, 2147483648
  %v7073 = vxor.u32 %v7042, 2147483648
  %v7074 = vxor.u32 %v7044, 2147483648
  %v7075 = vxor.u32 %v7045, 2147483648
  %v7076 = vxor.u32 %v7046, 2147483648
  %v7077 = vxor.u32 %v7048, 2147483648
  %v7078 = vxor.u32 %v7049, 2147483648
  %v7079 = vxor.u32 %v7050, 2147483648
  %v7080 = vxor.u32 %v7052, 2147483648
  %v7081 = vxor.u32 %v7053, 2147483648
  %v7082 = vxor.u32 %v7054, 2147483648
  %v7083 = vxor.u32 %v7056, 2147483648
  %v7084 = vxor.u32 %v7057, 2147483648
  %v7085 = vxor.u32 %v7058, 2147483648
  %v7086 = vxor.u32 %v7060, 2147483648
  %v7087 = vxor.u32 %v7061, 2147483648
  %v7088 = vxor.u32 %v7062, 2147483648
  %v7089 = vxor.u32 %v7064, 2147483648
  %v7090 = vxor.u32 %v7065, 2147483648
  %v7091 = vxor.u32 %v7066, 2147483648
  %v7092 = vmul.f32 %v7068, 1.442695
  %v7093 = vpow.pop %v7092
  %v7094 = vmul.f32 %v7069, 1.442695
  %v7095 = vpow.pop %v7094
  %v7096 = vmul.f32 %v7070, 1.442695
  %v7097 = vpow.pop %v7096
  %v7098 = vmul.f32 %v7071, 1.442695
  %v7099 = vpow.pop %v7098
  %v7100 = vmul.f32 %v7072, 1.442695
  %v7101 = vpow.pop %v7100
  %v7102 = vmul.f32 %v7073, 1.442695
  %v7103 = vpow.pop %v7102
  %v7104 = vmul.f32 %v7074, 1.442695
  %v7105 = vpow.pop %v7104
  %v7106 = vmul.f32 %v7075, 1.442695
  %v7107 = vpow.pop %v7106
  %v7108 = vmul.f32 %v7076, 1.442695
  %v7109 = vpow.pop %v7108
  %v7110 = vmul.f32 %v7077, 1.442695
  %v7111 = vpow.pop %v7110
  %v7112 = vmul.f32 %v7078, 1.442695
  %v7113 = vpow.pop %v7112
  %v7114 = vmul.f32 %v7079, 1.442695
  %v7115 = vpow.pop %v7114
  %v7116 = vmul.f32 %v7080, 1.442695
  %v7117 = vpow.pop %v7116
  %v7118 = vmul.f32 %v7081, 1.442695
  %v7119 = vpow.pop %v7118
  %v7120 = vmul.f32 %v7082, 1.442695
  %v7121 = vpow.pop %v7120
  %v7122 = vmul.f32 %v7083, 1.442695
  %v7123 = vpow.pop %v7122
  %v7124 = vmul.f32 %v7084, 1.442695
  %v7125 = vpow.pop %v7124
  %v7126 = vmul.f32 %v7085, 1.442695
  %v7127 = vpow.pop %v7126
  %v7128 = vmul.f32 %v7086, 1.442695
  %v7129 = vpow.pop %v7128
  %v7130 = vmul.f32 %v7087, 1.442695
  %v7131 = vpow.pop %v7130
  %v7132 = vmul.f32 %v7088, 1.442695
  %v7133 = vpow.pop %v7132
  %v7134 = vmul.f32 %v7089, 1.442695
  %v7135 = vpow.pop %v7134
  %v7136 = vmul.f32 %v7090, 1.442695
  %v7137 = vpow.pop %v7136
  %v7138 = vmul.f32 %v7091, 1.442695
  %v7139 = vpow.pop %v7138
  %v7140 = vadd.f32 %v7093, 1.0
  %v7141 = vadd.f32 %v7095, 1.0
  %v7142 = vadd.f32 %v7097, 1.0
  %v7143 = vadd.f32 %v7099, 1.0
  %v7144 = vadd.f32 %v7101, 1.0
  %v7145 = vadd.f32 %v7103, 1.0
  %v7146 = vadd.f32 %v7105, 1.0
  %v7147 = vadd.f32 %v7107, 1.0
  %v7148 = vadd.f32 %v7109, 1.0
  %v7149 = vadd.f32 %v7111, 1.0
  %v7150 = vadd.f32 %v7113, 1.0
  %v7151 = vadd.f32 %v7115, 1.0
  %v7152 = vadd.f32 %v7117, 1.0
  %v7153 = vadd.f32 %v7119, 1.0
  %v7154 = vadd.f32 %v7121, 1.0
  %v7155 = vadd.f32 %v7123, 1.0
  %v7156 = vadd.f32 %v7125, 1.0
  %v7157 = vadd.f32 %v7127, 1.0
  %v7158 = vadd.f32 %v7129, 1.0
  %v7159 = vadd.f32 %v7131, 1.0
  %v7160 = vadd.f32 %v7133, 1.0
  %v7161 = vadd.f32 %v7135, 1.0
  %v7162 = vadd.f32 %v7137, 1.0
  %v7163 = vadd.f32 %v7139, 1.0
  %v7164 = vrcp.pop %v7140
  %v7165 = vmul.f32 1.0, %v7164
  %v7166 = vrcp.pop %v7141
  %v7167 = vmul.f32 1.0, %v7166
  %v7168 = vrcp.pop %v7142
  %v7169 = vmul.f32 1.0, %v7168
  %v7170 = vrcp.pop %v7143
  %v7171 = vmul.f32 1.0, %v7170
  %v7172 = vrcp.pop %v7144
  %v7173 = vmul.f32 1.0, %v7172
  %v7174 = vrcp.pop %v7145
  %v7175 = vmul.f32 1.0, %v7174
  %v7176 = vrcp.pop %v7146
  %v7177 = vmul.f32 1.0, %v7176
  %v7178 = vrcp.pop %v7147
  %v7179 = vmul.f32 1.0, %v7178
  %v7180 = vrcp.pop %v7148
  %v7181 = vmul.f32 1.0, %v7180
  %v7182 = vrcp.pop %v7149
  %v7183 = vmul.f32 1.0, %v7182
  %v7184 = vrcp.pop %v7150
  %v7185 = vmul.f32 1.0, %v7184
  %v7186 = vrcp.pop %v7151
  %v7187 = vmul.f32 1.0, %v7186
  %v7188 = vrcp.pop %v7152
  %v7189 = vmul.f32 1.0, %v7188
  %v7190 = vrcp.pop %v7153
  %v7191 = vmul.f32 1.0, %v7190
  %v7192 = vrcp.pop %v7154
  %v7193 = vmul.f32 1.0, %v7192
  %v7194 = vrcp.pop %v7155
  %v7195 = vmul.f32 1.0, %v7194
  %v7196 = vrcp.pop %v7156
  %v7197 = vmul.f32 1.0, %v7196
  %v7198 = vrcp.pop %v7157
  %v7199 = vmul.f32 1.0, %v7198
  %v7200 = vrcp.pop %v7158
  %v7201 = vmul.f32 1.0, %v7200
  %v7202 = vrcp.pop %v7159
  %v7203 = vmul.f32 1.0, %v7202
  %v7204 = vrcp.pop %v7160
  %v7205 = vmul.f32 1.0, %v7204
  %v7206 = vrcp.pop %v7161
  %v7207 = vmul.f32 1.0, %v7206
  %v7208 = vrcp.pop %v7162
  %v7209 = vmul.f32 1.0, %v7208
  %v7210 = vrcp.pop %v7163
  %v7211 = vmul.f32 1.0, %v7210
  %v7212 = vtanh.pop %v7039
  %v7213 = vtanh.pop %v7043
  %v7214 = vtanh.pop %v7047
  %v7215 = vtanh.pop %v7051
  %v7216 = vtanh.pop %v7055
  %v7217 = vtanh.pop %v7059
  %v7218 = vtanh.pop %v7063
  %v7219 = vtanh.pop %v7067
  %v7220 = vld [vmem:[#allocation3] sm:$0xff]
  %v7222 = vrot.slane %v7220, 7
  %v7223 = vrot.slane %v7220, 1
  %v7224 = vrot.slane %v7220, 2
  %v7225 = vrot.slane %v7220, 3
  %v7226 = vrot.slane %v7220, 4
  %v7227 = vrot.slane %v7220, 5
  %v7228 = vrot.slane %v7220, 6
  %v7237 = vmul.f32 %v7167, %v7222
  %v7238 = vmul.f32 %v7173, %v7220
  %v7239 = vmul.f32 %v7179, %v7223
  %v7240 = vmul.f32 %v7185, %v7224
  %v7241 = vmul.f32 %v7191, %v7225
  %v7242 = vmul.f32 %v7197, %v7226
  %v7243 = vmul.f32 %v7203, %v7227
  %v7244 = vmul.f32 %v7209, %v7228
  %v7245 = vmul.f32 %v7165, %v7212
  %v7246 = vmul.f32 %v7171, %v7213
  %v7247 = vmul.f32 %v7177, %v7214
  %v7248 = vmul.f32 %v7183, %v7215
  %v7249 = vmul.f32 %v7189, %v7216
  %v7250 = vmul.f32 %v7195, %v7217
  %v7251 = vmul.f32 %v7201, %v7218
  %v7252 = vmul.f32 %v7207, %v7219
  %v7253 = vadd.f32 %v7237, %v7245
  %v7254 = vadd.f32 %v7238, %v7246
  %v7255 = vadd.f32 %v7239, %v7247
  %v7256 = vadd.f32 %v7240, %v7248
  %v7257 = vadd.f32 %v7241, %v7249
  %v7258 = vadd.f32 %v7242, %v7250
  %v7259 = vadd.f32 %v7243, %v7251
  %v7260 = vadd.f32 %v7244, %v7252
  %v7261 = vtanh.pop %v7253
  %v7262 = vtanh.pop %v7254
  %v7263 = vtanh.pop %v7255
  %v7264 = vtanh.pop %v7256
  %v7265 = vtanh.pop %v7257
  %v7266 = vtanh.pop %v7258
  %v7267 = vtanh.pop %v7259
  %v7268 = vtanh.pop %v7260
  %v7269 = vmul.f32 %v7169, %v7261
  %v7270 = vmul.f32 %v7175, %v7262
  %v7271 = vmul.f32 %v7181, %v7263
  %v7272 = vmul.f32 %v7187, %v7264
  %v7273 = vmul.f32 %v7193, %v7265
  %v7274 = vmul.f32 %v7199, %v7266
  %v7275 = vmul.f32 %v7205, %v7267
  %v7276 = vmul.f32 %v7211, %v7268
  %v7277 = vpack.c.bf16 %v7269, %v7269
  %v7278 = vpack.c.bf16 %v7270, %v7270
  %v7279 = vpack.c.bf16 %v7271, %v7271
  %v7280 = vpack.c.bf16 %v7272, %v7272
  %v7281 = vpack.c.bf16 %v7273, %v7273
  %v7282 = vpack.c.bf16 %v7274, %v7274
  %v7283 = vpack.c.bf16 %v7275, %v7275
  %v7284 = vpack.c.bf16 %v7276, %v7276
  %v7293 = vrot.slane %v7254, 7
  %v7294 = vsel %vm666, %v7293, %v7253
  %v7295 = vrot.slane %v7255, 6
  %v7296 = vsel %vm669, %v7295, %v7294
  %v7297 = vrot.slane %v7256, 5
  %v7298 = vsel %vm672, %v7297, %v7296
  %v7299 = vrot.slane %v7257, 4
  %v7300 = vsel %vm675, %v7299, %v7298
  %v7301 = vrot.slane %v7258, 3
  %v7302 = vsel %vm678, %v7301, %v7300
  %v7303 = vrot.slane %v7259, 2
  %v7304 = vsel %vm681, %v7303, %v7302
  %v7305 = vrot.slane %v7260, 1
  %7308 = vst [vmem:[#allocation3 - $0x1] sm:$0xfe] %v7304
  %7309 = vst [vmem:[#allocation3 + $0x7] sm:$0x1] %v7305
  %v7318 = vunpack.c.l.b16 %v7277
  %v7319 = vunpack.c.l.b16 %v7278
  %v7320 = vunpack.c.l.b16 %v7279
  %v7321 = vunpack.c.l.b16 %v7280
  %v7322 = vunpack.c.l.b16 %v7281
  %v7323 = vunpack.c.l.b16 %v7282
  %v7324 = vunpack.c.l.b16 %v7283
  %v7325 = vunpack.c.l.b16 %v7284
  %v7326 = vpack.c.b16 %v7318, %v7318
  %v7327 = vpack.c.b16 %v7319, %v7319
  %v7328 = vpack.c.b16 %v7320, %v7320
  %v7329 = vpack.c.b16 %v7321, %v7321
  %v7330 = vpack.c.b16 %v7322, %v7322
  %v7331 = vpack.c.b16 %v7323, %v7323
  %v7332 = vpack.c.b16 %v7324, %v7324
  %v7333 = vpack.c.b16 %v7325, %v7325
  %v7334 = vunpack.c.l.b16 %v7326
  %v7335 = vunpack.c.l.b16 %v7327
  %v7336 = vunpack.c.l.b16 %v7328
  %v7337 = vunpack.c.l.b16 %v7329
  %v7338 = vunpack.c.l.b16 %v7330
  %v7339 = vunpack.c.l.b16 %v7331
  %v7340 = vunpack.c.l.b16 %v7332
  %v7341 = vunpack.c.l.b16 %v7333
  %v7342 = vrot.slane %v7334, 1
  %v7343 = vsel %vm663, %v7335, %v7342
  %v7344 = vrot.slane %v7336, 7
  %v7345 = vsel %vm666, %v7344, %v7343
  %v7346 = vrot.slane %v7337, 6
  %v7347 = vsel %vm669, %v7346, %v7345
  %v7348 = vrot.slane %v7338, 5
  %v7349 = vsel %vm672, %v7348, %v7347
  %v7350 = vrot.slane %v7339, 4
  %v7351 = vsel %vm675, %v7350, %v7349
  %v7352 = vrot.slane %v7340, 3
  %v7353 = vsel %vm678, %v7352, %v7351
  %v7354 = vrot.slane %v7341, 2
  %v7355 = vsel %vm681, %v7354, %v7353
  %v7356 = vpack.c.b16 %v7355, %v7355
  %7358 = vst [vmem:[#allocation2] sm:$0xf] %v7356
  %v7359 = vld [vmem:[%s2 + $0x4] sm:$0x1]
  %v7360 = vsel %vm1472, %v7277, %v7359
  %7361 = vst [vmem:[%s2 + $0x4] sm:$0x1] %v7360
  %v7362 = vld [vmem:[%s2 + $0xc] sm:$0x1]
  %v7363 = vsel %vm1472, %v7278, %v7362
  %7364 = vst [vmem:[%s2 + $0xc] sm:$0x1] %v7363
  %v7365 = vld [vmem:[%s2 + $0x14] sm:$0x1]
  %v7366 = vsel %vm1472, %v7279, %v7365
  %7367 = vst [vmem:[%s2 + $0x14] sm:$0x1] %v7366
  %v7368 = vld [vmem:[%s2 + $0x1c] sm:$0x1]
  %v7369 = vsel %vm1472, %v7280, %v7368
  %7370 = vst [vmem:[%s2 + $0x1c] sm:$0x1] %v7369
  %v7371 = vld [vmem:[%s2 + $0x24] sm:$0x1]
  %v7372 = vsel %vm1472, %v7281, %v7371
  %7373 = vst [vmem:[%s2 + $0x24] sm:$0x1] %v7372
  %v7374 = vld [vmem:[%s2 + $0x2c] sm:$0x1]
  %v7375 = vsel %vm1472, %v7282, %v7374
  %7376 = vst [vmem:[%s2 + $0x2c] sm:$0x1] %v7375
  %v7377 = vld [vmem:[%s2 + $0x34] sm:$0x1]
  %v7378 = vsel %vm1472, %v7283, %v7377
  %7379 = vst [vmem:[%s2 + $0x34] sm:$0x1] %v7378
  %v7380 = vld [vmem:[%s2 + $0x3c] sm:$0x1]
  %v7381 = vsel %vm1472, %v7284, %v7380
  %7382 = vst [vmem:[%s2 + $0x3c] sm:$0x1] %v7381
  %v7383 = vld [vmem:[%s0 + $0x10] sm:$0x22]
  %v7384 = vld [vmem:[%s0 + $0x18] sm:$0x22]
  %v7385 = vld [vmem:[%s0 + $0x30] sm:$0x22]
  %v7386 = vld [vmem:[%s0 + $0x38] sm:$0x22]
  %v7387 = vld [vmem:[%s0 + $0x50] sm:$0x22]
  %v7388 = vld [vmem:[%s0 + $0x58] sm:$0x22]
  %v7389 = vld [vmem:[%s0 + $0x70] sm:$0x22]
  %v7390 = vld [vmem:[%s0 + $0x78] sm:$0x22]
  %v7391 = vld [vmem:[%s0 + $0x90] sm:$0x22]
  %v7392 = vld [vmem:[%s0 + $0x98] sm:$0x22]
  %v7393 = vld [vmem:[%s0 + $0xb0] sm:$0x22]
  %v7394 = vld [vmem:[%s0 + $0xb8] sm:$0x22]
  %v7395 = vld [vmem:[%s0 + $0xd0] sm:$0x22]
  %v7396 = vld [vmem:[%s0 + $0xd8] sm:$0x22]
  %v7397 = vld [vmem:[%s0 + $0xf0] sm:$0x22]
  %v7398 = vld [vmem:[%s0 + $0xf8] sm:$0x22]
  %v7399 = vunpack.c.l.bf16 %v7383
  %v7400 = vunpack.c.h.bf16 %v7383
  %v7401 = vunpack.c.l.bf16 %v7384
  %v7402 = vunpack.c.h.bf16 %v7384
  %v7403 = vunpack.c.l.bf16 %v7385
  %v7404 = vunpack.c.h.bf16 %v7385
  %v7405 = vunpack.c.l.bf16 %v7386
  %v7406 = vunpack.c.h.bf16 %v7386
  %v7407 = vunpack.c.l.bf16 %v7387
  %v7408 = vunpack.c.h.bf16 %v7387
  %v7409 = vunpack.c.l.bf16 %v7388
  %v7410 = vunpack.c.h.bf16 %v7388
  %v7411 = vunpack.c.l.bf16 %v7389
  %v7412 = vunpack.c.h.bf16 %v7389
  %v7413 = vunpack.c.l.bf16 %v7390
  %v7414 = vunpack.c.h.bf16 %v7390
  %v7415 = vunpack.c.l.bf16 %v7391
  %v7416 = vunpack.c.h.bf16 %v7391
  %v7417 = vunpack.c.l.bf16 %v7392
  %v7418 = vunpack.c.h.bf16 %v7392
  %v7419 = vunpack.c.l.bf16 %v7393
  %v7420 = vunpack.c.h.bf16 %v7393
  %v7421 = vunpack.c.l.bf16 %v7394
  %v7422 = vunpack.c.h.bf16 %v7394
  %v7423 = vunpack.c.l.bf16 %v7395
  %v7424 = vunpack.c.h.bf16 %v7395
  %v7425 = vunpack.c.l.bf16 %v7396
  %v7426 = vunpack.c.h.bf16 %v7396
  %v7427 = vunpack.c.l.bf16 %v7397
  %v7428 = vunpack.c.h.bf16 %v7397
  %v7429 = vunpack.c.l.bf16 %v7398
  %v7430 = vunpack.c.h.bf16 %v7398
  %v7431 = vld [vmem:[#allocation2] sm:$0xf]
  %v7432 = vld [vmem:[%s1] sm:$0xff]
  %v7433 = vld [vmem:[%s1 + $0x8] sm:$0xff]
  %v7434 = vld [vmem:[%s1 + $0x10] sm:$0xff]
  %v7435 = vld [vmem:[%s1 + $0x18] sm:$0xff]
  %v7436 = vld [vmem:[%s1 + $0x20] sm:$0xff]
  %v7437 = vld [vmem:[%s1 + $0x28] sm:$0xff]
  %v7438 = vld [vmem:[%s1 + $0x30] sm:$0xff]
  %v7439 = vld [vmem:[%s1 + $0x38] sm:$0xff]
  %v7440 = vld [vmem:[%s1 + $0x40] sm:$0xff]
  %v7441 = vld [vmem:[%s1 + $0x48] sm:$0xff]
  %v7442 = vld [vmem:[%s1 + $0x50] sm:$0xff]
  %v7443 = vld [vmem:[%s1 + $0x58] sm:$0xff]
  %v7444 = vld [vmem:[%s1 + $0x60] sm:$0xff]
  %v7445 = vld [vmem:[%s1 + $0x68] sm:$0xff]
  %v7446 = vld [vmem:[%s1 + $0x70] sm:$0xff]
  %v7447 = vld [vmem:[%s1 + $0x78] sm:$0xff]
  %v7448 = vld [vmem:[%s1 + $0x80] sm:$0xff]
  %v7449 = vld [vmem:[%s1 + $0x88] sm:$0xff]
  %v7450 = vld [vmem:[%s1 + $0x90] sm:$0xff]
  %v7451 = vld [vmem:[%s1 + $0x98] sm:$0xff]
  %v7452 = vld [vmem:[%s1 + $0xa0] sm:$0xff]
  %v7453 = vld [vmem:[%s1 + $0xa8] sm:$0xff]
  %v7454 = vld [vmem:[%s1 + $0xb0] sm:$0xff]
  %v7455 = vld [vmem:[%s1 + $0xb8] sm:$0xff]
  %v7456 = vld [vmem:[%s1 + $0xc0] sm:$0xff]
  %v7457 = vld [vmem:[%s1 + $0xc8] sm:$0xff]
  %v7458 = vld [vmem:[%s1 + $0xd0] sm:$0xff]
  %v7459 = vld [vmem:[%s1 + $0xd8] sm:$0xff]
  %v7460 = vld [vmem:[%s1 + $0xe0] sm:$0xff]
  %v7461 = vld [vmem:[%s1 + $0xe8] sm:$0xff]
  %v7462 = vld [vmem:[%s1 + $0xf0] sm:$0xff]
  %v7463 = vld [vmem:[%s1 + $0xf8] sm:$0xff]
  %v7496 = vunpack.c.l.b16 %v7432
  %v7497 = vunpack.c.h.b16 %v7432
  %v7498 = vunpack.c.l.b16 %v7433
  %v7499 = vunpack.c.h.b16 %v7433
  %v7500 = vunpack.c.l.b16 %v7434
  %v7501 = vunpack.c.h.b16 %v7434
  %v7502 = vunpack.c.l.b16 %v7435
  %v7503 = vunpack.c.h.b16 %v7435
  %v7504 = vunpack.c.l.b16 %v7436
  %v7505 = vunpack.c.h.b16 %v7436
  %v7506 = vunpack.c.l.b16 %v7437
  %v7507 = vunpack.c.h.b16 %v7437
  %v7508 = vunpack.c.l.b16 %v7438
  %v7509 = vunpack.c.h.b16 %v7438
  %v7510 = vunpack.c.l.b16 %v7439
  %v7511 = vunpack.c.h.b16 %v7439
  %v7512 = vunpack.c.l.b16 %v7440
  %v7513 = vunpack.c.h.b16 %v7440
  %v7514 = vunpack.c.l.b16 %v7441
  %v7515 = vunpack.c.h.b16 %v7441
  %v7516 = vunpack.c.l.b16 %v7442
  %v7517 = vunpack.c.h.b16 %v7442
  %v7518 = vunpack.c.l.b16 %v7443
  %v7519 = vunpack.c.h.b16 %v7443
  %v7520 = vunpack.c.l.b16 %v7444
  %v7521 = vunpack.c.h.b16 %v7444
  %v7522 = vunpack.c.l.b16 %v7445
  %v7523 = vunpack.c.h.b16 %v7445
  %v7524 = vunpack.c.l.b16 %v7446
  %v7525 = vunpack.c.h.b16 %v7446
  %v7526 = vunpack.c.l.b16 %v7447
  %v7527 = vunpack.c.h.b16 %v7447
  %v7528 = vunpack.c.l.b16 %v7448
  %v7529 = vunpack.c.h.b16 %v7448
  %v7530 = vunpack.c.l.b16 %v7449
  %v7531 = vunpack.c.h.b16 %v7449
  %v7532 = vunpack.c.l.b16 %v7450
  %v7533 = vunpack.c.h.b16 %v7450
  %v7534 = vunpack.c.l.b16 %v7451
  %v7535 = vunpack.c.h.b16 %v7451
  %v7536 = vunpack.c.l.b16 %v7452
  %v7537 = vunpack.c.h.b16 %v7452
  %v7538 = vunpack.c.l.b16 %v7453
  %v7539 = vunpack.c.h.b16 %v7453
  %v7540 = vunpack.c.l.b16 %v7454
  %v7541 = vunpack.c.h.b16 %v7454
  %v7542 = vunpack.c.l.b16 %v7455
  %v7543 = vunpack.c.h.b16 %v7455
  %v7544 = vunpack.c.l.b16 %v7456
  %v7545 = vunpack.c.h.b16 %v7456
  %v7546 = vunpack.c.l.b16 %v7457
  %v7547 = vunpack.c.h.b16 %v7457
  %v7548 = vunpack.c.l.b16 %v7458
  %v7549 = vunpack.c.h.b16 %v7458
  %v7550 = vunpack.c.l.b16 %v7459
  %v7551 = vunpack.c.h.b16 %v7459
  %v7552 = vunpack.c.l.b16 %v7460
  %v7553 = vunpack.c.h.b16 %v7460
  %v7554 = vunpack.c.l.b16 %v7461
  %v7555 = vunpack.c.h.b16 %v7461
  %v7556 = vunpack.c.l.b16 %v7462
  %v7557 = vunpack.c.h.b16 %v7462
  %v7558 = vunpack.c.l.b16 %v7463
  %v7559 = vunpack.c.h.b16 %v7463
  %v7560 = vpack.c.b16 %v7500, %v7496
  %v7561 = vpack.c.b16 %v7501, %v7497
  %v7562 = vpack.c.b16 %v7502, %v7498
  %v7563 = vpack.c.b16 %v7503, %v7499
  %v7564 = vpack.c.b16 %v7508, %v7504
  %v7565 = vpack.c.b16 %v7509, %v7505
  %v7566 = vpack.c.b16 %v7510, %v7506
  %v7567 = vpack.c.b16 %v7511, %v7507
  %v7568 = vpack.c.b16 %v7516, %v7512
  %v7569 = vpack.c.b16 %v7517, %v7513
  %v7570 = vpack.c.b16 %v7518, %v7514
  %v7571 = vpack.c.b16 %v7519, %v7515
  %v7572 = vpack.c.b16 %v7524, %v7520
  %v7573 = vpack.c.b16 %v7525, %v7521
  %v7574 = vpack.c.b16 %v7526, %v7522
  %v7575 = vpack.c.b16 %v7527, %v7523
  %v7576 = vpack.c.b16 %v7532, %v7528
  %v7577 = vpack.c.b16 %v7533, %v7529
  %v7578 = vpack.c.b16 %v7534, %v7530
  %v7579 = vpack.c.b16 %v7535, %v7531
  %v7580 = vpack.c.b16 %v7540, %v7536
  %v7581 = vpack.c.b16 %v7541, %v7537
  %v7582 = vpack.c.b16 %v7542, %v7538
  %v7583 = vpack.c.b16 %v7543, %v7539
  %v7584 = vpack.c.b16 %v7548, %v7544
  %v7585 = vpack.c.b16 %v7549, %v7545
  %v7586 = vpack.c.b16 %v7550, %v7546
  %v7587 = vpack.c.b16 %v7551, %v7547
  %v7588 = vpack.c.b16 %v7556, %v7552
  %v7589 = vpack.c.b16 %v7557, %v7553
  %v7590 = vpack.c.b16 %v7558, %v7554
  %v7591 = vpack.c.b16 %v7559, %v7555
  %7624 = vmatprep.subr.bf16.mxu0 %v7589
  %7625 = vmatpush1.bf16.msra.mxu0 %v7588
  %7626 = vmatprep.subr.bf16.mxu0 %v7585
  %7627 = vmatpush1.bf16.msra.mxu0 %v7584
  %7628 = vmatprep.subr.bf16.mxu0 %v7581
  %7629 = vmatpush1.bf16.msra.mxu0 %v7580
  %7630 = vmatprep.subr.bf16.mxu0 %v7577
  %7631 = vmatpush1.bf16.msra.mxu0 %v7576
  %7632 = vmatprep.subr.bf16.mxu0 %v7573
  %7633 = vmatpush1.bf16.msra.mxu0 %v7572
  %7634 = vmatprep.subr.bf16.mxu0 %v7569
  %7635 = vmatpush1.bf16.msra.mxu0 %v7568
  %7636 = vmatprep.subr.bf16.mxu0 %v7565
  %7637 = vmatpush1.bf16.msra.mxu0 %v7564
  %7638 = vmatprep.subr.bf16.mxu0 %v7561
  %7639 = vmatpush1.bf16.msra.mxu0 %v7560
  %7640 = vmatprep.subr.bf16.mxu0 0
  %7641 = vmatpush2.bf16.msra.mxu0 0
  %7642 = vmatprep.subr.bf16.mxu0 0
  %7643 = vmatpush2.bf16.msra.mxu0 0
  %7644 = vmatprep.subr.bf16.mxu0 0
  %7645 = vmatpush2.bf16.msra.mxu0 0
  %7646 = vmatprep.subr.bf16.mxu0 0
  %7647 = vmatpush2.bf16.msra.mxu0 0
  %7648 = vmatprep.subr.bf16.mxu0 0
  %7649 = vmatpush2.bf16.msra.mxu0 0
  %7650 = vmatprep.subr.bf16.mxu0 0
  %7651 = vmatpush2.bf16.msra.mxu0 0
  %7652 = vmatprep.subr.bf16.mxu0 0
  %7653 = vmatpush2.bf16.msra.mxu0 0
  %7654 = vmatprep.subr.bf16.mxu0 0
  %7655 = vmatpush2.bf16.msra.mxu0 0
  %7656 = vmatprep.mubr.bf16.mxu0 0
  %7657 = vmatmul.mubr.bf16.gmra.mxu0 %v7431
  %v7658 = vpop.f32.mrf.mxu0
  %v7659 = vadd.f32 0.0, %v7658
  %v7660 = vpop.f32.mrf.mxu0
  %v7661 = vadd.f32 0.0, %v7660
  %v7662 = vpop.f32.mrf.mxu0
  %v7663 = vpop.f32.mrf.mxu0
  %7664 = vdwg.mxu0
  %7665 = vmatprep.subr.bf16.mxu0 %v7591
  %7666 = vmatpush1.bf16.msra.mxu0 %v7590
  %7667 = vmatprep.subr.bf16.mxu0 %v7587
  %7668 = vmatpush1.bf16.msra.mxu0 %v7586
  %7669 = vmatprep.subr.bf16.mxu0 %v7583
  %7670 = vmatpush1.bf16.msra.mxu0 %v7582
  %7671 = vmatprep.subr.bf16.mxu0 %v7579
  %7672 = vmatpush1.bf16.msra.mxu0 %v7578
  %7673 = vmatprep.subr.bf16.mxu0 %v7575
  %7674 = vmatpush1.bf16.msra.mxu0 %v7574
  %7675 = vmatprep.subr.bf16.mxu0 %v7571
  %7676 = vmatpush1.bf16.msra.mxu0 %v7570
  %7677 = vmatprep.subr.bf16.mxu0 %v7567
  %7678 = vmatpush1.bf16.msra.mxu0 %v7566
  %7679 = vmatprep.subr.bf16.mxu0 %v7563
  %7680 = vmatpush1.bf16.msra.mxu0 %v7562
  %7681 = vmatprep.subr.bf16.mxu0 0
  %7682 = vmatpush2.bf16.msra.mxu0 0
  %7683 = vmatprep.subr.bf16.mxu0 0
  %7684 = vmatpush2.bf16.msra.mxu0 0
  %7685 = vmatprep.subr.bf16.mxu0 0
  %7686 = vmatpush2.bf16.msra.mxu0 0
  %7687 = vmatprep.subr.bf16.mxu0 0
  %7688 = vmatpush2.bf16.msra.mxu0 0
  %7689 = vmatprep.subr.bf16.mxu0 0
  %7690 = vmatpush2.bf16.msra.mxu0 0
  %7691 = vmatprep.subr.bf16.mxu0 0
  %7692 = vmatpush2.bf16.msra.mxu0 0
  %7693 = vmatprep.subr.bf16.mxu0 0
  %7694 = vmatpush2.bf16.msra.mxu0 0
  %7695 = vmatprep.subr.bf16.mxu0 0
  %7696 = vmatpush2.bf16.msra.mxu0 0
  %7697 = vmatprep.mubr.bf16.mxu0 0
  %7698 = vmatmul.mubr.bf16.gmra.mxu0 %v7431
  %v7699 = vpop.f32.mrf.mxu0
  %v7700 = vadd.f32 0.0, %v7699
  %v7701 = vpop.f32.mrf.mxu0
  %v7702 = vadd.f32 0.0, %v7701
  %v7703 = vpop.f32.mrf.mxu0
  %v7704 = vpop.f32.mrf.mxu0
  %7705 = vdwg.mxu0
  %v7710 = vrot.slane %v7659, 6
  %v7711 = vrot.slane %v7661, 6
  %v7712 = vrot.slane %v7700, 6
  %v7713 = vrot.slane %v7702, 6
  %v7714 = vrot.slane %v7659, 7
  %v7715 = vrot.slane %v7661, 7
  %v7716 = vrot.slane %v7700, 7
  %v7717 = vrot.slane %v7702, 7
  %v7718 = vrot.slane %v7659, 1
  %v7719 = vrot.slane %v7661, 1
  %v7720 = vrot.slane %v7700, 1
  %v7721 = vrot.slane %v7702, 1
  %v7722 = vrot.slane %v7659, 2
  %v7723 = vrot.slane %v7661, 2
  %v7724 = vrot.slane %v7700, 2
  %v7725 = vrot.slane %v7702, 2
  %v7726 = vrot.slane %v7659, 3
  %v7727 = vrot.slane %v7661, 3
  %v7728 = vrot.slane %v7700, 3
  %v7729 = vrot.slane %v7702, 3
  %v7730 = vrot.slane %v7659, 4
  %v7731 = vrot.slane %v7661, 4
  %v7732 = vrot.slane %v7700, 4
  %v7733 = vrot.slane %v7702, 4
  %v7734 = vrot.slane %v7659, 5
  %v7735 = vrot.slane %v7661, 5
  %v7736 = vrot.slane %v7700, 5
  %v7737 = vrot.slane %v7702, 5
  %v7770 = vadd.f32 %v7399, %v7710
  %v7771 = vadd.f32 %v7400, %v7711
  %v7772 = vadd.f32 %v7401, %v7712
  %v7773 = vadd.f32 %v7402, %v7713
  %v7774 = vadd.f32 %v7403, %v7714
  %v7775 = vadd.f32 %v7404, %v7715
  %v7776 = vadd.f32 %v7405, %v7716
  %v7777 = vadd.f32 %v7406, %v7717
  %v7778 = vadd.f32 %v7407, %v7659
  %v7779 = vadd.f32 %v7408, %v7661
  %v7780 = vadd.f32 %v7409, %v7700
  %v7781 = vadd.f32 %v7410, %v7702
  %v7782 = vadd.f32 %v7411, %v7718
  %v7783 = vadd.f32 %v7412, %v7719
  %v7784 = vadd.f32 %v7413, %v7720
  %v7785 = vadd.f32 %v7414, %v7721
  %v7786 = vadd.f32 %v7415, %v7722
  %v7787 = vadd.f32 %v7416, %v7723
  %v7788 = vadd.f32 %v7417, %v7724
  %v7789 = vadd.f32 %v7418, %v7725
  %v7790 = vadd.f32 %v7419, %v7726
  %v7791 = vadd.f32 %v7420, %v7727
  %v7792 = vadd.f32 %v7421, %v7728
  %v7793 = vadd.f32 %v7422, %v7729
  %v7794 = vadd.f32 %v7423, %v7730
  %v7795 = vadd.f32 %v7424, %v7731
  %v7796 = vadd.f32 %v7425, %v7732
  %v7797 = vadd.f32 %v7426, %v7733
  %v7798 = vadd.f32 %v7427, %v7734
  %v7799 = vadd.f32 %v7428, %v7735
  %v7800 = vadd.f32 %v7429, %v7736
  %v7801 = vadd.f32 %v7430, %v7737
  %v7802 = vxor.u32 %v7770, 2147483648
  %v7803 = vxor.u32 %v7771, 2147483648
  %v7804 = vxor.u32 %v7772, 2147483648
  %v7805 = vxor.u32 %v7774, 2147483648
  %v7806 = vxor.u32 %v7775, 2147483648
  %v7807 = vxor.u32 %v7776, 2147483648
  %v7808 = vxor.u32 %v7778, 2147483648
  %v7809 = vxor.u32 %v7779, 2147483648
  %v7810 = vxor.u32 %v7780, 2147483648
  %v7811 = vxor.u32 %v7782, 2147483648
  %v7812 = vxor.u32 %v7783, 2147483648
  %v7813 = vxor.u32 %v7784, 2147483648
  %v7814 = vxor.u32 %v7786, 2147483648
  %v7815 = vxor.u32 %v7787, 2147483648
  %v7816 = vxor.u32 %v7788, 2147483648
  %v7817 = vxor.u32 %v7790, 2147483648
  %v7818 = vxor.u32 %v7791, 2147483648
  %v7819 = vxor.u32 %v7792, 2147483648
  %v7820 = vxor.u32 %v7794, 2147483648
  %v7821 = vxor.u32 %v7795, 2147483648
  %v7822 = vxor.u32 %v7796, 2147483648
  %v7823 = vxor.u32 %v7798, 2147483648
  %v7824 = vxor.u32 %v7799, 2147483648
  %v7825 = vxor.u32 %v7800, 2147483648
  %v7826 = vmul.f32 %v7802, 1.442695
  %v7827 = vpow.pop %v7826
  %v7828 = vmul.f32 %v7803, 1.442695
  %v7829 = vpow.pop %v7828
  %v7830 = vmul.f32 %v7804, 1.442695
  %v7831 = vpow.pop %v7830
  %v7832 = vmul.f32 %v7805, 1.442695
  %v7833 = vpow.pop %v7832
  %v7834 = vmul.f32 %v7806, 1.442695
  %v7835 = vpow.pop %v7834
  %v7836 = vmul.f32 %v7807, 1.442695
  %v7837 = vpow.pop %v7836
  %v7838 = vmul.f32 %v7808, 1.442695
  %v7839 = vpow.pop %v7838
  %v7840 = vmul.f32 %v7809, 1.442695
  %v7841 = vpow.pop %v7840
  %v7842 = vmul.f32 %v7810, 1.442695
  %v7843 = vpow.pop %v7842
  %v7844 = vmul.f32 %v7811, 1.442695
  %v7845 = vpow.pop %v7844
  %v7846 = vmul.f32 %v7812, 1.442695
  %v7847 = vpow.pop %v7846
  %v7848 = vmul.f32 %v7813, 1.442695
  %v7849 = vpow.pop %v7848
  %v7850 = vmul.f32 %v7814, 1.442695
  %v7851 = vpow.pop %v7850
  %v7852 = vmul.f32 %v7815, 1.442695
  %v7853 = vpow.pop %v7852
  %v7854 = vmul.f32 %v7816, 1.442695
  %v7855 = vpow.pop %v7854
  %v7856 = vmul.f32 %v7817, 1.442695
  %v7857 = vpow.pop %v7856
  %v7858 = vmul.f32 %v7818, 1.442695
  %v7859 = vpow.pop %v7858
  %v7860 = vmul.f32 %v7819, 1.442695
  %v7861 = vpow.pop %v7860
  %v7862 = vmul.f32 %v7820, 1.442695
  %v7863 = vpow.pop %v7862
  %v7864 = vmul.f32 %v7821, 1.442695
  %v7865 = vpow.pop %v7864
  %v7866 = vmul.f32 %v7822, 1.442695
  %v7867 = vpow.pop %v7866
  %v7868 = vmul.f32 %v7823, 1.442695
  %v7869 = vpow.pop %v7868
  %v7870 = vmul.f32 %v7824, 1.442695
  %v7871 = vpow.pop %v7870
  %v7872 = vmul.f32 %v7825, 1.442695
  %v7873 = vpow.pop %v7872
  %v7874 = vadd.f32 %v7827, 1.0
  %v7875 = vadd.f32 %v7829, 1.0
  %v7876 = vadd.f32 %v7831, 1.0
  %v7877 = vadd.f32 %v7833, 1.0
  %v7878 = vadd.f32 %v7835, 1.0
  %v7879 = vadd.f32 %v7837, 1.0
  %v7880 = vadd.f32 %v7839, 1.0
  %v7881 = vadd.f32 %v7841, 1.0
  %v7882 = vadd.f32 %v7843, 1.0
  %v7883 = vadd.f32 %v7845, 1.0
  %v7884 = vadd.f32 %v7847, 1.0
  %v7885 = vadd.f32 %v7849, 1.0
  %v7886 = vadd.f32 %v7851, 1.0
  %v7887 = vadd.f32 %v7853, 1.0
  %v7888 = vadd.f32 %v7855, 1.0
  %v7889 = vadd.f32 %v7857, 1.0
  %v7890 = vadd.f32 %v7859, 1.0
  %v7891 = vadd.f32 %v7861, 1.0
  %v7892 = vadd.f32 %v7863, 1.0
  %v7893 = vadd.f32 %v7865, 1.0
  %v7894 = vadd.f32 %v7867, 1.0
  %v7895 = vadd.f32 %v7869, 1.0
  %v7896 = vadd.f32 %v7871, 1.0
  %v7897 = vadd.f32 %v7873, 1.0
  %v7898 = vrcp.pop %v7874
  %v7899 = vmul.f32 1.0, %v7898
  %v7900 = vrcp.pop %v7875
  %v7901 = vmul.f32 1.0, %v7900
  %v7902 = vrcp.pop %v7876
  %v7903 = vmul.f32 1.0, %v7902
  %v7904 = vrcp.pop %v7877
  %v7905 = vmul.f32 1.0, %v7904
  %v7906 = vrcp.pop %v7878
  %v7907 = vmul.f32 1.0, %v7906
  %v7908 = vrcp.pop %v7879
  %v7909 = vmul.f32 1.0, %v7908
  %v7910 = vrcp.pop %v7880
  %v7911 = vmul.f32 1.0, %v7910
  %v7912 = vrcp.pop %v7881
  %v7913 = vmul.f32 1.0, %v7912
  %v7914 = vrcp.pop %v7882
  %v7915 = vmul.f32 1.0, %v7914
  %v7916 = vrcp.pop %v7883
  %v7917 = vmul.f32 1.0, %v7916
  %v7918 = vrcp.pop %v7884
  %v7919 = vmul.f32 1.0, %v7918
  %v7920 = vrcp.pop %v7885
  %v7921 = vmul.f32 1.0, %v7920
  %v7922 = vrcp.pop %v7886
  %v7923 = vmul.f32 1.0, %v7922
  %v7924 = vrcp.pop %v7887
  %v7925 = vmul.f32 1.0, %v7924
  %v7926 = vrcp.pop %v7888
  %v7927 = vmul.f32 1.0, %v7926
  %v7928 = vrcp.pop %v7889
  %v7929 = vmul.f32 1.0, %v7928
  %v7930 = vrcp.pop %v7890
  %v7931 = vmul.f32 1.0, %v7930
  %v7932 = vrcp.pop %v7891
  %v7933 = vmul.f32 1.0, %v7932
  %v7934 = vrcp.pop %v7892
  %v7935 = vmul.f32 1.0, %v7934
  %v7936 = vrcp.pop %v7893
  %v7937 = vmul.f32 1.0, %v7936
  %v7938 = vrcp.pop %v7894
  %v7939 = vmul.f32 1.0, %v7938
  %v7940 = vrcp.pop %v7895
  %v7941 = vmul.f32 1.0, %v7940
  %v7942 = vrcp.pop %v7896
  %v7943 = vmul.f32 1.0, %v7942
  %v7944 = vrcp.pop %v7897
  %v7945 = vmul.f32 1.0, %v7944
  %v7946 = vtanh.pop %v7773
  %v7947 = vtanh.pop %v7777
  %v7948 = vtanh.pop %v7781
  %v7949 = vtanh.pop %v7785
  %v7950 = vtanh.pop %v7789
  %v7951 = vtanh.pop %v7793
  %v7952 = vtanh.pop %v7797
  %v7953 = vtanh.pop %v7801
  %v7954 = vld [vmem:[#allocation3] sm:$0xff]
  %v7956 = vrot.slane %v7954, 6
  %v7957 = vrot.slane %v7954, 7
  %v7958 = vrot.slane %v7954, 1
  %v7959 = vrot.slane %v7954, 2
  %v7960 = vrot.slane %v7954, 3
  %v7961 = vrot.slane %v7954, 4
  %v7962 = vrot.slane %v7954, 5
  %v7971 = vmul.f32 %v7901, %v7956
  %v7972 = vmul.f32 %v7907, %v7957
  %v7973 = vmul.f32 %v7913, %v7954
  %v7974 = vmul.f32 %v7919, %v7958
  %v7975 = vmul.f32 %v7925, %v7959
  %v7976 = vmul.f32 %v7931, %v7960
  %v7977 = vmul.f32 %v7937, %v7961
  %v7978 = vmul.f32 %v7943, %v7962
  %v7979 = vmul.f32 %v7899, %v7946
  %v7980 = vmul.f32 %v7905, %v7947
  %v7981 = vmul.f32 %v7911, %v7948
  %v7982 = vmul.f32 %v7917, %v7949
  %v7983 = vmul.f32 %v7923, %v7950
  %v7984 = vmul.f32 %v7929, %v7951
  %v7985 = vmul.f32 %v7935, %v7952
  %v7986 = vmul.f32 %v7941, %v7953
  %v7987 = vadd.f32 %v7971, %v7979
  %v7988 = vadd.f32 %v7972, %v7980
  %v7989 = vadd.f32 %v7973, %v7981
  %v7990 = vadd.f32 %v7974, %v7982
  %v7991 = vadd.f32 %v7975, %v7983
  %v7992 = vadd.f32 %v7976, %v7984
  %v7993 = vadd.f32 %v7977, %v7985
  %v7994 = vadd.f32 %v7978, %v7986
  %v7995 = vtanh.pop %v7987
  %v7996 = vtanh.pop %v7988
  %v7997 = vtanh.pop %v7989
  %v7998 = vtanh.pop %v7990
  %v7999 = vtanh.pop %v7991
  %v8000 = vtanh.pop %v7992
  %v8001 = vtanh.pop %v7993
  %v8002 = vtanh.pop %v7994
  %v8003 = vmul.f32 %v7903, %v7995
  %v8004 = vmul.f32 %v7909, %v7996
  %v8005 = vmul.f32 %v7915, %v7997
  %v8006 = vmul.f32 %v7921, %v7998
  %v8007 = vmul.f32 %v7927, %v7999
  %v8008 = vmul.f32 %v7933, %v8000
  %v8009 = vmul.f32 %v7939, %v8001
  %v8010 = vmul.f32 %v7945, %v8002
  %v8011 = vpack.c.bf16 %v8003, %v8003
  %v8012 = vpack.c.bf16 %v8004, %v8004
  %v8013 = vpack.c.bf16 %v8005, %v8005
  %v8014 = vpack.c.bf16 %v8006, %v8006
  %v8015 = vpack.c.bf16 %v8007, %v8007
  %v8016 = vpack.c.bf16 %v8008, %v8008
  %v8017 = vpack.c.bf16 %v8009, %v8009
  %v8018 = vpack.c.bf16 %v8010, %v8010
  %v8027 = vrot.slane %v7988, 7
  %v8028 = vsel %vm669, %v8027, %v7987
  %v8029 = vrot.slane %v7989, 6
  %v8030 = vsel %vm672, %v8029, %v8028
  %v8031 = vrot.slane %v7990, 5
  %v8032 = vsel %vm675, %v8031, %v8030
  %v8033 = vrot.slane %v7991, 4
  %v8034 = vsel %vm678, %v8033, %v8032
  %v8035 = vrot.slane %v7992, 3
  %v8036 = vsel %vm681, %v8035, %v8034
  %v8037 = vrot.slane %v7993, 2
  %v8038 = vrot.slane %v7994, 1
  %v8039 = vsel %vm663, %v8038, %v8037
  %8042 = vst [vmem:[#allocation3 - $0x2] sm:$0xfc] %v8036
  %8043 = vst [vmem:[#allocation3 + $0x6] sm:$0x3] %v8039
  %v8052 = vunpack.c.l.b16 %v8011
  %v8053 = vunpack.c.l.b16 %v8012
  %v8054 = vunpack.c.l.b16 %v8013
  %v8055 = vunpack.c.l.b16 %v8014
  %v8056 = vunpack.c.l.b16 %v8015
  %v8057 = vunpack.c.l.b16 %v8016
  %v8058 = vunpack.c.l.b16 %v8017
  %v8059 = vunpack.c.l.b16 %v8018
  %v8060 = vpack.c.b16 %v8052, %v8052
  %v8061 = vpack.c.b16 %v8053, %v8053
  %v8062 = vpack.c.b16 %v8054, %v8054
  %v8063 = vpack.c.b16 %v8055, %v8055
  %v8064 = vpack.c.b16 %v8056, %v8056
  %v8065 = vpack.c.b16 %v8057, %v8057
  %v8066 = vpack.c.b16 %v8058, %v8058
  %v8067 = vpack.c.b16 %v8059, %v8059
  %v8068 = vunpack.c.l.b16 %v8060
  %v8069 = vunpack.c.l.b16 %v8061
  %v8070 = vunpack.c.l.b16 %v8062
  %v8071 = vunpack.c.l.b16 %v8063
  %v8072 = vunpack.c.l.b16 %v8064
  %v8073 = vunpack.c.l.b16 %v8065
  %v8074 = vunpack.c.l.b16 %v8066
  %v8075 = vunpack.c.l.b16 %v8067
  %v8076 = vrot.slane %v8068, 2
  %v8077 = vrot.slane %v8069, 1
  %v8078 = vsel %vm663, %v8077, %v8076
  %v8079 = vsel %vm666, %v8070, %v8078
  %v8080 = vrot.slane %v8071, 7
  %v8081 = vsel %vm669, %v8080, %v8079
  %v8082 = vrot.slane %v8072, 6
  %v8083 = vsel %vm672, %v8082, %v8081
  %v8084 = vrot.slane %v8073, 5
  %v8085 = vsel %vm675, %v8084, %v8083
  %v8086 = vrot.slane %v8074, 4
  %v8087 = vsel %vm678, %v8086, %v8085
  %v8088 = vrot.slane %v8075, 3
  %v8089 = vsel %vm681, %v8088, %v8087
  %v8090 = vpack.c.b16 %v8089, %v8089
  %8092 = vst [vmem:[#allocation2] sm:$0xf] %v8090
  %v8093 = vld [vmem:[%s2 + $0x4] sm:$0x2]
  %v8094 = vsel %vm2209, %v8011, %v8093
  %8095 = vst [vmem:[%s2 + $0x4] sm:$0x2] %v8094
  %v8096 = vld [vmem:[%s2 + $0xc] sm:$0x2]
  %v8097 = vsel %vm2209, %v8012, %v8096
  %8098 = vst [vmem:[%s2 + $0xc] sm:$0x2] %v8097
  %v8099 = vld [vmem:[%s2 + $0x14] sm:$0x2]
  %v8100 = vsel %vm2209, %v8013, %v8099
  %8101 = vst [vmem:[%s2 + $0x14] sm:$0x2] %v8100
  %v8102 = vld [vmem:[%s2 + $0x1c] sm:$0x2]
  %v8103 = vsel %vm2209, %v8014, %v8102
  %8104 = vst [vmem:[%s2 + $0x1c] sm:$0x2] %v8103
  %v8105 = vld [vmem:[%s2 + $0x24] sm:$0x2]
  %v8106 = vsel %vm2209, %v8015, %v8105
  %8107 = vst [vmem:[%s2 + $0x24] sm:$0x2] %v8106
  %v8108 = vld [vmem:[%s2 + $0x2c] sm:$0x2]
  %v8109 = vsel %vm2209, %v8016, %v8108
  %8110 = vst [vmem:[%s2 + $0x2c] sm:$0x2] %v8109
  %v8111 = vld [vmem:[%s2 + $0x34] sm:$0x2]
  %v8112 = vsel %vm2209, %v8017, %v8111
  %8113 = vst [vmem:[%s2 + $0x34] sm:$0x2] %v8112
  %v8114 = vld [vmem:[%s2 + $0x3c] sm:$0x2]
  %v8115 = vsel %vm2209, %v8018, %v8114
  %8116 = vst [vmem:[%s2 + $0x3c] sm:$0x2] %v8115
  %v8117 = vld [vmem:[%s0 + $0x10] sm:$0x22]
  %v8118 = vld [vmem:[%s0 + $0x18] sm:$0x22]
  %v8119 = vld [vmem:[%s0 + $0x30] sm:$0x22]
  %v8120 = vld [vmem:[%s0 + $0x38] sm:$0x22]
  %v8121 = vld [vmem:[%s0 + $0x50] sm:$0x22]
  %v8122 = vld [vmem:[%s0 + $0x58] sm:$0x22]
  %v8123 = vld [vmem:[%s0 + $0x70] sm:$0x22]
  %v8124 = vld [vmem:[%s0 + $0x78] sm:$0x22]
  %v8125 = vld [vmem:[%s0 + $0x90] sm:$0x22]
  %v8126 = vld [vmem:[%s0 + $0x98] sm:$0x22]
  %v8127 = vld [vmem:[%s0 + $0xb0] sm:$0x22]
  %v8128 = vld [vmem:[%s0 + $0xb8] sm:$0x22]
  %v8129 = vld [vmem:[%s0 + $0xd0] sm:$0x22]
  %v8130 = vld [vmem:[%s0 + $0xd8] sm:$0x22]
  %v8131 = vld [vmem:[%s0 + $0xf0] sm:$0x22]
  %v8132 = vld [vmem:[%s0 + $0xf8] sm:$0x22]
  %v8133 = vunpack.c.l.bf16 %v8117
  %v8134 = vunpack.c.h.bf16 %v8117
  %v8135 = vunpack.c.l.bf16 %v8118
  %v8136 = vunpack.c.h.bf16 %v8118
  %v8137 = vunpack.c.l.bf16 %v8119
  %v8138 = vunpack.c.h.bf16 %v8119
  %v8139 = vunpack.c.l.bf16 %v8120
  %v8140 = vunpack.c.h.bf16 %v8120
  %v8141 = vunpack.c.l.bf16 %v8121
  %v8142 = vunpack.c.h.bf16 %v8121
  %v8143 = vunpack.c.l.bf16 %v8122
  %v8144 = vunpack.c.h.bf16 %v8122
  %v8145 = vunpack.c.l.bf16 %v8123
  %v8146 = vunpack.c.h.bf16 %v8123
  %v8147 = vunpack.c.l.bf16 %v8124
  %v8148 = vunpack.c.h.bf16 %v8124
  %v8149 = vunpack.c.l.bf16 %v8125
  %v8150 = vunpack.c.h.bf16 %v8125
  %v8151 = vunpack.c.l.bf16 %v8126
  %v8152 = vunpack.c.h.bf16 %v8126
  %v8153 = vunpack.c.l.bf16 %v8127
  %v8154 = vunpack.c.h.bf16 %v8127
  %v8155 = vunpack.c.l.bf16 %v8128
  %v8156 = vunpack.c.h.bf16 %v8128
  %v8157 = vunpack.c.l.bf16 %v8129
  %v8158 = vunpack.c.h.bf16 %v8129
  %v8159 = vunpack.c.l.bf16 %v8130
  %v8160 = vunpack.c.h.bf16 %v8130
  %v8161 = vunpack.c.l.bf16 %v8131
  %v8162 = vunpack.c.h.bf16 %v8131
  %v8163 = vunpack.c.l.bf16 %v8132
  %v8164 = vunpack.c.h.bf16 %v8132
  %v8165 = vld [vmem:[#allocation2] sm:$0xf]
  %v8166 = vld [vmem:[%s1] sm:$0xff]
  %v8167 = vld [vmem:[%s1 + $0x8] sm:$0xff]
  %v8168 = vld [vmem:[%s1 + $0x10] sm:$0xff]
  %v8169 = vld [vmem:[%s1 + $0x18] sm:$0xff]
  %v8170 = vld [vmem:[%s1 + $0x20] sm:$0xff]
  %v8171 = vld [vmem:[%s1 + $0x28] sm:$0xff]
  %v8172 = vld [vmem:[%s1 + $0x30] sm:$0xff]
  %v8173 = vld [vmem:[%s1 + $0x38] sm:$0xff]
  %v8174 = vld [vmem:[%s1 + $0x40] sm:$0xff]
  %v8175 = vld [vmem:[%s1 + $0x48] sm:$0xff]
  %v8176 = vld [vmem:[%s1 + $0x50] sm:$0xff]
  %v8177 = vld [vmem:[%s1 + $0x58] sm:$0xff]
  %v8178 = vld [vmem:[%s1 + $0x60] sm:$0xff]
  %v8179 = vld [vmem:[%s1 + $0x68] sm:$0xff]
  %v8180 = vld [vmem:[%s1 + $0x70] sm:$0xff]
  %v8181 = vld [vmem:[%s1 + $0x78] sm:$0xff]
  %v8182 = vld [vmem:[%s1 + $0x80] sm:$0xff]
  %v8183 = vld [vmem:[%s1 + $0x88] sm:$0xff]
  %v8184 = vld [vmem:[%s1 + $0x90] sm:$0xff]
  %v8185 = vld [vmem:[%s1 + $0x98] sm:$0xff]
  %v8186 = vld [vmem:[%s1 + $0xa0] sm:$0xff]
  %v8187 = vld [vmem:[%s1 + $0xa8] sm:$0xff]
  %v8188 = vld [vmem:[%s1 + $0xb0] sm:$0xff]
  %v8189 = vld [vmem:[%s1 + $0xb8] sm:$0xff]
  %v8190 = vld [vmem:[%s1 + $0xc0] sm:$0xff]
  %v8191 = vld [vmem:[%s1 + $0xc8] sm:$0xff]
  %v8192 = vld [vmem:[%s1 + $0xd0] sm:$0xff]
  %v8193 = vld [vmem:[%s1 + $0xd8] sm:$0xff]
  %v8194 = vld [vmem:[%s1 + $0xe0] sm:$0xff]
  %v8195 = vld [vmem:[%s1 + $0xe8] sm:$0xff]
  %v8196 = vld [vmem:[%s1 + $0xf0] sm:$0xff]
  %v8197 = vld [vmem:[%s1 + $0xf8] sm:$0xff]
  %v8230 = vunpack.c.l.b16 %v8166
  %v8231 = vunpack.c.h.b16 %v8166
  %v8232 = vunpack.c.l.b16 %v8167
  %v8233 = vunpack.c.h.b16 %v8167
  %v8234 = vunpack.c.l.b16 %v8168
  %v8235 = vunpack.c.h.b16 %v8168
  %v8236 = vunpack.c.l.b16 %v8169
  %v8237 = vunpack.c.h.b16 %v8169
  %v8238 = vunpack.c.l.b16 %v8170
  %v8239 = vunpack.c.h.b16 %v8170
  %v8240 = vunpack.c.l.b16 %v8171
  %v8241 = vunpack.c.h.b16 %v8171
  %v8242 = vunpack.c.l.b16 %v8172
  %v8243 = vunpack.c.h.b16 %v8172
  %v8244 = vunpack.c.l.b16 %v8173
  %v8245 = vunpack.c.h.b16 %v8173
  %v8246 = vunpack.c.l.b16 %v8174
  %v8247 = vunpack.c.h.b16 %v8174
  %v8248 = vunpack.c.l.b16 %v8175
  %v8249 = vunpack.c.h.b16 %v8175
  %v8250 = vunpack.c.l.b16 %v8176
  %v8251 = vunpack.c.h.b16 %v8176
  %v8252 = vunpack.c.l.b16 %v8177
  %v8253 = vunpack.c.h.b16 %v8177
  %v8254 = vunpack.c.l.b16 %v8178
  %v8255 = vunpack.c.h.b16 %v8178
  %v8256 = vunpack.c.l.b16 %v8179
  %v8257 = vunpack.c.h.b16 %v8179
  %v8258 = vunpack.c.l.b16 %v8180
  %v8259 = vunpack.c.h.b16 %v8180
  %v8260 = vunpack.c.l.b16 %v8181
  %v8261 = vunpack.c.h.b16 %v8181
  %v8262 = vunpack.c.l.b16 %v8182
  %v8263 = vunpack.c.h.b16 %v8182
  %v8264 = vunpack.c.l.b16 %v8183
  %v8265 = vunpack.c.h.b16 %v8183
  %v8266 = vunpack.c.l.b16 %v8184
  %v8267 = vunpack.c.h.b16 %v8184
  %v8268 = vunpack.c.l.b16 %v8185
  %v8269 = vunpack.c.h.b16 %v8185
  %v8270 = vunpack.c.l.b16 %v8186
  %v8271 = vunpack.c.h.b16 %v8186
  %v8272 = vunpack.c.l.b16 %v8187
  %v8273 = vunpack.c.h.b16 %v8187
  %v8274 = vunpack.c.l.b16 %v8188
  %v8275 = vunpack.c.h.b16 %v8188
  %v8276 = vunpack.c.l.b16 %v8189
  %v8277 = vunpack.c.h.b16 %v8189
  %v8278 = vunpack.c.l.b16 %v8190
  %v8279 = vunpack.c.h.b16 %v8190
  %v8280 = vunpack.c.l.b16 %v8191
  %v8281 = vunpack.c.h.b16 %v8191
  %v8282 = vunpack.c.l.b16 %v8192
  %v8283 = vunpack.c.h.b16 %v8192
  %v8284 = vunpack.c.l.b16 %v8193
  %v8285 = vunpack.c.h.b16 %v8193
  %v8286 = vunpack.c.l.b16 %v8194
  %v8287 = vunpack.c.h.b16 %v8194
  %v8288 = vunpack.c.l.b16 %v8195
  %v8289 = vunpack.c.h.b16 %v8195
  %v8290 = vunpack.c.l.b16 %v8196
  %v8291 = vunpack.c.h.b16 %v8196
  %v8292 = vunpack.c.l.b16 %v8197
  %v8293 = vunpack.c.h.b16 %v8197
  %v8294 = vpack.c.b16 %v8234, %v8230
  %v8295 = vpack.c.b16 %v8235, %v8231
  %v8296 = vpack.c.b16 %v8236, %v8232
  %v8297 = vpack.c.b16 %v8237, %v8233
  %v8298 = vpack.c.b16 %v8242, %v8238
  %v8299 = vpack.c.b16 %v8243, %v8239
  %v8300 = vpack.c.b16 %v8244, %v8240
  %v8301 = vpack.c.b16 %v8245, %v8241
  %v8302 = vpack.c.b16 %v8250, %v8246
  %v8303 = vpack.c.b16 %v8251, %v8247
  %v8304 = vpack.c.b16 %v8252, %v8248
  %v8305 = vpack.c.b16 %v8253, %v8249
  %v8306 = vpack.c.b16 %v8258, %v8254
  %v8307 = vpack.c.b16 %v8259, %v8255
  %v8308 = vpack.c.b16 %v8260, %v8256
  %v8309 = vpack.c.b16 %v8261, %v8257
  %v8310 = vpack.c.b16 %v8266, %v8262
  %v8311 = vpack.c.b16 %v8267, %v8263
  %v8312 = vpack.c.b16 %v8268, %v8264
  %v8313 = vpack.c.b16 %v8269, %v8265
  %v8314 = vpack.c.b16 %v8274, %v8270
  %v8315 = vpack.c.b16 %v8275, %v8271
  %v8316 = vpack.c.b16 %v8276, %v8272
  %v8317 = vpack.c.b16 %v8277, %v8273
  %v8318 = vpack.c.b16 %v8282, %v8278
  %v8319 = vpack.c.b16 %v8283, %v8279
  %v8320 = vpack.c.b16 %v8284, %v8280
  %v8321 = vpack.c.b16 %v8285, %v8281
  %v8322 = vpack.c.b16 %v8290, %v8286
  %v8323 = vpack.c.b16 %v8291, %v8287
  %v8324 = vpack.c.b16 %v8292, %v8288
  %v8325 = vpack.c.b16 %v8293, %v8289
  %8358 = vmatprep.subr.bf16.mxu0 %v8323
  %8359 = vmatpush1.bf16.msra.mxu0 %v8322
  %8360 = vmatprep.subr.bf16.mxu0 %v8319
  %8361 = vmatpush1.bf16.msra.mxu0 %v8318
  %8362 = vmatprep.subr.bf16.mxu0 %v8315
  %8363 = vmatpush1.bf16.msra.mxu0 %v8314
  %8364 = vmatprep.subr.bf16.mxu0 %v8311
  %8365 = vmatpush1.bf16.msra.mxu0 %v8310
  %8366 = vmatprep.subr.bf16.mxu0 %v8307
  %8367 = vmatpush1.bf16.msra.mxu0 %v8306
  %8368 = vmatprep.subr.bf16.mxu0 %v8303
  %8369 = vmatpush1.bf16.msra.mxu0 %v8302
  %8370 = vmatprep.subr.bf16.mxu0 %v8299
  %8371 = vmatpush1.bf16.msra.mxu0 %v8298
  %8372 = vmatprep.subr.bf16.mxu0 %v8295
  %8373 = vmatpush1.bf16.msra.mxu0 %v8294
  %8374 = vmatprep.subr.bf16.mxu0 0
  %8375 = vmatpush2.bf16.msra.mxu0 0
  %8376 = vmatprep.subr.bf16.mxu0 0
  %8377 = vmatpush2.bf16.msra.mxu0 0
  %8378 = vmatprep.subr.bf16.mxu0 0
  %8379 = vmatpush2.bf16.msra.mxu0 0
  %8380 = vmatprep.subr.bf16.mxu0 0
  %8381 = vmatpush2.bf16.msra.mxu0 0
  %8382 = vmatprep.subr.bf16.mxu0 0
  %8383 = vmatpush2.bf16.msra.mxu0 0
  %8384 = vmatprep.subr.bf16.mxu0 0
  %8385 = vmatpush2.bf16.msra.mxu0 0
  %8386 = vmatprep.subr.bf16.mxu0 0
  %8387 = vmatpush2.bf16.msra.mxu0 0
  %8388 = vmatprep.subr.bf16.mxu0 0
  %8389 = vmatpush2.bf16.msra.mxu0 0
  %8390 = vmatprep.mubr.bf16.mxu0 0
  %8391 = vmatmul.mubr.bf16.gmra.mxu0 %v8165
  %v8392 = vpop.f32.mrf.mxu0
  %v8393 = vadd.f32 0.0, %v8392
  %v8394 = vpop.f32.mrf.mxu0
  %v8395 = vadd.f32 0.0, %v8394
  %v8396 = vpop.f32.mrf.mxu0
  %v8397 = vpop.f32.mrf.mxu0
  %8398 = vdwg.mxu0
  %8399 = vmatprep.subr.bf16.mxu0 %v8325
  %8400 = vmatpush1.bf16.msra.mxu0 %v8324
  %8401 = vmatprep.subr.bf16.mxu0 %v8321
  %8402 = vmatpush1.bf16.msra.mxu0 %v8320
  %8403 = vmatprep.subr.bf16.mxu0 %v8317
  %8404 = vmatpush1.bf16.msra.mxu0 %v8316
  %8405 = vmatprep.subr.bf16.mxu0 %v8313
  %8406 = vmatpush1.bf16.msra.mxu0 %v8312
  %8407 = vmatprep.subr.bf16.mxu0 %v8309
  %8408 = vmatpush1.bf16.msra.mxu0 %v8308
  %8409 = vmatprep.subr.bf16.mxu0 %v8305
  %8410 = vmatpush1.bf16.msra.mxu0 %v8304
  %8411 = vmatprep.subr.bf16.mxu0 %v8301
  %8412 = vmatpush1.bf16.msra.mxu0 %v8300
  %8413 = vmatprep.subr.bf16.mxu0 %v8297
  %8414 = vmatpush1.bf16.msra.mxu0 %v8296
  %8415 = vmatprep.subr.bf16.mxu0 0
  %8416 = vmatpush2.bf16.msra.mxu0 0
  %8417 = vmatprep.subr.bf16.mxu0 0
  %8418 = vmatpush2.bf16.msra.mxu0 0
  %8419 = vmatprep.subr.bf16.mxu0 0
  %8420 = vmatpush2.bf16.msra.mxu0 0
  %8421 = vmatprep.subr.bf16.mxu0 0
  %8422 = vmatpush2.bf16.msra.mxu0 0
  %8423 = vmatprep.subr.bf16.mxu0 0
  %8424 = vmatpush2.bf16.msra.mxu0 0
  %8425 = vmatprep.subr.bf16.mxu0 0
  %8426 = vmatpush2.bf16.msra.mxu0 0
  %8427 = vmatprep.subr.bf16.mxu0 0
  %8428 = vmatpush2.bf16.msra.mxu0 0
  %8429 = vmatprep.subr.bf16.mxu0 0
  %8430 = vmatpush2.bf16.msra.mxu0 0
  %8431 = vmatprep.mubr.bf16.mxu0 0
  %8432 = vmatmul.mubr.bf16.gmra.mxu0 %v8165
  %v8433 = vpop.f32.mrf.mxu0
  %v8434 = vadd.f32 0.0, %v8433
  %v8435 = vpop.f32.mrf.mxu0
  %v8436 = vadd.f32 0.0, %v8435
  %v8437 = vpop.f32.mrf.mxu0
  %v8438 = vpop.f32.mrf.mxu0
  %8439 = vdwg.mxu0
  %v8444 = vrot.slane %v8393, 5
  %v8445 = vrot.slane %v8395, 5
  %v8446 = vrot.slane %v8434, 5
  %v8447 = vrot.slane %v8436, 5
  %v8448 = vrot.slane %v8393, 6
  %v8449 = vrot.slane %v8395, 6
  %v8450 = vrot.slane %v8434, 6
  %v8451 = vrot.slane %v8436, 6
  %v8452 = vrot.slane %v8393, 7
  %v8453 = vrot.slane %v8395, 7
  %v8454 = vrot.slane %v8434, 7
  %v8455 = vrot.slane %v8436, 7
  %v8456 = vrot.slane %v8393, 1
  %v8457 = vrot.slane %v8395, 1
  %v8458 = vrot.slane %v8434, 1
  %v8459 = vrot.slane %v8436, 1
  %v8460 = vrot.slane %v8393, 2
  %v8461 = vrot.slane %v8395, 2
  %v8462 = vrot.slane %v8434, 2
  %v8463 = vrot.slane %v8436, 2
  %v8464 = vrot.slane %v8393, 3
  %v8465 = vrot.slane %v8395, 3
  %v8466 = vrot.slane %v8434, 3
  %v8467 = vrot.slane %v8436, 3
  %v8468 = vrot.slane %v8393, 4
  %v8469 = vrot.slane %v8395, 4
  %v8470 = vrot.slane %v8434, 4
  %v8471 = vrot.slane %v8436, 4
  %v8504 = vadd.f32 %v8133, %v8444
  %v8505 = vadd.f32 %v8134, %v8445
  %v8506 = vadd.f32 %v8135, %v8446
  %v8507 = vadd.f32 %v8136, %v8447
  %v8508 = vadd.f32 %v8137, %v8448
  %v8509 = vadd.f32 %v8138, %v8449
  %v8510 = vadd.f32 %v8139, %v8450
  %v8511 = vadd.f32 %v8140, %v8451
  %v8512 = vadd.f32 %v8141, %v8452
  %v8513 = vadd.f32 %v8142, %v8453
  %v8514 = vadd.f32 %v8143, %v8454
  %v8515 = vadd.f32 %v8144, %v8455
  %v8516 = vadd.f32 %v8145, %v8393
  %v8517 = vadd.f32 %v8146, %v8395
  %v8518 = vadd.f32 %v8147, %v8434
  %v8519 = vadd.f32 %v8148, %v8436
  %v8520 = vadd.f32 %v8149, %v8456
  %v8521 = vadd.f32 %v8150, %v8457
  %v8522 = vadd.f32 %v8151, %v8458
  %v8523 = vadd.f32 %v8152, %v8459
  %v8524 = vadd.f32 %v8153, %v8460
  %v8525 = vadd.f32 %v8154, %v8461
  %v8526 = vadd.f32 %v8155, %v8462
  %v8527 = vadd.f32 %v8156, %v8463
  %v8528 = vadd.f32 %v8157, %v8464
  %v8529 = vadd.f32 %v8158, %v8465
  %v8530 = vadd.f32 %v8159, %v8466
  %v8531 = vadd.f32 %v8160, %v8467
  %v8532 = vadd.f32 %v8161, %v8468
  %v8533 = vadd.f32 %v8162, %v8469
  %v8534 = vadd.f32 %v8163, %v8470
  %v8535 = vadd.f32 %v8164, %v8471
  %v8536 = vxor.u32 %v8504, 2147483648
  %v8537 = vxor.u32 %v8505, 2147483648
  %v8538 = vxor.u32 %v8506, 2147483648
  %v8539 = vxor.u32 %v8508, 2147483648
  %v8540 = vxor.u32 %v8509, 2147483648
  %v8541 = vxor.u32 %v8510, 2147483648
  %v8542 = vxor.u32 %v8512, 2147483648
  %v8543 = vxor.u32 %v8513, 2147483648
  %v8544 = vxor.u32 %v8514, 2147483648
  %v8545 = vxor.u32 %v8516, 2147483648
  %v8546 = vxor.u32 %v8517, 2147483648
  %v8547 = vxor.u32 %v8518, 2147483648
  %v8548 = vxor.u32 %v8520, 2147483648
  %v8549 = vxor.u32 %v8521, 2147483648
  %v8550 = vxor.u32 %v8522, 2147483648
  %v8551 = vxor.u32 %v8524, 2147483648
  %v8552 = vxor.u32 %v8525, 2147483648
  %v8553 = vxor.u32 %v8526, 2147483648
  %v8554 = vxor.u32 %v8528, 2147483648
  %v8555 = vxor.u32 %v8529, 2147483648
  %v8556 = vxor.u32 %v8530, 2147483648
  %v8557 = vxor.u32 %v8532, 2147483648
  %v8558 = vxor.u32 %v8533, 2147483648
  %v8559 = vxor.u32 %v8534, 2147483648
  %v8560 = vmul.f32 %v8536, 1.442695
  %v8561 = vpow.pop %v8560
  %v8562 = vmul.f32 %v8537, 1.442695
  %v8563 = vpow.pop %v8562
  %v8564 = vmul.f32 %v8538, 1.442695
  %v8565 = vpow.pop %v8564
  %v8566 = vmul.f32 %v8539, 1.442695
  %v8567 = vpow.pop %v8566
  %v8568 = vmul.f32 %v8540, 1.442695
  %v8569 = vpow.pop %v8568
  %v8570 = vmul.f32 %v8541, 1.442695
  %v8571 = vpow.pop %v8570
  %v8572 = vmul.f32 %v8542, 1.442695
  %v8573 = vpow.pop %v8572
  %v8574 = vmul.f32 %v8543, 1.442695
  %v8575 = vpow.pop %v8574
  %v8576 = vmul.f32 %v8544, 1.442695
  %v8577 = vpow.pop %v8576
  %v8578 = vmul.f32 %v8545, 1.442695
  %v8579 = vpow.pop %v8578
  %v8580 = vmul.f32 %v8546, 1.442695
  %v8581 = vpow.pop %v8580
  %v8582 = vmul.f32 %v8547, 1.442695
  %v8583 = vpow.pop %v8582
  %v8584 = vmul.f32 %v8548, 1.442695
  %v8585 = vpow.pop %v8584
  %v8586 = vmul.f32 %v8549, 1.442695
  %v8587 = vpow.pop %v8586
  %v8588 = vmul.f32 %v8550, 1.442695
  %v8589 = vpow.pop %v8588
  %v8590 = vmul.f32 %v8551, 1.442695
  %v8591 = vpow.pop %v8590
  %v8592 = vmul.f32 %v8552, 1.442695
  %v8593 = vpow.pop %v8592
  %v8594 = vmul.f32 %v8553, 1.442695
  %v8595 = vpow.pop %v8594
  %v8596 = vmul.f32 %v8554, 1.442695
  %v8597 = vpow.pop %v8596
  %v8598 = vmul.f32 %v8555, 1.442695
  %v8599 = vpow.pop %v8598
  %v8600 = vmul.f32 %v8556, 1.442695
  %v8601 = vpow.pop %v8600
  %v8602 = vmul.f32 %v8557, 1.442695
  %v8603 = vpow.pop %v8602
  %v8604 = vmul.f32 %v8558, 1.442695
  %v8605 = vpow.pop %v8604
  %v8606 = vmul.f32 %v8559, 1.442695
  %v8607 = vpow.pop %v8606
  %v8608 = vadd.f32 %v8561, 1.0
  %v8609 = vadd.f32 %v8563, 1.0
  %v8610 = vadd.f32 %v8565, 1.0
  %v8611 = vadd.f32 %v8567, 1.0
  %v8612 = vadd.f32 %v8569, 1.0
  %v8613 = vadd.f32 %v8571, 1.0
  %v8614 = vadd.f32 %v8573, 1.0
  %v8615 = vadd.f32 %v8575, 1.0
  %v8616 = vadd.f32 %v8577, 1.0
  %v8617 = vadd.f32 %v8579, 1.0
  %v8618 = vadd.f32 %v8581, 1.0
  %v8619 = vadd.f32 %v8583, 1.0
  %v8620 = vadd.f32 %v8585, 1.0
  %v8621 = vadd.f32 %v8587, 1.0
  %v8622 = vadd.f32 %v8589, 1.0
  %v8623 = vadd.f32 %v8591, 1.0
  %v8624 = vadd.f32 %v8593, 1.0
  %v8625 = vadd.f32 %v8595, 1.0
  %v8626 = vadd.f32 %v8597, 1.0
  %v8627 = vadd.f32 %v8599, 1.0
  %v8628 = vadd.f32 %v8601, 1.0
  %v8629 = vadd.f32 %v8603, 1.0
  %v8630 = vadd.f32 %v8605, 1.0
  %v8631 = vadd.f32 %v8607, 1.0
  %v8632 = vrcp.pop %v8608
  %v8633 = vmul.f32 1.0, %v8632
  %v8634 = vrcp.pop %v8609
  %v8635 = vmul.f32 1.0, %v8634
  %v8636 = vrcp.pop %v8610
  %v8637 = vmul.f32 1.0, %v8636
  %v8638 = vrcp.pop %v8611
  %v8639 = vmul.f32 1.0, %v8638
  %v8640 = vrcp.pop %v8612
  %v8641 = vmul.f32 1.0, %v8640
  %v8642 = vrcp.pop %v8613
  %v8643 = vmul.f32 1.0, %v8642
  %v8644 = vrcp.pop %v8614
  %v8645 = vmul.f32 1.0, %v8644
  %v8646 = vrcp.pop %v8615
  %v8647 = vmul.f32 1.0, %v8646
  %v8648 = vrcp.pop %v8616
  %v8649 = vmul.f32 1.0, %v8648
  %v8650 = vrcp.pop %v8617
  %v8651 = vmul.f32 1.0, %v8650
  %v8652 = vrcp.pop %v8618
  %v8653 = vmul.f32 1.0, %v8652
  %v8654 = vrcp.pop %v8619
  %v8655 = vmul.f32 1.0, %v8654
  %v8656 = vrcp.pop %v8620
  %v8657 = vmul.f32 1.0, %v8656
  %v8658 = vrcp.pop %v8621
  %v8659 = vmul.f32 1.0, %v8658
  %v8660 = vrcp.pop %v8622
  %v8661 = vmul.f32 1.0, %v8660
  %v8662 = vrcp.pop %v8623
  %v8663 = vmul.f32 1.0, %v8662
  %v8664 = vrcp.pop %v8624
  %v8665 = vmul.f32 1.0, %v8664
  %v8666 = vrcp.pop %v8625
  %v8667 = vmul.f32 1.0, %v8666
  %v8668 = vrcp.pop %v8626
  %v8669 = vmul.f32 1.0, %v8668
  %v8670 = vrcp.pop %v8627
  %v8671 = vmul.f32 1.0, %v8670
  %v8672 = vrcp.pop %v8628
  %v8673 = vmul.f32 1.0, %v8672
  %v8674 = vrcp.pop %v8629
  %v8675 = vmul.f32 1.0, %v8674
  %v8676 = vrcp.pop %v8630
  %v8677 = vmul.f32 1.0, %v8676
  %v8678 = vrcp.pop %v8631
  %v8679 = vmul.f32 1.0, %v8678
  %v8680 = vtanh.pop %v8507
  %v8681 = vtanh.pop %v8511
  %v8682 = vtanh.pop %v8515
  %v8683 = vtanh.pop %v8519
  %v8684 = vtanh.pop %v8523
  %v8685 = vtanh.pop %v8527
  %v8686 = vtanh.pop %v8531
  %v8687 = vtanh.pop %v8535
  %v8688 = vld [vmem:[#allocation3] sm:$0xff]
  %v8690 = vrot.slane %v8688, 5
  %v8691 = vrot.slane %v8688, 6
  %v8692 = vrot.slane %v8688, 7
  %v8693 = vrot.slane %v8688, 1
  %v8694 = vrot.slane %v8688, 2
  %v8695 = vrot.slane %v8688, 3
  %v8696 = vrot.slane %v8688, 4
  %v8705 = vmul.f32 %v8635, %v8690
  %v8706 = vmul.f32 %v8641, %v8691
  %v8707 = vmul.f32 %v8647, %v8692
  %v8708 = vmul.f32 %v8653, %v8688
  %v8709 = vmul.f32 %v8659, %v8693
  %v8710 = vmul.f32 %v8665, %v8694
  %v8711 = vmul.f32 %v8671, %v8695
  %v8712 = vmul.f32 %v8677, %v8696
  %v8713 = vmul.f32 %v8633, %v8680
  %v8714 = vmul.f32 %v8639, %v8681
  %v8715 = vmul.f32 %v8645, %v8682
  %v8716 = vmul.f32 %v8651, %v8683
  %v8717 = vmul.f32 %v8657, %v8684
  %v8718 = vmul.f32 %v8663, %v8685
  %v8719 = vmul.f32 %v8669, %v8686
  %v8720 = vmul.f32 %v8675, %v8687
  %v8721 = vadd.f32 %v8705, %v8713
  %v8722 = vadd.f32 %v8706, %v8714
  %v8723 = vadd.f32 %v8707, %v8715
  %v8724 = vadd.f32 %v8708, %v8716
  %v8725 = vadd.f32 %v8709, %v8717
  %v8726 = vadd.f32 %v8710, %v8718
  %v8727 = vadd.f32 %v8711, %v8719
  %v8728 = vadd.f32 %v8712, %v8720
  %v8729 = vtanh.pop %v8721
  %v8730 = vtanh.pop %v8722
  %v8731 = vtanh.pop %v8723
  %v8732 = vtanh.pop %v8724
  %v8733 = vtanh.pop %v8725
  %v8734 = vtanh.pop %v8726
  %v8735 = vtanh.pop %v8727
  %v8736 = vtanh.pop %v8728
  %v8737 = vmul.f32 %v8637, %v8729
  %v8738 = vmul.f32 %v8643, %v8730
  %v8739 = vmul.f32 %v8649, %v8731
  %v8740 = vmul.f32 %v8655, %v8732
  %v8741 = vmul.f32 %v8661, %v8733
  %v8742 = vmul.f32 %v8667, %v8734
  %v8743 = vmul.f32 %v8673, %v8735
  %v8744 = vmul.f32 %v8679, %v8736
  %v8745 = vpack.c.bf16 %v8737, %v8737
  %v8746 = vpack.c.bf16 %v8738, %v8738
  %v8747 = vpack.c.bf16 %v8739, %v8739
  %v8748 = vpack.c.bf16 %v8740, %v8740
  %v8749 = vpack.c.bf16 %v8741, %v8741
  %v8750 = vpack.c.bf16 %v8742, %v8742
  %v8751 = vpack.c.bf16 %v8743, %v8743
  %v8752 = vpack.c.bf16 %v8744, %v8744
  %v8761 = vrot.slane %v8722, 7
  %v8762 = vsel %vm672, %v8761, %v8721
  %v8763 = vrot.slane %v8723, 6
  %v8764 = vsel %vm675, %v8763, %v8762
  %v8765 = vrot.slane %v8724, 5
  %v8766 = vsel %vm678, %v8765, %v8764
  %v8767 = vrot.slane %v8725, 4
  %v8768 = vsel %vm681, %v8767, %v8766
  %v8769 = vrot.slane %v8726, 3
  %v8770 = vrot.slane %v8727, 2
  %v8771 = vsel %vm663, %v8770, %v8769
  %v8772 = vrot.slane %v8728, 1
  %v8773 = vsel %vm666, %v8772, %v8771
  %8776 = vst [vmem:[#allocation3 - $0x3] sm:$0xf8] %v8768
  %8777 = vst [vmem:[#allocation3 + $0x5] sm:$0x7] %v8773
  %v8786 = vunpack.c.l.b16 %v8745
  %v8787 = vunpack.c.l.b16 %v8746
  %v8788 = vunpack.c.l.b16 %v8747
  %v8789 = vunpack.c.l.b16 %v8748
  %v8790 = vunpack.c.l.b16 %v8749
  %v8791 = vunpack.c.l.b16 %v8750
  %v8792 = vunpack.c.l.b16 %v8751
  %v8793 = vunpack.c.l.b16 %v8752
  %v8794 = vpack.c.b16 %v8786, %v8786
  %v8795 = vpack.c.b16 %v8787, %v8787
  %v8796 = vpack.c.b16 %v8788, %v8788
  %v8797 = vpack.c.b16 %v8789, %v8789
  %v8798 = vpack.c.b16 %v8790, %v8790
  %v8799 = vpack.c.b16 %v8791, %v8791
  %v8800 = vpack.c.b16 %v8792, %v8792
  %v8801 = vpack.c.b16 %v8793, %v8793
  %v8802 = vunpack.c.l.b16 %v8794
  %v8803 = vunpack.c.l.b16 %v8795
  %v8804 = vunpack.c.l.b16 %v8796
  %v8805 = vunpack.c.l.b16 %v8797
  %v8806 = vunpack.c.l.b16 %v8798
  %v8807 = vunpack.c.l.b16 %v8799
  %v8808 = vunpack.c.l.b16 %v8800
  %v8809 = vunpack.c.l.b16 %v8801
  %v8810 = vrot.slane %v8802, 3
  %v8811 = vrot.slane %v8803, 2
  %v8812 = vsel %vm663, %v8811, %v8810
  %v8813 = vrot.slane %v8804, 1
  %v8814 = vsel %vm666, %v8813, %v8812
  %v8815 = vsel %vm669, %v8805, %v8814
  %v8816 = vrot.slane %v8806, 7
  %v8817 = vsel %vm672, %v8816, %v8815
  %v8818 = vrot.slane %v8807, 6
  %v8819 = vsel %vm675, %v8818, %v8817
  %v8820 = vrot.slane %v8808, 5
  %v8821 = vsel %vm678, %v8820, %v8819
  %v8822 = vrot.slane %v8809, 4
  %v8823 = vsel %vm681, %v8822, %v8821
  %v8824 = vpack.c.b16 %v8823, %v8823
  %8826 = vst [vmem:[#allocation2] sm:$0xf] %v8824
  %v8827 = vld [vmem:[%s2 + $0x4] sm:$0x2]
  %v8828 = vsel %vm2945, %v8745, %v8827
  %8829 = vst [vmem:[%s2 + $0x4] sm:$0x2] %v8828
  %v8830 = vld [vmem:[%s2 + $0xc] sm:$0x2]
  %v8831 = vsel %vm2945, %v8746, %v8830
  %8832 = vst [vmem:[%s2 + $0xc] sm:$0x2] %v8831
  %v8833 = vld [vmem:[%s2 + $0x14] sm:$0x2]
  %v8834 = vsel %vm2945, %v8747, %v8833
  %8835 = vst [vmem:[%s2 + $0x14] sm:$0x2] %v8834
  %v8836 = vld [vmem:[%s2 + $0x1c] sm:$0x2]
  %v8837 = vsel %vm2945, %v8748, %v8836
  %8838 = vst [vmem:[%s2 + $0x1c] sm:$0x2] %v8837
  %v8839 = vld [vmem:[%s2 + $0x24] sm:$0x2]
  %v8840 = vsel %vm2945, %v8749, %v8839
  %8841 = vst [vmem:[%s2 + $0x24] sm:$0x2] %v8840
  %v8842 = vld [vmem:[%s2 + $0x2c] sm:$0x2]
  %v8843 = vsel %vm2945, %v8750, %v8842
  %8844 = vst [vmem:[%s2 + $0x2c] sm:$0x2] %v8843
  %v8845 = vld [vmem:[%s2 + $0x34] sm:$0x2]
  %v8846 = vsel %vm2945, %v8751, %v8845
  %8847 = vst [vmem:[%s2 + $0x34] sm:$0x2] %v8846
  %v8848 = vld [vmem:[%s2 + $0x3c] sm:$0x2]
  %v8849 = vsel %vm2945, %v8752, %v8848
  %8850 = vst [vmem:[%s2 + $0x3c] sm:$0x2] %v8849
  %v8851 = vld [vmem:[%s0 + $0x10] sm:$0x44]
  %v8852 = vld [vmem:[%s0 + $0x18] sm:$0x44]
  %v8853 = vld [vmem:[%s0 + $0x30] sm:$0x44]
  %v8854 = vld [vmem:[%s0 + $0x38] sm:$0x44]
  %v8855 = vld [vmem:[%s0 + $0x50] sm:$0x44]
  %v8856 = vld [vmem:[%s0 + $0x58] sm:$0x44]
  %v8857 = vld [vmem:[%s0 + $0x70] sm:$0x44]
  %v8858 = vld [vmem:[%s0 + $0x78] sm:$0x44]
  %v8859 = vld [vmem:[%s0 + $0x90] sm:$0x44]
  %v8860 = vld [vmem:[%s0 + $0x98] sm:$0x44]
  %v8861 = vld [vmem:[%s0 + $0xb0] sm:$0x44]
  %v8862 = vld [vmem:[%s0 + $0xb8] sm:$0x44]
  %v8863 = vld [vmem:[%s0 + $0xd0] sm:$0x44]
  %v8864 = vld [vmem:[%s0 + $0xd8] sm:$0x44]
  %v8865 = vld [vmem:[%s0 + $0xf0] sm:$0x44]
  %v8866 = vld [vmem:[%s0 + $0xf8] sm:$0x44]
  %v8867 = vunpack.c.l.bf16 %v8851
  %v8868 = vunpack.c.h.bf16 %v8851
  %v8869 = vunpack.c.l.bf16 %v8852
  %v8870 = vunpack.c.h.bf16 %v8852
  %v8871 = vunpack.c.l.bf16 %v8853
  %v8872 = vunpack.c.h.bf16 %v8853
  %v8873 = vunpack.c.l.bf16 %v8854
  %v8874 = vunpack.c.h.bf16 %v8854
  %v8875 = vunpack.c.l.bf16 %v8855
  %v8876 = vunpack.c.h.bf16 %v8855
  %v8877 = vunpack.c.l.bf16 %v8856
  %v8878 = vunpack.c.h.bf16 %v8856
  %v8879 = vunpack.c.l.bf16 %v8857
  %v8880 = vunpack.c.h.bf16 %v8857
  %v8881 = vunpack.c.l.bf16 %v8858
  %v8882 = vunpack.c.h.bf16 %v8858
  %v8883 = vunpack.c.l.bf16 %v8859
  %v8884 = vunpack.c.h.bf16 %v8859
  %v8885 = vunpack.c.l.bf16 %v8860
  %v8886 = vunpack.c.h.bf16 %v8860
  %v8887 = vunpack.c.l.bf16 %v8861
  %v8888 = vunpack.c.h.bf16 %v8861
  %v8889 = vunpack.c.l.bf16 %v8862
  %v8890 = vunpack.c.h.bf16 %v8862
  %v8891 = vunpack.c.l.bf16 %v8863
  %v8892 = vunpack.c.h.bf16 %v8863
  %v8893 = vunpack.c.l.bf16 %v8864
  %v8894 = vunpack.c.h.bf16 %v8864
  %v8895 = vunpack.c.l.bf16 %v8865
  %v8896 = vunpack.c.h.bf16 %v8865
  %v8897 = vunpack.c.l.bf16 %v8866
  %v8898 = vunpack.c.h.bf16 %v8866
  %v8899 = vld [vmem:[#allocation2] sm:$0xf]
  %v8900 = vld [vmem:[%s1] sm:$0xff]
  %v8901 = vld [vmem:[%s1 + $0x8] sm:$0xff]
  %v8902 = vld [vmem:[%s1 + $0x10] sm:$0xff]
  %v8903 = vld [vmem:[%s1 + $0x18] sm:$0xff]
  %v8904 = vld [vmem:[%s1 + $0x20] sm:$0xff]
  %v8905 = vld [vmem:[%s1 + $0x28] sm:$0xff]
  %v8906 = vld [vmem:[%s1 + $0x30] sm:$0xff]
  %v8907 = vld [vmem:[%s1 + $0x38] sm:$0xff]
  %v8908 = vld [vmem:[%s1 + $0x40] sm:$0xff]
  %v8909 = vld [vmem:[%s1 + $0x48] sm:$0xff]
  %v8910 = vld [vmem:[%s1 + $0x50] sm:$0xff]
  %v8911 = vld [vmem:[%s1 + $0x58] sm:$0xff]
  %v8912 = vld [vmem:[%s1 + $0x60] sm:$0xff]
  %v8913 = vld [vmem:[%s1 + $0x68] sm:$0xff]
  %v8914 = vld [vmem:[%s1 + $0x70] sm:$0xff]
  %v8915 = vld [vmem:[%s1 + $0x78] sm:$0xff]
  %v8916 = vld [vmem:[%s1 + $0x80] sm:$0xff]
  %v8917 = vld [vmem:[%s1 + $0x88] sm:$0xff]
  %v8918 = vld [vmem:[%s1 + $0x90] sm:$0xff]
  %v8919 = vld [vmem:[%s1 + $0x98] sm:$0xff]
  %v8920 = vld [vmem:[%s1 + $0xa0] sm:$0xff]
  %v8921 = vld [vmem:[%s1 + $0xa8] sm:$0xff]
  %v8922 = vld [vmem:[%s1 + $0xb0] sm:$0xff]
  %v8923 = vld [vmem:[%s1 + $0xb8] sm:$0xff]
  %v8924 = vld [vmem:[%s1 + $0xc0] sm:$0xff]
  %v8925 = vld [vmem:[%s1 + $0xc8] sm:$0xff]
  %v8926 = vld [vmem:[%s1 + $0xd0] sm:$0xff]
  %v8927 = vld [vmem:[%s1 + $0xd8] sm:$0xff]
  %v8928 = vld [vmem:[%s1 + $0xe0] sm:$0xff]
  %v8929 = vld [vmem:[%s1 + $0xe8] sm:$0xff]
  %v8930 = vld [vmem:[%s1 + $0xf0] sm:$0xff]
  %v8931 = vld [vmem:[%s1 + $0xf8] sm:$0xff]
  %v8964 = vunpack.c.l.b16 %v8900
  %v8965 = vunpack.c.h.b16 %v8900
  %v8966 = vunpack.c.l.b16 %v8901
  %v8967 = vunpack.c.h.b16 %v8901
  %v8968 = vunpack.c.l.b16 %v8902
  %v8969 = vunpack.c.h.b16 %v8902
  %v8970 = vunpack.c.l.b16 %v8903
  %v8971 = vunpack.c.h.b16 %v8903
  %v8972 = vunpack.c.l.b16 %v8904
  %v8973 = vunpack.c.h.b16 %v8904
  %v8974 = vunpack.c.l.b16 %v8905
  %v8975 = vunpack.c.h.b16 %v8905
  %v8976 = vunpack.c.l.b16 %v8906
  %v8977 = vunpack.c.h.b16 %v8906
  %v8978 = vunpack.c.l.b16 %v8907
  %v8979 = vunpack.c.h.b16 %v8907
  %v8980 = vunpack.c.l.b16 %v8908
  %v8981 = vunpack.c.h.b16 %v8908
  %v8982 = vunpack.c.l.b16 %v8909
  %v8983 = vunpack.c.h.b16 %v8909
  %v8984 = vunpack.c.l.b16 %v8910
  %v8985 = vunpack.c.h.b16 %v8910
  %v8986 = vunpack.c.l.b16 %v8911
  %v8987 = vunpack.c.h.b16 %v8911
  %v8988 = vunpack.c.l.b16 %v8912
  %v8989 = vunpack.c.h.b16 %v8912
  %v8990 = vunpack.c.l.b16 %v8913
  %v8991 = vunpack.c.h.b16 %v8913
  %v8992 = vunpack.c.l.b16 %v8914
  %v8993 = vunpack.c.h.b16 %v8914
  %v8994 = vunpack.c.l.b16 %v8915
  %v8995 = vunpack.c.h.b16 %v8915
  %v8996 = vunpack.c.l.b16 %v8916
  %v8997 = vunpack.c.h.b16 %v8916
  %v8998 = vunpack.c.l.b16 %v8917
  %v8999 = vunpack.c.h.b16 %v8917
  %v9000 = vunpack.c.l.b16 %v8918
  %v9001 = vunpack.c.h.b16 %v8918
  %v9002 = vunpack.c.l.b16 %v8919
  %v9003 = vunpack.c.h.b16 %v8919
  %v9004 = vunpack.c.l.b16 %v8920
  %v9005 = vunpack.c.h.b16 %v8920
  %v9006 = vunpack.c.l.b16 %v8921
  %v9007 = vunpack.c.h.b16 %v8921
  %v9008 = vunpack.c.l.b16 %v8922
  %v9009 = vunpack.c.h.b16 %v8922
  %v9010 = vunpack.c.l.b16 %v8923
  %v9011 = vunpack.c.h.b16 %v8923
  %v9012 = vunpack.c.l.b16 %v8924
  %v9013 = vunpack.c.h.b16 %v8924
  %v9014 = vunpack.c.l.b16 %v8925
  %v9015 = vunpack.c.h.b16 %v8925
  %v9016 = vunpack.c.l.b16 %v8926
  %v9017 = vunpack.c.h.b16 %v8926
  %v9018 = vunpack.c.l.b16 %v8927
  %v9019 = vunpack.c.h.b16 %v8927
  %v9020 = vunpack.c.l.b16 %v8928
  %v9021 = vunpack.c.h.b16 %v8928
  %v9022 = vunpack.c.l.b16 %v8929
  %v9023 = vunpack.c.h.b16 %v8929
  %v9024 = vunpack.c.l.b16 %v8930
  %v9025 = vunpack.c.h.b16 %v8930
  %v9026 = vunpack.c.l.b16 %v8931
  %v9027 = vunpack.c.h.b16 %v8931
  %v9028 = vpack.c.b16 %v8968, %v8964
  %v9029 = vpack.c.b16 %v8969, %v8965
  %v9030 = vpack.c.b16 %v8970, %v8966
  %v9031 = vpack.c.b16 %v8971, %v8967
  %v9032 = vpack.c.b16 %v8976, %v8972
  %v9033 = vpack.c.b16 %v8977, %v8973
  %v9034 = vpack.c.b16 %v8978, %v8974
  %v9035 = vpack.c.b16 %v8979, %v8975
  %v9036 = vpack.c.b16 %v8984, %v8980
  %v9037 = vpack.c.b16 %v8985, %v8981
  %v9038 = vpack.c.b16 %v8986, %v8982
  %v9039 = vpack.c.b16 %v8987, %v8983
  %v9040 = vpack.c.b16 %v8992, %v8988
  %v9041 = vpack.c.b16 %v8993, %v8989
  %v9042 = vpack.c.b16 %v8994, %v8990
  %v9043 = vpack.c.b16 %v8995, %v8991
  %v9044 = vpack.c.b16 %v9000, %v8996
  %v9045 = vpack.c.b16 %v9001, %v8997
  %v9046 = vpack.c.b16 %v9002, %v8998
  %v9047 = vpack.c.b16 %v9003, %v8999
  %v9048 = vpack.c.b16 %v9008, %v9004
  %v9049 = vpack.c.b16 %v9009, %v9005
  %v9050 = vpack.c.b16 %v9010, %v9006
  %v9051 = vpack.c.b16 %v9011, %v9007
  %v9052 = vpack.c.b16 %v9016, %v9012
  %v9053 = vpack.c.b16 %v9017, %v9013
  %v9054 = vpack.c.b16 %v9018, %v9014
  %v9055 = vpack.c.b16 %v9019, %v9015
  %v9056 = vpack.c.b16 %v9024, %v9020
  %v9057 = vpack.c.b16 %v9025, %v9021
  %v9058 = vpack.c.b16 %v9026, %v9022
  %v9059 = vpack.c.b16 %v9027, %v9023
  %9092 = vmatprep.subr.bf16.mxu0 %v9057
  %9093 = vmatpush1.bf16.msra.mxu0 %v9056
  %9094 = vmatprep.subr.bf16.mxu0 %v9053
  %9095 = vmatpush1.bf16.msra.mxu0 %v9052
  %9096 = vmatprep.subr.bf16.mxu0 %v9049
  %9097 = vmatpush1.bf16.msra.mxu0 %v9048
  %9098 = vmatprep.subr.bf16.mxu0 %v9045
  %9099 = vmatpush1.bf16.msra.mxu0 %v9044
  %9100 = vmatprep.subr.bf16.mxu0 %v9041
  %9101 = vmatpush1.bf16.msra.mxu0 %v9040
  %9102 = vmatprep.subr.bf16.mxu0 %v9037
  %9103 = vmatpush1.bf16.msra.mxu0 %v9036
  %9104 = vmatprep.subr.bf16.mxu0 %v9033
  %9105 = vmatpush1.bf16.msra.mxu0 %v9032
  %9106 = vmatprep.subr.bf16.mxu0 %v9029
  %9107 = vmatpush1.bf16.msra.mxu0 %v9028
  %9108 = vmatprep.subr.bf16.mxu0 0
  %9109 = vmatpush2.bf16.msra.mxu0 0
  %9110 = vmatprep.subr.bf16.mxu0 0
  %9111 = vmatpush2.bf16.msra.mxu0 0
  %9112 = vmatprep.subr.bf16.mxu0 0
  %9113 = vmatpush2.bf16.msra.mxu0 0
  %9114 = vmatprep.subr.bf16.mxu0 0
  %9115 = vmatpush2.bf16.msra.mxu0 0
  %9116 = vmatprep.subr.bf16.mxu0 0
  %9117 = vmatpush2.bf16.msra.mxu0 0
  %9118 = vmatprep.subr.bf16.mxu0 0
  %9119 = vmatpush2.bf16.msra.mxu0 0
  %9120 = vmatprep.subr.bf16.mxu0 0
  %9121 = vmatpush2.bf16.msra.mxu0 0
  %9122 = vmatprep.subr.bf16.mxu0 0
  %9123 = vmatpush2.bf16.msra.mxu0 0
  %9124 = vmatprep.mubr.bf16.mxu0 0
  %9125 = vmatmul.mubr.bf16.gmra.mxu0 %v8899
  %v9126 = vpop.f32.mrf.mxu0
  %v9127 = vadd.f32 0.0, %v9126
  %v9128 = vpop.f32.mrf.mxu0
  %v9129 = vadd.f32 0.0, %v9128
  %v9130 = vpop.f32.mrf.mxu0
  %v9131 = vpop.f32.mrf.mxu0
  %9132 = vdwg.mxu0
  %9133 = vmatprep.subr.bf16.mxu0 %v9059
  %9134 = vmatpush1.bf16.msra.mxu0 %v9058
  %9135 = vmatprep.subr.bf16.mxu0 %v9055
  %9136 = vmatpush1.bf16.msra.mxu0 %v9054
  %9137 = vmatprep.subr.bf16.mxu0 %v9051
  %9138 = vmatpush1.bf16.msra.mxu0 %v9050
  %9139 = vmatprep.subr.bf16.mxu0 %v9047
  %9140 = vmatpush1.bf16.msra.mxu0 %v9046
  %9141 = vmatprep.subr.bf16.mxu0 %v9043
  %9142 = vmatpush1.bf16.msra.mxu0 %v9042
  %9143 = vmatprep.subr.bf16.mxu0 %v9039
  %9144 = vmatpush1.bf16.msra.mxu0 %v9038
  %9145 = vmatprep.subr.bf16.mxu0 %v9035
  %9146 = vmatpush1.bf16.msra.mxu0 %v9034
  %9147 = vmatprep.subr.bf16.mxu0 %v9031
  %9148 = vmatpush1.bf16.msra.mxu0 %v9030
  %9149 = vmatprep.subr.bf16.mxu0 0
  %9150 = vmatpush2.bf16.msra.mxu0 0
  %9151 = vmatprep.subr.bf16.mxu0 0
  %9152 = vmatpush2.bf16.msra.mxu0 0
  %9153 = vmatprep.subr.bf16.mxu0 0
  %9154 = vmatpush2.bf16.msra.mxu0 0
  %9155 = vmatprep.subr.bf16.mxu0 0
  %9156 = vmatpush2.bf16.msra.mxu0 0
  %9157 = vmatprep.subr.bf16.mxu0 0
  %9158 = vmatpush2.bf16.msra.mxu0 0
  %9159 = vmatprep.subr.bf16.mxu0 0
  %9160 = vmatpush2.bf16.msra.mxu0 0
  %9161 = vmatprep.subr.bf16.mxu0 0
  %9162 = vmatpush2.bf16.msra.mxu0 0
  %9163 = vmatprep.subr.bf16.mxu0 0
  %9164 = vmatpush2.bf16.msra.mxu0 0
  %9165 = vmatprep.mubr.bf16.mxu0 0
  %9166 = vmatmul.mubr.bf16.gmra.mxu0 %v8899
  %v9167 = vpop.f32.mrf.mxu0
  %v9168 = vadd.f32 0.0, %v9167
  %v9169 = vpop.f32.mrf.mxu0
  %v9170 = vadd.f32 0.0, %v9169
  %v9171 = vpop.f32.mrf.mxu0
  %v9172 = vpop.f32.mrf.mxu0
  %9173 = vdwg.mxu0
  %v9178 = vrot.slane %v9127, 4
  %v9179 = vrot.slane %v9129, 4
  %v9180 = vrot.slane %v9168, 4
  %v9181 = vrot.slane %v9170, 4
  %v9182 = vrot.slane %v9127, 5
  %v9183 = vrot.slane %v9129, 5
  %v9184 = vrot.slane %v9168, 5
  %v9185 = vrot.slane %v9170, 5
  %v9186 = vrot.slane %v9127, 6
  %v9187 = vrot.slane %v9129, 6
  %v9188 = vrot.slane %v9168, 6
  %v9189 = vrot.slane %v9170, 6
  %v9190 = vrot.slane %v9127, 7
  %v9191 = vrot.slane %v9129, 7
  %v9192 = vrot.slane %v9168, 7
  %v9193 = vrot.slane %v9170, 7
  %v9194 = vrot.slane %v9127, 1
  %v9195 = vrot.slane %v9129, 1
  %v9196 = vrot.slane %v9168, 1
  %v9197 = vrot.slane %v9170, 1
  %v9198 = vrot.slane %v9127, 2
  %v9199 = vrot.slane %v9129, 2
  %v9200 = vrot.slane %v9168, 2
  %v9201 = vrot.slane %v9170, 2
  %v9202 = vrot.slane %v9127, 3
  %v9203 = vrot.slane %v9129, 3
  %v9204 = vrot.slane %v9168, 3
  %v9205 = vrot.slane %v9170, 3
  %v9238 = vadd.f32 %v8867, %v9178
  %v9239 = vadd.f32 %v8868, %v9179
  %v9240 = vadd.f32 %v8869, %v9180
  %v9241 = vadd.f32 %v8870, %v9181
  %v9242 = vadd.f32 %v8871, %v9182
  %v9243 = vadd.f32 %v8872, %v9183
  %v9244 = vadd.f32 %v8873, %v9184
  %v9245 = vadd.f32 %v8874, %v9185
  %v9246 = vadd.f32 %v8875, %v9186
  %v9247 = vadd.f32 %v8876, %v9187
  %v9248 = vadd.f32 %v8877, %v9188
  %v9249 = vadd.f32 %v8878, %v9189
  %v9250 = vadd.f32 %v8879, %v9190
  %v9251 = vadd.f32 %v8880, %v9191
  %v9252 = vadd.f32 %v8881, %v9192
  %v9253 = vadd.f32 %v8882, %v9193
  %v9254 = vadd.f32 %v8883, %v9127
  %v9255 = vadd.f32 %v8884, %v9129
  %v9256 = vadd.f32 %v8885, %v9168
  %v9257 = vadd.f32 %v8886, %v9170
  %v9258 = vadd.f32 %v8887, %v9194
  %v9259 = vadd.f32 %v8888, %v9195
  %v9260 = vadd.f32 %v8889, %v9196
  %v9261 = vadd.f32 %v8890, %v9197
  %v9262 = vadd.f32 %v8891, %v9198
  %v9263 = vadd.f32 %v8892, %v9199
  %v9264 = vadd.f32 %v8893, %v9200
  %v9265 = vadd.f32 %v8894, %v9201
  %v9266 = vadd.f32 %v8895, %v9202
  %v9267 = vadd.f32 %v8896, %v9203
  %v9268 = vadd.f32 %v8897, %v9204
  %v9269 = vadd.f32 %v8898, %v9205
  %v9270 = vxor.u32 %v9238, 2147483648
  %v9271 = vxor.u32 %v9239, 2147483648
  %v9272 = vxor.u32 %v9240, 2147483648
  %v9273 = vxor.u32 %v9242, 2147483648
  %v9274 = vxor.u32 %v9243, 2147483648
  %v9275 = vxor.u32 %v9244, 2147483648
  %v9276 = vxor.u32 %v9246, 2147483648
  %v9277 = vxor.u32 %v9247, 2147483648
  %v9278 = vxor.u32 %v9248, 2147483648
  %v9279 = vxor.u32 %v9250, 2147483648
  %v9280 = vxor.u32 %v9251, 2147483648
  %v9281 = vxor.u32 %v9252, 2147483648
  %v9282 = vxor.u32 %v9254, 2147483648
  %v9283 = vxor.u32 %v9255, 2147483648
  %v9284 = vxor.u32 %v9256, 2147483648
  %v9285 = vxor.u32 %v9258, 2147483648
  %v9286 = vxor.u32 %v9259, 2147483648
  %v9287 = vxor.u32 %v9260, 2147483648
  %v9288 = vxor.u32 %v9262, 2147483648
  %v9289 = vxor.u32 %v9263, 2147483648
  %v9290 = vxor.u32 %v9264, 2147483648
  %v9291 = vxor.u32 %v9266, 2147483648
  %v9292 = vxor.u32 %v9267, 2147483648
  %v9293 = vxor.u32 %v9268, 2147483648
  %v9294 = vmul.f32 %v9270, 1.442695
  %v9295 = vpow.pop %v9294
  %v9296 = vmul.f32 %v9271, 1.442695
  %v9297 = vpow.pop %v9296
  %v9298 = vmul.f32 %v9272, 1.442695
  %v9299 = vpow.pop %v9298
  %v9300 = vmul.f32 %v9273, 1.442695
  %v9301 = vpow.pop %v9300
  %v9302 = vmul.f32 %v9274, 1.442695
  %v9303 = vpow.pop %v9302
  %v9304 = vmul.f32 %v9275, 1.442695
  %v9305 = vpow.pop %v9304
  %v9306 = vmul.f32 %v9276, 1.442695
  %v9307 = vpow.pop %v9306
  %v9308 = vmul.f32 %v9277, 1.442695
  %v9309 = vpow.pop %v9308
  %v9310 = vmul.f32 %v9278, 1.442695
  %v9311 = vpow.pop %v9310
  %v9312 = vmul.f32 %v9279, 1.442695
  %v9313 = vpow.pop %v9312
  %v9314 = vmul.f32 %v9280, 1.442695
  %v9315 = vpow.pop %v9314
  %v9316 = vmul.f32 %v9281, 1.442695
  %v9317 = vpow.pop %v9316
  %v9318 = vmul.f32 %v9282, 1.442695
  %v9319 = vpow.pop %v9318
  %v9320 = vmul.f32 %v9283, 1.442695
  %v9321 = vpow.pop %v9320
  %v9322 = vmul.f32 %v9284, 1.442695
  %v9323 = vpow.pop %v9322
  %v9324 = vmul.f32 %v9285, 1.442695
  %v9325 = vpow.pop %v9324
  %v9326 = vmul.f32 %v9286, 1.442695
  %v9327 = vpow.pop %v9326
  %v9328 = vmul.f32 %v9287, 1.442695
  %v9329 = vpow.pop %v9328
  %v9330 = vmul.f32 %v9288, 1.442695
  %v9331 = vpow.pop %v9330
  %v9332 = vmul.f32 %v9289, 1.442695
  %v9333 = vpow.pop %v9332
  %v9334 = vmul.f32 %v9290, 1.442695
  %v9335 = vpow.pop %v9334
  %v9336 = vmul.f32 %v9291, 1.442695
  %v9337 = vpow.pop %v9336
  %v9338 = vmul.f32 %v9292, 1.442695
  %v9339 = vpow.pop %v9338
  %v9340 = vmul.f32 %v9293, 1.442695
  %v9341 = vpow.pop %v9340
  %v9342 = vadd.f32 %v9295, 1.0
  %v9343 = vadd.f32 %v9297, 1.0
  %v9344 = vadd.f32 %v9299, 1.0
  %v9345 = vadd.f32 %v9301, 1.0
  %v9346 = vadd.f32 %v9303, 1.0
  %v9347 = vadd.f32 %v9305, 1.0
  %v9348 = vadd.f32 %v9307, 1.0
  %v9349 = vadd.f32 %v9309, 1.0
  %v9350 = vadd.f32 %v9311, 1.0
  %v9351 = vadd.f32 %v9313, 1.0
  %v9352 = vadd.f32 %v9315, 1.0
  %v9353 = vadd.f32 %v9317, 1.0
  %v9354 = vadd.f32 %v9319, 1.0
  %v9355 = vadd.f32 %v9321, 1.0
  %v9356 = vadd.f32 %v9323, 1.0
  %v9357 = vadd.f32 %v9325, 1.0
  %v9358 = vadd.f32 %v9327, 1.0
  %v9359 = vadd.f32 %v9329, 1.0
  %v9360 = vadd.f32 %v9331, 1.0
  %v9361 = vadd.f32 %v9333, 1.0
  %v9362 = vadd.f32 %v9335, 1.0
  %v9363 = vadd.f32 %v9337, 1.0
  %v9364 = vadd.f32 %v9339, 1.0
  %v9365 = vadd.f32 %v9341, 1.0
  %v9366 = vrcp.pop %v9342
  %v9367 = vmul.f32 1.0, %v9366
  %v9368 = vrcp.pop %v9343
  %v9369 = vmul.f32 1.0, %v9368
  %v9370 = vrcp.pop %v9344
  %v9371 = vmul.f32 1.0, %v9370
  %v9372 = vrcp.pop %v9345
  %v9373 = vmul.f32 1.0, %v9372
  %v9374 = vrcp.pop %v9346
  %v9375 = vmul.f32 1.0, %v9374
  %v9376 = vrcp.pop %v9347
  %v9377 = vmul.f32 1.0, %v9376
  %v9378 = vrcp.pop %v9348
  %v9379 = vmul.f32 1.0, %v9378
  %v9380 = vrcp.pop %v9349
  %v9381 = vmul.f32 1.0, %v9380
  %v9382 = vrcp.pop %v9350
  %v9383 = vmul.f32 1.0, %v9382
  %v9384 = vrcp.pop %v9351
  %v9385 = vmul.f32 1.0, %v9384
  %v9386 = vrcp.pop %v9352
  %v9387 = vmul.f32 1.0, %v9386
  %v9388 = vrcp.pop %v9353
  %v9389 = vmul.f32 1.0, %v9388
  %v9390 = vrcp.pop %v9354
  %v9391 = vmul.f32 1.0, %v9390
  %v9392 = vrcp.pop %v9355
  %v9393 = vmul.f32 1.0, %v9392
  %v9394 = vrcp.pop %v9356
  %v9395 = vmul.f32 1.0, %v9394
  %v9396 = vrcp.pop %v9357
  %v9397 = vmul.f32 1.0, %v9396
  %v9398 = vrcp.pop %v9358
  %v9399 = vmul.f32 1.0, %v9398
  %v9400 = vrcp.pop %v9359
  %v9401 = vmul.f32 1.0, %v9400
  %v9402 = vrcp.pop %v9360
  %v9403 = vmul.f32 1.0, %v9402
  %v9404 = vrcp.pop %v9361
  %v9405 = vmul.f32 1.0, %v9404
  %v9406 = vrcp.pop %v9362
  %v9407 = vmul.f32 1.0, %v9406
  %v9408 = vrcp.pop %v9363
  %v9409 = vmul.f32 1.0, %v9408
  %v9410 = vrcp.pop %v9364
  %v9411 = vmul.f32 1.0, %v9410
  %v9412 = vrcp.pop %v9365
  %v9413 = vmul.f32 1.0, %v9412
  %v9414 = vtanh.pop %v9241
  %v9415 = vtanh.pop %v9245
  %v9416 = vtanh.pop %v9249
  %v9417 = vtanh.pop %v9253
  %v9418 = vtanh.pop %v9257
  %v9419 = vtanh.pop %v9261
  %v9420 = vtanh.pop %v9265
  %v9421 = vtanh.pop %v9269
  %v9422 = vld [vmem:[#allocation3] sm:$0xff]
  %v9424 = vrot.slane %v9422, 4
  %v9425 = vrot.slane %v9422, 5
  %v9426 = vrot.slane %v9422, 6
  %v9427 = vrot.slane %v9422, 7
  %v9428 = vrot.slane %v9422, 1
  %v9429 = vrot.slane %v9422, 2
  %v9430 = vrot.slane %v9422, 3
  %v9439 = vmul.f32 %v9369, %v9424
  %v9440 = vmul.f32 %v9375, %v9425
  %v9441 = vmul.f32 %v9381, %v9426
  %v9442 = vmul.f32 %v9387, %v9427
  %v9443 = vmul.f32 %v9393, %v9422
  %v9444 = vmul.f32 %v9399, %v9428
  %v9445 = vmul.f32 %v9405, %v9429
  %v9446 = vmul.f32 %v9411, %v9430
  %v9447 = vmul.f32 %v9367, %v9414
  %v9448 = vmul.f32 %v9373, %v9415
  %v9449 = vmul.f32 %v9379, %v9416
  %v9450 = vmul.f32 %v9385, %v9417
  %v9451 = vmul.f32 %v9391, %v9418
  %v9452 = vmul.f32 %v9397, %v9419
  %v9453 = vmul.f32 %v9403, %v9420
  %v9454 = vmul.f32 %v9409, %v9421
  %v9455 = vadd.f32 %v9439, %v9447
  %v9456 = vadd.f32 %v9440, %v9448
  %v9457 = vadd.f32 %v9441, %v9449
  %v9458 = vadd.f32 %v9442, %v9450
  %v9459 = vadd.f32 %v9443, %v9451
  %v9460 = vadd.f32 %v9444, %v9452
  %v9461 = vadd.f32 %v9445, %v9453
  %v9462 = vadd.f32 %v9446, %v9454
  %v9463 = vtanh.pop %v9455
  %v9464 = vtanh.pop %v9456
  %v9465 = vtanh.pop %v9457
  %v9466 = vtanh.pop %v9458
  %v9467 = vtanh.pop %v9459
  %v9468 = vtanh.pop %v9460
  %v9469 = vtanh.pop %v9461
  %v9470 = vtanh.pop %v9462
  %v9471 = vmul.f32 %v9371, %v9463
  %v9472 = vmul.f32 %v9377, %v9464
  %v9473 = vmul.f32 %v9383, %v9465
  %v9474 = vmul.f32 %v9389, %v9466
  %v9475 = vmul.f32 %v9395, %v9467
  %v9476 = vmul.f32 %v9401, %v9468
  %v9477 = vmul.f32 %v9407, %v9469
  %v9478 = vmul.f32 %v9413, %v9470
  %v9479 = vpack.c.bf16 %v9471, %v9471
  %v9480 = vpack.c.bf16 %v9472, %v9472
  %v9481 = vpack.c.bf16 %v9473, %v9473
  %v9482 = vpack.c.bf16 %v9474, %v9474
  %v9483 = vpack.c.bf16 %v9475, %v9475
  %v9484 = vpack.c.bf16 %v9476, %v9476
  %v9485 = vpack.c.bf16 %v9477, %v9477
  %v9486 = vpack.c.bf16 %v9478, %v9478
  %v9495 = vrot.slane %v9456, 7
  %v9496 = vsel %vm675, %v9495, %v9455
  %v9497 = vrot.slane %v9457, 6
  %v9498 = vsel %vm678, %v9497, %v9496
  %v9499 = vrot.slane %v9458, 5
  %v9500 = vsel %vm681, %v9499, %v9498
  %v9501 = vrot.slane %v9459, 4
  %v9502 = vrot.slane %v9460, 3
  %v9503 = vsel %vm663, %v9502, %v9501
  %v9504 = vrot.slane %v9461, 2
  %v9505 = vsel %vm666, %v9504, %v9503
  %v9506 = vrot.slane %v9462, 1
  %v9507 = vsel %vm669, %v9506, %v9505
  %9510 = vst [vmem:[#allocation3 - $0x4] sm:$0xf0] %v9500
  %9511 = vst [vmem:[#allocation3 + $0x4] sm:$0xf] %v9507
  %v9520 = vunpack.c.l.b16 %v9479
  %v9521 = vunpack.c.l.b16 %v9480
  %v9522 = vunpack.c.l.b16 %v9481
  %v9523 = vunpack.c.l.b16 %v9482
  %v9524 = vunpack.c.l.b16 %v9483
  %v9525 = vunpack.c.l.b16 %v9484
  %v9526 = vunpack.c.l.b16 %v9485
  %v9527 = vunpack.c.l.b16 %v9486
  %v9528 = vpack.c.b16 %v9520, %v9520
  %v9529 = vpack.c.b16 %v9521, %v9521
  %v9530 = vpack.c.b16 %v9522, %v9522
  %v9531 = vpack.c.b16 %v9523, %v9523
  %v9532 = vpack.c.b16 %v9524, %v9524
  %v9533 = vpack.c.b16 %v9525, %v9525
  %v9534 = vpack.c.b16 %v9526, %v9526
  %v9535 = vpack.c.b16 %v9527, %v9527
  %v9536 = vunpack.c.l.b16 %v9528
  %v9537 = vunpack.c.l.b16 %v9529
  %v9538 = vunpack.c.l.b16 %v9530
  %v9539 = vunpack.c.l.b16 %v9531
  %v9540 = vunpack.c.l.b16 %v9532
  %v9541 = vunpack.c.l.b16 %v9533
  %v9542 = vunpack.c.l.b16 %v9534
  %v9543 = vunpack.c.l.b16 %v9535
  %v9544 = vrot.slane %v9536, 4
  %v9545 = vrot.slane %v9537, 3
  %v9546 = vsel %vm663, %v9545, %v9544
  %v9547 = vrot.slane %v9538, 2
  %v9548 = vsel %vm666, %v9547, %v9546
  %v9549 = vrot.slane %v9539, 1
  %v9550 = vsel %vm669, %v9549, %v9548
  %v9551 = vsel %vm672, %v9540, %v9550
  %v9552 = vrot.slane %v9541, 7
  %v9553 = vsel %vm675, %v9552, %v9551
  %v9554 = vrot.slane %v9542, 6
  %v9555 = vsel %vm678, %v9554, %v9553
  %v9556 = vrot.slane %v9543, 5
  %v9557 = vsel %vm681, %v9556, %v9555
  %v9558 = vpack.c.b16 %v9557, %v9557
  %9560 = vst [vmem:[#allocation2] sm:$0xf] %v9558
  %v9561 = vld [vmem:[%s2 + $0x4] sm:$0x4]
  %v9562 = vsel %vm3682, %v9479, %v9561
  %9563 = vst [vmem:[%s2 + $0x4] sm:$0x4] %v9562
  %v9564 = vld [vmem:[%s2 + $0xc] sm:$0x4]
  %v9565 = vsel %vm3682, %v9480, %v9564
  %9566 = vst [vmem:[%s2 + $0xc] sm:$0x4] %v9565
  %v9567 = vld [vmem:[%s2 + $0x14] sm:$0x4]
  %v9568 = vsel %vm3682, %v9481, %v9567
  %9569 = vst [vmem:[%s2 + $0x14] sm:$0x4] %v9568
  %v9570 = vld [vmem:[%s2 + $0x1c] sm:$0x4]
  %v9571 = vsel %vm3682, %v9482, %v9570
  %9572 = vst [vmem:[%s2 + $0x1c] sm:$0x4] %v9571
  %v9573 = vld [vmem:[%s2 + $0x24] sm:$0x4]
  %v9574 = vsel %vm3682, %v9483, %v9573
  %9575 = vst [vmem:[%s2 + $0x24] sm:$0x4] %v9574
  %v9576 = vld [vmem:[%s2 + $0x2c] sm:$0x4]
  %v9577 = vsel %vm3682, %v9484, %v9576
  %9578 = vst [vmem:[%s2 + $0x2c] sm:$0x4] %v9577
  %v9579 = vld [vmem:[%s2 + $0x34] sm:$0x4]
  %v9580 = vsel %vm3682, %v9485, %v9579
  %9581 = vst [vmem:[%s2 + $0x34] sm:$0x4] %v9580
  %v9582 = vld [vmem:[%s2 + $0x3c] sm:$0x4]
  %v9583 = vsel %vm3682, %v9486, %v9582
  %9584 = vst [vmem:[%s2 + $0x3c] sm:$0x4] %v9583
  %v9585 = vld [vmem:[%s0 + $0x10] sm:$0x44]
  %v9586 = vld [vmem:[%s0 + $0x18] sm:$0x44]
  %v9587 = vld [vmem:[%s0 + $0x30] sm:$0x44]
  %v9588 = vld [vmem:[%s0 + $0x38] sm:$0x44]
  %v9589 = vld [vmem:[%s0 + $0x50] sm:$0x44]
  %v9590 = vld [vmem:[%s0 + $0x58] sm:$0x44]
  %v9591 = vld [vmem:[%s0 + $0x70] sm:$0x44]
  %v9592 = vld [vmem:[%s0 + $0x78] sm:$0x44]
  %v9593 = vld [vmem:[%s0 + $0x90] sm:$0x44]
  %v9594 = vld [vmem:[%s0 + $0x98] sm:$0x44]
  %v9595 = vld [vmem:[%s0 + $0xb0] sm:$0x44]
  %v9596 = vld [vmem:[%s0 + $0xb8] sm:$0x44]
  %v9597 = vld [vmem:[%s0 + $0xd0] sm:$0x44]
  %v9598 = vld [vmem:[%s0 + $0xd8] sm:$0x44]
  %v9599 = vld [vmem:[%s0 + $0xf0] sm:$0x44]
  %v9600 = vld [vmem:[%s0 + $0xf8] sm:$0x44]
  %v9601 = vunpack.c.l.bf16 %v9585
  %v9602 = vunpack.c.h.bf16 %v9585
  %v9603 = vunpack.c.l.bf16 %v9586
  %v9604 = vunpack.c.h.bf16 %v9586
  %v9605 = vunpack.c.l.bf16 %v9587
  %v9606 = vunpack.c.h.bf16 %v9587
  %v9607 = vunpack.c.l.bf16 %v9588
  %v9608 = vunpack.c.h.bf16 %v9588
  %v9609 = vunpack.c.l.bf16 %v9589
  %v9610 = vunpack.c.h.bf16 %v9589
  %v9611 = vunpack.c.l.bf16 %v9590
  %v9612 = vunpack.c.h.bf16 %v9590
  %v9613 = vunpack.c.l.bf16 %v9591
  %v9614 = vunpack.c.h.bf16 %v9591
  %v9615 = vunpack.c.l.bf16 %v9592
  %v9616 = vunpack.c.h.bf16 %v9592
  %v9617 = vunpack.c.l.bf16 %v9593
  %v9618 = vunpack.c.h.bf16 %v9593
  %v9619 = vunpack.c.l.bf16 %v9594
  %v9620 = vunpack.c.h.bf16 %v9594
  %v9621 = vunpack.c.l.bf16 %v9595
  %v9622 = vunpack.c.h.bf16 %v9595
  %v9623 = vunpack.c.l.bf16 %v9596
  %v9624 = vunpack.c.h.bf16 %v9596
  %v9625 = vunpack.c.l.bf16 %v9597
  %v9626 = vunpack.c.h.bf16 %v9597
  %v9627 = vunpack.c.l.bf16 %v9598
  %v9628 = vunpack.c.h.bf16 %v9598
  %v9629 = vunpack.c.l.bf16 %v9599
  %v9630 = vunpack.c.h.bf16 %v9599
  %v9631 = vunpack.c.l.bf16 %v9600
  %v9632 = vunpack.c.h.bf16 %v9600
  %v9633 = vld [vmem:[#allocation2] sm:$0xf]
  %v9634 = vld [vmem:[%s1] sm:$0xff]
  %v9635 = vld [vmem:[%s1 + $0x8] sm:$0xff]
  %v9636 = vld [vmem:[%s1 + $0x10] sm:$0xff]
  %v9637 = vld [vmem:[%s1 + $0x18] sm:$0xff]
  %v9638 = vld [vmem:[%s1 + $0x20] sm:$0xff]
  %v9639 = vld [vmem:[%s1 + $0x28] sm:$0xff]
  %v9640 = vld [vmem:[%s1 + $0x30] sm:$0xff]
  %v9641 = vld [vmem:[%s1 + $0x38] sm:$0xff]
  %v9642 = vld [vmem:[%s1 + $0x40] sm:$0xff]
  %v9643 = vld [vmem:[%s1 + $0x48] sm:$0xff]
  %v9644 = vld [vmem:[%s1 + $0x50] sm:$0xff]
  %v9645 = vld [vmem:[%s1 + $0x58] sm:$0xff]
  %v9646 = vld [vmem:[%s1 + $0x60] sm:$0xff]
  %v9647 = vld [vmem:[%s1 + $0x68] sm:$0xff]
  %v9648 = vld [vmem:[%s1 + $0x70] sm:$0xff]
  %v9649 = vld [vmem:[%s1 + $0x78] sm:$0xff]
  %v9650 = vld [vmem:[%s1 + $0x80] sm:$0xff]
  %v9651 = vld [vmem:[%s1 + $0x88] sm:$0xff]
  %v9652 = vld [vmem:[%s1 + $0x90] sm:$0xff]
  %v9653 = vld [vmem:[%s1 + $0x98] sm:$0xff]
  %v9654 = vld [vmem:[%s1 + $0xa0] sm:$0xff]
  %v9655 = vld [vmem:[%s1 + $0xa8] sm:$0xff]
  %v9656 = vld [vmem:[%s1 + $0xb0] sm:$0xff]
  %v9657 = vld [vmem:[%s1 + $0xb8] sm:$0xff]
  %v9658 = vld [vmem:[%s1 + $0xc0] sm:$0xff]
  %v9659 = vld [vmem:[%s1 + $0xc8] sm:$0xff]
  %v9660 = vld [vmem:[%s1 + $0xd0] sm:$0xff]
  %v9661 = vld [vmem:[%s1 + $0xd8] sm:$0xff]
  %v9662 = vld [vmem:[%s1 + $0xe0] sm:$0xff]
  %v9663 = vld [vmem:[%s1 + $0xe8] sm:$0xff]
  %v9664 = vld [vmem:[%s1 + $0xf0] sm:$0xff]
  %v9665 = vld [vmem:[%s1 + $0xf8] sm:$0xff]
  %v9698 = vunpack.c.l.b16 %v9634
  %v9699 = vunpack.c.h.b16 %v9634
  %v9700 = vunpack.c.l.b16 %v9635
  %v9701 = vunpack.c.h.b16 %v9635
  %v9702 = vunpack.c.l.b16 %v9636
  %v9703 = vunpack.c.h.b16 %v9636
  %v9704 = vunpack.c.l.b16 %v9637
  %v9705 = vunpack.c.h.b16 %v9637
  %v9706 = vunpack.c.l.b16 %v9638
  %v9707 = vunpack.c.h.b16 %v9638
  %v9708 = vunpack.c.l.b16 %v9639
  %v9709 = vunpack.c.h.b16 %v9639
  %v9710 = vunpack.c.l.b16 %v9640
  %v9711 = vunpack.c.h.b16 %v9640
  %v9712 = vunpack.c.l.b16 %v9641
  %v9713 = vunpack.c.h.b16 %v9641
  %v9714 = vunpack.c.l.b16 %v9642
  %v9715 = vunpack.c.h.b16 %v9642
  %v9716 = vunpack.c.l.b16 %v9643
  %v9717 = vunpack.c.h.b16 %v9643
  %v9718 = vunpack.c.l.b16 %v9644
  %v9719 = vunpack.c.h.b16 %v9644
  %v9720 = vunpack.c.l.b16 %v9645
  %v9721 = vunpack.c.h.b16 %v9645
  %v9722 = vunpack.c.l.b16 %v9646
  %v9723 = vunpack.c.h.b16 %v9646
  %v9724 = vunpack.c.l.b16 %v9647
  %v9725 = vunpack.c.h.b16 %v9647
  %v9726 = vunpack.c.l.b16 %v9648
  %v9727 = vunpack.c.h.b16 %v9648
  %v9728 = vunpack.c.l.b16 %v9649
  %v9729 = vunpack.c.h.b16 %v9649
  %v9730 = vunpack.c.l.b16 %v9650
  %v9731 = vunpack.c.h.b16 %v9650
  %v9732 = vunpack.c.l.b16 %v9651
  %v9733 = vunpack.c.h.b16 %v9651
  %v9734 = vunpack.c.l.b16 %v9652
  %v9735 = vunpack.c.h.b16 %v9652
  %v9736 = vunpack.c.l.b16 %v9653
  %v9737 = vunpack.c.h.b16 %v9653
  %v9738 = vunpack.c.l.b16 %v9654
  %v9739 = vunpack.c.h.b16 %v9654
  %v9740 = vunpack.c.l.b16 %v9655
  %v9741 = vunpack.c.h.b16 %v9655
  %v9742 = vunpack.c.l.b16 %v9656
  %v9743 = vunpack.c.h.b16 %v9656
  %v9744 = vunpack.c.l.b16 %v9657
  %v9745 = vunpack.c.h.b16 %v9657
  %v9746 = vunpack.c.l.b16 %v9658
  %v9747 = vunpack.c.h.b16 %v9658
  %v9748 = vunpack.c.l.b16 %v9659
  %v9749 = vunpack.c.h.b16 %v9659
  %v9750 = vunpack.c.l.b16 %v9660
  %v9751 = vunpack.c.h.b16 %v9660
  %v9752 = vunpack.c.l.b16 %v9661
  %v9753 = vunpack.c.h.b16 %v9661
  %v9754 = vunpack.c.l.b16 %v9662
  %v9755 = vunpack.c.h.b16 %v9662
  %v9756 = vunpack.c.l.b16 %v9663
  %v9757 = vunpack.c.h.b16 %v9663
  %v9758 = vunpack.c.l.b16 %v9664
  %v9759 = vunpack.c.h.b16 %v9664
  %v9760 = vunpack.c.l.b16 %v9665
  %v9761 = vunpack.c.h.b16 %v9665
  %v9762 = vpack.c.b16 %v9702, %v9698
  %v9763 = vpack.c.b16 %v9703, %v9699
  %v9764 = vpack.c.b16 %v9704, %v9700
  %v9765 = vpack.c.b16 %v9705, %v9701
  %v9766 = vpack.c.b16 %v9710, %v9706
  %v9767 = vpack.c.b16 %v9711, %v9707
  %v9768 = vpack.c.b16 %v9712, %v9708
  %v9769 = vpack.c.b16 %v9713, %v9709
  %v9770 = vpack.c.b16 %v9718, %v9714
  %v9771 = vpack.c.b16 %v9719, %v9715
  %v9772 = vpack.c.b16 %v9720, %v9716
  %v9773 = vpack.c.b16 %v9721, %v9717
  %v9774 = vpack.c.b16 %v9726, %v9722
  %v9775 = vpack.c.b16 %v9727, %v9723
  %v9776 = vpack.c.b16 %v9728, %v9724
  %v9777 = vpack.c.b16 %v9729, %v9725
  %v9778 = vpack.c.b16 %v9734, %v9730
  %v9779 = vpack.c.b16 %v9735, %v9731
  %v9780 = vpack.c.b16 %v9736, %v9732
  %v9781 = vpack.c.b16 %v9737, %v9733
  %v9782 = vpack.c.b16 %v9742, %v9738
  %v9783 = vpack.c.b16 %v9743, %v9739
  %v9784 = vpack.c.b16 %v9744, %v9740
  %v9785 = vpack.c.b16 %v9745, %v9741
  %v9786 = vpack.c.b16 %v9750, %v9746
  %v9787 = vpack.c.b16 %v9751, %v9747
  %v9788 = vpack.c.b16 %v9752, %v9748
  %v9789 = vpack.c.b16 %v9753, %v9749
  %v9790 = vpack.c.b16 %v9758, %v9754
  %v9791 = vpack.c.b16 %v9759, %v9755
  %v9792 = vpack.c.b16 %v9760, %v9756
  %v9793 = vpack.c.b16 %v9761, %v9757
  %9826 = vmatprep.subr.bf16.mxu0 %v9791
  %9827 = vmatpush1.bf16.msra.mxu0 %v9790
  %9828 = vmatprep.subr.bf16.mxu0 %v9787
  %9829 = vmatpush1.bf16.msra.mxu0 %v9786
  %9830 = vmatprep.subr.bf16.mxu0 %v9783
  %9831 = vmatpush1.bf16.msra.mxu0 %v9782
  %9832 = vmatprep.subr.bf16.mxu0 %v9779
  %9833 = vmatpush1.bf16.msra.mxu0 %v9778
  %9834 = vmatprep.subr.bf16.mxu0 %v9775
  %9835 = vmatpush1.bf16.msra.mxu0 %v9774
  %9836 = vmatprep.subr.bf16.mxu0 %v9771
  %9837 = vmatpush1.bf16.msra.mxu0 %v9770
  %9838 = vmatprep.subr.bf16.mxu0 %v9767
  %9839 = vmatpush1.bf16.msra.mxu0 %v9766
  %9840 = vmatprep.subr.bf16.mxu0 %v9763
  %9841 = vmatpush1.bf16.msra.mxu0 %v9762
  %9842 = vmatprep.subr.bf16.mxu0 0
  %9843 = vmatpush2.bf16.msra.mxu0 0
  %9844 = vmatprep.subr.bf16.mxu0 0
  %9845 = vmatpush2.bf16.msra.mxu0 0
  %9846 = vmatprep.subr.bf16.mxu0 0
  %9847 = vmatpush2.bf16.msra.mxu0 0
  %9848 = vmatprep.subr.bf16.mxu0 0
  %9849 = vmatpush2.bf16.msra.mxu0 0
  %9850 = vmatprep.subr.bf16.mxu0 0
  %9851 = vmatpush2.bf16.msra.mxu0 0
  %9852 = vmatprep.subr.bf16.mxu0 0
  %9853 = vmatpush2.bf16.msra.mxu0 0
  %9854 = vmatprep.subr.bf16.mxu0 0
  %9855 = vmatpush2.bf16.msra.mxu0 0
  %9856 = vmatprep.subr.bf16.mxu0 0
  %9857 = vmatpush2.bf16.msra.mxu0 0
  %9858 = vmatprep.mubr.bf16.mxu0 0
  %9859 = vmatmul.mubr.bf16.gmra.mxu0 %v9633
  %v9860 = vpop.f32.mrf.mxu0
  %v9861 = vadd.f32 0.0, %v9860
  %v9862 = vpop.f32.mrf.mxu0
  %v9863 = vadd.f32 0.0, %v9862
  %v9864 = vpop.f32.mrf.mxu0
  %v9865 = vpop.f32.mrf.mxu0
  %9866 = vdwg.mxu0
  %9867 = vmatprep.subr.bf16.mxu0 %v9793
  %9868 = vmatpush1.bf16.msra.mxu0 %v9792
  %9869 = vmatprep.subr.bf16.mxu0 %v9789
  %9870 = vmatpush1.bf16.msra.mxu0 %v9788
  %9871 = vmatprep.subr.bf16.mxu0 %v9785
  %9872 = vmatpush1.bf16.msra.mxu0 %v9784
  %9873 = vmatprep.subr.bf16.mxu0 %v9781
  %9874 = vmatpush1.bf16.msra.mxu0 %v9780
  %9875 = vmatprep.subr.bf16.mxu0 %v9777
  %9876 = vmatpush1.bf16.msra.mxu0 %v9776
  %9877 = vmatprep.subr.bf16.mxu0 %v9773
  %9878 = vmatpush1.bf16.msra.mxu0 %v9772
  %9879 = vmatprep.subr.bf16.mxu0 %v9769
  %9880 = vmatpush1.bf16.msra.mxu0 %v9768
  %9881 = vmatprep.subr.bf16.mxu0 %v9765
  %9882 = vmatpush1.bf16.msra.mxu0 %v9764
  %9883 = vmatprep.subr.bf16.mxu0 0
  %9884 = vmatpush2.bf16.msra.mxu0 0
  %9885 = vmatprep.subr.bf16.mxu0 0
  %9886 = vmatpush2.bf16.msra.mxu0 0
  %9887 = vmatprep.subr.bf16.mxu0 0
  %9888 = vmatpush2.bf16.msra.mxu0 0
  %9889 = vmatprep.subr.bf16.mxu0 0
  %9890 = vmatpush2.bf16.msra.mxu0 0
  %9891 = vmatprep.subr.bf16.mxu0 0
  %9892 = vmatpush2.bf16.msra.mxu0 0
  %9893 = vmatprep.subr.bf16.mxu0 0
  %9894 = vmatpush2.bf16.msra.mxu0 0
  %9895 = vmatprep.subr.bf16.mxu0 0
  %9896 = vmatpush2.bf16.msra.mxu0 0
  %9897 = vmatprep.subr.bf16.mxu0 0
  %9898 = vmatpush2.bf16.msra.mxu0 0
  %9899 = vmatprep.mubr.bf16.mxu0 0
  %9900 = vmatmul.mubr.bf16.gmra.mxu0 %v9633
  %v9901 = vpop.f32.mrf.mxu0
  %v9902 = vadd.f32 0.0, %v9901
  %v9903 = vpop.f32.mrf.mxu0
  %v9904 = vadd.f32 0.0, %v9903
  %v9905 = vpop.f32.mrf.mxu0
  %v9906 = vpop.f32.mrf.mxu0
  %9907 = vdwg.mxu0
  %v9912 = vrot.slane %v9861, 3
  %v9913 = vrot.slane %v9863, 3
  %v9914 = vrot.slane %v9902, 3
  %v9915 = vrot.slane %v9904, 3
  %v9916 = vrot.slane %v9861, 4
  %v9917 = vrot.slane %v9863, 4
  %v9918 = vrot.slane %v9902, 4
  %v9919 = vrot.slane %v9904, 4
  %v9920 = vrot.slane %v9861, 5
  %v9921 = vrot.slane %v9863, 5
  %v9922 = vrot.slane %v9902, 5
  %v9923 = vrot.slane %v9904, 5
  %v9924 = vrot.slane %v9861, 6
  %v9925 = vrot.slane %v9863, 6
  %v9926 = vrot.slane %v9902, 6
  %v9927 = vrot.slane %v9904, 6
  %v9928 = vrot.slane %v9861, 7
  %v9929 = vrot.slane %v9863, 7
  %v9930 = vrot.slane %v9902, 7
  %v9931 = vrot.slane %v9904, 7
  %v9932 = vrot.slane %v9861, 1
  %v9933 = vrot.slane %v9863, 1
  %v9934 = vrot.slane %v9902, 1
  %v9935 = vrot.slane %v9904, 1
  %v9936 = vrot.slane %v9861, 2
  %v9937 = vrot.slane %v9863, 2
  %v9938 = vrot.slane %v9902, 2
  %v9939 = vrot.slane %v9904, 2
  %v9972 = vadd.f32 %v9601, %v9912
  %v9973 = vadd.f32 %v9602, %v9913
  %v9974 = vadd.f32 %v9603, %v9914
  %v9975 = vadd.f32 %v9604, %v9915
  %v9976 = vadd.f32 %v9605, %v9916
  %v9977 = vadd.f32 %v9606, %v9917
  %v9978 = vadd.f32 %v9607, %v9918
  %v9979 = vadd.f32 %v9608, %v9919
  %v9980 = vadd.f32 %v9609, %v9920
  %v9981 = vadd.f32 %v9610, %v9921
  %v9982 = vadd.f32 %v9611, %v9922
  %v9983 = vadd.f32 %v9612, %v9923
  %v9984 = vadd.f32 %v9613, %v9924
  %v9985 = vadd.f32 %v9614, %v9925
  %v9986 = vadd.f32 %v9615, %v9926
  %v9987 = vadd.f32 %v9616, %v9927
  %v9988 = vadd.f32 %v9617, %v9928
  %v9989 = vadd.f32 %v9618, %v9929
  %v9990 = vadd.f32 %v9619, %v9930
  %v9991 = vadd.f32 %v9620, %v9931
  %v9992 = vadd.f32 %v9621, %v9861
  %v9993 = vadd.f32 %v9622, %v9863
  %v9994 = vadd.f32 %v9623, %v9902
  %v9995 = vadd.f32 %v9624, %v9904
  %v9996 = vadd.f32 %v9625, %v9932
  %v9997 = vadd.f32 %v9626, %v9933
  %v9998 = vadd.f32 %v9627, %v9934
  %v9999 = vadd.f32 %v9628, %v9935
  %v10000 = vadd.f32 %v9629, %v9936
  %v10001 = vadd.f32 %v9630, %v9937
  %v10002 = vadd.f32 %v9631, %v9938
  %v10003 = vadd.f32 %v9632, %v9939
  %v10004 = vxor.u32 %v9972, 2147483648
  %v10005 = vxor.u32 %v9973, 2147483648
  %v10006 = vxor.u32 %v9974, 2147483648
  %v10007 = vxor.u32 %v9976, 2147483648
  %v10008 = vxor.u32 %v9977, 2147483648
  %v10009 = vxor.u32 %v9978, 2147483648
  %v10010 = vxor.u32 %v9980, 2147483648
  %v10011 = vxor.u32 %v9981, 2147483648
  %v10012 = vxor.u32 %v9982, 2147483648
  %v10013 = vxor.u32 %v9984, 2147483648
  %v10014 = vxor.u32 %v9985, 2147483648
  %v10015 = vxor.u32 %v9986, 2147483648
  %v10016 = vxor.u32 %v9988, 2147483648
  %v10017 = vxor.u32 %v9989, 2147483648
  %v10018 = vxor.u32 %v9990, 2147483648
  %v10019 = vxor.u32 %v9992, 2147483648
  %v10020 = vxor.u32 %v9993, 2147483648
  %v10021 = vxor.u32 %v9994, 2147483648
  %v10022 = vxor.u32 %v9996, 2147483648
  %v10023 = vxor.u32 %v9997, 2147483648
  %v10024 = vxor.u32 %v9998, 2147483648
  %v10025 = vxor.u32 %v10000, 2147483648
  %v10026 = vxor.u32 %v10001, 2147483648
  %v10027 = vxor.u32 %v10002, 2147483648
  %v10028 = vmul.f32 %v10004, 1.442695
  %v10029 = vpow.pop %v10028
  %v10030 = vmul.f32 %v10005, 1.442695
  %v10031 = vpow.pop %v10030
  %v10032 = vmul.f32 %v10006, 1.442695
  %v10033 = vpow.pop %v10032
  %v10034 = vmul.f32 %v10007, 1.442695
  %v10035 = vpow.pop %v10034
  %v10036 = vmul.f32 %v10008, 1.442695
  %v10037 = vpow.pop %v10036
  %v10038 = vmul.f32 %v10009, 1.442695
  %v10039 = vpow.pop %v10038
  %v10040 = vmul.f32 %v10010, 1.442695
  %v10041 = vpow.pop %v10040
  %v10042 = vmul.f32 %v10011, 1.442695
  %v10043 = vpow.pop %v10042
  %v10044 = vmul.f32 %v10012, 1.442695
  %v10045 = vpow.pop %v10044
  %v10046 = vmul.f32 %v10013, 1.442695
  %v10047 = vpow.pop %v10046
  %v10048 = vmul.f32 %v10014, 1.442695
  %v10049 = vpow.pop %v10048
  %v10050 = vmul.f32 %v10015, 1.442695
  %v10051 = vpow.pop %v10050
  %v10052 = vmul.f32 %v10016, 1.442695
  %v10053 = vpow.pop %v10052
  %v10054 = vmul.f32 %v10017, 1.442695
  %v10055 = vpow.pop %v10054
  %v10056 = vmul.f32 %v10018, 1.442695
  %v10057 = vpow.pop %v10056
  %v10058 = vmul.f32 %v10019, 1.442695
  %v10059 = vpow.pop %v10058
  %v10060 = vmul.f32 %v10020, 1.442695
  %v10061 = vpow.pop %v10060
  %v10062 = vmul.f32 %v10021, 1.442695
  %v10063 = vpow.pop %v10062
  %v10064 = vmul.f32 %v10022, 1.442695
  %v10065 = vpow.pop %v10064
  %v10066 = vmul.f32 %v10023, 1.442695
  %v10067 = vpow.pop %v10066
  %v10068 = vmul.f32 %v10024, 1.442695
  %v10069 = vpow.pop %v10068
  %v10070 = vmul.f32 %v10025, 1.442695
  %v10071 = vpow.pop %v10070
  %v10072 = vmul.f32 %v10026, 1.442695
  %v10073 = vpow.pop %v10072
  %v10074 = vmul.f32 %v10027, 1.442695
  %v10075 = vpow.pop %v10074
  %v10076 = vadd.f32 %v10029, 1.0
  %v10077 = vadd.f32 %v10031, 1.0
  %v10078 = vadd.f32 %v10033, 1.0
  %v10079 = vadd.f32 %v10035, 1.0
  %v10080 = vadd.f32 %v10037, 1.0
  %v10081 = vadd.f32 %v10039, 1.0
  %v10082 = vadd.f32 %v10041, 1.0
  %v10083 = vadd.f32 %v10043, 1.0
  %v10084 = vadd.f32 %v10045, 1.0
  %v10085 = vadd.f32 %v10047, 1.0
  %v10086 = vadd.f32 %v10049, 1.0
  %v10087 = vadd.f32 %v10051, 1.0
  %v10088 = vadd.f32 %v10053, 1.0
  %v10089 = vadd.f32 %v10055, 1.0
  %v10090 = vadd.f32 %v10057, 1.0
  %v10091 = vadd.f32 %v10059, 1.0
  %v10092 = vadd.f32 %v10061, 1.0
  %v10093 = vadd.f32 %v10063, 1.0
  %v10094 = vadd.f32 %v10065, 1.0
  %v10095 = vadd.f32 %v10067, 1.0
  %v10096 = vadd.f32 %v10069, 1.0
  %v10097 = vadd.f32 %v10071, 1.0
  %v10098 = vadd.f32 %v10073, 1.0
  %v10099 = vadd.f32 %v10075, 1.0
  %v10100 = vrcp.pop %v10076
  %v10101 = vmul.f32 1.0, %v10100
  %v10102 = vrcp.pop %v10077
  %v10103 = vmul.f32 1.0, %v10102
  %v10104 = vrcp.pop %v10078
  %v10105 = vmul.f32 1.0, %v10104
  %v10106 = vrcp.pop %v10079
  %v10107 = vmul.f32 1.0, %v10106
  %v10108 = vrcp.pop %v10080
  %v10109 = vmul.f32 1.0, %v10108
  %v10110 = vrcp.pop %v10081
  %v10111 = vmul.f32 1.0, %v10110
  %v10112 = vrcp.pop %v10082
  %v10113 = vmul.f32 1.0, %v10112
  %v10114 = vrcp.pop %v10083
  %v10115 = vmul.f32 1.0, %v10114
  %v10116 = vrcp.pop %v10084
  %v10117 = vmul.f32 1.0, %v10116
  %v10118 = vrcp.pop %v10085
  %v10119 = vmul.f32 1.0, %v10118
  %v10120 = vrcp.pop %v10086
  %v10121 = vmul.f32 1.0, %v10120
  %v10122 = vrcp.pop %v10087
  %v10123 = vmul.f32 1.0, %v10122
  %v10124 = vrcp.pop %v10088
  %v10125 = vmul.f32 1.0, %v10124
  %v10126 = vrcp.pop %v10089
  %v10127 = vmul.f32 1.0, %v10126
  %v10128 = vrcp.pop %v10090
  %v10129 = vmul.f32 1.0, %v10128
  %v10130 = vrcp.pop %v10091
  %v10131 = vmul.f32 1.0, %v10130
  %v10132 = vrcp.pop %v10092
  %v10133 = vmul.f32 1.0, %v10132
  %v10134 = vrcp.pop %v10093
  %v10135 = vmul.f32 1.0, %v10134
  %v10136 = vrcp.pop %v10094
  %v10137 = vmul.f32 1.0, %v10136
  %v10138 = vrcp.pop %v10095
  %v10139 = vmul.f32 1.0, %v10138
  %v10140 = vrcp.pop %v10096
  %v10141 = vmul.f32 1.0, %v10140
  %v10142 = vrcp.pop %v10097
  %v10143 = vmul.f32 1.0, %v10142
  %v10144 = vrcp.pop %v10098
  %v10145 = vmul.f32 1.0, %v10144
  %v10146 = vrcp.pop %v10099
  %v10147 = vmul.f32 1.0, %v10146
  %v10148 = vtanh.pop %v9975
  %v10149 = vtanh.pop %v9979
  %v10150 = vtanh.pop %v9983
  %v10151 = vtanh.pop %v9987
  %v10152 = vtanh.pop %v9991
  %v10153 = vtanh.pop %v9995
  %v10154 = vtanh.pop %v9999
  %v10155 = vtanh.pop %v10003
  %v10156 = vld [vmem:[#allocation3] sm:$0xff]
  %v10158 = vrot.slane %v10156, 3
  %v10159 = vrot.slane %v10156, 4
  %v10160 = vrot.slane %v10156, 5
  %v10161 = vrot.slane %v10156, 6
  %v10162 = vrot.slane %v10156, 7
  %v10163 = vrot.slane %v10156, 1
  %v10164 = vrot.slane %v10156, 2
  %v10173 = vmul.f32 %v10103, %v10158
  %v10174 = vmul.f32 %v10109, %v10159
  %v10175 = vmul.f32 %v10115, %v10160
  %v10176 = vmul.f32 %v10121, %v10161
  %v10177 = vmul.f32 %v10127, %v10162
  %v10178 = vmul.f32 %v10133, %v10156
  %v10179 = vmul.f32 %v10139, %v10163
  %v10180 = vmul.f32 %v10145, %v10164
  %v10181 = vmul.f32 %v10101, %v10148
  %v10182 = vmul.f32 %v10107, %v10149
  %v10183 = vmul.f32 %v10113, %v10150
  %v10184 = vmul.f32 %v10119, %v10151
  %v10185 = vmul.f32 %v10125, %v10152
  %v10186 = vmul.f32 %v10131, %v10153
  %v10187 = vmul.f32 %v10137, %v10154
  %v10188 = vmul.f32 %v10143, %v10155
  %v10189 = vadd.f32 %v10173, %v10181
  %v10190 = vadd.f32 %v10174, %v10182
  %v10191 = vadd.f32 %v10175, %v10183
  %v10192 = vadd.f32 %v10176, %v10184
  %v10193 = vadd.f32 %v10177, %v10185
  %v10194 = vadd.f32 %v10178, %v10186
  %v10195 = vadd.f32 %v10179, %v10187
  %v10196 = vadd.f32 %v10180, %v10188
  %v10197 = vtanh.pop %v10189
  %v10198 = vtanh.pop %v10190
  %v10199 = vtanh.pop %v10191
  %v10200 = vtanh.pop %v10192
  %v10201 = vtanh.pop %v10193
  %v10202 = vtanh.pop %v10194
  %v10203 = vtanh.pop %v10195
  %v10204 = vtanh.pop %v10196
  %v10205 = vmul.f32 %v10105, %v10197
  %v10206 = vmul.f32 %v10111, %v10198
  %v10207 = vmul.f32 %v10117, %v10199
  %v10208 = vmul.f32 %v10123, %v10200
  %v10209 = vmul.f32 %v10129, %v10201
  %v10210 = vmul.f32 %v10135, %v10202
  %v10211 = vmul.f32 %v10141, %v10203
  %v10212 = vmul.f32 %v10147, %v10204
  %v10213 = vpack.c.bf16 %v10205, %v10205
  %v10214 = vpack.c.bf16 %v10206, %v10206
  %v10215 = vpack.c.bf16 %v10207, %v10207
  %v10216 = vpack.c.bf16 %v10208, %v10208
  %v10217 = vpack.c.bf16 %v10209, %v10209
  %v10218 = vpack.c.bf16 %v10210, %v10210
  %v10219 = vpack.c.bf16 %v10211, %v10211
  %v10220 = vpack.c.bf16 %v10212, %v10212
  %v10229 = vrot.slane %v10190, 7
  %v10230 = vsel %vm678, %v10229, %v10189
  %v10231 = vrot.slane %v10191, 6
  %v10232 = vsel %vm681, %v10231, %v10230
  %v10233 = vrot.slane %v10192, 5
  %v10234 = vrot.slane %v10193, 4
  %v10235 = vsel %vm663, %v10234, %v10233
  %v10236 = vrot.slane %v10194, 3
  %v10237 = vsel %vm666, %v10236, %v10235
  %v10238 = vrot.slane %v10195, 2
  %v10239 = vsel %vm669, %v10238, %v10237
  %v10240 = vrot.slane %v10196, 1
  %v10241 = vsel %vm672, %v10240, %v10239
  %10244 = vst [vmem:[#allocation3 - $0x5] sm:$0xe0] %v10232
  %10245 = vst [vmem:[#allocation3 + $0x3] sm:$0x1f] %v10241
  %v10254 = vunpack.c.l.b16 %v10213
  %v10255 = vunpack.c.l.b16 %v10214
  %v10256 = vunpack.c.l.b16 %v10215
  %v10257 = vunpack.c.l.b16 %v10216
  %v10258 = vunpack.c.l.b16 %v10217
  %v10259 = vunpack.c.l.b16 %v10218
  %v10260 = vunpack.c.l.b16 %v10219
  %v10261 = vunpack.c.l.b16 %v10220
  %v10262 = vpack.c.b16 %v10254, %v10254
  %v10263 = vpack.c.b16 %v10255, %v10255
  %v10264 = vpack.c.b16 %v10256, %v10256
  %v10265 = vpack.c.b16 %v10257, %v10257
  %v10266 = vpack.c.b16 %v10258, %v10258
  %v10267 = vpack.c.b16 %v10259, %v10259
  %v10268 = vpack.c.b16 %v10260, %v10260
  %v10269 = vpack.c.b16 %v10261, %v10261
  %v10270 = vunpack.c.l.b16 %v10262
  %v10271 = vunpack.c.l.b16 %v10263
  %v10272 = vunpack.c.l.b16 %v10264
  %v10273 = vunpack.c.l.b16 %v10265
  %v10274 = vunpack.c.l.b16 %v10266
  %v10275 = vunpack.c.l.b16 %v10267
  %v10276 = vunpack.c.l.b16 %v10268
  %v10277 = vunpack.c.l.b16 %v10269
  %v10278 = vrot.slane %v10270, 5
  %v10279 = vrot.slane %v10271, 4
  %v10280 = vsel %vm663, %v10279, %v10278
  %v10281 = vrot.slane %v10272, 3
  %v10282 = vsel %vm666, %v10281, %v10280
  %v10283 = vrot.slane %v10273, 2
  %v10284 = vsel %vm669, %v10283, %v10282
  %v10285 = vrot.slane %v10274, 1
  %v10286 = vsel %vm672, %v10285, %v10284
  %v10287 = vsel %vm675, %v10275, %v10286
  %v10288 = vrot.slane %v10276, 7
  %v10289 = vsel %vm678, %v10288, %v10287
  %v10290 = vrot.slane %v10277, 6
  %v10291 = vsel %vm681, %v10290, %v10289
  %v10292 = vpack.c.b16 %v10291, %v10291
  %10294 = vst [vmem:[#allocation2] sm:$0xf] %v10292
  %v10295 = vld [vmem:[%s2 + $0x4] sm:$0x4]
  %v10296 = vsel %vm4418, %v10213, %v10295
  %10297 = vst [vmem:[%s2 + $0x4] sm:$0x4] %v10296
  %v10298 = vld [vmem:[%s2 + $0xc] sm:$0x4]
  %v10299 = vsel %vm4418, %v10214, %v10298
  %10300 = vst [vmem:[%s2 + $0xc] sm:$0x4] %v10299
  %v10301 = vld [vmem:[%s2 + $0x14] sm:$0x4]
  %v10302 = vsel %vm4418, %v10215, %v10301
  %10303 = vst [vmem:[%s2 + $0x14] sm:$0x4] %v10302
  %v10304 = vld [vmem:[%s2 + $0x1c] sm:$0x4]
  %v10305 = vsel %vm4418, %v10216, %v10304
  %10306 = vst [vmem:[%s2 + $0x1c] sm:$0x4] %v10305
  %v10307 = vld [vmem:[%s2 + $0x24] sm:$0x4]
  %v10308 = vsel %vm4418, %v10217, %v10307
  %10309 = vst [vmem:[%s2 + $0x24] sm:$0x4] %v10308
  %v10310 = vld [vmem:[%s2 + $0x2c] sm:$0x4]
  %v10311 = vsel %vm4418, %v10218, %v10310
  %10312 = vst [vmem:[%s2 + $0x2c] sm:$0x4] %v10311
  %v10313 = vld [vmem:[%s2 + $0x34] sm:$0x4]
  %v10314 = vsel %vm4418, %v10219, %v10313
  %10315 = vst [vmem:[%s2 + $0x34] sm:$0x4] %v10314
  %v10316 = vld [vmem:[%s2 + $0x3c] sm:$0x4]
  %v10317 = vsel %vm4418, %v10220, %v10316
  %10318 = vst [vmem:[%s2 + $0x3c] sm:$0x4] %v10317
  %v10319 = vld [vmem:[%s0 + $0x10] sm:$0x88]
  %v10320 = vld [vmem:[%s0 + $0x18] sm:$0x88]
  %v10321 = vld [vmem:[%s0 + $0x30] sm:$0x88]
  %v10322 = vld [vmem:[%s0 + $0x38] sm:$0x88]
  %v10323 = vld [vmem:[%s0 + $0x50] sm:$0x88]
  %v10324 = vld [vmem:[%s0 + $0x58] sm:$0x88]
  %v10325 = vld [vmem:[%s0 + $0x70] sm:$0x88]
  %v10326 = vld [vmem:[%s0 + $0x78] sm:$0x88]
  %v10327 = vld [vmem:[%s0 + $0x90] sm:$0x88]
  %v10328 = vld [vmem:[%s0 + $0x98] sm:$0x88]
  %v10329 = vld [vmem:[%s0 + $0xb0] sm:$0x88]
  %v10330 = vld [vmem:[%s0 + $0xb8] sm:$0x88]
  %v10331 = vld [vmem:[%s0 + $0xd0] sm:$0x88]
  %v10332 = vld [vmem:[%s0 + $0xd8] sm:$0x88]
  %v10333 = vld [vmem:[%s0 + $0xf0] sm:$0x88]
  %v10334 = vld [vmem:[%s0 + $0xf8] sm:$0x88]
  %v10335 = vunpack.c.l.bf16 %v10319
  %v10336 = vunpack.c.h.bf16 %v10319
  %v10337 = vunpack.c.l.bf16 %v10320
  %v10338 = vunpack.c.h.bf16 %v10320
  %v10339 = vunpack.c.l.bf16 %v10321
  %v10340 = vunpack.c.h.bf16 %v10321
  %v10341 = vunpack.c.l.bf16 %v10322
  %v10342 = vunpack.c.h.bf16 %v10322
  %v10343 = vunpack.c.l.bf16 %v10323
  %v10344 = vunpack.c.h.bf16 %v10323
  %v10345 = vunpack.c.l.bf16 %v10324
  %v10346 = vunpack.c.h.bf16 %v10324
  %v10347 = vunpack.c.l.bf16 %v10325
  %v10348 = vunpack.c.h.bf16 %v10325
  %v10349 = vunpack.c.l.bf16 %v10326
  %v10350 = vunpack.c.h.bf16 %v10326
  %v10351 = vunpack.c.l.bf16 %v10327
  %v10352 = vunpack.c.h.bf16 %v10327
  %v10353 = vunpack.c.l.bf16 %v10328
  %v10354 = vunpack.c.h.bf16 %v10328
  %v10355 = vunpack.c.l.bf16 %v10329
  %v10356 = vunpack.c.h.bf16 %v10329
  %v10357 = vunpack.c.l.bf16 %v10330
  %v10358 = vunpack.c.h.bf16 %v10330
  %v10359 = vunpack.c.l.bf16 %v10331
  %v10360 = vunpack.c.h.bf16 %v10331
  %v10361 = vunpack.c.l.bf16 %v10332
  %v10362 = vunpack.c.h.bf16 %v10332
  %v10363 = vunpack.c.l.bf16 %v10333
  %v10364 = vunpack.c.h.bf16 %v10333
  %v10365 = vunpack.c.l.bf16 %v10334
  %v10366 = vunpack.c.h.bf16 %v10334
  %v10367 = vld [vmem:[#allocation2] sm:$0xf]
  %v10368 = vld [vmem:[%s1] sm:$0xff]
  %v10369 = vld [vmem:[%s1 + $0x8] sm:$0xff]
  %v10370 = vld [vmem:[%s1 + $0x10] sm:$0xff]
  %v10371 = vld [vmem:[%s1 + $0x18] sm:$0xff]
  %v10372 = vld [vmem:[%s1 + $0x20] sm:$0xff]
  %v10373 = vld [vmem:[%s1 + $0x28] sm:$0xff]
  %v10374 = vld [vmem:[%s1 + $0x30] sm:$0xff]
  %v10375 = vld [vmem:[%s1 + $0x38] sm:$0xff]
  %v10376 = vld [vmem:[%s1 + $0x40] sm:$0xff]
  %v10377 = vld [vmem:[%s1 + $0x48] sm:$0xff]
  %v10378 = vld [vmem:[%s1 + $0x50] sm:$0xff]
  %v10379 = vld [vmem:[%s1 + $0x58] sm:$0xff]
  %v10380 = vld [vmem:[%s1 + $0x60] sm:$0xff]
  %v10381 = vld [vmem:[%s1 + $0x68] sm:$0xff]
  %v10382 = vld [vmem:[%s1 + $0x70] sm:$0xff]
  %v10383 = vld [vmem:[%s1 + $0x78] sm:$0xff]
  %v10384 = vld [vmem:[%s1 + $0x80] sm:$0xff]
  %v10385 = vld [vmem:[%s1 + $0x88] sm:$0xff]
  %v10386 = vld [vmem:[%s1 + $0x90] sm:$0xff]
  %v10387 = vld [vmem:[%s1 + $0x98] sm:$0xff]
  %v10388 = vld [vmem:[%s1 + $0xa0] sm:$0xff]
  %v10389 = vld [vmem:[%s1 + $0xa8] sm:$0xff]
  %v10390 = vld [vmem:[%s1 + $0xb0] sm:$0xff]
  %v10391 = vld [vmem:[%s1 + $0xb8] sm:$0xff]
  %v10392 = vld [vmem:[%s1 + $0xc0] sm:$0xff]
  %v10393 = vld [vmem:[%s1 + $0xc8] sm:$0xff]
  %v10394 = vld [vmem:[%s1 + $0xd0] sm:$0xff]
  %v10395 = vld [vmem:[%s1 + $0xd8] sm:$0xff]
  %v10396 = vld [vmem:[%s1 + $0xe0] sm:$0xff]
  %v10397 = vld [vmem:[%s1 + $0xe8] sm:$0xff]
  %v10398 = vld [vmem:[%s1 + $0xf0] sm:$0xff]
  %v10399 = vld [vmem:[%s1 + $0xf8] sm:$0xff]
  %v10432 = vunpack.c.l.b16 %v10368
  %v10433 = vunpack.c.h.b16 %v10368
  %v10434 = vunpack.c.l.b16 %v10369
  %v10435 = vunpack.c.h.b16 %v10369
  %v10436 = vunpack.c.l.b16 %v10370
  %v10437 = vunpack.c.h.b16 %v10370
  %v10438 = vunpack.c.l.b16 %v10371
  %v10439 = vunpack.c.h.b16 %v10371
  %v10440 = vunpack.c.l.b16 %v10372
  %v10441 = vunpack.c.h.b16 %v10372
  %v10442 = vunpack.c.l.b16 %v10373
  %v10443 = vunpack.c.h.b16 %v10373
  %v10444 = vunpack.c.l.b16 %v10374
  %v10445 = vunpack.c.h.b16 %v10374
  %v10446 = vunpack.c.l.b16 %v10375
  %v10447 = vunpack.c.h.b16 %v10375
  %v10448 = vunpack.c.l.b16 %v10376
  %v10449 = vunpack.c.h.b16 %v10376
  %v10450 = vunpack.c.l.b16 %v10377
  %v10451 = vunpack.c.h.b16 %v10377
  %v10452 = vunpack.c.l.b16 %v10378
  %v10453 = vunpack.c.h.b16 %v10378
  %v10454 = vunpack.c.l.b16 %v10379
  %v10455 = vunpack.c.h.b16 %v10379
  %v10456 = vunpack.c.l.b16 %v10380
  %v10457 = vunpack.c.h.b16 %v10380
  %v10458 = vunpack.c.l.b16 %v10381
  %v10459 = vunpack.c.h.b16 %v10381
  %v10460 = vunpack.c.l.b16 %v10382
  %v10461 = vunpack.c.h.b16 %v10382
  %v10462 = vunpack.c.l.b16 %v10383
  %v10463 = vunpack.c.h.b16 %v10383
  %v10464 = vunpack.c.l.b16 %v10384
  %v10465 = vunpack.c.h.b16 %v10384
  %v10466 = vunpack.c.l.b16 %v10385
  %v10467 = vunpack.c.h.b16 %v10385
  %v10468 = vunpack.c.l.b16 %v10386
  %v10469 = vunpack.c.h.b16 %v10386
  %v10470 = vunpack.c.l.b16 %v10387
  %v10471 = vunpack.c.h.b16 %v10387
  %v10472 = vunpack.c.l.b16 %v10388
  %v10473 = vunpack.c.h.b16 %v10388
  %v10474 = vunpack.c.l.b16 %v10389
  %v10475 = vunpack.c.h.b16 %v10389
  %v10476 = vunpack.c.l.b16 %v10390
  %v10477 = vunpack.c.h.b16 %v10390
  %v10478 = vunpack.c.l.b16 %v10391
  %v10479 = vunpack.c.h.b16 %v10391
  %v10480 = vunpack.c.l.b16 %v10392
  %v10481 = vunpack.c.h.b16 %v10392
  %v10482 = vunpack.c.l.b16 %v10393
  %v10483 = vunpack.c.h.b16 %v10393
  %v10484 = vunpack.c.l.b16 %v10394
  %v10485 = vunpack.c.h.b16 %v10394
  %v10486 = vunpack.c.l.b16 %v10395
  %v10487 = vunpack.c.h.b16 %v10395
  %v10488 = vunpack.c.l.b16 %v10396
  %v10489 = vunpack.c.h.b16 %v10396
  %v10490 = vunpack.c.l.b16 %v10397
  %v10491 = vunpack.c.h.b16 %v10397
  %v10492 = vunpack.c.l.b16 %v10398
  %v10493 = vunpack.c.h.b16 %v10398
  %v10494 = vunpack.c.l.b16 %v10399
  %v10495 = vunpack.c.h.b16 %v10399
  %v10496 = vpack.c.b16 %v10436, %v10432
  %v10497 = vpack.c.b16 %v10437, %v10433
  %v10498 = vpack.c.b16 %v10438, %v10434
  %v10499 = vpack.c.b16 %v10439, %v10435
  %v10500 = vpack.c.b16 %v10444, %v10440
  %v10501 = vpack.c.b16 %v10445, %v10441
  %v10502 = vpack.c.b16 %v10446, %v10442
  %v10503 = vpack.c.b16 %v10447, %v10443
  %v10504 = vpack.c.b16 %v10452, %v10448
  %v10505 = vpack.c.b16 %v10453, %v10449
  %v10506 = vpack.c.b16 %v10454, %v10450
  %v10507 = vpack.c.b16 %v10455, %v10451
  %v10508 = vpack.c.b16 %v10460, %v10456
  %v10509 = vpack.c.b16 %v10461, %v10457
  %v10510 = vpack.c.b16 %v10462, %v10458
  %v10511 = vpack.c.b16 %v10463, %v10459
  %v10512 = vpack.c.b16 %v10468, %v10464
  %v10513 = vpack.c.b16 %v10469, %v10465
  %v10514 = vpack.c.b16 %v10470, %v10466
  %v10515 = vpack.c.b16 %v10471, %v10467
  %v10516 = vpack.c.b16 %v10476, %v10472
  %v10517 = vpack.c.b16 %v10477, %v10473
  %v10518 = vpack.c.b16 %v10478, %v10474
  %v10519 = vpack.c.b16 %v10479, %v10475
  %v10520 = vpack.c.b16 %v10484, %v10480
  %v10521 = vpack.c.b16 %v10485, %v10481
  %v10522 = vpack.c.b16 %v10486, %v10482
  %v10523 = vpack.c.b16 %v10487, %v10483
  %v10524 = vpack.c.b16 %v10492, %v10488
  %v10525 = vpack.c.b16 %v10493, %v10489
  %v10526 = vpack.c.b16 %v10494, %v10490
  %v10527 = vpack.c.b16 %v10495, %v10491
  %10560 = vmatprep.subr.bf16.mxu0 %v10525
  %10561 = vmatpush1.bf16.msra.mxu0 %v10524
  %10562 = vmatprep.subr.bf16.mxu0 %v10521
  %10563 = vmatpush1.bf16.msra.mxu0 %v10520
  %10564 = vmatprep.subr.bf16.mxu0 %v10517
  %10565 = vmatpush1.bf16.msra.mxu0 %v10516
  %10566 = vmatprep.subr.bf16.mxu0 %v10513
  %10567 = vmatpush1.bf16.msra.mxu0 %v10512
  %10568 = vmatprep.subr.bf16.mxu0 %v10509
  %10569 = vmatpush1.bf16.msra.mxu0 %v10508
  %10570 = vmatprep.subr.bf16.mxu0 %v10505
  %10571 = vmatpush1.bf16.msra.mxu0 %v10504
  %10572 = vmatprep.subr.bf16.mxu0 %v10501
  %10573 = vmatpush1.bf16.msra.mxu0 %v10500
  %10574 = vmatprep.subr.bf16.mxu0 %v10497
  %10575 = vmatpush1.bf16.msra.mxu0 %v10496
  %10576 = vmatprep.subr.bf16.mxu0 0
  %10577 = vmatpush2.bf16.msra.mxu0 0
  %10578 = vmatprep.subr.bf16.mxu0 0
  %10579 = vmatpush2.bf16.msra.mxu0 0
  %10580 = vmatprep.subr.bf16.mxu0 0
  %10581 = vmatpush2.bf16.msra.mxu0 0
  %10582 = vmatprep.subr.bf16.mxu0 0
  %10583 = vmatpush2.bf16.msra.mxu0 0
  %10584 = vmatprep.subr.bf16.mxu0 0
  %10585 = vmatpush2.bf16.msra.mxu0 0
  %10586 = vmatprep.subr.bf16.mxu0 0
  %10587 = vmatpush2.bf16.msra.mxu0 0
  %10588 = vmatprep.subr.bf16.mxu0 0
  %10589 = vmatpush2.bf16.msra.mxu0 0
  %10590 = vmatprep.subr.bf16.mxu0 0
  %10591 = vmatpush2.bf16.msra.mxu0 0
  %10592 = vmatprep.mubr.bf16.mxu0 0
  %10593 = vmatmul.mubr.bf16.gmra.mxu0 %v10367
  %v10594 = vpop.f32.mrf.mxu0
  %v10595 = vadd.f32 0.0, %v10594
  %v10596 = vpop.f32.mrf.mxu0
  %v10597 = vadd.f32 0.0, %v10596
  %v10598 = vpop.f32.mrf.mxu0
  %v10599 = vpop.f32.mrf.mxu0
  %10600 = vdwg.mxu0
  %10601 = vmatprep.subr.bf16.mxu0 %v10527
  %10602 = vmatpush1.bf16.msra.mxu0 %v10526
  %10603 = vmatprep.subr.bf16.mxu0 %v10523
  %10604 = vmatpush1.bf16.msra.mxu0 %v10522
  %10605 = vmatprep.subr.bf16.mxu0 %v10519
  %10606 = vmatpush1.bf16.msra.mxu0 %v10518
  %10607 = vmatprep.subr.bf16.mxu0 %v10515
  %10608 = vmatpush1.bf16.msra.mxu0 %v10514
  %10609 = vmatprep.subr.bf16.mxu0 %v10511
  %10610 = vmatpush1.bf16.msra.mxu0 %v10510
  %10611 = vmatprep.subr.bf16.mxu0 %v10507
  %10612 = vmatpush1.bf16.msra.mxu0 %v10506
  %10613 = vmatprep.subr.bf16.mxu0 %v10503
  %10614 = vmatpush1.bf16.msra.mxu0 %v10502
  %10615 = vmatprep.subr.bf16.mxu0 %v10499
  %10616 = vmatpush1.bf16.msra.mxu0 %v10498
  %10617 = vmatprep.subr.bf16.mxu0 0
  %10618 = vmatpush2.bf16.msra.mxu0 0
  %10619 = vmatprep.subr.bf16.mxu0 0
  %10620 = vmatpush2.bf16.msra.mxu0 0
  %10621 = vmatprep.subr.bf16.mxu0 0
  %10622 = vmatpush2.bf16.msra.mxu0 0
  %10623 = vmatprep.subr.bf16.mxu0 0
  %10624 = vmatpush2.bf16.msra.mxu0 0
  %10625 = vmatprep.subr.bf16.mxu0 0
  %10626 = vmatpush2.bf16.msra.mxu0 0
  %10627 = vmatprep.subr.bf16.mxu0 0
  %10628 = vmatpush2.bf16.msra.mxu0 0
  %10629 = vmatprep.subr.bf16.mxu0 0
  %10630 = vmatpush2.bf16.msra.mxu0 0
  %10631 = vmatprep.subr.bf16.mxu0 0
  %10632 = vmatpush2.bf16.msra.mxu0 0
  %10633 = vmatprep.mubr.bf16.mxu0 0
  %10634 = vmatmul.mubr.bf16.gmra.mxu0 %v10367
  %v10635 = vpop.f32.mrf.mxu0
  %v10636 = vadd.f32 0.0, %v10635
  %v10637 = vpop.f32.mrf.mxu0
  %v10638 = vadd.f32 0.0, %v10637
  %v10639 = vpop.f32.mrf.mxu0
  %v10640 = vpop.f32.mrf.mxu0
  %10641 = vdwg.mxu0
  %v10646 = vrot.slane %v10595, 2
  %v10647 = vrot.slane %v10597, 2
  %v10648 = vrot.slane %v10636, 2
  %v10649 = vrot.slane %v10638, 2
  %v10650 = vrot.slane %v10595, 3
  %v10651 = vrot.slane %v10597, 3
  %v10652 = vrot.slane %v10636, 3
  %v10653 = vrot.slane %v10638, 3
  %v10654 = vrot.slane %v10595, 4
  %v10655 = vrot.slane %v10597, 4
  %v10656 = vrot.slane %v10636, 4
  %v10657 = vrot.slane %v10638, 4
  %v10658 = vrot.slane %v10595, 5
  %v10659 = vrot.slane %v10597, 5
  %v10660 = vrot.slane %v10636, 5
  %v10661 = vrot.slane %v10638, 5
  %v10662 = vrot.slane %v10595, 6
  %v10663 = vrot.slane %v10597, 6
  %v10664 = vrot.slane %v10636, 6
  %v10665 = vrot.slane %v10638, 6
  %v10666 = vrot.slane %v10595, 7
  %v10667 = vrot.slane %v10597, 7
  %v10668 = vrot.slane %v10636, 7
  %v10669 = vrot.slane %v10638, 7
  %v10670 = vrot.slane %v10595, 1
  %v10671 = vrot.slane %v10597, 1
  %v10672 = vrot.slane %v10636, 1
  %v10673 = vrot.slane %v10638, 1
  %v10706 = vadd.f32 %v10335, %v10646
  %v10707 = vadd.f32 %v10336, %v10647
  %v10708 = vadd.f32 %v10337, %v10648
  %v10709 = vadd.f32 %v10338, %v10649
  %v10710 = vadd.f32 %v10339, %v10650
  %v10711 = vadd.f32 %v10340, %v10651
  %v10712 = vadd.f32 %v10341, %v10652
  %v10713 = vadd.f32 %v10342, %v10653
  %v10714 = vadd.f32 %v10343, %v10654
  %v10715 = vadd.f32 %v10344, %v10655
  %v10716 = vadd.f32 %v10345, %v10656
  %v10717 = vadd.f32 %v10346, %v10657
  %v10718 = vadd.f32 %v10347, %v10658
  %v10719 = vadd.f32 %v10348, %v10659
  %v10720 = vadd.f32 %v10349, %v10660
  %v10721 = vadd.f32 %v10350, %v10661
  %v10722 = vadd.f32 %v10351, %v10662
  %v10723 = vadd.f32 %v10352, %v10663
  %v10724 = vadd.f32 %v10353, %v10664
  %v10725 = vadd.f32 %v10354, %v10665
  %v10726 = vadd.f32 %v10355, %v10666
  %v10727 = vadd.f32 %v10356, %v10667
  %v10728 = vadd.f32 %v10357, %v10668
  %v10729 = vadd.f32 %v10358, %v10669
  %v10730 = vadd.f32 %v10359, %v10595
  %v10731 = vadd.f32 %v10360, %v10597
  %v10732 = vadd.f32 %v10361, %v10636
  %v10733 = vadd.f32 %v10362, %v10638
  %v10734 = vadd.f32 %v10363, %v10670
  %v10735 = vadd.f32 %v10364, %v10671
  %v10736 = vadd.f32 %v10365, %v10672
  %v10737 = vadd.f32 %v10366, %v10673
  %v10738 = vxor.u32 %v10706, 2147483648
  %v10739 = vxor.u32 %v10707, 2147483648
  %v10740 = vxor.u32 %v10708, 2147483648
  %v10741 = vxor.u32 %v10710, 2147483648
  %v10742 = vxor.u32 %v10711, 2147483648
  %v10743 = vxor.u32 %v10712, 2147483648
  %v10744 = vxor.u32 %v10714, 2147483648
  %v10745 = vxor.u32 %v10715, 2147483648
  %v10746 = vxor.u32 %v10716, 2147483648
  %v10747 = vxor.u32 %v10718, 2147483648
  %v10748 = vxor.u32 %v10719, 2147483648
  %v10749 = vxor.u32 %v10720, 2147483648
  %v10750 = vxor.u32 %v10722, 2147483648
  %v10751 = vxor.u32 %v10723, 2147483648
  %v10752 = vxor.u32 %v10724, 2147483648
  %v10753 = vxor.u32 %v10726, 2147483648
  %v10754 = vxor.u32 %v10727, 2147483648
  %v10755 = vxor.u32 %v10728, 2147483648
  %v10756 = vxor.u32 %v10730, 2147483648
  %v10757 = vxor.u32 %v10731, 2147483648
  %v10758 = vxor.u32 %v10732, 2147483648
  %v10759 = vxor.u32 %v10734, 2147483648
  %v10760 = vxor.u32 %v10735, 2147483648
  %v10761 = vxor.u32 %v10736, 2147483648
  %v10762 = vmul.f32 %v10738, 1.442695
  %v10763 = vpow.pop %v10762
  %v10764 = vmul.f32 %v10739, 1.442695
  %v10765 = vpow.pop %v10764
  %v10766 = vmul.f32 %v10740, 1.442695
  %v10767 = vpow.pop %v10766
  %v10768 = vmul.f32 %v10741, 1.442695
  %v10769 = vpow.pop %v10768
  %v10770 = vmul.f32 %v10742, 1.442695
  %v10771 = vpow.pop %v10770
  %v10772 = vmul.f32 %v10743, 1.442695
  %v10773 = vpow.pop %v10772
  %v10774 = vmul.f32 %v10744, 1.442695
  %v10775 = vpow.pop %v10774
  %v10776 = vmul.f32 %v10745, 1.442695
  %v10777 = vpow.pop %v10776
  %v10778 = vmul.f32 %v10746, 1.442695
  %v10779 = vpow.pop %v10778
  %v10780 = vmul.f32 %v10747, 1.442695
  %v10781 = vpow.pop %v10780
  %v10782 = vmul.f32 %v10748, 1.442695
  %v10783 = vpow.pop %v10782
  %v10784 = vmul.f32 %v10749, 1.442695
  %v10785 = vpow.pop %v10784
  %v10786 = vmul.f32 %v10750, 1.442695
  %v10787 = vpow.pop %v10786
  %v10788 = vmul.f32 %v10751, 1.442695
  %v10789 = vpow.pop %v10788
  %v10790 = vmul.f32 %v10752, 1.442695
  %v10791 = vpow.pop %v10790
  %v10792 = vmul.f32 %v10753, 1.442695
  %v10793 = vpow.pop %v10792
  %v10794 = vmul.f32 %v10754, 1.442695
  %v10795 = vpow.pop %v10794
  %v10796 = vmul.f32 %v10755, 1.442695
  %v10797 = vpow.pop %v10796
  %v10798 = vmul.f32 %v10756, 1.442695
  %v10799 = vpow.pop %v10798
  %v10800 = vmul.f32 %v10757, 1.442695
  %v10801 = vpow.pop %v10800
  %v10802 = vmul.f32 %v10758, 1.442695
  %v10803 = vpow.pop %v10802
  %v10804 = vmul.f32 %v10759, 1.442695
  %v10805 = vpow.pop %v10804
  %v10806 = vmul.f32 %v10760, 1.442695
  %v10807 = vpow.pop %v10806
  %v10808 = vmul.f32 %v10761, 1.442695
  %v10809 = vpow.pop %v10808
  %v10810 = vadd.f32 %v10763, 1.0
  %v10811 = vadd.f32 %v10765, 1.0
  %v10812 = vadd.f32 %v10767, 1.0
  %v10813 = vadd.f32 %v10769, 1.0
  %v10814 = vadd.f32 %v10771, 1.0
  %v10815 = vadd.f32 %v10773, 1.0
  %v10816 = vadd.f32 %v10775, 1.0
  %v10817 = vadd.f32 %v10777, 1.0
  %v10818 = vadd.f32 %v10779, 1.0
  %v10819 = vadd.f32 %v10781, 1.0
  %v10820 = vadd.f32 %v10783, 1.0
  %v10821 = vadd.f32 %v10785, 1.0
  %v10822 = vadd.f32 %v10787, 1.0
  %v10823 = vadd.f32 %v10789, 1.0
  %v10824 = vadd.f32 %v10791, 1.0
  %v10825 = vadd.f32 %v10793, 1.0
  %v10826 = vadd.f32 %v10795, 1.0
  %v10827 = vadd.f32 %v10797, 1.0
  %v10828 = vadd.f32 %v10799, 1.0
  %v10829 = vadd.f32 %v10801, 1.0
  %v10830 = vadd.f32 %v10803, 1.0
  %v10831 = vadd.f32 %v10805, 1.0
  %v10832 = vadd.f32 %v10807, 1.0
  %v10833 = vadd.f32 %v10809, 1.0
  %v10834 = vrcp.pop %v10810
  %v10835 = vmul.f32 1.0, %v10834
  %v10836 = vrcp.pop %v10811
  %v10837 = vmul.f32 1.0, %v10836
  %v10838 = vrcp.pop %v10812
  %v10839 = vmul.f32 1.0, %v10838
  %v10840 = vrcp.pop %v10813
  %v10841 = vmul.f32 1.0, %v10840
  %v10842 = vrcp.pop %v10814
  %v10843 = vmul.f32 1.0, %v10842
  %v10844 = vrcp.pop %v10815
  %v10845 = vmul.f32 1.0, %v10844
  %v10846 = vrcp.pop %v10816
  %v10847 = vmul.f32 1.0, %v10846
  %v10848 = vrcp.pop %v10817
  %v10849 = vmul.f32 1.0, %v10848
  %v10850 = vrcp.pop %v10818
  %v10851 = vmul.f32 1.0, %v10850
  %v10852 = vrcp.pop %v10819
  %v10853 = vmul.f32 1.0, %v10852
  %v10854 = vrcp.pop %v10820
  %v10855 = vmul.f32 1.0, %v10854
  %v10856 = vrcp.pop %v10821
  %v10857 = vmul.f32 1.0, %v10856
  %v10858 = vrcp.pop %v10822
  %v10859 = vmul.f32 1.0, %v10858
  %v10860 = vrcp.pop %v10823
  %v10861 = vmul.f32 1.0, %v10860
  %v10862 = vrcp.pop %v10824
  %v10863 = vmul.f32 1.0, %v10862
  %v10864 = vrcp.pop %v10825
  %v10865 = vmul.f32 1.0, %v10864
  %v10866 = vrcp.pop %v10826
  %v10867 = vmul.f32 1.0, %v10866
  %v10868 = vrcp.pop %v10827
  %v10869 = vmul.f32 1.0, %v10868
  %v10870 = vrcp.pop %v10828
  %v10871 = vmul.f32 1.0, %v10870
  %v10872 = vrcp.pop %v10829
  %v10873 = vmul.f32 1.0, %v10872
  %v10874 = vrcp.pop %v10830
  %v10875 = vmul.f32 1.0, %v10874
  %v10876 = vrcp.pop %v10831
  %v10877 = vmul.f32 1.0, %v10876
  %v10878 = vrcp.pop %v10832
  %v10879 = vmul.f32 1.0, %v10878
  %v10880 = vrcp.pop %v10833
  %v10881 = vmul.f32 1.0, %v10880
  %v10882 = vtanh.pop %v10709
  %v10883 = vtanh.pop %v10713
  %v10884 = vtanh.pop %v10717
  %v10885 = vtanh.pop %v10721
  %v10886 = vtanh.pop %v10725
  %v10887 = vtanh.pop %v10729
  %v10888 = vtanh.pop %v10733
  %v10889 = vtanh.pop %v10737
  %v10890 = vld [vmem:[#allocation3] sm:$0xff]
  %v10892 = vrot.slane %v10890, 2
  %v10893 = vrot.slane %v10890, 3
  %v10894 = vrot.slane %v10890, 4
  %v10895 = vrot.slane %v10890, 5
  %v10896 = vrot.slane %v10890, 6
  %v10897 = vrot.slane %v10890, 7
  %v10898 = vrot.slane %v10890, 1
  %v10907 = vmul.f32 %v10837, %v10892
  %v10908 = vmul.f32 %v10843, %v10893
  %v10909 = vmul.f32 %v10849, %v10894
  %v10910 = vmul.f32 %v10855, %v10895
  %v10911 = vmul.f32 %v10861, %v10896
  %v10912 = vmul.f32 %v10867, %v10897
  %v10913 = vmul.f32 %v10873, %v10890
  %v10914 = vmul.f32 %v10879, %v10898
  %v10915 = vmul.f32 %v10835, %v10882
  %v10916 = vmul.f32 %v10841, %v10883
  %v10917 = vmul.f32 %v10847, %v10884
  %v10918 = vmul.f32 %v10853, %v10885
  %v10919 = vmul.f32 %v10859, %v10886
  %v10920 = vmul.f32 %v10865, %v10887
  %v10921 = vmul.f32 %v10871, %v10888
  %v10922 = vmul.f32 %v10877, %v10889
  %v10923 = vadd.f32 %v10907, %v10915
  %v10924 = vadd.f32 %v10908, %v10916
  %v10925 = vadd.f32 %v10909, %v10917
  %v10926 = vadd.f32 %v10910, %v10918
  %v10927 = vadd.f32 %v10911, %v10919
  %v10928 = vadd.f32 %v10912, %v10920
  %v10929 = vadd.f32 %v10913, %v10921
  %v10930 = vadd.f32 %v10914, %v10922
  %v10931 = vtanh.pop %v10923
  %v10932 = vtanh.pop %v10924
  %v10933 = vtanh.pop %v10925
  %v10934 = vtanh.pop %v10926
  %v10935 = vtanh.pop %v10927
  %v10936 = vtanh.pop %v10928
  %v10937 = vtanh.pop %v10929
  %v10938 = vtanh.pop %v10930
  %v10939 = vmul.f32 %v10839, %v10931
  %v10940 = vmul.f32 %v10845, %v10932
  %v10941 = vmul.f32 %v10851, %v10933
  %v10942 = vmul.f32 %v10857, %v10934
  %v10943 = vmul.f32 %v10863, %v10935
  %v10944 = vmul.f32 %v10869, %v10936
  %v10945 = vmul.f32 %v10875, %v10937
  %v10946 = vmul.f32 %v10881, %v10938
  %v10947 = vpack.c.bf16 %v10939, %v10939
  %v10948 = vpack.c.bf16 %v10940, %v10940
  %v10949 = vpack.c.bf16 %v10941, %v10941
  %v10950 = vpack.c.bf16 %v10942, %v10942
  %v10951 = vpack.c.bf16 %v10943, %v10943
  %v10952 = vpack.c.bf16 %v10944, %v10944
  %v10953 = vpack.c.bf16 %v10945, %v10945
  %v10954 = vpack.c.bf16 %v10946, %v10946
  %v10963 = vrot.slane %v10924, 7
  %v10964 = vsel %vm681, %v10963, %v10923
  %v10965 = vrot.slane %v10925, 6
  %v10966 = vrot.slane %v10926, 5
  %v10967 = vsel %vm663, %v10966, %v10965
  %v10968 = vrot.slane %v10927, 4
  %v10969 = vsel %vm666, %v10968, %v10967
  %v10970 = vrot.slane %v10928, 3
  %v10971 = vsel %vm669, %v10970, %v10969
  %v10972 = vrot.slane %v10929, 2
  %v10973 = vsel %vm672, %v10972, %v10971
  %v10974 = vrot.slane %v10930, 1
  %v10975 = vsel %vm675, %v10974, %v10973
  %10978 = vst [vmem:[#allocation3 - $0x6] sm:$0xc0] %v10964
  %10979 = vst [vmem:[#allocation3 + $0x2] sm:$0x3f] %v10975
  %v10988 = vunpack.c.l.b16 %v10947
  %v10989 = vunpack.c.l.b16 %v10948
  %v10990 = vunpack.c.l.b16 %v10949
  %v10991 = vunpack.c.l.b16 %v10950
  %v10992 = vunpack.c.l.b16 %v10951
  %v10993 = vunpack.c.l.b16 %v10952
  %v10994 = vunpack.c.l.b16 %v10953
  %v10995 = vunpack.c.l.b16 %v10954
  %v10996 = vpack.c.b16 %v10988, %v10988
  %v10997 = vpack.c.b16 %v10989, %v10989
  %v10998 = vpack.c.b16 %v10990, %v10990
  %v10999 = vpack.c.b16 %v10991, %v10991
  %v11000 = vpack.c.b16 %v10992, %v10992
  %v11001 = vpack.c.b16 %v10993, %v10993
  %v11002 = vpack.c.b16 %v10994, %v10994
  %v11003 = vpack.c.b16 %v10995, %v10995
  %v11004 = vunpack.c.l.b16 %v10996
  %v11005 = vunpack.c.l.b16 %v10997
  %v11006 = vunpack.c.l.b16 %v10998
  %v11007 = vunpack.c.l.b16 %v10999
  %v11008 = vunpack.c.l.b16 %v11000
  %v11009 = vunpack.c.l.b16 %v11001
  %v11010 = vunpack.c.l.b16 %v11002
  %v11011 = vunpack.c.l.b16 %v11003
  %v11012 = vrot.slane %v11004, 6
  %v11013 = vrot.slane %v11005, 5
  %v11014 = vsel %vm663, %v11013, %v11012
  %v11015 = vrot.slane %v11006, 4
  %v11016 = vsel %vm666, %v11015, %v11014
  %v11017 = vrot.slane %v11007, 3
  %v11018 = vsel %vm669, %v11017, %v11016
  %v11019 = vrot.slane %v11008, 2
  %v11020 = vsel %vm672, %v11019, %v11018
  %v11021 = vrot.slane %v11009, 1
  %v11022 = vsel %vm675, %v11021, %v11020
  %v11023 = vsel %vm678, %v11010, %v11022
  %v11024 = vrot.slane %v11011, 7
  %v11025 = vsel %vm681, %v11024, %v11023
  %v11026 = vpack.c.b16 %v11025, %v11025
  %11028 = vst [vmem:[#allocation2] sm:$0xf] %v11026
  %v11029 = vld [vmem:[%s2 + $0x4] sm:$0x8]
  %v11030 = vsel %vm5155, %v10947, %v11029
  %11031 = vst [vmem:[%s2 + $0x4] sm:$0x8] %v11030
  %v11032 = vld [vmem:[%s2 + $0xc] sm:$0x8]
  %v11033 = vsel %vm5155, %v10948, %v11032
  %11034 = vst [vmem:[%s2 + $0xc] sm:$0x8] %v11033
  %v11035 = vld [vmem:[%s2 + $0x14] sm:$0x8]
  %v11036 = vsel %vm5155, %v10949, %v11035
  %11037 = vst [vmem:[%s2 + $0x14] sm:$0x8] %v11036
  %v11038 = vld [vmem:[%s2 + $0x1c] sm:$0x8]
  %v11039 = vsel %vm5155, %v10950, %v11038
  %11040 = vst [vmem:[%s2 + $0x1c] sm:$0x8] %v11039
  %v11041 = vld [vmem:[%s2 + $0x24] sm:$0x8]
  %v11042 = vsel %vm5155, %v10951, %v11041
  %11043 = vst [vmem:[%s2 + $0x24] sm:$0x8] %v11042
  %v11044 = vld [vmem:[%s2 + $0x2c] sm:$0x8]
  %v11045 = vsel %vm5155, %v10952, %v11044
  %11046 = vst [vmem:[%s2 + $0x2c] sm:$0x8] %v11045
  %v11047 = vld [vmem:[%s2 + $0x34] sm:$0x8]
  %v11048 = vsel %vm5155, %v10953, %v11047
  %11049 = vst [vmem:[%s2 + $0x34] sm:$0x8] %v11048
  %v11050 = vld [vmem:[%s2 + $0x3c] sm:$0x8]
  %v11051 = vsel %vm5155, %v10954, %v11050
  %11052 = vst [vmem:[%s2 + $0x3c] sm:$0x8] %v11051
  %v11053 = vld [vmem:[%s0 + $0x10] sm:$0x88]
  %v11054 = vld [vmem:[%s0 + $0x18] sm:$0x88]
  %v11055 = vld [vmem:[%s0 + $0x30] sm:$0x88]
  %v11056 = vld [vmem:[%s0 + $0x38] sm:$0x88]
  %v11057 = vld [vmem:[%s0 + $0x50] sm:$0x88]
  %v11058 = vld [vmem:[%s0 + $0x58] sm:$0x88]
  %v11059 = vld [vmem:[%s0 + $0x70] sm:$0x88]
  %v11060 = vld [vmem:[%s0 + $0x78] sm:$0x88]
  %v11061 = vld [vmem:[%s0 + $0x90] sm:$0x88]
  %v11062 = vld [vmem:[%s0 + $0x98] sm:$0x88]
  %v11063 = vld [vmem:[%s0 + $0xb0] sm:$0x88]
  %v11064 = vld [vmem:[%s0 + $0xb8] sm:$0x88]
  %v11065 = vld [vmem:[%s0 + $0xd0] sm:$0x88]
  %v11066 = vld [vmem:[%s0 + $0xd8] sm:$0x88]
  %v11067 = vld [vmem:[%s0 + $0xf0] sm:$0x88]
  %v11068 = vld [vmem:[%s0 + $0xf8] sm:$0x88]
  %v11069 = vunpack.c.l.bf16 %v11053
  %v11070 = vunpack.c.h.bf16 %v11053
  %v11071 = vunpack.c.l.bf16 %v11054
  %v11072 = vunpack.c.h.bf16 %v11054
  %v11073 = vunpack.c.l.bf16 %v11055
  %v11074 = vunpack.c.h.bf16 %v11055
  %v11075 = vunpack.c.l.bf16 %v11056
  %v11076 = vunpack.c.h.bf16 %v11056
  %v11077 = vunpack.c.l.bf16 %v11057
  %v11078 = vunpack.c.h.bf16 %v11057
  %v11079 = vunpack.c.l.bf16 %v11058
  %v11080 = vunpack.c.h.bf16 %v11058
  %v11081 = vunpack.c.l.bf16 %v11059
  %v11082 = vunpack.c.h.bf16 %v11059
  %v11083 = vunpack.c.l.bf16 %v11060
  %v11084 = vunpack.c.h.bf16 %v11060
  %v11085 = vunpack.c.l.bf16 %v11061
  %v11086 = vunpack.c.h.bf16 %v11061
  %v11087 = vunpack.c.l.bf16 %v11062
  %v11088 = vunpack.c.h.bf16 %v11062
  %v11089 = vunpack.c.l.bf16 %v11063
  %v11090 = vunpack.c.h.bf16 %v11063
  %v11091 = vunpack.c.l.bf16 %v11064
  %v11092 = vunpack.c.h.bf16 %v11064
  %v11093 = vunpack.c.l.bf16 %v11065
  %v11094 = vunpack.c.h.bf16 %v11065
  %v11095 = vunpack.c.l.bf16 %v11066
  %v11096 = vunpack.c.h.bf16 %v11066
  %v11097 = vunpack.c.l.bf16 %v11067
  %v11098 = vunpack.c.h.bf16 %v11067
  %v11099 = vunpack.c.l.bf16 %v11068
  %v11100 = vunpack.c.h.bf16 %v11068
  %v11101 = vld [vmem:[#allocation2] sm:$0xf]
  %v11102 = vld [vmem:[%s1] sm:$0xff]
  %v11103 = vld [vmem:[%s1 + $0x8] sm:$0xff]
  %v11104 = vld [vmem:[%s1 + $0x10] sm:$0xff]
  %v11105 = vld [vmem:[%s1 + $0x18] sm:$0xff]
  %v11106 = vld [vmem:[%s1 + $0x20] sm:$0xff]
  %v11107 = vld [vmem:[%s1 + $0x28] sm:$0xff]
  %v11108 = vld [vmem:[%s1 + $0x30] sm:$0xff]
  %v11109 = vld [vmem:[%s1 + $0x38] sm:$0xff]
  %v11110 = vld [vmem:[%s1 + $0x40] sm:$0xff]
  %v11111 = vld [vmem:[%s1 + $0x48] sm:$0xff]
  %v11112 = vld [vmem:[%s1 + $0x50] sm:$0xff]
  %v11113 = vld [vmem:[%s1 + $0x58] sm:$0xff]
  %v11114 = vld [vmem:[%s1 + $0x60] sm:$0xff]
  %v11115 = vld [vmem:[%s1 + $0x68] sm:$0xff]
  %v11116 = vld [vmem:[%s1 + $0x70] sm:$0xff]
  %v11117 = vld [vmem:[%s1 + $0x78] sm:$0xff]
  %v11118 = vld [vmem:[%s1 + $0x80] sm:$0xff]
  %v11119 = vld [vmem:[%s1 + $0x88] sm:$0xff]
  %v11120 = vld [vmem:[%s1 + $0x90] sm:$0xff]
  %v11121 = vld [vmem:[%s1 + $0x98] sm:$0xff]
  %v11122 = vld [vmem:[%s1 + $0xa0] sm:$0xff]
  %v11123 = vld [vmem:[%s1 + $0xa8] sm:$0xff]
  %v11124 = vld [vmem:[%s1 + $0xb0] sm:$0xff]
  %v11125 = vld [vmem:[%s1 + $0xb8] sm:$0xff]
  %v11126 = vld [vmem:[%s1 + $0xc0] sm:$0xff]
  %v11127 = vld [vmem:[%s1 + $0xc8] sm:$0xff]
  %v11128 = vld [vmem:[%s1 + $0xd0] sm:$0xff]
  %v11129 = vld [vmem:[%s1 + $0xd8] sm:$0xff]
  %v11130 = vld [vmem:[%s1 + $0xe0] sm:$0xff]
  %v11131 = vld [vmem:[%s1 + $0xe8] sm:$0xff]
  %v11132 = vld [vmem:[%s1 + $0xf0] sm:$0xff]
  %v11133 = vld [vmem:[%s1 + $0xf8] sm:$0xff]
  %v11166 = vunpack.c.l.b16 %v11102
  %v11167 = vunpack.c.h.b16 %v11102
  %v11168 = vunpack.c.l.b16 %v11103
  %v11169 = vunpack.c.h.b16 %v11103
  %v11170 = vunpack.c.l.b16 %v11104
  %v11171 = vunpack.c.h.b16 %v11104
  %v11172 = vunpack.c.l.b16 %v11105
  %v11173 = vunpack.c.h.b16 %v11105
  %v11174 = vunpack.c.l.b16 %v11106
  %v11175 = vunpack.c.h.b16 %v11106
  %v11176 = vunpack.c.l.b16 %v11107
  %v11177 = vunpack.c.h.b16 %v11107
  %v11178 = vunpack.c.l.b16 %v11108
  %v11179 = vunpack.c.h.b16 %v11108
  %v11180 = vunpack.c.l.b16 %v11109
  %v11181 = vunpack.c.h.b16 %v11109
  %v11182 = vunpack.c.l.b16 %v11110
  %v11183 = vunpack.c.h.b16 %v11110
  %v11184 = vunpack.c.l.b16 %v11111
  %v11185 = vunpack.c.h.b16 %v11111
  %v11186 = vunpack.c.l.b16 %v11112
  %v11187 = vunpack.c.h.b16 %v11112
  %v11188 = vunpack.c.l.b16 %v11113
  %v11189 = vunpack.c.h.b16 %v11113
  %v11190 = vunpack.c.l.b16 %v11114
  %v11191 = vunpack.c.h.b16 %v11114
  %v11192 = vunpack.c.l.b16 %v11115
  %v11193 = vunpack.c.h.b16 %v11115
  %v11194 = vunpack.c.l.b16 %v11116
  %v11195 = vunpack.c.h.b16 %v11116
  %v11196 = vunpack.c.l.b16 %v11117
  %v11197 = vunpack.c.h.b16 %v11117
  %v11198 = vunpack.c.l.b16 %v11118
  %v11199 = vunpack.c.h.b16 %v11118
  %v11200 = vunpack.c.l.b16 %v11119
  %v11201 = vunpack.c.h.b16 %v11119
  %v11202 = vunpack.c.l.b16 %v11120
  %v11203 = vunpack.c.h.b16 %v11120
  %v11204 = vunpack.c.l.b16 %v11121
  %v11205 = vunpack.c.h.b16 %v11121
  %v11206 = vunpack.c.l.b16 %v11122
  %v11207 = vunpack.c.h.b16 %v11122
  %v11208 = vunpack.c.l.b16 %v11123
  %v11209 = vunpack.c.h.b16 %v11123
  %v11210 = vunpack.c.l.b16 %v11124
  %v11211 = vunpack.c.h.b16 %v11124
  %v11212 = vunpack.c.l.b16 %v11125
  %v11213 = vunpack.c.h.b16 %v11125
  %v11214 = vunpack.c.l.b16 %v11126
  %v11215 = vunpack.c.h.b16 %v11126
  %v11216 = vunpack.c.l.b16 %v11127
  %v11217 = vunpack.c.h.b16 %v11127
  %v11218 = vunpack.c.l.b16 %v11128
  %v11219 = vunpack.c.h.b16 %v11128
  %v11220 = vunpack.c.l.b16 %v11129
  %v11221 = vunpack.c.h.b16 %v11129
  %v11222 = vunpack.c.l.b16 %v11130
  %v11223 = vunpack.c.h.b16 %v11130
  %v11224 = vunpack.c.l.b16 %v11131
  %v11225 = vunpack.c.h.b16 %v11131
  %v11226 = vunpack.c.l.b16 %v11132
  %v11227 = vunpack.c.h.b16 %v11132
  %v11228 = vunpack.c.l.b16 %v11133
  %v11229 = vunpack.c.h.b16 %v11133
  %v11230 = vpack.c.b16 %v11170, %v11166
  %v11231 = vpack.c.b16 %v11171, %v11167
  %v11232 = vpack.c.b16 %v11172, %v11168
  %v11233 = vpack.c.b16 %v11173, %v11169
  %v11234 = vpack.c.b16 %v11178, %v11174
  %v11235 = vpack.c.b16 %v11179, %v11175
  %v11236 = vpack.c.b16 %v11180, %v11176
  %v11237 = vpack.c.b16 %v11181, %v11177
  %v11238 = vpack.c.b16 %v11186, %v11182
  %v11239 = vpack.c.b16 %v11187, %v11183
  %v11240 = vpack.c.b16 %v11188, %v11184
  %v11241 = vpack.c.b16 %v11189, %v11185
  %v11242 = vpack.c.b16 %v11194, %v11190
  %v11243 = vpack.c.b16 %v11195, %v11191
  %v11244 = vpack.c.b16 %v11196, %v11192
  %v11245 = vpack.c.b16 %v11197, %v11193
  %v11246 = vpack.c.b16 %v11202, %v11198
  %v11247 = vpack.c.b16 %v11203, %v11199
  %v11248 = vpack.c.b16 %v11204, %v11200
  %v11249 = vpack.c.b16 %v11205, %v11201
  %v11250 = vpack.c.b16 %v11210, %v11206
  %v11251 = vpack.c.b16 %v11211, %v11207
  %v11252 = vpack.c.b16 %v11212, %v11208
  %v11253 = vpack.c.b16 %v11213, %v11209
  %v11254 = vpack.c.b16 %v11218, %v11214
  %v11255 = vpack.c.b16 %v11219, %v11215
  %v11256 = vpack.c.b16 %v11220, %v11216
  %v11257 = vpack.c.b16 %v11221, %v11217
  %v11258 = vpack.c.b16 %v11226, %v11222
  %v11259 = vpack.c.b16 %v11227, %v11223
  %v11260 = vpack.c.b16 %v11228, %v11224
  %v11261 = vpack.c.b16 %v11229, %v11225
  %11294 = vmatprep.subr.bf16.mxu0 %v11259
  %11295 = vmatpush1.bf16.msra.mxu0 %v11258
  %11296 = vmatprep.subr.bf16.mxu0 %v11255
  %11297 = vmatpush1.bf16.msra.mxu0 %v11254
  %11298 = vmatprep.subr.bf16.mxu0 %v11251
  %11299 = vmatpush1.bf16.msra.mxu0 %v11250
  %11300 = vmatprep.subr.bf16.mxu0 %v11247
  %11301 = vmatpush1.bf16.msra.mxu0 %v11246
  %11302 = vmatprep.subr.bf16.mxu0 %v11243
  %11303 = vmatpush1.bf16.msra.mxu0 %v11242
  %11304 = vmatprep.subr.bf16.mxu0 %v11239
  %11305 = vmatpush1.bf16.msra.mxu0 %v11238
  %11306 = vmatprep.subr.bf16.mxu0 %v11235
  %11307 = vmatpush1.bf16.msra.mxu0 %v11234
  %11308 = vmatprep.subr.bf16.mxu0 %v11231
  %11309 = vmatpush1.bf16.msra.mxu0 %v11230
  %11310 = vmatprep.subr.bf16.mxu0 0
  %11311 = vmatpush2.bf16.msra.mxu0 0
  %11312 = vmatprep.subr.bf16.mxu0 0
  %11313 = vmatpush2.bf16.msra.mxu0 0
  %11314 = vmatprep.subr.bf16.mxu0 0
  %11315 = vmatpush2.bf16.msra.mxu0 0
  %11316 = vmatprep.subr.bf16.mxu0 0
  %11317 = vmatpush2.bf16.msra.mxu0 0
  %11318 = vmatprep.subr.bf16.mxu0 0
  %11319 = vmatpush2.bf16.msra.mxu0 0
  %11320 = vmatprep.subr.bf16.mxu0 0
  %11321 = vmatpush2.bf16.msra.mxu0 0
  %11322 = vmatprep.subr.bf16.mxu0 0
  %11323 = vmatpush2.bf16.msra.mxu0 0
  %11324 = vmatprep.subr.bf16.mxu0 0
  %11325 = vmatpush2.bf16.msra.mxu0 0
  %11326 = vmatprep.mubr.bf16.mxu0 0
  %11327 = vmatmul.mubr.bf16.gmra.mxu0 %v11101
  %v11328 = vpop.f32.mrf.mxu0
  %v11329 = vadd.f32 0.0, %v11328
  %v11330 = vpop.f32.mrf.mxu0
  %v11331 = vadd.f32 0.0, %v11330
  %v11332 = vpop.f32.mrf.mxu0
  %v11333 = vpop.f32.mrf.mxu0
  %11334 = vdwg.mxu0
  %11335 = vmatprep.subr.bf16.mxu0 %v11261
  %11336 = vmatpush1.bf16.msra.mxu0 %v11260
  %11337 = vmatprep.subr.bf16.mxu0 %v11257
  %11338 = vmatpush1.bf16.msra.mxu0 %v11256
  %11339 = vmatprep.subr.bf16.mxu0 %v11253
  %11340 = vmatpush1.bf16.msra.mxu0 %v11252
  %11341 = vmatprep.subr.bf16.mxu0 %v11249
  %11342 = vmatpush1.bf16.msra.mxu0 %v11248
  %11343 = vmatprep.subr.bf16.mxu0 %v11245
  %11344 = vmatpush1.bf16.msra.mxu0 %v11244
  %11345 = vmatprep.subr.bf16.mxu0 %v11241
  %11346 = vmatpush1.bf16.msra.mxu0 %v11240
  %11347 = vmatprep.subr.bf16.mxu0 %v11237
  %11348 = vmatpush1.bf16.msra.mxu0 %v11236
  %11349 = vmatprep.subr.bf16.mxu0 %v11233
  %11350 = vmatpush1.bf16.msra.mxu0 %v11232
  %11351 = vmatprep.subr.bf16.mxu0 0
  %11352 = vmatpush2.bf16.msra.mxu0 0
  %11353 = vmatprep.subr.bf16.mxu0 0
  %11354 = vmatpush2.bf16.msra.mxu0 0
  %11355 = vmatprep.subr.bf16.mxu0 0
  %11356 = vmatpush2.bf16.msra.mxu0 0
  %11357 = vmatprep.subr.bf16.mxu0 0
  %11358 = vmatpush2.bf16.msra.mxu0 0
  %11359 = vmatprep.subr.bf16.mxu0 0
  %11360 = vmatpush2.bf16.msra.mxu0 0
  %11361 = vmatprep.subr.bf16.mxu0 0
  %11362 = vmatpush2.bf16.msra.mxu0 0
  %11363 = vmatprep.subr.bf16.mxu0 0
  %11364 = vmatpush2.bf16.msra.mxu0 0
  %11365 = vmatprep.subr.bf16.mxu0 0
  %11366 = vmatpush2.bf16.msra.mxu0 0
  %11367 = vmatprep.mubr.bf16.mxu0 0
  %11368 = vmatmul.mubr.bf16.gmra.mxu0 %v11101
  %v11369 = vpop.f32.mrf.mxu0
  %v11370 = vadd.f32 0.0, %v11369
  %v11371 = vpop.f32.mrf.mxu0
  %v11372 = vadd.f32 0.0, %v11371
  %v11373 = vpop.f32.mrf.mxu0
  %v11374 = vpop.f32.mrf.mxu0
  %11375 = vdwg.mxu0
  %v11380 = vrot.slane %v11329, 1
  %v11381 = vrot.slane %v11331, 1
  %v11382 = vrot.slane %v11370, 1
  %v11383 = vrot.slane %v11372, 1
  %v11384 = vrot.slane %v11329, 2
  %v11385 = vrot.slane %v11331, 2
  %v11386 = vrot.slane %v11370, 2
  %v11387 = vrot.slane %v11372, 2
  %v11388 = vrot.slane %v11329, 3
  %v11389 = vrot.slane %v11331, 3
  %v11390 = vrot.slane %v11370, 3
  %v11391 = vrot.slane %v11372, 3
  %v11392 = vrot.slane %v11329, 4
  %v11393 = vrot.slane %v11331, 4
  %v11394 = vrot.slane %v11370, 4
  %v11395 = vrot.slane %v11372, 4
  %v11396 = vrot.slane %v11329, 5
  %v11397 = vrot.slane %v11331, 5
  %v11398 = vrot.slane %v11370, 5
  %v11399 = vrot.slane %v11372, 5
  %v11400 = vrot.slane %v11329, 6
  %v11401 = vrot.slane %v11331, 6
  %v11402 = vrot.slane %v11370, 6
  %v11403 = vrot.slane %v11372, 6
  %v11404 = vrot.slane %v11329, 7
  %v11405 = vrot.slane %v11331, 7
  %v11406 = vrot.slane %v11370, 7
  %v11407 = vrot.slane %v11372, 7
  %v11440 = vadd.f32 %v11069, %v11380
  %v11441 = vadd.f32 %v11070, %v11381
  %v11442 = vadd.f32 %v11071, %v11382
  %v11443 = vadd.f32 %v11072, %v11383
  %v11444 = vadd.f32 %v11073, %v11384
  %v11445 = vadd.f32 %v11074, %v11385
  %v11446 = vadd.f32 %v11075, %v11386
  %v11447 = vadd.f32 %v11076, %v11387
  %v11448 = vadd.f32 %v11077, %v11388
  %v11449 = vadd.f32 %v11078, %v11389
  %v11450 = vadd.f32 %v11079, %v11390
  %v11451 = vadd.f32 %v11080, %v11391
  %v11452 = vadd.f32 %v11081, %v11392
  %v11453 = vadd.f32 %v11082, %v11393
  %v11454 = vadd.f32 %v11083, %v11394
  %v11455 = vadd.f32 %v11084, %v11395
  %v11456 = vadd.f32 %v11085, %v11396
  %v11457 = vadd.f32 %v11086, %v11397
  %v11458 = vadd.f32 %v11087, %v11398
  %v11459 = vadd.f32 %v11088, %v11399
  %v11460 = vadd.f32 %v11089, %v11400
  %v11461 = vadd.f32 %v11090, %v11401
  %v11462 = vadd.f32 %v11091, %v11402
  %v11463 = vadd.f32 %v11092, %v11403
  %v11464 = vadd.f32 %v11093, %v11404
  %v11465 = vadd.f32 %v11094, %v11405
  %v11466 = vadd.f32 %v11095, %v11406
  %v11467 = vadd.f32 %v11096, %v11407
  %v11468 = vadd.f32 %v11097, %v11329
  %v11469 = vadd.f32 %v11098, %v11331
  %v11470 = vadd.f32 %v11099, %v11370
  %v11471 = vadd.f32 %v11100, %v11372
  %v11472 = vxor.u32 %v11440, 2147483648
  %v11473 = vxor.u32 %v11441, 2147483648
  %v11474 = vxor.u32 %v11442, 2147483648
  %v11475 = vxor.u32 %v11444, 2147483648
  %v11476 = vxor.u32 %v11445, 2147483648
  %v11477 = vxor.u32 %v11446, 2147483648
  %v11478 = vxor.u32 %v11448, 2147483648
  %v11479 = vxor.u32 %v11449, 2147483648
  %v11480 = vxor.u32 %v11450, 2147483648
  %v11481 = vxor.u32 %v11452, 2147483648
  %v11482 = vxor.u32 %v11453, 2147483648
  %v11483 = vxor.u32 %v11454, 2147483648
  %v11484 = vxor.u32 %v11456, 2147483648
  %v11485 = vxor.u32 %v11457, 2147483648
  %v11486 = vxor.u32 %v11458, 2147483648
  %v11487 = vxor.u32 %v11460, 2147483648
  %v11488 = vxor.u32 %v11461, 2147483648
  %v11489 = vxor.u32 %v11462, 2147483648
  %v11490 = vxor.u32 %v11464, 2147483648
  %v11491 = vxor.u32 %v11465, 2147483648
  %v11492 = vxor.u32 %v11466, 2147483648
  %v11493 = vxor.u32 %v11468, 2147483648
  %v11494 = vxor.u32 %v11469, 2147483648
  %v11495 = vxor.u32 %v11470, 2147483648
  %v11496 = vmul.f32 %v11472, 1.442695
  %v11497 = vpow.pop %v11496
  %v11498 = vmul.f32 %v11473, 1.442695
  %v11499 = vpow.pop %v11498
  %v11500 = vmul.f32 %v11474, 1.442695
  %v11501 = vpow.pop %v11500
  %v11502 = vmul.f32 %v11475, 1.442695
  %v11503 = vpow.pop %v11502
  %v11504 = vmul.f32 %v11476, 1.442695
  %v11505 = vpow.pop %v11504
  %v11506 = vmul.f32 %v11477, 1.442695
  %v11507 = vpow.pop %v11506
  %v11508 = vmul.f32 %v11478, 1.442695
  %v11509 = vpow.pop %v11508
  %v11510 = vmul.f32 %v11479, 1.442695
  %v11511 = vpow.pop %v11510
  %v11512 = vmul.f32 %v11480, 1.442695
  %v11513 = vpow.pop %v11512
  %v11514 = vmul.f32 %v11481, 1.442695
  %v11515 = vpow.pop %v11514
  %v11516 = vmul.f32 %v11482, 1.442695
  %v11517 = vpow.pop %v11516
  %v11518 = vmul.f32 %v11483, 1.442695
  %v11519 = vpow.pop %v11518
  %v11520 = vmul.f32 %v11484, 1.442695
  %v11521 = vpow.pop %v11520
  %v11522 = vmul.f32 %v11485, 1.442695
  %v11523 = vpow.pop %v11522
  %v11524 = vmul.f32 %v11486, 1.442695
  %v11525 = vpow.pop %v11524
  %v11526 = vmul.f32 %v11487, 1.442695
  %v11527 = vpow.pop %v11526
  %v11528 = vmul.f32 %v11488, 1.442695
  %v11529 = vpow.pop %v11528
  %v11530 = vmul.f32 %v11489, 1.442695
  %v11531 = vpow.pop %v11530
  %v11532 = vmul.f32 %v11490, 1.442695
  %v11533 = vpow.pop %v11532
  %v11534 = vmul.f32 %v11491, 1.442695
  %v11535 = vpow.pop %v11534
  %v11536 = vmul.f32 %v11492, 1.442695
  %v11537 = vpow.pop %v11536
  %v11538 = vmul.f32 %v11493, 1.442695
  %v11539 = vpow.pop %v11538
  %v11540 = vmul.f32 %v11494, 1.442695
  %v11541 = vpow.pop %v11540
  %v11542 = vmul.f32 %v11495, 1.442695
  %v11543 = vpow.pop %v11542
  %v11544 = vadd.f32 %v11497, 1.0
  %v11545 = vadd.f32 %v11499, 1.0
  %v11546 = vadd.f32 %v11501, 1.0
  %v11547 = vadd.f32 %v11503, 1.0
  %v11548 = vadd.f32 %v11505, 1.0
  %v11549 = vadd.f32 %v11507, 1.0
  %v11550 = vadd.f32 %v11509, 1.0
  %v11551 = vadd.f32 %v11511, 1.0
  %v11552 = vadd.f32 %v11513, 1.0
  %v11553 = vadd.f32 %v11515, 1.0
  %v11554 = vadd.f32 %v11517, 1.0
  %v11555 = vadd.f32 %v11519, 1.0
  %v11556 = vadd.f32 %v11521, 1.0
  %v11557 = vadd.f32 %v11523, 1.0
  %v11558 = vadd.f32 %v11525, 1.0
  %v11559 = vadd.f32 %v11527, 1.0
  %v11560 = vadd.f32 %v11529, 1.0
  %v11561 = vadd.f32 %v11531, 1.0
  %v11562 = vadd.f32 %v11533, 1.0
  %v11563 = vadd.f32 %v11535, 1.0
  %v11564 = vadd.f32 %v11537, 1.0
  %v11565 = vadd.f32 %v11539, 1.0
  %v11566 = vadd.f32 %v11541, 1.0
  %v11567 = vadd.f32 %v11543, 1.0
  %v11568 = vrcp.pop %v11544
  %v11569 = vmul.f32 1.0, %v11568
  %v11570 = vrcp.pop %v11545
  %v11571 = vmul.f32 1.0, %v11570
  %v11572 = vrcp.pop %v11546
  %v11573 = vmul.f32 1.0, %v11572
  %v11574 = vrcp.pop %v11547
  %v11575 = vmul.f32 1.0, %v11574
  %v11576 = vrcp.pop %v11548
  %v11577 = vmul.f32 1.0, %v11576
  %v11578 = vrcp.pop %v11549
  %v11579 = vmul.f32 1.0, %v11578
  %v11580 = vrcp.pop %v11550
  %v11581 = vmul.f32 1.0, %v11580
  %v11582 = vrcp.pop %v11551
  %v11583 = vmul.f32 1.0, %v11582
  %v11584 = vrcp.pop %v11552
  %v11585 = vmul.f32 1.0, %v11584
  %v11586 = vrcp.pop %v11553
  %v11587 = vmul.f32 1.0, %v11586
  %v11588 = vrcp.pop %v11554
  %v11589 = vmul.f32 1.0, %v11588
  %v11590 = vrcp.pop %v11555
  %v11591 = vmul.f32 1.0, %v11590
  %v11592 = vrcp.pop %v11556
  %v11593 = vmul.f32 1.0, %v11592
  %v11594 = vrcp.pop %v11557
  %v11595 = vmul.f32 1.0, %v11594
  %v11596 = vrcp.pop %v11558
  %v11597 = vmul.f32 1.0, %v11596
  %v11598 = vrcp.pop %v11559
  %v11599 = vmul.f32 1.0, %v11598
  %v11600 = vrcp.pop %v11560
  %v11601 = vmul.f32 1.0, %v11600
  %v11602 = vrcp.pop %v11561
  %v11603 = vmul.f32 1.0, %v11602
  %v11604 = vrcp.pop %v11562
  %v11605 = vmul.f32 1.0, %v11604
  %v11606 = vrcp.pop %v11563
  %v11607 = vmul.f32 1.0, %v11606
  %v11608 = vrcp.pop %v11564
  %v11609 = vmul.f32 1.0, %v11608
  %v11610 = vrcp.pop %v11565
  %v11611 = vmul.f32 1.0, %v11610
  %v11612 = vrcp.pop %v11566
  %v11613 = vmul.f32 1.0, %v11612
  %v11614 = vrcp.pop %v11567
  %v11615 = vmul.f32 1.0, %v11614
  %v11616 = vtanh.pop %v11443
  %v11617 = vtanh.pop %v11447
  %v11618 = vtanh.pop %v11451
  %v11619 = vtanh.pop %v11455
  %v11620 = vtanh.pop %v11459
  %v11621 = vtanh.pop %v11463
  %v11622 = vtanh.pop %v11467
  %v11623 = vtanh.pop %v11471
  %v11624 = vld [vmem:[#allocation3] sm:$0xff]
  %v11626 = vrot.slane %v11624, 1
  %v11627 = vrot.slane %v11624, 2
  %v11628 = vrot.slane %v11624, 3
  %v11629 = vrot.slane %v11624, 4
  %v11630 = vrot.slane %v11624, 5
  %v11631 = vrot.slane %v11624, 6
  %v11632 = vrot.slane %v11624, 7
  %v11641 = vmul.f32 %v11571, %v11626
  %v11642 = vmul.f32 %v11577, %v11627
  %v11643 = vmul.f32 %v11583, %v11628
  %v11644 = vmul.f32 %v11589, %v11629
  %v11645 = vmul.f32 %v11595, %v11630
  %v11646 = vmul.f32 %v11601, %v11631
  %v11647 = vmul.f32 %v11607, %v11632
  %v11648 = vmul.f32 %v11613, %v11624
  %v11649 = vmul.f32 %v11569, %v11616
  %v11650 = vmul.f32 %v11575, %v11617
  %v11651 = vmul.f32 %v11581, %v11618
  %v11652 = vmul.f32 %v11587, %v11619
  %v11653 = vmul.f32 %v11593, %v11620
  %v11654 = vmul.f32 %v11599, %v11621
  %v11655 = vmul.f32 %v11605, %v11622
  %v11656 = vmul.f32 %v11611, %v11623
  %v11657 = vadd.f32 %v11641, %v11649
  %v11658 = vadd.f32 %v11642, %v11650
  %v11659 = vadd.f32 %v11643, %v11651
  %v11660 = vadd.f32 %v11644, %v11652
  %v11661 = vadd.f32 %v11645, %v11653
  %v11662 = vadd.f32 %v11646, %v11654
  %v11663 = vadd.f32 %v11647, %v11655
  %v11664 = vadd.f32 %v11648, %v11656
  %v11665 = vtanh.pop %v11657
  %v11666 = vtanh.pop %v11658
  %v11667 = vtanh.pop %v11659
  %v11668 = vtanh.pop %v11660
  %v11669 = vtanh.pop %v11661
  %v11670 = vtanh.pop %v11662
  %v11671 = vtanh.pop %v11663
  %v11672 = vtanh.pop %v11664
  %v11673 = vmul.f32 %v11573, %v11665
  %v11674 = vmul.f32 %v11579, %v11666
  %v11675 = vmul.f32 %v11585, %v11667
  %v11676 = vmul.f32 %v11591, %v11668
  %v11677 = vmul.f32 %v11597, %v11669
  %v11678 = vmul.f32 %v11603, %v11670
  %v11679 = vmul.f32 %v11609, %v11671
  %v11680 = vmul.f32 %v11615, %v11672
  %v11681 = vpack.c.bf16 %v11673, %v11673
  %v11682 = vpack.c.bf16 %v11674, %v11674
  %v11683 = vpack.c.bf16 %v11675, %v11675
  %v11684 = vpack.c.bf16 %v11676, %v11676
  %v11685 = vpack.c.bf16 %v11677, %v11677
  %v11686 = vpack.c.bf16 %v11678, %v11678
  %v11687 = vpack.c.bf16 %v11679, %v11679
  %v11688 = vpack.c.bf16 %v11680, %v11680
  %v11697 = vrot.slane %v11658, 7
  %v11698 = vrot.slane %v11659, 6
  %v11699 = vsel %vm663, %v11698, %v11697
  %v11700 = vrot.slane %v11660, 5
  %v11701 = vsel %vm666, %v11700, %v11699
  %v11702 = vrot.slane %v11661, 4
  %v11703 = vsel %vm669, %v11702, %v11701
  %v11704 = vrot.slane %v11662, 3
  %v11705 = vsel %vm672, %v11704, %v11703
  %v11706 = vrot.slane %v11663, 2
  %v11707 = vsel %vm675, %v11706, %v11705
  %v11708 = vrot.slane %v11664, 1
  %v11709 = vsel %vm678, %v11708, %v11707
  %11712 = vst [vmem:[#allocation3 - $0x7] sm:$0x80] %v11657
  %11713 = vst [vmem:[#allocation3 + $0x1] sm:$0x7f] %v11709
  %v11722 = vunpack.c.l.b16 %v11681
  %v11723 = vunpack.c.l.b16 %v11682
  %v11724 = vunpack.c.l.b16 %v11683
  %v11725 = vunpack.c.l.b16 %v11684
  %v11726 = vunpack.c.l.b16 %v11685
  %v11727 = vunpack.c.l.b16 %v11686
  %v11728 = vunpack.c.l.b16 %v11687
  %v11729 = vunpack.c.l.b16 %v11688
  %v11730 = vpack.c.b16 %v11722, %v11722
  %v11731 = vpack.c.b16 %v11723, %v11723
  %v11732 = vpack.c.b16 %v11724, %v11724
  %v11733 = vpack.c.b16 %v11725, %v11725
  %v11734 = vpack.c.b16 %v11726, %v11726
  %v11735 = vpack.c.b16 %v11727, %v11727
  %v11736 = vpack.c.b16 %v11728, %v11728
  %v11737 = vpack.c.b16 %v11729, %v11729
  %v11738 = vunpack.c.l.b16 %v11730
  %v11739 = vunpack.c.l.b16 %v11731
  %v11740 = vunpack.c.l.b16 %v11732
  %v11741 = vunpack.c.l.b16 %v11733
  %v11742 = vunpack.c.l.b16 %v11734
  %v11743 = vunpack.c.l.b16 %v11735
  %v11744 = vunpack.c.l.b16 %v11736
  %v11745 = vunpack.c.l.b16 %v11737
  %v11746 = vrot.slane %v11738, 7
  %v11747 = vrot.slane %v11739, 6
  %v11748 = vsel %vm663, %v11747, %v11746
  %v11749 = vrot.slane %v11740, 5
  %v11750 = vsel %vm666, %v11749, %v11748
  %v11751 = vrot.slane %v11741, 4
  %v11752 = vsel %vm669, %v11751, %v11750
  %v11753 = vrot.slane %v11742, 3
  %v11754 = vsel %vm672, %v11753, %v11752
  %v11755 = vrot.slane %v11743, 2
  %v11756 = vsel %vm675, %v11755, %v11754
  %v11757 = vrot.slane %v11744, 1
  %v11758 = vsel %vm678, %v11757, %v11756
  %v11759 = vsel %vm681, %v11745, %v11758
  %v11760 = vpack.c.b16 %v11759, %v11759
  %11762 = vst [vmem:[#allocation2] sm:$0xf] %v11760
  %v11763 = vld [vmem:[%s2 + $0x4] sm:$0x8]
  %v11764 = vsel %vm5891, %v11681, %v11763
  %11765 = vst [vmem:[%s2 + $0x4] sm:$0x8] %v11764
  %v11766 = vld [vmem:[%s2 + $0xc] sm:$0x8]
  %v11767 = vsel %vm5891, %v11682, %v11766
  %11768 = vst [vmem:[%s2 + $0xc] sm:$0x8] %v11767
  %v11769 = vld [vmem:[%s2 + $0x14] sm:$0x8]
  %v11770 = vsel %vm5891, %v11683, %v11769
  %11771 = vst [vmem:[%s2 + $0x14] sm:$0x8] %v11770
  %v11772 = vld [vmem:[%s2 + $0x1c] sm:$0x8]
  %v11773 = vsel %vm5891, %v11684, %v11772
  %11774 = vst [vmem:[%s2 + $0x1c] sm:$0x8] %v11773
  %v11775 = vld [vmem:[%s2 + $0x24] sm:$0x8]
  %v11776 = vsel %vm5891, %v11685, %v11775
  %11777 = vst [vmem:[%s2 + $0x24] sm:$0x8] %v11776
  %v11778 = vld [vmem:[%s2 + $0x2c] sm:$0x8]
  %v11779 = vsel %vm5891, %v11686, %v11778
  %11780 = vst [vmem:[%s2 + $0x2c] sm:$0x8] %v11779
  %v11781 = vld [vmem:[%s2 + $0x34] sm:$0x8]
  %v11782 = vsel %vm5891, %v11687, %v11781
  %11783 = vst [vmem:[%s2 + $0x34] sm:$0x8] %v11782
  %v11784 = vld [vmem:[%s2 + $0x3c] sm:$0x8]
  %v11785 = vsel %vm5891, %v11688, %v11784
  %11786 = vst [vmem:[%s2 + $0x3c] sm:$0x8] %v11785
  // Predicated region
  $region14: #{decoder_rnn_forward.2} parent=0 // pred_check
    _
  $region15: #{decoder_rnn_forward.2} parent=0 // pred_check_branch
    %11788 = sbr.rel (0) target = $region17
  $region16: #{decoder_rnn_forward.2} parent=0 // pred_region
    _
  $region17: #{decoder_rnn_forward.2} parent=0 // pred_fallthru
    _
  // Predicated region
  $region18: #{decoder_rnn_forward.2} parent=0 // pred_check
    _
  $region19: #{decoder_rnn_forward.2} parent=0 // pred_check_branch
    %11790 = sbr.rel (0) target = $region21
  $region20: #{decoder_rnn_forward.2} parent=0 // pred_region
    _
  $region21: #{decoder_rnn_forward.2} parent=0 // pred_fallthru
    _

</llo_original>
